<compile_context>
chip_gen: v7x
topology: tpu7x:2x2x1
jax: 0.10.0
libtpu: 0.0.40
codegen_flags: <defaults>
</compile_context>

<pallas_src>
import numpy as np
import jax
import jax.numpy as jnp
from jax import lax
from jax.experimental import pallas as pl
from jax.experimental.pallas import tpu as pltpu

_EPS = 1e-8
_SLOPE = 0.2                       # LeakyReLU negative slope
_WSCALE_GAIN = float(np.sqrt(2.0))
_INIT_RES = 4


def _pn(x):
    """Pixel norm over the channel (lane) axis; rsqrt uses the EUP slot."""
    return x * lax.rsqrt(jnp.mean(x * x, axis=-1, keepdims=True) + _EPS)


def _lrelu(x):
    return jnp.where(x > 0.0, x, _SLOPE * x)


# ----------------------------------------------------------------------------
# trace-time constants for the guarded flat zero-padded layout
# ----------------------------------------------------------------------------
def _interior_mask(batch, res):
    """(B*wp*wp, 1) f32: 1 where the flat-padded row is a real interior pixel."""
    wp = res + 2
    p_img = wp * wp
    idx = np.arange(batch * p_img) % p_img
    row, col = idx // wp, idx % wp
    ok = (row >= 1) & (row <= res) & (col >= 1) & (col <= res)
    return jnp.asarray(ok.astype(np.float32).reshape(-1, 1))


def _upsample_blockdiag(batch, res_lo):
    """(B*p_hi, B*p_lo) 0/1 matrix: flat-padded x2 nearest-neighbour upsample,
    block-diagonal over batch (ring rows of the hi-res layout are all-zero)."""
    res_hi = 2 * res_lo
    wp_lo, wp_hi = res_lo + 2, res_hi + 2
    p_lo, p_hi = wp_lo * wp_lo, wp_hi * wp_hi
    R = np.zeros((batch * p_hi, batch * p_lo), np.float32)
    for b in range(batch):
        for rh in range(1, res_hi + 1):
            rl = (rh - 1) // 2 + 1
            for ch in range(1, res_hi + 1):
                cl = (ch - 1) // 2 + 1
                R[b * p_hi + rh * wp_hi + ch, b * p_lo + rl * wp_lo + cl] = 1.0
    return jnp.asarray(R)


def _dense_place_blockdiag(batch, res):
    """(B*p_img, res*res*B) 0/1 matrix scattering the dense-conv pixels into the
    padded flat layout (zero rows at pad positions), block-diagonal over batch.
    Staging rows are pixel-major: row index = pix*B + b."""
    wp = res + 2
    p_img = wp * wp
    P = np.zeros((batch * p_img, res * res * batch), np.float32)
    for b in range(batch):
        for i in range(res):
            for j in range(res):
                pix = i * res + j
                P[b * p_img + (i + 1) * wp + (j + 1), pix * batch + b] = 1.0
    return jnp.asarray(P)


# ----------------------------------------------------------------------------
# Generator (parameter construction + fused forward)
# ----------------------------------------------------------------------------
class PGGANGeneratorPallas:
    """PGGAN generator, lod=0 (the default `lod` buffer value) forward path."""

    def __init__(self, resolution=8, z_space_dim=32, image_channels=3,
                 final_tanh=False, fused_scale=False,
                 fmaps_base=256, fmaps_max=64, seed=0):
        assert resolution in [8, 16, 32, 64, 128, 256, 512, 1024]
        # Fully fused single-kernel path keeps all activations/weights in VMEM.
        # TODO(synk): resolutions > 32 need a BlockSpec strip-tiled per-layer path.
        assert resolution <= 32
        assert not fused_scale  # TODO(synk): fused_scale conv_transpose path not implemented
        self.resolution = resolution
        self.z_space_dim = z_space_dim
        self.image_channels = image_channels
        self.final_tanh = final_tanh
        self.fmaps_base = fmaps_base
        self.fmaps_max = fmaps_max
        self.init_res_log2 = int(np.log2(_INIT_RES))
        self.final_res_log2 = int(np.log2(resolution))

        key = jax.random.PRNGKey(seed)

        def new_key():
            nonlocal key
            key, sub = jax.random.split(key)
            return sub

        def nf(res):
            return min(self.fmaps_base // res, self.fmaps_max)

        self.ref_blocks = []   # PyTorch-semantics params (for the pure-JAX reference)
        self.kparams = []      # kernel-ready params, in execution order

        for res_log2 in range(self.init_res_log2, self.final_res_log2 + 1):
            res = 2 ** res_log2
            out_c = nf(res)
            if res == _INIT_RES:
                in_c, ks, pad, ups = self.z_space_dim, _INIT_RES, _INIT_RES - 1, False
            else:
                in_c, ks, pad, ups = nf(res // 2), 3, 1, True
            w = jax.random.normal(new_key(), (out_c, in_c, ks, ks), jnp.float32)
            b = jnp.zeros((out_c,), jnp.float32)
            wscale = _WSCALE_GAIN / np.sqrt(ks * ks * in_c)
            self.ref_blocks.append(dict(w=w, b=b, wscale=wscale, padding=pad,
                                        upsample=ups, lrelu=True))
            if res == _INIT_RES:
                # 1x1 input, 4x4 kernel, pad 3  ==  per-pixel dense with flipped taps.
                ws = w * wscale
                wflip = ws[:, :, ::-1, ::-1]
                # Wd[c, pix*cout + o] = wflip[o, c, i, j],  pix = i*4 + j
                wd = jnp.transpose(wflip, (1, 2, 3, 0)).reshape(in_c, 16 * out_c)
                self.kparams.append(dict(kind='dense', wd=wd,
                                         b=b.reshape(1, out_c), cout=out_c))
            else:
                w9 = (w * wscale).transpose(2, 3, 1, 0).reshape(9, in_c, out_c)
                self.kparams.append(dict(kind='conv', w9=w9, b=b.reshape(1, out_c),
                                         upsample=True, in_res=res // 2, out_res=res,
                                         cin=in_c, cout=out_c))

            # second 3x3 conv at this resolution
            w = jax.random.normal(new_key(), (out_c, out_c, 3, 3), jnp.float32)
            b = jnp.zeros((out_c,), jnp.float32)
            wscale = _WSCALE_GAIN / np.sqrt(9 * out_c)
            self.ref_blocks.append(dict(w=w, b=b, wscale=wscale, padding=1,
                                        upsample=False, lrelu=True))
            w9 = (w * wscale).transpose(2, 3, 1, 0).reshape(9, out_c, out_c)
            self.kparams.append(dict(kind='conv', w9=w9, b=b.reshape(1, out_c),
                                     upsample=False, in_res=res, out_res=res,
                                     cin=out_c, cout=out_c))

        # ToRGB at the final resolution (the only output block used when lod=0)
        c = nf(self.resolution)
        w = jax.random.normal(new_key(), (self.image_channels, c, 1, 1), jnp.float32)
        b = jnp.zeros((self.image_channels,), jnp.float32)
        wscale = 1.0 / np.sqrt(c)
        self.ref_blocks.append(dict(w=w, b=b, wscale=wscale, padding=0,
                                    upsample=False, lrelu=False))
        self.kparams.append(dict(kind='torgb', w_rgb=(w * wscale)[:, :, 0, 0],  # (3, C)
                                 b_rgb=b.reshape(self.image_channels, 1),
                                 res=self.resolution, cin=c))

        self._c_max = max(p['cout'] for p in self.kparams if p['kind'] != 'torgb')

    # --- fused Pallas forward -------------------------------------------------
    def __call__(self, z):
        assert z.ndim == 2 and z.shape[1] == self.z_space_dim
        B = int(z.shape[0])
        res_f = self.resolution
        wp_f = res_f + 2
        pb_f = B * wp_f * wp_f
        G = ((wp_f + 1 + 7) // 8) * 8        # guard rows (>= wp+1 for all layers), 8-aligned
        C = self._c_max                      # widest channel count stored in a buffer
        n_rgb = self.image_channels
        final_tanh = self.final_tanh
        init_pix = _INIT_RES * _INIT_RES

        inputs = [z]
        plan = []
        mask_of_res = {}

        def add(arr):
            inputs.append(arr)
            return len(inputs) - 1

        for p in self.kparams:
            if p['kind'] == 'dense':
                plan.append(dict(kind='dense', w=add(p['wd']), b=add(p['b']),
                                 P=add(_dense_place_blockdiag(B, _INIT_RES)),
                                 cout=p['cout'], res=_INIT_RES))
            elif p['kind'] == 'conv':
                if p['out_res'] not in mask_of_res:
                    mask_of_res[p['out_res']] = add(_interior_mask(B, p['out_res']))
                d = dict(kind='conv', w=add(p['w9']), b=add(p['b']),
                         mask=mask_of_res[p['out_res']], upsample=p['upsample'],
                         in_res=p['in_res'], out_res=p['out_res'],
                         cin=p['cin'], cout=p['cout'])
                if p['upsample']:
                    d['R'] = add(_upsample_blockdiag(B, p['in_res']))
                plan.append(d)
            else:
                plan.append(dict(kind='torgb', w=add(p['w_rgb']), b=add(p['b_rgb']),
                                 res=p['res'], cin=p['cin']))

        n_in = len(inputs)
        buf_rows = G + pb_f + G

        def kernel(*refs):
            in_refs = refs[:n_in]
            out_ref = refs[n_in]
            bufs = (refs[n_in + 1], refs[n_in + 2])   # ping-pong activation buffers
            stage = refs[n_in + 3]                    # tiny dense-layer staging

            zeros_guard = jnp.zeros((G, C), jnp.float32)   # hoisted, reused everywhere

            def write_block(buf, pb, cout, data):
                # One aligned slab store of the data region; guard regions are
                # zeroed so every row a later conv tap reads is finite and the
                # padding ring / masked garbage rows stay exactly zero.
                buf[0:G, :] = zeros_guard
                buf[G:G + pb, 0:cout] = data
                buf[G + pb:G + pb + G, :] = zeros_guard

            cur = 0   # python-tracked index of the buffer holding the live activation
            for d in plan:
                if d['kind'] == 'dense':
                    res = d['res']; wp = res + 2; pb = B * wp * wp; cout = d['cout']
                    zn = _pn(_pn(in_refs[0][...]))        # forward() pn + layer0 pn
                    # ONE (B, z) x (z, 16*cout) matmul for all 16 pixels.
                    y = jnp.dot(zn, in_refs[d['w']][...],
                                preferred_element_type=jnp.float32)
                    # lanes -> sublanes restage (16 tiny (B, cout) copies to scratch)
                    for k in range(init_pix):
                        stage[k * B:(k + 1) * B, 0:cout] = y[:, k * cout:(k + 1) * cout]
                    y16 = _pn(_lrelu(stage[0:init_pix * B, 0:cout]
                                     + in_refs[d['b']][...]))   # consumer pn fused
                    # 0/1 placement matmul scatters every image's pixels into the
                    # padded flat layout; pad rows are exact zeros.
                    data = jnp.dot(in_refs[d['P']][...], y16,
                                   preferred_element_type=jnp.float32)
                    write_block(bufs[cur], pb, cout, data)

                elif d['kind'] == 'conv':
                    res = d['out_res']; wp = res + 2; pb = B * wp * wp
                    cin, cout = d['cin'], d['cout']
                    if d['upsample']:
                        # x2 nearest upsample + re-pad for the whole batch in one
                        # block-diagonal 0/1 matmul + one aligned slab store.
                        pb_lo = B * (d['in_res'] + 2) ** 2
                        up = jnp.dot(in_refs[d['R']][...],
                                     bufs[cur][G:G + pb_lo, 0:cin],
                                     preferred_element_type=jnp.float32)
                        src = bufs[1 - cur]
                        write_block(src, pb, cin, up)
                        dst = bufs[cur]           # low-res activation is dead: reuse
                    else:
                        src = bufs[cur]
                        dst = bufs[1 - cur]
                        cur = 1 - cur
                    w9 = in_refs[d['w']]
                    # 3x3 conv = 9 shifted whole-buffer matmuls (batch + all rows
                    # folded into M). All pb centers are computed; rows whose
                    # center is a pad position are garbage and masked below.
                    acc = jnp.dot(src[G - wp - 1:G - wp - 1 + pb, 0:cin], w9[0],
                                  preferred_element_type=jnp.float32)
                    for t in range(1, 9):
                        s0 = G + (t // 3 - 1) * wp + (t % 3 - 1)
                        acc = acc + jnp.dot(src[s0:s0 + pb, 0:cin], w9[t],
                                            preferred_element_type=jnp.float32)
                    y = _pn(_lrelu(acc + in_refs[d['b']][...])) * in_refs[d['mask']][...]
                    write_block(dst, pb, cout, y)

                else:   # torgb: 1x1 conv + bias (+tanh) over the whole flat buffer
                    res = d['res']; wp = res + 2; pb = B * wp * wp; cin = d['cin']
                    o = lax.dot_general(in_refs[d['w']][...],
                                        bufs[cur][G:G + pb, 0:cin],
                                        dimension_numbers=(((1,), (1,)), ((), ())),
                                        preferred_element_type=jnp.float32)  # (3, pb)
                    o = o + in_refs[d['b']][...]
                    if final_tanh:
                        o = jnp.tanh(o)
                    out_ref[...] = o            # single lane-dense (3, pb) store

        out_flat = pl.pallas_call(
            kernel,
            out_shape=jax.ShapeDtypeStruct((n_rgb, pb_f), jnp.float32),
            scratch_shapes=[pltpu.VMEM((buf_rows, C), jnp.float32),
                            pltpu.VMEM((buf_rows, C), jnp.float32),
                            pltpu.VMEM((init_pix * B, C), jnp.float32)],
            compiler_params=pltpu.CompilerParams(
                vmem_limit_bytes=64 * 1024 * 1024),
        )(*inputs)

        # Layout plumbing only (outside the kernel): padded flat -> NCHW interior.
        img = out_flat.reshape(n_rgb, B, wp_f, wp_f)
        img = jnp.transpose(img, (1, 0, 2, 3))[:, :, 1:1 + res_f, 1:1 + res_f]
        return img

    # --- pure-JAX reference (PyTorch NCHW semantics) ---------------------------
    def reference(self, z):
        def pn(x, axis):
            return x / jnp.sqrt(jnp.mean(x * x, axis=axis, keepdims=True) + _EPS)

        x = pn(z, 1).reshape(z.shape[0], self.z_space_dim, 1, 1)
        for blk in self.ref_blocks:
            x = pn(x, 1)
            if blk['upsample']:
                x = jnp.repeat(jnp.repeat(x, 2, axis=2), 2, axis=3)
            p = blk['padding']
            y = lax.conv_general_dilated(
                x, blk['w'] * blk['wscale'], (1, 1), [(p, p), (p, p)],
                dimension_numbers=('NCHW', 'OIHW', 'NCHW'),
                precision=lax.Precision.HIGHEST)
            x = y + blk['b'][None, :, None, None]
            if blk['lrelu']:
                x = jnp.where(x > 0.0, x, _SLOPE * x)
        if self.final_tanh:
            x = jnp.tanh(x)
        return x


if __name__ == "__main__":
    # Small config: resolution=8, z_space_dim=32, nf(4)=64, nf(8)=32, batch=2.
    gen = PGGANGeneratorPallas(resolution=8, z_space_dim=32, image_channels=3,
                               fmaps_base=256, fmaps_max=64, seed=0)
    z = jax.random.normal(jax.random.PRNGKey(0), (2, 32), jnp.float32)

    img = jax.block_until_ready(gen(z))              # fused Pallas forward
    ref = jax.block_until_ready(gen.reference(z))    # pure-JAX reference

    assert img.shape == (2, 3, 8, 8), img.shape
    np.testing.assert_allclose(np.asarray(img), np.asarray(ref), rtol=1e-2, atol=1e-3)
    print("KERNEL_OK")
</pallas_src>

<mosaic_0001>
module attributes {stable_mosaic.version = 11 : i64} {
  func.func @kernel(%arg0: memref<2x32xf32, #tpu.memory_space<vmem>>, %arg1: memref<32x1024xf32, #tpu.memory_space<vmem>>, %arg2: memref<1x64xf32, #tpu.memory_space<vmem>>, %arg3: memref<72x32xf32, #tpu.memory_space<vmem>>, %arg4: memref<72x1xf32, #tpu.memory_space<vmem>>, %arg5: memref<9x64x64xf32, #tpu.memory_space<vmem>>, %arg6: memref<1x64xf32, #tpu.memory_space<vmem>>, %arg7: memref<200x1xf32, #tpu.memory_space<vmem>>, %arg8: memref<9x64x32xf32, #tpu.memory_space<vmem>>, %arg9: memref<1x32xf32, #tpu.memory_space<vmem>>, %arg10: memref<200x72xf32, #tpu.memory_space<vmem>>, %arg11: memref<9x32x32xf32, #tpu.memory_space<vmem>>, %arg12: memref<1x32xf32, #tpu.memory_space<vmem>>, %arg13: memref<3x32xf32, #tpu.memory_space<vmem>>, %arg14: memref<3x1xf32, #tpu.memory_space<vmem>>, %arg15: memref<3x200xf32, #tpu.memory_space<vmem>>, %arg16: memref<232x64xf32, #tpu.memory_space<vmem>>, %arg17: memref<232x64xf32, #tpu.memory_space<vmem>>, %arg18: memref<32x64xf32, #tpu.memory_space<vmem>>) attributes {dimension_semantics = [], scalar_prefetch = 0 : i64, scratch_operands = 3 : i64, tpu.core_type = #tpu.core_type<tc>} {
    %cst = arith.constant 0.000000e+00 : f32
    %0 = vector.broadcast %cst : f32 to vector<16x64xf32>
    %c0 = arith.constant 0 : index
    %c0_0 = arith.constant 0 : index
    %1 = vector.load %arg0[%c0, %c0_0] : memref<2x32xf32, #tpu.memory_space<vmem>>, vector<2x32xf32>
    %2 = arith.mulf %1, %1 : vector<2x32xf32>
    %cst_1 = arith.constant dense<0.000000e+00> : vector<2xf32>
    %3 = vector.multi_reduction <add>, %2, %cst_1 [1] : vector<2x32xf32> to vector<2xf32>
    %4 = vector.shape_cast %3 : vector<2xf32> to vector<2x1xf32>
    %cst_2 = arith.constant 3.200000e+01 : f32
    %5 = vector.broadcast %cst_2 : f32 to vector<2x1xf32>
    %6 = arith.divf %4, %5 : vector<2x1xf32>
    %cst_3 = arith.constant 9.99999993E-9 : f32
    %7 = vector.broadcast %cst_3 : f32 to vector<2x1xf32>
    %8 = arith.addf %6, %7 : vector<2x1xf32>
    %9 = math.rsqrt %8 : vector<2x1xf32>
    %10 = vector.broadcast %9 : vector<2x1xf32> to vector<2x32xf32>
    %11 = arith.mulf %1, %10 : vector<2x32xf32>
    %12 = arith.mulf %11, %11 : vector<2x32xf32>
    %cst_4 = arith.constant dense<0.000000e+00> : vector<2xf32>
    %13 = vector.multi_reduction <add>, %12, %cst_4 [1] : vector<2x32xf32> to vector<2xf32>
    %14 = vector.shape_cast %13 : vector<2xf32> to vector<2x1xf32>
    %cst_5 = arith.constant 3.200000e+01 : f32
    %15 = vector.broadcast %cst_5 : f32 to vector<2x1xf32>
    %16 = arith.divf %14, %15 : vector<2x1xf32>
    %cst_6 = arith.constant 9.99999993E-9 : f32
    %17 = vector.broadcast %cst_6 : f32 to vector<2x1xf32>
    %18 = arith.addf %16, %17 : vector<2x1xf32>
    %19 = math.rsqrt %18 : vector<2x1xf32>
    %20 = vector.broadcast %19 : vector<2x1xf32> to vector<2x32xf32>
    %21 = arith.mulf %11, %20 : vector<2x32xf32>
    %c0_7 = arith.constant 0 : index
    %c0_8 = arith.constant 0 : index
    %22 = vector.load %arg1[%c0_7, %c0_8] : memref<32x1024xf32, #tpu.memory_space<vmem>>, vector<32x1024xf32>
    %cst_9 = arith.constant dense<0.000000e+00> : vector<2x1024xf32>
    %23 = tpu.matmul %21, %22, %cst_9 {dimension_numbers = #tpu.dot_dimension_numbers<[1], [0], [0], [1], [0, 0, 1, 1], [], []>} : vector<2x32xf32>, vector<32x1024xf32>, vector<2x1024xf32> -> vector<2x1024xf32>
    %24 = vector.extract_strided_slice %23 {offsets = [0, 0], sizes = [2, 64], strides = [1, 1]} : vector<2x1024xf32> to vector<2x64xf32>
    %c0_10 = arith.constant 0 : index
    %c0_11 = arith.constant 0 : index
    %25 = vector.load %arg18[%c0_10, %c0_11] : memref<32x64xf32, #tpu.memory_space<vmem>>, vector<2x64xf32>
    tpu.vector_store %arg18[%c0_10, %c0_11], %24 {strides = array<i32>} : memref<32x64xf32, #tpu.memory_space<vmem>>, vector<2x64xf32>,
    %26 = vector.extract_strided_slice %23 {offsets = [0, 64], sizes = [2, 64], strides = [1, 1]} : vector<2x1024xf32> to vector<2x64xf32>
    %c2 = arith.constant 2 : index
    %c0_12 = arith.constant 0 : index
    %27 = vector.load %arg18[%c2, %c0_12] : memref<32x64xf32, #tpu.memory_space<vmem>>, vector<2x64xf32>
    tpu.vector_store %arg18[%c2, %c0_12], %26 {strides = array<i32>} : memref<32x64xf32, #tpu.memory_space<vmem>>, vector<2x64xf32>,
    %28 = vector.extract_strided_slice %23 {offsets = [0, 128], sizes = [2, 64], strides = [1, 1]} : vector<2x1024xf32> to vector<2x64xf32>
    %c4 = arith.constant 4 : index
    %c0_13 = arith.constant 0 : index
    %29 = vector.load %arg18[%c4, %c0_13] : memref<32x64xf32, #tpu.memory_space<vmem>>, vector<2x64xf32>
    tpu.vector_store %arg18[%c4, %c0_13], %28 {strides = array<i32>} : memref<32x64xf32, #tpu.memory_space<vmem>>, vector<2x64xf32>,
    %30 = vector.extract_strided_slice %23 {offsets = [0, 192], sizes = [2, 64], strides = [1, 1]} : vector<2x1024xf32> to vector<2x64xf32>
    %c6 = arith.constant 6 : index
    %c0_14 = arith.constant 0 : index
    %31 = vector.load %arg18[%c6, %c0_14] : memref<32x64xf32, #tpu.memory_space<vmem>>, vector<2x64xf32>
    tpu.vector_store %arg18[%c6, %c0_14], %30 {strides = array<i32>} : memref<32x64xf32, #tpu.memory_space<vmem>>, vector<2x64xf32>,
    %32 = vector.extract_strided_slice %23 {offsets = [0, 256], sizes = [2, 64], strides = [1, 1]} : vector<2x1024xf32> to vector<2x64xf32>
    %c8 = arith.constant 8 : index
    %c0_15 = arith.constant 0 : index
    %33 = vector.load %arg18[%c8, %c0_15] : memref<32x64xf32, #tpu.memory_space<vmem>>, vector<2x64xf32>
    tpu.vector_store %arg18[%c8, %c0_15], %32 {strides = array<i32>} : memref<32x64xf32, #tpu.memory_space<vmem>>, vector<2x64xf32>,
    %34 = vector.extract_strided_slice %23 {offsets = [0, 320], sizes = [2, 64], strides = [1, 1]} : vector<2x1024xf32> to vector<2x64xf32>
    %c10 = arith.constant 10 : index
    %c0_16 = arith.constant 0 : index
    %35 = vector.load %arg18[%c10, %c0_16] : memref<32x64xf32, #tpu.memory_space<vmem>>, vector<2x64xf32>
    tpu.vector_store %arg18[%c10, %c0_16], %34 {strides = array<i32>} : memref<32x64xf32, #tpu.memory_space<vmem>>, vector<2x64xf32>,
    %36 = vector.extract_strided_slice %23 {offsets = [0, 384], sizes = [2, 64], strides = [1, 1]} : vector<2x1024xf32> to vector<2x64xf32>
    %c12 = arith.constant 12 : index
    %c0_17 = arith.constant 0 : index
    %37 = vector.load %arg18[%c12, %c0_17] : memref<32x64xf32, #tpu.memory_space<vmem>>, vector<2x64xf32>
    tpu.vector_store %arg18[%c12, %c0_17], %36 {strides = array<i32>} : memref<32x64xf32, #tpu.memory_space<vmem>>, vector<2x64xf32>,
    %38 = vector.extract_strided_slice %23 {offsets = [0, 448], sizes = [2, 64], strides = [1, 1]} : vector<2x1024xf32> to vector<2x64xf32>
    %c14 = arith.constant 14 : index
    %c0_18 = arith.constant 0 : index
    %39 = vector.load %arg18[%c14, %c0_18] : memref<32x64xf32, #tpu.memory_space<vmem>>, vector<2x64xf32>
    tpu.vector_store %arg18[%c14, %c0_18], %38 {strides = array<i32>} : memref<32x64xf32, #tpu.memory_space<vmem>>, vector<2x64xf32>,
    %40 = vector.extract_strided_slice %23 {offsets = [0, 512], sizes = [2, 64], strides = [1, 1]} : vector<2x1024xf32> to vector<2x64xf32>
    %c16 = arith.constant 16 : index
    %c0_19 = arith.constant 0 : index
    %41 = vector.load %arg18[%c16, %c0_19] : memref<32x64xf32, #tpu.memory_space<vmem>>, vector<2x64xf32>
    tpu.vector_store %arg18[%c16, %c0_19], %40 {strides = array<i32>} : memref<32x64xf32, #tpu.memory_space<vmem>>, vector<2x64xf32>,
    %42 = vector.extract_strided_slice %23 {offsets = [0, 576], sizes = [2, 64], strides = [1, 1]} : vector<2x1024xf32> to vector<2x64xf32>
    %c18 = arith.constant 18 : index
    %c0_20 = arith.constant 0 : index
    %43 = vector.load %arg18[%c18, %c0_20] : memref<32x64xf32, #tpu.memory_space<vmem>>, vector<2x64xf32>
    tpu.vector_store %arg18[%c18, %c0_20], %42 {strides = array<i32>} : memref<32x64xf32, #tpu.memory_space<vmem>>, vector<2x64xf32>,
    %44 = vector.extract_strided_slice %23 {offsets = [0, 640], sizes = [2, 64], strides = [1, 1]} : vector<2x1024xf32> to vector<2x64xf32>
    %c20 = arith.constant 20 : index
    %c0_21 = arith.constant 0 : index
    %45 = vector.load %arg18[%c20, %c0_21] : memref<32x64xf32, #tpu.memory_space<vmem>>, vector<2x64xf32>
    tpu.vector_store %arg18[%c20, %c0_21], %44 {strides = array<i32>} : memref<32x64xf32, #tpu.memory_space<vmem>>, vector<2x64xf32>,
    %46 = vector.extract_strided_slice %23 {offsets = [0, 704], sizes = [2, 64], strides = [1, 1]} : vector<2x1024xf32> to vector<2x64xf32>
    %c22 = arith.constant 22 : index
    %c0_22 = arith.constant 0 : index
    %47 = vector.load %arg18[%c22, %c0_22] : memref<32x64xf32, #tpu.memory_space<vmem>>, vector<2x64xf32>
    tpu.vector_store %arg18[%c22, %c0_22], %46 {strides = array<i32>} : memref<32x64xf32, #tpu.memory_space<vmem>>, vector<2x64xf32>,
    %48 = vector.extract_strided_slice %23 {offsets = [0, 768], sizes = [2, 64], strides = [1, 1]} : vector<2x1024xf32> to vector<2x64xf32>
    %c24 = arith.constant 24 : index
    %c0_23 = arith.constant 0 : index
    %49 = vector.load %arg18[%c24, %c0_23] : memref<32x64xf32, #tpu.memory_space<vmem>>, vector<2x64xf32>
    tpu.vector_store %arg18[%c24, %c0_23], %48 {strides = array<i32>} : memref<32x64xf32, #tpu.memory_space<vmem>>, vector<2x64xf32>,
    %50 = vector.extract_strided_slice %23 {offsets = [0, 832], sizes = [2, 64], strides = [1, 1]} : vector<2x1024xf32> to vector<2x64xf32>
    %c26 = arith.constant 26 : index
    %c0_24 = arith.constant 0 : index
    %51 = vector.load %arg18[%c26, %c0_24] : memref<32x64xf32, #tpu.memory_space<vmem>>, vector<2x64xf32>
    tpu.vector_store %arg18[%c26, %c0_24], %50 {strides = array<i32>} : memref<32x64xf32, #tpu.memory_space<vmem>>, vector<2x64xf32>,
    %52 = vector.extract_strided_slice %23 {offsets = [0, 896], sizes = [2, 64], strides = [1, 1]} : vector<2x1024xf32> to vector<2x64xf32>
    %c28 = arith.constant 28 : index
    %c0_25 = arith.constant 0 : index
    %53 = vector.load %arg18[%c28, %c0_25] : memref<32x64xf32, #tpu.memory_space<vmem>>, vector<2x64xf32>
    tpu.vector_store %arg18[%c28, %c0_25], %52 {strides = array<i32>} : memref<32x64xf32, #tpu.memory_space<vmem>>, vector<2x64xf32>,
    %54 = vector.extract_strided_slice %23 {offsets = [0, 960], sizes = [2, 64], strides = [1, 1]} : vector<2x1024xf32> to vector<2x64xf32>
    %c30 = arith.constant 30 : index
    %c0_26 = arith.constant 0 : index
    %55 = vector.load %arg18[%c30, %c0_26] : memref<32x64xf32, #tpu.memory_space<vmem>>, vector<2x64xf32>
    tpu.vector_store %arg18[%c30, %c0_26], %54 {strides = array<i32>} : memref<32x64xf32, #tpu.memory_space<vmem>>, vector<2x64xf32>,
    %c0_27 = arith.constant 0 : index
    %c0_28 = arith.constant 0 : index
    %56 = vector.load %arg18[%c0_27, %c0_28] : memref<32x64xf32, #tpu.memory_space<vmem>>, vector<32x64xf32>
    %c0_29 = arith.constant 0 : index
    %c0_30 = arith.constant 0 : index
    %57 = vector.load %arg2[%c0_29, %c0_30] : memref<1x64xf32, #tpu.memory_space<vmem>>, vector<1x64xf32>
    %58 = vector.broadcast %57 : vector<1x64xf32> to vector<32x64xf32>
    %59 = arith.addf %56, %58 : vector<32x64xf32>
    %cst_31 = arith.constant 0.000000e+00 : f32
    %60 = vector.broadcast %cst_31 : f32 to vector<32x64xf32>
    %61 = arith.cmpf ogt, %59, %60 : vector<32x64xf32>
    %cst_32 = arith.constant 2.000000e-01 : f32
    %62 = vector.broadcast %cst_32 : f32 to vector<32x64xf32>
    %63 = arith.mulf %62, %59 : vector<32x64xf32>
    %64 = arith.select %61, %59, %63 : vector<32x64xi1>, vector<32x64xf32>
    %65 = arith.mulf %64, %64 : vector<32x64xf32>
    %cst_33 = arith.constant dense<0.000000e+00> : vector<32xf32>
    %66 = vector.multi_reduction <add>, %65, %cst_33 [1] : vector<32x64xf32> to vector<32xf32>
    %67 = vector.shape_cast %66 : vector<32xf32> to vector<32x1xf32>
    %cst_34 = arith.constant 6.400000e+01 : f32
    %68 = vector.broadcast %cst_34 : f32 to vector<32x1xf32>
    %69 = arith.divf %67, %68 : vector<32x1xf32>
    %cst_35 = arith.constant 9.99999993E-9 : f32
    %70 = vector.broadcast %cst_35 : f32 to vector<32x1xf32>
    %71 = arith.addf %69, %70 : vector<32x1xf32>
    %72 = math.rsqrt %71 : vector<32x1xf32>
    %73 = vector.broadcast %72 : vector<32x1xf32> to vector<32x64xf32>
    %74 = arith.mulf %64, %73 : vector<32x64xf32>
    %c0_36 = arith.constant 0 : index
    %c0_37 = arith.constant 0 : index
    %75 = vector.load %arg3[%c0_36, %c0_37] : memref<72x32xf32, #tpu.memory_space<vmem>>, vector<72x32xf32>
    %cst_38 = arith.constant dense<0.000000e+00> : vector<72x64xf32>
    %76 = tpu.matmul %75, %74, %cst_38 {dimension_numbers = #tpu.dot_dimension_numbers<[1], [0], [0], [1], [0, 0, 1, 1], [], []>} : vector<72x32xf32>, vector<32x64xf32>, vector<72x64xf32> -> vector<72x64xf32>
    %c0_39 = arith.constant 0 : index
    %c0_40 = arith.constant 0 : index
    %77 = vector.load %arg16[%c0_39, %c0_40] : memref<232x64xf32, #tpu.memory_space<vmem>>, vector<16x64xf32>
    tpu.vector_store %arg16[%c0_39, %c0_40], %0 {strides = array<i32>} : memref<232x64xf32, #tpu.memory_space<vmem>>, vector<16x64xf32>,
    %c16_41 = arith.constant 16 : index
    %c0_42 = arith.constant 0 : index
    %78 = vector.load %arg16[%c16_41, %c0_42] : memref<232x64xf32, #tpu.memory_space<vmem>>, vector<72x64xf32>
    tpu.vector_store %arg16[%c16_41, %c0_42], %76 {strides = array<i32>} : memref<232x64xf32, #tpu.memory_space<vmem>>, vector<72x64xf32>,
    %c88 = arith.constant 88 : index
    %c0_43 = arith.constant 0 : index
    %79 = vector.load %arg16[%c88, %c0_43] : memref<232x64xf32, #tpu.memory_space<vmem>>, vector<16x64xf32>
    tpu.vector_store %arg16[%c88, %c0_43], %0 {strides = array<i32>} : memref<232x64xf32, #tpu.memory_space<vmem>>, vector<16x64xf32>,
    %c9 = arith.constant 9 : index
    %c0_44 = arith.constant 0 : index
    %80 = vector.load %arg16[%c9, %c0_44] : memref<232x64xf32, #tpu.memory_space<vmem>>, vector<72x64xf32>
    %c0_45 = arith.constant 0 : index
    %c0_46 = arith.constant 0 : index
    %c0_47 = arith.constant 0 : index
    %81 = vector.load %arg5[%c0_45, %c0_46, %c0_47] : memref<9x64x64xf32, #tpu.memory_space<vmem>>, vector<1x64x64xf32>
    %82 = vector.shape_cast %81 : vector<1x64x64xf32> to vector<64x64xf32>
    %cst_48 = arith.constant dense<0.000000e+00> : vector<72x64xf32>
    %83 = tpu.matmul %80, %82, %cst_48 {dimension_numbers = #tpu.dot_dimension_numbers<[1], [0], [0], [1], [0, 0, 1, 1], [], []>} : vector<72x64xf32>, vector<64x64xf32>, vector<72x64xf32> -> vector<72x64xf32>
    %c10_49 = arith.constant 10 : index
    %c0_50 = arith.constant 0 : index
    %84 = vector.load %arg16[%c10_49, %c0_50] : memref<232x64xf32, #tpu.memory_space<vmem>>, vector<72x64xf32>
    %c1 = arith.constant 1 : index
    %c0_51 = arith.constant 0 : index
    %c0_52 = arith.constant 0 : index
    %85 = vector.load %arg5[%c1, %c0_51, %c0_52] : memref<9x64x64xf32, #tpu.memory_space<vmem>>, vector<1x64x64xf32>
    %86 = vector.shape_cast %85 : vector<1x64x64xf32> to vector<64x64xf32>
    %cst_53 = arith.constant dense<0.000000e+00> : vector<72x64xf32>
    %87 = tpu.matmul %84, %86, %cst_53 {dimension_numbers = #tpu.dot_dimension_numbers<[1], [0], [0], [1], [0, 0, 1, 1], [], []>} : vector<72x64xf32>, vector<64x64xf32>, vector<72x64xf32> -> vector<72x64xf32>
    %88 = arith.addf %83, %87 : vector<72x64xf32>
    %c11 = arith.constant 11 : index
    %c0_54 = arith.constant 0 : index
    %89 = vector.load %arg16[%c11, %c0_54] : memref<232x64xf32, #tpu.memory_space<vmem>>, vector<72x64xf32>
    %c2_55 = arith.constant 2 : index
    %c0_56 = arith.constant 0 : index
    %c0_57 = arith.constant 0 : index
    %90 = vector.load %arg5[%c2_55, %c0_56, %c0_57] : memref<9x64x64xf32, #tpu.memory_space<vmem>>, vector<1x64x64xf32>
    %91 = vector.shape_cast %90 : vector<1x64x64xf32> to vector<64x64xf32>
    %cst_58 = arith.constant dense<0.000000e+00> : vector<72x64xf32>
    %92 = tpu.matmul %89, %91, %cst_58 {dimension_numbers = #tpu.dot_dimension_numbers<[1], [0], [0], [1], [0, 0, 1, 1], [], []>} : vector<72x64xf32>, vector<64x64xf32>, vector<72x64xf32> -> vector<72x64xf32>
    %93 = arith.addf %88, %92 : vector<72x64xf32>
    %c15 = arith.constant 15 : index
    %c0_59 = arith.constant 0 : index
    %94 = vector.load %arg16[%c15, %c0_59] : memref<232x64xf32, #tpu.memory_space<vmem>>, vector<72x64xf32>
    %c3 = arith.constant 3 : index
    %c0_60 = arith.constant 0 : index
    %c0_61 = arith.constant 0 : index
    %95 = vector.load %arg5[%c3, %c0_60, %c0_61] : memref<9x64x64xf32, #tpu.memory_space<vmem>>, vector<1x64x64xf32>
    %96 = vector.shape_cast %95 : vector<1x64x64xf32> to vector<64x64xf32>
    %cst_62 = arith.constant dense<0.000000e+00> : vector<72x64xf32>
    %97 = tpu.matmul %94, %96, %cst_62 {dimension_numbers = #tpu.dot_dimension_numbers<[1], [0], [0], [1], [0, 0, 1, 1], [], []>} : vector<72x64xf32>, vector<64x64xf32>, vector<72x64xf32> -> vector<72x64xf32>
    %98 = arith.addf %93, %97 : vector<72x64xf32>
    %c16_63 = arith.constant 16 : index
    %c0_64 = arith.constant 0 : index
    %99 = vector.load %arg16[%c16_63, %c0_64] : memref<232x64xf32, #tpu.memory_space<vmem>>, vector<72x64xf32>
    %c4_65 = arith.constant 4 : index
    %c0_66 = arith.constant 0 : index
    %c0_67 = arith.constant 0 : index
    %100 = vector.load %arg5[%c4_65, %c0_66, %c0_67] : memref<9x64x64xf32, #tpu.memory_space<vmem>>, vector<1x64x64xf32>
    %101 = vector.shape_cast %100 : vector<1x64x64xf32> to vector<64x64xf32>
    %cst_68 = arith.constant dense<0.000000e+00> : vector<72x64xf32>
    %102 = tpu.matmul %99, %101, %cst_68 {dimension_numbers = #tpu.dot_dimension_numbers<[1], [0], [0], [1], [0, 0, 1, 1], [], []>} : vector<72x64xf32>, vector<64x64xf32>, vector<72x64xf32> -> vector<72x64xf32>
    %103 = arith.addf %98, %102 : vector<72x64xf32>
    %c17 = arith.constant 17 : index
    %c0_69 = arith.constant 0 : index
    %104 = vector.load %arg16[%c17, %c0_69] : memref<232x64xf32, #tpu.memory_space<vmem>>, vector<72x64xf32>
    %c5 = arith.constant 5 : index
    %c0_70 = arith.constant 0 : index
    %c0_71 = arith.constant 0 : index
    %105 = vector.load %arg5[%c5, %c0_70, %c0_71] : memref<9x64x64xf32, #tpu.memory_space<vmem>>, vector<1x64x64xf32>
    %106 = vector.shape_cast %105 : vector<1x64x64xf32> to vector<64x64xf32>
    %cst_72 = arith.constant dense<0.000000e+00> : vector<72x64xf32>
    %107 = tpu.matmul %104, %106, %cst_72 {dimension_numbers = #tpu.dot_dimension_numbers<[1], [0], [0], [1], [0, 0, 1, 1], [], []>} : vector<72x64xf32>, vector<64x64xf32>, vector<72x64xf32> -> vector<72x64xf32>
    %108 = arith.addf %103, %107 : vector<72x64xf32>
    %c21 = arith.constant 21 : index
    %c0_73 = arith.constant 0 : index
    %109 = vector.load %arg16[%c21, %c0_73] : memref<232x64xf32, #tpu.memory_space<vmem>>, vector<72x64xf32>
    %c6_74 = arith.constant 6 : index
    %c0_75 = arith.constant 0 : index
    %c0_76 = arith.constant 0 : index
    %110 = vector.load %arg5[%c6_74, %c0_75, %c0_76] : memref<9x64x64xf32, #tpu.memory_space<vmem>>, vector<1x64x64xf32>
    %111 = vector.shape_cast %110 : vector<1x64x64xf32> to vector<64x64xf32>
    %cst_77 = arith.constant dense<0.000000e+00> : vector<72x64xf32>
    %112 = tpu.matmul %109, %111, %cst_77 {dimension_numbers = #tpu.dot_dimension_numbers<[1], [0], [0], [1], [0, 0, 1, 1], [], []>} : vector<72x64xf32>, vector<64x64xf32>, vector<72x64xf32> -> vector<72x64xf32>
    %113 = arith.addf %108, %112 : vector<72x64xf32>
    %c22_78 = arith.constant 22 : index
    %c0_79 = arith.constant 0 : index
    %114 = vector.load %arg16[%c22_78, %c0_79] : memref<232x64xf32, #tpu.memory_space<vmem>>, vector<72x64xf32>
    %c7 = arith.constant 7 : index
    %c0_80 = arith.constant 0 : index
    %c0_81 = arith.constant 0 : index
    %115 = vector.load %arg5[%c7, %c0_80, %c0_81] : memref<9x64x64xf32, #tpu.memory_space<vmem>>, vector<1x64x64xf32>
    %116 = vector.shape_cast %115 : vector<1x64x64xf32> to vector<64x64xf32>
    %cst_82 = arith.constant dense<0.000000e+00> : vector<72x64xf32>
    %117 = tpu.matmul %114, %116, %cst_82 {dimension_numbers = #tpu.dot_dimension_numbers<[1], [0], [0], [1], [0, 0, 1, 1], [], []>} : vector<72x64xf32>, vector<64x64xf32>, vector<72x64xf32> -> vector<72x64xf32>
    %118 = arith.addf %113, %117 : vector<72x64xf32>
    %c23 = arith.constant 23 : index
    %c0_83 = arith.constant 0 : index
    %119 = vector.load %arg16[%c23, %c0_83] : memref<232x64xf32, #tpu.memory_space<vmem>>, vector<72x64xf32>
    %c8_84 = arith.constant 8 : index
    %c0_85 = arith.constant 0 : index
    %c0_86 = arith.constant 0 : index
    %120 = vector.load %arg5[%c8_84, %c0_85, %c0_86] : memref<9x64x64xf32, #tpu.memory_space<vmem>>, vector<1x64x64xf32>
    %121 = vector.shape_cast %120 : vector<1x64x64xf32> to vector<64x64xf32>
    %cst_87 = arith.constant dense<0.000000e+00> : vector<72x64xf32>
    %122 = tpu.matmul %119, %121, %cst_87 {dimension_numbers = #tpu.dot_dimension_numbers<[1], [0], [0], [1], [0, 0, 1, 1], [], []>} : vector<72x64xf32>, vector<64x64xf32>, vector<72x64xf32> -> vector<72x64xf32>
    %123 = arith.addf %118, %122 : vector<72x64xf32>
    %c0_88 = arith.constant 0 : index
    %c0_89 = arith.constant 0 : index
    %124 = vector.load %arg6[%c0_88, %c0_89] : memref<1x64xf32, #tpu.memory_space<vmem>>, vector<1x64xf32>
    %125 = vector.broadcast %124 : vector<1x64xf32> to vector<72x64xf32>
    %126 = arith.addf %123, %125 : vector<72x64xf32>
    %cst_90 = arith.constant 0.000000e+00 : f32
    %127 = vector.broadcast %cst_90 : f32 to vector<72x64xf32>
    %128 = arith.cmpf ogt, %126, %127 : vector<72x64xf32>
    %cst_91 = arith.constant 2.000000e-01 : f32
    %129 = vector.broadcast %cst_91 : f32 to vector<72x64xf32>
    %130 = arith.mulf %129, %126 : vector<72x64xf32>
    %131 = arith.select %128, %126, %130 : vector<72x64xi1>, vector<72x64xf32>
    %132 = arith.mulf %131, %131 : vector<72x64xf32>
    %cst_92 = arith.constant dense<0.000000e+00> : vector<72xf32>
    %133 = vector.multi_reduction <add>, %132, %cst_92 [1] : vector<72x64xf32> to vector<72xf32>
    %134 = vector.shape_cast %133 : vector<72xf32> to vector<72x1xf32>
    %cst_93 = arith.constant 6.400000e+01 : f32
    %135 = vector.broadcast %cst_93 : f32 to vector<72x1xf32>
    %136 = arith.divf %134, %135 : vector<72x1xf32>
    %cst_94 = arith.constant 9.99999993E-9 : f32
    %137 = vector.broadcast %cst_94 : f32 to vector<72x1xf32>
    %138 = arith.addf %136, %137 : vector<72x1xf32>
    %139 = math.rsqrt %138 : vector<72x1xf32>
    %140 = vector.broadcast %139 : vector<72x1xf32> to vector<72x64xf32>
    %141 = arith.mulf %131, %140 : vector<72x64xf32>
    %c0_95 = arith.constant 0 : index
    %c0_96 = arith.constant 0 : index
    %142 = vector.load %arg4[%c0_95, %c0_96] : memref<72x1xf32, #tpu.memory_space<vmem>>, vector<72x1xf32>
    %143 = vector.broadcast %142 : vector<72x1xf32> to vector<72x64xf32>
    %144 = arith.mulf %141, %143 : vector<72x64xf32>
    %c0_97 = arith.constant 0 : index
    %c0_98 = arith.constant 0 : index
    %145 = vector.load %arg17[%c0_97, %c0_98] : memref<232x64xf32, #tpu.memory_space<vmem>>, vector<16x64xf32>
    tpu.vector_store %arg17[%c0_97, %c0_98], %0 {strides = array<i32>} : memref<232x64xf32, #tpu.memory_space<vmem>>, vector<16x64xf32>,
    %c16_99 = arith.constant 16 : index
    %c0_100 = arith.constant 0 : index
    %146 = vector.load %arg17[%c16_99, %c0_100] : memref<232x64xf32, #tpu.memory_space<vmem>>, vector<72x64xf32>
    tpu.vector_store %arg17[%c16_99, %c0_100], %144 {strides = array<i32>} : memref<232x64xf32, #tpu.memory_space<vmem>>, vector<72x64xf32>,
    %c88_101 = arith.constant 88 : index
    %c0_102 = arith.constant 0 : index
    %147 = vector.load %arg17[%c88_101, %c0_102] : memref<232x64xf32, #tpu.memory_space<vmem>>, vector<16x64xf32>
    tpu.vector_store %arg17[%c88_101, %c0_102], %0 {strides = array<i32>} : memref<232x64xf32, #tpu.memory_space<vmem>>, vector<16x64xf32>,
    %c0_103 = arith.constant 0 : index
    %c0_104 = arith.constant 0 : index
    %148 = vector.load %arg10[%c0_103, %c0_104] : memref<200x72xf32, #tpu.memory_space<vmem>>, vector<200x72xf32>
    %c16_105 = arith.constant 16 : index
    %c0_106 = arith.constant 0 : index
    %149 = vector.load %arg17[%c16_105, %c0_106] : memref<232x64xf32, #tpu.memory_space<vmem>>, vector<72x64xf32>
    %cst_107 = arith.constant dense<0.000000e+00> : vector<200x64xf32>
    %150 = tpu.matmul %148, %149, %cst_107 {dimension_numbers = #tpu.dot_dimension_numbers<[1], [0], [0], [1], [0, 0, 1, 1], [], []>} : vector<200x72xf32>, vector<72x64xf32>, vector<200x64xf32> -> vector<200x64xf32>
    %c0_108 = arith.constant 0 : index
    %c0_109 = arith.constant 0 : index
    %151 = vector.load %arg16[%c0_108, %c0_109] : memref<232x64xf32, #tpu.memory_space<vmem>>, vector<16x64xf32>
    tpu.vector_store %arg16[%c0_108, %c0_109], %0 {strides = array<i32>} : memref<232x64xf32, #tpu.memory_space<vmem>>, vector<16x64xf32>,
    %c16_110 = arith.constant 16 : index
    %c0_111 = arith.constant 0 : index
    %152 = vector.load %arg16[%c16_110, %c0_111] : memref<232x64xf32, #tpu.memory_space<vmem>>, vector<200x64xf32>
    tpu.vector_store %arg16[%c16_110, %c0_111], %150 {strides = array<i32>} : memref<232x64xf32, #tpu.memory_space<vmem>>, vector<200x64xf32>,
    %c216 = arith.constant 216 : index
    %c0_112 = arith.constant 0 : index
    %153 = vector.load %arg16[%c216, %c0_112] : memref<232x64xf32, #tpu.memory_space<vmem>>, vector<16x64xf32>
    tpu.vector_store %arg16[%c216, %c0_112], %0 {strides = array<i32>} : memref<232x64xf32, #tpu.memory_space<vmem>>, vector<16x64xf32>,
    %c5_113 = arith.constant 5 : index
    %c0_114 = arith.constant 0 : index
    %154 = vector.load %arg16[%c5_113, %c0_114] : memref<232x64xf32, #tpu.memory_space<vmem>>, vector<200x64xf32>
    %c0_115 = arith.constant 0 : index
    %c0_116 = arith.constant 0 : index
    %c0_117 = arith.constant 0 : index
    %155 = vector.load %arg8[%c0_115, %c0_116, %c0_117] : memref<9x64x32xf32, #tpu.memory_space<vmem>>, vector<1x64x32xf32>
    %156 = vector.shape_cast %155 : vector<1x64x32xf32> to vector<64x32xf32>
    %cst_118 = arith.constant dense<0.000000e+00> : vector<200x32xf32>
    %157 = tpu.matmul %154, %156, %cst_118 {dimension_numbers = #tpu.dot_dimension_numbers<[1], [0], [0], [1], [0, 0, 1, 1], [], []>} : vector<200x64xf32>, vector<64x32xf32>, vector<200x32xf32> -> vector<200x32xf32>
    %c6_119 = arith.constant 6 : index
    %c0_120 = arith.constant 0 : index
    %158 = vector.load %arg16[%c6_119, %c0_120] : memref<232x64xf32, #tpu.memory_space<vmem>>, vector<200x64xf32>
    %c1_121 = arith.constant 1 : index
    %c0_122 = arith.constant 0 : index
    %c0_123 = arith.constant 0 : index
    %159 = vector.load %arg8[%c1_121, %c0_122, %c0_123] : memref<9x64x32xf32, #tpu.memory_space<vmem>>, vector<1x64x32xf32>
    %160 = vector.shape_cast %159 : vector<1x64x32xf32> to vector<64x32xf32>
    %cst_124 = arith.constant dense<0.000000e+00> : vector<200x32xf32>
    %161 = tpu.matmul %158, %160, %cst_124 {dimension_numbers = #tpu.dot_dimension_numbers<[1], [0], [0], [1], [0, 0, 1, 1], [], []>} : vector<200x64xf32>, vector<64x32xf32>, vector<200x32xf32> -> vector<200x32xf32>
    %162 = arith.addf %157, %161 : vector<200x32xf32>
    %c7_125 = arith.constant 7 : index
    %c0_126 = arith.constant 0 : index
    %163 = vector.load %arg16[%c7_125, %c0_126] : memref<232x64xf32, #tpu.memory_space<vmem>>, vector<200x64xf32>
    %c2_127 = arith.constant 2 : index
    %c0_128 = arith.constant 0 : index
    %c0_129 = arith.constant 0 : index
    %164 = vector.load %arg8[%c2_127, %c0_128, %c0_129] : memref<9x64x32xf32, #tpu.memory_space<vmem>>, vector<1x64x32xf32>
    %165 = vector.shape_cast %164 : vector<1x64x32xf32> to vector<64x32xf32>
    %cst_130 = arith.constant dense<0.000000e+00> : vector<200x32xf32>
    %166 = tpu.matmul %163, %165, %cst_130 {dimension_numbers = #tpu.dot_dimension_numbers<[1], [0], [0], [1], [0, 0, 1, 1], [], []>} : vector<200x64xf32>, vector<64x32xf32>, vector<200x32xf32> -> vector<200x32xf32>
    %167 = arith.addf %162, %166 : vector<200x32xf32>
    %c15_131 = arith.constant 15 : index
    %c0_132 = arith.constant 0 : index
    %168 = vector.load %arg16[%c15_131, %c0_132] : memref<232x64xf32, #tpu.memory_space<vmem>>, vector<200x64xf32>
    %c3_133 = arith.constant 3 : index
    %c0_134 = arith.constant 0 : index
    %c0_135 = arith.constant 0 : index
    %169 = vector.load %arg8[%c3_133, %c0_134, %c0_135] : memref<9x64x32xf32, #tpu.memory_space<vmem>>, vector<1x64x32xf32>
    %170 = vector.shape_cast %169 : vector<1x64x32xf32> to vector<64x32xf32>
    %cst_136 = arith.constant dense<0.000000e+00> : vector<200x32xf32>
    %171 = tpu.matmul %168, %170, %cst_136 {dimension_numbers = #tpu.dot_dimension_numbers<[1], [0], [0], [1], [0, 0, 1, 1], [], []>} : vector<200x64xf32>, vector<64x32xf32>, vector<200x32xf32> -> vector<200x32xf32>
    %172 = arith.addf %167, %171 : vector<200x32xf32>
    %c16_137 = arith.constant 16 : index
    %c0_138 = arith.constant 0 : index
    %173 = vector.load %arg16[%c16_137, %c0_138] : memref<232x64xf32, #tpu.memory_space<vmem>>, vector<200x64xf32>
    %c4_139 = arith.constant 4 : index
    %c0_140 = arith.constant 0 : index
    %c0_141 = arith.constant 0 : index
    %174 = vector.load %arg8[%c4_139, %c0_140, %c0_141] : memref<9x64x32xf32, #tpu.memory_space<vmem>>, vector<1x64x32xf32>
    %175 = vector.shape_cast %174 : vector<1x64x32xf32> to vector<64x32xf32>
    %cst_142 = arith.constant dense<0.000000e+00> : vector<200x32xf32>
    %176 = tpu.matmul %173, %175, %cst_142 {dimension_numbers = #tpu.dot_dimension_numbers<[1], [0], [0], [1], [0, 0, 1, 1], [], []>} : vector<200x64xf32>, vector<64x32xf32>, vector<200x32xf32> -> vector<200x32xf32>
    %177 = arith.addf %172, %176 : vector<200x32xf32>
    %c17_143 = arith.constant 17 : index
    %c0_144 = arith.constant 0 : index
    %178 = vector.load %arg16[%c17_143, %c0_144] : memref<232x64xf32, #tpu.memory_space<vmem>>, vector<200x64xf32>
    %c5_145 = arith.constant 5 : index
    %c0_146 = arith.constant 0 : index
    %c0_147 = arith.constant 0 : index
    %179 = vector.load %arg8[%c5_145, %c0_146, %c0_147] : memref<9x64x32xf32, #tpu.memory_space<vmem>>, vector<1x64x32xf32>
    %180 = vector.shape_cast %179 : vector<1x64x32xf32> to vector<64x32xf32>
    %cst_148 = arith.constant dense<0.000000e+00> : vector<200x32xf32>
    %181 = tpu.matmul %178, %180, %cst_148 {dimension_numbers = #tpu.dot_dimension_numbers<[1], [0], [0], [1], [0, 0, 1, 1], [], []>} : vector<200x64xf32>, vector<64x32xf32>, vector<200x32xf32> -> vector<200x32xf32>
    %182 = arith.addf %177, %181 : vector<200x32xf32>
    %c25 = arith.constant 25 : index
    %c0_149 = arith.constant 0 : index
    %183 = vector.load %arg16[%c25, %c0_149] : memref<232x64xf32, #tpu.memory_space<vmem>>, vector<200x64xf32>
    %c6_150 = arith.constant 6 : index
    %c0_151 = arith.constant 0 : index
    %c0_152 = arith.constant 0 : index
    %184 = vector.load %arg8[%c6_150, %c0_151, %c0_152] : memref<9x64x32xf32, #tpu.memory_space<vmem>>, vector<1x64x32xf32>
    %185 = vector.shape_cast %184 : vector<1x64x32xf32> to vector<64x32xf32>
    %cst_153 = arith.constant dense<0.000000e+00> : vector<200x32xf32>
    %186 = tpu.matmul %183, %185, %cst_153 {dimension_numbers = #tpu.dot_dimension_numbers<[1], [0], [0], [1], [0, 0, 1, 1], [], []>} : vector<200x64xf32>, vector<64x32xf32>, vector<200x32xf32> -> vector<200x32xf32>
    %187 = arith.addf %182, %186 : vector<200x32xf32>
    %c26_154 = arith.constant 26 : index
    %c0_155 = arith.constant 0 : index
    %188 = vector.load %arg16[%c26_154, %c0_155] : memref<232x64xf32, #tpu.memory_space<vmem>>, vector<200x64xf32>
    %c7_156 = arith.constant 7 : index
    %c0_157 = arith.constant 0 : index
    %c0_158 = arith.constant 0 : index
    %189 = vector.load %arg8[%c7_156, %c0_157, %c0_158] : memref<9x64x32xf32, #tpu.memory_space<vmem>>, vector<1x64x32xf32>
    %190 = vector.shape_cast %189 : vector<1x64x32xf32> to vector<64x32xf32>
    %cst_159 = arith.constant dense<0.000000e+00> : vector<200x32xf32>
    %191 = tpu.matmul %188, %190, %cst_159 {dimension_numbers = #tpu.dot_dimension_numbers<[1], [0], [0], [1], [0, 0, 1, 1], [], []>} : vector<200x64xf32>, vector<64x32xf32>, vector<200x32xf32> -> vector<200x32xf32>
    %192 = arith.addf %187, %191 : vector<200x32xf32>
    %c27 = arith.constant 27 : index
    %c0_160 = arith.constant 0 : index
    %193 = vector.load %arg16[%c27, %c0_160] : memref<232x64xf32, #tpu.memory_space<vmem>>, vector<200x64xf32>
    %c8_161 = arith.constant 8 : index
    %c0_162 = arith.constant 0 : index
    %c0_163 = arith.constant 0 : index
    %194 = vector.load %arg8[%c8_161, %c0_162, %c0_163] : memref<9x64x32xf32, #tpu.memory_space<vmem>>, vector<1x64x32xf32>
    %195 = vector.shape_cast %194 : vector<1x64x32xf32> to vector<64x32xf32>
    %cst_164 = arith.constant dense<0.000000e+00> : vector<200x32xf32>
    %196 = tpu.matmul %193, %195, %cst_164 {dimension_numbers = #tpu.dot_dimension_numbers<[1], [0], [0], [1], [0, 0, 1, 1], [], []>} : vector<200x64xf32>, vector<64x32xf32>, vector<200x32xf32> -> vector<200x32xf32>
    %197 = arith.addf %192, %196 : vector<200x32xf32>
    %c0_165 = arith.constant 0 : index
    %c0_166 = arith.constant 0 : index
    %198 = vector.load %arg9[%c0_165, %c0_166] : memref<1x32xf32, #tpu.memory_space<vmem>>, vector<1x32xf32>
    %199 = vector.broadcast %198 : vector<1x32xf32> to vector<200x32xf32>
    %200 = arith.addf %197, %199 : vector<200x32xf32>
    %cst_167 = arith.constant 0.000000e+00 : f32
    %201 = vector.broadcast %cst_167 : f32 to vector<200x32xf32>
    %202 = arith.cmpf ogt, %200, %201 : vector<200x32xf32>
    %cst_168 = arith.constant 2.000000e-01 : f32
    %203 = vector.broadcast %cst_168 : f32 to vector<200x32xf32>
    %204 = arith.mulf %203, %200 : vector<200x32xf32>
    %205 = arith.select %202, %200, %204 : vector<200x32xi1>, vector<200x32xf32>
    %206 = arith.mulf %205, %205 : vector<200x32xf32>
    %cst_169 = arith.constant dense<0.000000e+00> : vector<200xf32>
    %207 = vector.multi_reduction <add>, %206, %cst_169 [1] : vector<200x32xf32> to vector<200xf32>
    %208 = vector.shape_cast %207 : vector<200xf32> to vector<200x1xf32>
    %cst_170 = arith.constant 3.200000e+01 : f32
    %209 = vector.broadcast %cst_170 : f32 to vector<200x1xf32>
    %210 = arith.divf %208, %209 : vector<200x1xf32>
    %cst_171 = arith.constant 9.99999993E-9 : f32
    %211 = vector.broadcast %cst_171 : f32 to vector<200x1xf32>
    %212 = arith.addf %210, %211 : vector<200x1xf32>
    %213 = math.rsqrt %212 : vector<200x1xf32>
    %214 = vector.broadcast %213 : vector<200x1xf32> to vector<200x32xf32>
    %215 = arith.mulf %205, %214 : vector<200x32xf32>
    %c0_172 = arith.constant 0 : index
    %c0_173 = arith.constant 0 : index
    %216 = vector.load %arg7[%c0_172, %c0_173] : memref<200x1xf32, #tpu.memory_space<vmem>>, vector<200x1xf32>
    %217 = vector.broadcast %216 : vector<200x1xf32> to vector<200x32xf32>
    %218 = arith.mulf %215, %217 : vector<200x32xf32>
    %c0_174 = arith.constant 0 : index
    %c0_175 = arith.constant 0 : index
    %219 = vector.load %arg17[%c0_174, %c0_175] : memref<232x64xf32, #tpu.memory_space<vmem>>, vector<16x64xf32>
    tpu.vector_store %arg17[%c0_174, %c0_175], %0 {strides = array<i32>} : memref<232x64xf32, #tpu.memory_space<vmem>>, vector<16x64xf32>,
    %c16_176 = arith.constant 16 : index
    %c0_177 = arith.constant 0 : index
    %220 = vector.load %arg17[%c16_176, %c0_177] : memref<232x64xf32, #tpu.memory_space<vmem>>, vector<200x32xf32>
    tpu.vector_store %arg17[%c16_176, %c0_177], %218 {strides = array<i32>} : memref<232x64xf32, #tpu.memory_space<vmem>>, vector<200x32xf32>,
    %c216_178 = arith.constant 216 : index
    %c0_179 = arith.constant 0 : index
    %221 = vector.load %arg17[%c216_178, %c0_179] : memref<232x64xf32, #tpu.memory_space<vmem>>, vector<16x64xf32>
    tpu.vector_store %arg17[%c216_178, %c0_179], %0 {strides = array<i32>} : memref<232x64xf32, #tpu.memory_space<vmem>>, vector<16x64xf32>,
    %c5_180 = arith.constant 5 : index
    %c0_181 = arith.constant 0 : index
    %222 = vector.load %arg17[%c5_180, %c0_181] : memref<232x64xf32, #tpu.memory_space<vmem>>, vector<200x32xf32>
    %c0_182 = arith.constant 0 : index
    %c0_183 = arith.constant 0 : index
    %c0_184 = arith.constant 0 : index
    %223 = vector.load %arg11[%c0_182, %c0_183, %c0_184] : memref<9x32x32xf32, #tpu.memory_space<vmem>>, vector<1x32x32xf32>
    %224 = vector.shape_cast %223 : vector<1x32x32xf32> to vector<32x32xf32>
    %cst_185 = arith.constant dense<0.000000e+00> : vector<200x32xf32>
    %225 = tpu.matmul %222, %224, %cst_185 {dimension_numbers = #tpu.dot_dimension_numbers<[1], [0], [0], [1], [0, 0, 1, 1], [], []>} : vector<200x32xf32>, vector<32x32xf32>, vector<200x32xf32> -> vector<200x32xf32>
    %c6_186 = arith.constant 6 : index
    %c0_187 = arith.constant 0 : index
    %226 = vector.load %arg17[%c6_186, %c0_187] : memref<232x64xf32, #tpu.memory_space<vmem>>, vector<200x32xf32>
    %c1_188 = arith.constant 1 : index
    %c0_189 = arith.constant 0 : index
    %c0_190 = arith.constant 0 : index
    %227 = vector.load %arg11[%c1_188, %c0_189, %c0_190] : memref<9x32x32xf32, #tpu.memory_space<vmem>>, vector<1x32x32xf32>
    %228 = vector.shape_cast %227 : vector<1x32x32xf32> to vector<32x32xf32>
    %cst_191 = arith.constant dense<0.000000e+00> : vector<200x32xf32>
    %229 = tpu.matmul %226, %228, %cst_191 {dimension_numbers = #tpu.dot_dimension_numbers<[1], [0], [0], [1], [0, 0, 1, 1], [], []>} : vector<200x32xf32>, vector<32x32xf32>, vector<200x32xf32> -> vector<200x32xf32>
    %230 = arith.addf %225, %229 : vector<200x32xf32>
    %c7_192 = arith.constant 7 : index
    %c0_193 = arith.constant 0 : index
    %231 = vector.load %arg17[%c7_192, %c0_193] : memref<232x64xf32, #tpu.memory_space<vmem>>, vector<200x32xf32>
    %c2_194 = arith.constant 2 : index
    %c0_195 = arith.constant 0 : index
    %c0_196 = arith.constant 0 : index
    %232 = vector.load %arg11[%c2_194, %c0_195, %c0_196] : memref<9x32x32xf32, #tpu.memory_space<vmem>>, vector<1x32x32xf32>
    %233 = vector.shape_cast %232 : vector<1x32x32xf32> to vector<32x32xf32>
    %cst_197 = arith.constant dense<0.000000e+00> : vector<200x32xf32>
    %234 = tpu.matmul %231, %233, %cst_197 {dimension_numbers = #tpu.dot_dimension_numbers<[1], [0], [0], [1], [0, 0, 1, 1], [], []>} : vector<200x32xf32>, vector<32x32xf32>, vector<200x32xf32> -> vector<200x32xf32>
    %235 = arith.addf %230, %234 : vector<200x32xf32>
    %c15_198 = arith.constant 15 : index
    %c0_199 = arith.constant 0 : index
    %236 = vector.load %arg17[%c15_198, %c0_199] : memref<232x64xf32, #tpu.memory_space<vmem>>, vector<200x32xf32>
    %c3_200 = arith.constant 3 : index
    %c0_201 = arith.constant 0 : index
    %c0_202 = arith.constant 0 : index
    %237 = vector.load %arg11[%c3_200, %c0_201, %c0_202] : memref<9x32x32xf32, #tpu.memory_space<vmem>>, vector<1x32x32xf32>
    %238 = vector.shape_cast %237 : vector<1x32x32xf32> to vector<32x32xf32>
    %cst_203 = arith.constant dense<0.000000e+00> : vector<200x32xf32>
    %239 = tpu.matmul %236, %238, %cst_203 {dimension_numbers = #tpu.dot_dimension_numbers<[1], [0], [0], [1], [0, 0, 1, 1], [], []>} : vector<200x32xf32>, vector<32x32xf32>, vector<200x32xf32> -> vector<200x32xf32>
    %240 = arith.addf %235, %239 : vector<200x32xf32>
    %c16_204 = arith.constant 16 : index
    %c0_205 = arith.constant 0 : index
    %241 = vector.load %arg17[%c16_204, %c0_205] : memref<232x64xf32, #tpu.memory_space<vmem>>, vector<200x32xf32>
    %c4_206 = arith.constant 4 : index
    %c0_207 = arith.constant 0 : index
    %c0_208 = arith.constant 0 : index
    %242 = vector.load %arg11[%c4_206, %c0_207, %c0_208] : memref<9x32x32xf32, #tpu.memory_space<vmem>>, vector<1x32x32xf32>
    %243 = vector.shape_cast %242 : vector<1x32x32xf32> to vector<32x32xf32>
    %cst_209 = arith.constant dense<0.000000e+00> : vector<200x32xf32>
    %244 = tpu.matmul %241, %243, %cst_209 {dimension_numbers = #tpu.dot_dimension_numbers<[1], [0], [0], [1], [0, 0, 1, 1], [], []>} : vector<200x32xf32>, vector<32x32xf32>, vector<200x32xf32> -> vector<200x32xf32>
    %245 = arith.addf %240, %244 : vector<200x32xf32>
    %c17_210 = arith.constant 17 : index
    %c0_211 = arith.constant 0 : index
    %246 = vector.load %arg17[%c17_210, %c0_211] : memref<232x64xf32, #tpu.memory_space<vmem>>, vector<200x32xf32>
    %c5_212 = arith.constant 5 : index
    %c0_213 = arith.constant 0 : index
    %c0_214 = arith.constant 0 : index
    %247 = vector.load %arg11[%c5_212, %c0_213, %c0_214] : memref<9x32x32xf32, #tpu.memory_space<vmem>>, vector<1x32x32xf32>
    %248 = vector.shape_cast %247 : vector<1x32x32xf32> to vector<32x32xf32>
    %cst_215 = arith.constant dense<0.000000e+00> : vector<200x32xf32>
    %249 = tpu.matmul %246, %248, %cst_215 {dimension_numbers = #tpu.dot_dimension_numbers<[1], [0], [0], [1], [0, 0, 1, 1], [], []>} : vector<200x32xf32>, vector<32x32xf32>, vector<200x32xf32> -> vector<200x32xf32>
    %250 = arith.addf %245, %249 : vector<200x32xf32>
    %c25_216 = arith.constant 25 : index
    %c0_217 = arith.constant 0 : index
    %251 = vector.load %arg17[%c25_216, %c0_217] : memref<232x64xf32, #tpu.memory_space<vmem>>, vector<200x32xf32>
    %c6_218 = arith.constant 6 : index
    %c0_219 = arith.constant 0 : index
    %c0_220 = arith.constant 0 : index
    %252 = vector.load %arg11[%c6_218, %c0_219, %c0_220] : memref<9x32x32xf32, #tpu.memory_space<vmem>>, vector<1x32x32xf32>
    %253 = vector.shape_cast %252 : vector<1x32x32xf32> to vector<32x32xf32>
    %cst_221 = arith.constant dense<0.000000e+00> : vector<200x32xf32>
    %254 = tpu.matmul %251, %253, %cst_221 {dimension_numbers = #tpu.dot_dimension_numbers<[1], [0], [0], [1], [0, 0, 1, 1], [], []>} : vector<200x32xf32>, vector<32x32xf32>, vector<200x32xf32> -> vector<200x32xf32>
    %255 = arith.addf %250, %254 : vector<200x32xf32>
    %c26_222 = arith.constant 26 : index
    %c0_223 = arith.constant 0 : index
    %256 = vector.load %arg17[%c26_222, %c0_223] : memref<232x64xf32, #tpu.memory_space<vmem>>, vector<200x32xf32>
    %c7_224 = arith.constant 7 : index
    %c0_225 = arith.constant 0 : index
    %c0_226 = arith.constant 0 : index
    %257 = vector.load %arg11[%c7_224, %c0_225, %c0_226] : memref<9x32x32xf32, #tpu.memory_space<vmem>>, vector<1x32x32xf32>
    %258 = vector.shape_cast %257 : vector<1x32x32xf32> to vector<32x32xf32>
    %cst_227 = arith.constant dense<0.000000e+00> : vector<200x32xf32>
    %259 = tpu.matmul %256, %258, %cst_227 {dimension_numbers = #tpu.dot_dimension_numbers<[1], [0], [0], [1], [0, 0, 1, 1], [], []>} : vector<200x32xf32>, vector<32x32xf32>, vector<200x32xf32> -> vector<200x32xf32>
    %260 = arith.addf %255, %259 : vector<200x32xf32>
    %c27_228 = arith.constant 27 : index
    %c0_229 = arith.constant 0 : index
    %261 = vector.load %arg17[%c27_228, %c0_229] : memref<232x64xf32, #tpu.memory_space<vmem>>, vector<200x32xf32>
    %c8_230 = arith.constant 8 : index
    %c0_231 = arith.constant 0 : index
    %c0_232 = arith.constant 0 : index
    %262 = vector.load %arg11[%c8_230, %c0_231, %c0_232] : memref<9x32x32xf32, #tpu.memory_space<vmem>>, vector<1x32x32xf32>
    %263 = vector.shape_cast %262 : vector<1x32x32xf32> to vector<32x32xf32>
    %cst_233 = arith.constant dense<0.000000e+00> : vector<200x32xf32>
    %264 = tpu.matmul %261, %263, %cst_233 {dimension_numbers = #tpu.dot_dimension_numbers<[1], [0], [0], [1], [0, 0, 1, 1], [], []>} : vector<200x32xf32>, vector<32x32xf32>, vector<200x32xf32> -> vector<200x32xf32>
    %265 = arith.addf %260, %264 : vector<200x32xf32>
    %c0_234 = arith.constant 0 : index
    %c0_235 = arith.constant 0 : index
    %266 = vector.load %arg12[%c0_234, %c0_235] : memref<1x32xf32, #tpu.memory_space<vmem>>, vector<1x32xf32>
    %267 = vector.broadcast %266 : vector<1x32xf32> to vector<200x32xf32>
    %268 = arith.addf %265, %267 : vector<200x32xf32>
    %cst_236 = arith.constant 0.000000e+00 : f32
    %269 = vector.broadcast %cst_236 : f32 to vector<200x32xf32>
    %270 = arith.cmpf ogt, %268, %269 : vector<200x32xf32>
    %cst_237 = arith.constant 2.000000e-01 : f32
    %271 = vector.broadcast %cst_237 : f32 to vector<200x32xf32>
    %272 = arith.mulf %271, %268 : vector<200x32xf32>
    %273 = arith.select %270, %268, %272 : vector<200x32xi1>, vector<200x32xf32>
    %274 = arith.mulf %273, %273 : vector<200x32xf32>
    %cst_238 = arith.constant dense<0.000000e+00> : vector<200xf32>
    %275 = vector.multi_reduction <add>, %274, %cst_238 [1] : vector<200x32xf32> to vector<200xf32>
    %276 = vector.shape_cast %275 : vector<200xf32> to vector<200x1xf32>
    %cst_239 = arith.constant 3.200000e+01 : f32
    %277 = vector.broadcast %cst_239 : f32 to vector<200x1xf32>
    %278 = arith.divf %276, %277 : vector<200x1xf32>
    %cst_240 = arith.constant 9.99999993E-9 : f32
    %279 = vector.broadcast %cst_240 : f32 to vector<200x1xf32>
    %280 = arith.addf %278, %279 : vector<200x1xf32>
    %281 = math.rsqrt %280 : vector<200x1xf32>
    %282 = vector.broadcast %281 : vector<200x1xf32> to vector<200x32xf32>
    %283 = arith.mulf %273, %282 : vector<200x32xf32>
    %c0_241 = arith.constant 0 : index
    %c0_242 = arith.constant 0 : index
    %284 = vector.load %arg7[%c0_241, %c0_242] : memref<200x1xf32, #tpu.memory_space<vmem>>, vector<200x1xf32>
    %285 = vector.broadcast %284 : vector<200x1xf32> to vector<200x32xf32>
    %286 = arith.mulf %283, %285 : vector<200x32xf32>
    %c0_243 = arith.constant 0 : index
    %c0_244 = arith.constant 0 : index
    %287 = vector.load %arg16[%c0_243, %c0_244] : memref<232x64xf32, #tpu.memory_space<vmem>>, vector<16x64xf32>
    tpu.vector_store %arg16[%c0_243, %c0_244], %0 {strides = array<i32>} : memref<232x64xf32, #tpu.memory_space<vmem>>, vector<16x64xf32>,
    %c16_245 = arith.constant 16 : index
    %c0_246 = arith.constant 0 : index
    %288 = vector.load %arg16[%c16_245, %c0_246] : memref<232x64xf32, #tpu.memory_space<vmem>>, vector<200x32xf32>
    tpu.vector_store %arg16[%c16_245, %c0_246], %286 {strides = array<i32>} : memref<232x64xf32, #tpu.memory_space<vmem>>, vector<200x32xf32>,
    %c216_247 = arith.constant 216 : index
    %c0_248 = arith.constant 0 : index
    %289 = vector.load %arg16[%c216_247, %c0_248] : memref<232x64xf32, #tpu.memory_space<vmem>>, vector<16x64xf32>
    tpu.vector_store %arg16[%c216_247, %c0_248], %0 {strides = array<i32>} : memref<232x64xf32, #tpu.memory_space<vmem>>, vector<16x64xf32>,
    %c0_249 = arith.constant 0 : index
    %c0_250 = arith.constant 0 : index
    %290 = vector.load %arg13[%c0_249, %c0_250] : memref<3x32xf32, #tpu.memory_space<vmem>>, vector<3x32xf32>
    %c16_251 = arith.constant 16 : index
    %c0_252 = arith.constant 0 : index
    %291 = vector.load %arg16[%c16_251, %c0_252] : memref<232x64xf32, #tpu.memory_space<vmem>>, vector<200x32xf32>
    %cst_253 = arith.constant dense<0.000000e+00> : vector<3x200xf32>
    %292 = tpu.matmul %290, %291, %cst_253 {dimension_numbers = #tpu.dot_dimension_numbers<[1], [1], [0], [0], [0, 0, 1, 0], [], []>} : vector<3x32xf32>, vector<200x32xf32>, vector<3x200xf32> -> vector<3x200xf32>
    %c0_254 = arith.constant 0 : index
    %c0_255 = arith.constant 0 : index
    %293 = vector.load %arg14[%c0_254, %c0_255] : memref<3x1xf32, #tpu.memory_space<vmem>>, vector<3x1xf32>
    %294 = vector.broadcast %293 : vector<3x1xf32> to vector<3x200xf32>
    %295 = arith.addf %292, %294 : vector<3x200xf32>
    %c0_256 = arith.constant 0 : index
    %c0_257 = arith.constant 0 : index
    %296 = vector.load %arg15[%c0_256, %c0_257] : memref<3x200xf32, #tpu.memory_space<vmem>>, vector<3x200xf32>
    tpu.vector_store %arg15[%c0_256, %c0_257], %295 {strides = array<i32>} : memref<3x200xf32, #tpu.memory_space<vmem>>, vector<3x200xf32>,
    return
  }
}

</mosaic_0001>

<llo_original>
// kernel: tpu_custom_call.1
$region0: #{tpu_custom_call.1}
  #allocation0 [shape = 'u32[]', space=smem, size = 0x4, offset = 0x4, fixed_abs, tag = 'smem constant byte address 0x4 - core index']
  #allocation1 [shape = 'u32[144,128]{1,0:T(1,128)}', space=vmem, size = 0x12000, scoped, tag = 'internal scratch']
  #allocation2 [shape = 'f32[232,64]{1,0:T(8,128)}', space=vmem, size = 0x1d000, scoped, tag = 'scratch operand']
  #allocation3 [shape = 'f32[232,64]{1,0:T(8,128)}', space=vmem, size = 0x1d000, scoped, tag = 'scratch operand']
  #allocation4 [shape = 'f32[32,64]{1,0:T(8,128)}', space=vmem, size = 0x4000, scoped, tag = 'scratch operand']
  %s0 = inlined_call_operand.hbm [shape: f32[2,32], index: 0, kind: input, shape index: {}]
  %s1 = inlined_call_operand.hbm [shape: f32[32,1024], index: 1, kind: input, shape index: {}]
  %s2 = inlined_call_operand.hbm [shape: f32[1,64], index: 2, kind: input, shape index: {}]
  %s3 = inlined_call_operand.hbm [shape: f32[72,32], index: 3, kind: input, shape index: {}]
  %s4 = inlined_call_operand.hbm [shape: f32[72,1], index: 4, kind: input, shape index: {}]
  %s5 = inlined_call_operand.hbm [shape: f32[9,64,64], index: 5, kind: input, shape index: {}]
  %s6 = inlined_call_operand.hbm [shape: f32[1,64], index: 6, kind: input, shape index: {}]
  %s7 = inlined_call_operand.hbm [shape: f32[200,1], index: 7, kind: input, shape index: {}]
  %s8 = inlined_call_operand.hbm [shape: f32[9,64,32], index: 8, kind: input, shape index: {}]
  %s9 = inlined_call_operand.hbm [shape: f32[1,32], index: 9, kind: input, shape index: {}]
  %s10 = inlined_call_operand.hbm [shape: f32[200,72], index: 10, kind: input, shape index: {}]
  %s11 = inlined_call_operand.hbm [shape: f32[9,32,32], index: 11, kind: input, shape index: {}]
  %s12 = inlined_call_operand.hbm [shape: f32[1,32], index: 12, kind: input, shape index: {}]
  %s13 = inlined_call_operand.hbm [shape: f32[3,32], index: 13, kind: input, shape index: {}]
  %s14 = inlined_call_operand.hbm [shape: f32[3,1], index: 14, kind: input, shape index: {}]
  %s15 = inlined_call_operand.hbm [shape: f32[3,200], index: 15, kind: output, shape index: {}]
  %s16 = sld [smem:[#allocation0]]
  $region130: #{tpu_custom_call.1} parent=0
    _
  %s18 = ssub.s32 1, %s16
  %s19 = scalar_select 0, %s18, %s16
  $region1: #{tpu_custom_call.1} parent=0
    #allocation5 [shape = 'u8[1024]{0}', space=vmem, size = 0x400, scoped, tag = 'input window, operand 0, single buffered']
    #allocation6 [shape = 's32[1]{0}', space=sflag, size = 0x4, scoped, tag = 'scoped memory for tpu_custom_call.1']
    #allocation7 [shape = 's32[1]{0}', space=sflag, size = 0x4, scoped, tag = 'scoped memory for tpu_custom_call.1']
    #allocation8 [shape = 'u8[131072]{0}', space=vmem, size = 0x20000, scoped, tag = 'input window, operand 1, single buffered']
    #allocation9 [shape = 's32[1]{0}', space=sflag, size = 0x4, scoped, tag = 'scoped memory for tpu_custom_call.1']
    #allocation10 [shape = 'u8[512]{0}', space=vmem, size = 0x400, scoped, tag = 'input window, operand 2, single buffered']
    #allocation11 [shape = 'u8[36864]{0}', space=vmem, size = 0x9000, scoped, tag = 'input window, operand 3, single buffered']
    #allocation12 [shape = 's32[1]{0}', space=sflag, size = 0x4, scoped, tag = 'scoped memory for tpu_custom_call.1']
    #allocation13 [shape = 'u8[36864]{0}', space=vmem, size = 0x9000, scoped, tag = 'input window, operand 4, single buffered']
    #allocation14 [shape = 'u8[294912]{0}', space=vmem, size = 0x48000, scoped, tag = 'input window, operand 5, single buffered']
    #allocation15 [shape = 's32[1]{0}', space=sflag, size = 0x4, scoped, tag = 'scoped memory for tpu_custom_call.1']
    #allocation16 [shape = 'u8[512]{0}', space=vmem, size = 0x400, scoped, tag = 'input window, operand 6, single buffered']
    #allocation17 [shape = 'u8[102400]{0}', space=vmem, size = 0x19000, scoped, tag = 'input window, operand 7, single buffered']
    #allocation18 [shape = 's32[1]{0}', space=sflag, size = 0x4, scoped, tag = 'scoped memory for tpu_custom_call.1']
    #allocation19 [shape = 'u8[294912]{0}', space=vmem, size = 0x48000, scoped, tag = 'input window, operand 8, single buffered']
    #allocation20 [shape = 'u8[512]{0}', space=vmem, size = 0x400, scoped, tag = 'input window, operand 9, single buffered']
    #allocation21 [shape = 's32[1]{0}', space=sflag, size = 0x4, scoped, tag = 'scoped memory for tpu_custom_call.1']
    #allocation22 [shape = 'u8[102400]{0}', space=vmem, size = 0x19000, scoped, tag = 'input window, operand 10, single buffered']
    #allocation23 [shape = 'u8[147456]{0}', space=vmem, size = 0x24000, scoped, tag = 'input window, operand 11, single buffered']
    #allocation24 [shape = 's32[1]{0}', space=sflag, size = 0x4, scoped, tag = 'scoped memory for tpu_custom_call.1']
    #allocation25 [shape = 'u8[512]{0}', space=vmem, size = 0x400, scoped, tag = 'input window, operand 12, single buffered']
    #allocation26 [shape = 'u8[2048]{0}', space=vmem, size = 0x800, scoped, tag = 'input window, operand 13, single buffered']
    #allocation27 [shape = 's32[1]{0}', space=sflag, size = 0x4, scoped, tag = 'scoped memory for tpu_custom_call.1']
    #allocation28 [shape = 'u8[2048]{0}', space=vmem, size = 0x800, scoped, tag = 'input window, operand 14, single buffered']
    #allocation29 [shape = 'u8[4096]{0}', space=vmem, size = 0x1000, scoped, tag = 'output window, operand 0, single buffered']
    %20 = vsyncpa [#allocation6], 0
    %21 = vsyncpa [#allocation9], 0
    %22 = vsyncpa [#allocation12], 0
    %23 = vsyncpa [#allocation15], 0
    %24 = vsyncpa [#allocation18], 0
    %25 = vsyncpa [#allocation21], 0
    %26 = vsyncpa [#allocation24], 0
    %27 = vsyncpa [#allocation27], 0
    %28 = vsyncpa [#allocation7], 0
    // Predicated region
    $region2: #{tpu_custom_call.1} parent=1 // pred_check
      _
    $region3: #{tpu_custom_call.1} parent=1 // pred_check_branch
      %30 = sbr.rel (0) target = $region5
    $region4: #{tpu_custom_call.1} parent=1 // pred_region
      %s32 = ssub.s32 32, 32
      %33 = vsyncadd [#allocation6], %s32
      %s35 = sshll.u32 [#allocation5], 4
      %s36 = int_to_ptr.vmem [resolvable:$true] %s35
      %38 = dma.hbm_to_vmem [thread:$0]  %s0, 32, %s36, [#allocation6]
    $region5: #{tpu_custom_call.1} parent=1 // pred_fallthru
      _
    // Predicated region
    $region6: #{tpu_custom_call.1} parent=1 // pred_check
      _
    $region7: #{tpu_custom_call.1} parent=1 // pred_check_branch
      %40 = sbr.rel (0) target = $region9
    $region8: #{tpu_custom_call.1} parent=1 // pred_region
      %s42 = ssub.s32 4096, 4096
      %43 = vsyncadd [#allocation9], %s42
      %s44 = sshll.u32 [#allocation8], 4
      %s45 = int_to_ptr.vmem [resolvable:$true] %s44
      %50 = dma.hbm_to_vmem [thread:$0]  %s1, 4096, %s45, [#allocation9], 1024, 1024, 64
    $region9: #{tpu_custom_call.1} parent=1 // pred_fallthru
      _
    // Predicated region
    $region10: #{tpu_custom_call.1} parent=1 // pred_check
      _
    $region11: #{tpu_custom_call.1} parent=1 // pred_check_branch
      %52 = sbr.rel (0) target = $region13
    $region12: #{tpu_custom_call.1} parent=1 // pred_region
      %s54 = ssub.s32 16, 16
      %55 = vsyncadd [#allocation9], %s54
      %s57 = sshll.u32 [#allocation10], 4
      %s58 = int_to_ptr.vmem [resolvable:$true] %s57
      %60 = dma.hbm_to_vmem [thread:$0]  %s2, 16, %s58, [#allocation9]
    $region13: #{tpu_custom_call.1} parent=1 // pred_fallthru
      _
    // Predicated region
    $region14: #{tpu_custom_call.1} parent=1 // pred_check
      _
    $region15: #{tpu_custom_call.1} parent=1 // pred_check_branch
      %62 = sbr.rel (0) target = $region17
    $region16: #{tpu_custom_call.1} parent=1 // pred_region
      %s64 = ssub.s32 1152, 1152
      %65 = vsyncadd [#allocation12], %s64
      %s66 = sshll.u32 [#allocation11], 4
      %s67 = int_to_ptr.vmem [resolvable:$true] %s66
      %72 = dma.hbm_to_vmem [thread:$0]  %s3, 1152, %s67, [#allocation12], 128, 128, 8
    $region17: #{tpu_custom_call.1} parent=1 // pred_fallthru
      _
    // Predicated region
    $region18: #{tpu_custom_call.1} parent=1 // pred_check
      _
    $region19: #{tpu_custom_call.1} parent=1 // pred_check_branch
      %74 = sbr.rel (0) target = $region21
    $region20: #{tpu_custom_call.1} parent=1 // pred_region
      %s76 = ssub.s32 1152, 1152
      %77 = vsyncadd [#allocation12], %s76
      %s78 = sshll.u32 [#allocation13], 4
      %s79 = int_to_ptr.vmem [resolvable:$true] %s78
      %84 = dma.hbm_to_vmem [thread:$0]  %s4, 1152, %s79, [#allocation12], 128, 128, 8
    $region21: #{tpu_custom_call.1} parent=1 // pred_fallthru
      _
    // Predicated region
    $region22: #{tpu_custom_call.1} parent=1 // pred_check
      _
    $region23: #{tpu_custom_call.1} parent=1 // pred_check_branch
      %86 = sbr.rel (0) target = $region25
    $region24: #{tpu_custom_call.1} parent=1 // pred_region
      %s88 = ssub.s32 9216, 9216
      %89 = vsyncadd [#allocation15], %s88
      %s90 = sshll.u32 [#allocation14], 4
      %s91 = int_to_ptr.vmem [resolvable:$true] %s90
      %96 = dma.hbm_to_vmem [thread:$0]  %s5, 9216, %s91, [#allocation15], 128, 128, 8
    $region25: #{tpu_custom_call.1} parent=1 // pred_fallthru
      _
    // Predicated region
    $region26: #{tpu_custom_call.1} parent=1 // pred_check
      _
    $region27: #{tpu_custom_call.1} parent=1 // pred_check_branch
      %98 = sbr.rel (0) target = $region29
    $region28: #{tpu_custom_call.1} parent=1 // pred_region
      %s100 = ssub.s32 16, 16
      %101 = vsyncadd [#allocation15], %s100
      %s103 = sshll.u32 [#allocation16], 4
      %s104 = int_to_ptr.vmem [resolvable:$true] %s103
      %106 = dma.hbm_to_vmem [thread:$0]  %s6, 16, %s104, [#allocation15]
    $region29: #{tpu_custom_call.1} parent=1 // pred_fallthru
      _
    // Predicated region
    $region30: #{tpu_custom_call.1} parent=1 // pred_check
      _
    $region31: #{tpu_custom_call.1} parent=1 // pred_check_branch
      %108 = sbr.rel (0) target = $region33
    $region32: #{tpu_custom_call.1} parent=1 // pred_region
      %s110 = ssub.s32 3200, 3200
      %111 = vsyncadd [#allocation18], %s110
      %s112 = sshll.u32 [#allocation17], 4
      %s113 = int_to_ptr.vmem [resolvable:$true] %s112
      %118 = dma.hbm_to_vmem [thread:$0]  %s7, 3200, %s113, [#allocation18], 128, 128, 8
    $region33: #{tpu_custom_call.1} parent=1 // pred_fallthru
      _
    // Predicated region
    $region34: #{tpu_custom_call.1} parent=1 // pred_check
      _
    $region35: #{tpu_custom_call.1} parent=1 // pred_check_branch
      %120 = sbr.rel (0) target = $region37
    $region36: #{tpu_custom_call.1} parent=1 // pred_region
      %s122 = ssub.s32 9216, 9216
      %123 = vsyncadd [#allocation18], %s122
      %s124 = sshll.u32 [#allocation19], 4
      %s125 = int_to_ptr.vmem [resolvable:$true] %s124
      %130 = dma.hbm_to_vmem [thread:$0]  %s8, 9216, %s125, [#allocation18], 128, 128, 8
    $region37: #{tpu_custom_call.1} parent=1 // pred_fallthru
      _
    // Predicated region
    $region38: #{tpu_custom_call.1} parent=1 // pred_check
      _
    $region39: #{tpu_custom_call.1} parent=1 // pred_check_branch
      %132 = sbr.rel (0) target = $region41
    $region40: #{tpu_custom_call.1} parent=1 // pred_region
      %s134 = ssub.s32 16, 16
      %135 = vsyncadd [#allocation21], %s134
      %s137 = sshll.u32 [#allocation20], 4
      %s138 = int_to_ptr.vmem [resolvable:$true] %s137
      %140 = dma.hbm_to_vmem [thread:$0]  %s9, 16, %s138, [#allocation21]
    $region41: #{tpu_custom_call.1} parent=1 // pred_fallthru
      _
    // Predicated region
    $region42: #{tpu_custom_call.1} parent=1 // pred_check
      _
    $region43: #{tpu_custom_call.1} parent=1 // pred_check_branch
      %142 = sbr.rel (0) target = $region45
    $region44: #{tpu_custom_call.1} parent=1 // pred_region
      %s144 = ssub.s32 3200, 3200
      %145 = vsyncadd [#allocation21], %s144
      %s146 = sshll.u32 [#allocation22], 4
      %s147 = int_to_ptr.vmem [resolvable:$true] %s146
      %152 = dma.hbm_to_vmem [thread:$0]  %s10, 3200, %s147, [#allocation21], 128, 128, 8
    $region45: #{tpu_custom_call.1} parent=1 // pred_fallthru
      _
    // Predicated region
    $region46: #{tpu_custom_call.1} parent=1 // pred_check
      _
    $region47: #{tpu_custom_call.1} parent=1 // pred_check_branch
      %154 = sbr.rel (0) target = $region49
    $region48: #{tpu_custom_call.1} parent=1 // pred_region
      %s156 = ssub.s32 4608, 4608
      %157 = vsyncadd [#allocation24], %s156
      %s158 = sshll.u32 [#allocation23], 4
      %s159 = int_to_ptr.vmem [resolvable:$true] %s158
      %164 = dma.hbm_to_vmem [thread:$0]  %s11, 4608, %s159, [#allocation24], 128, 128, 8
    $region49: #{tpu_custom_call.1} parent=1 // pred_fallthru
      _
    // Predicated region
    $region50: #{tpu_custom_call.1} parent=1 // pred_check
      _
    $region51: #{tpu_custom_call.1} parent=1 // pred_check_branch
      %166 = sbr.rel (0) target = $region53
    $region52: #{tpu_custom_call.1} parent=1 // pred_region
      %s168 = ssub.s32 16, 16
      %169 = vsyncadd [#allocation24], %s168
      %s171 = sshll.u32 [#allocation25], 4
      %s172 = int_to_ptr.vmem [resolvable:$true] %s171
      %174 = dma.hbm_to_vmem [thread:$0]  %s12, 16, %s172, [#allocation24]
    $region53: #{tpu_custom_call.1} parent=1 // pred_fallthru
      _
    // Predicated region
    $region54: #{tpu_custom_call.1} parent=1 // pred_check
      _
    $region55: #{tpu_custom_call.1} parent=1 // pred_check_branch
      %176 = sbr.rel (0) target = $region57
    $region56: #{tpu_custom_call.1} parent=1 // pred_region
      %s178 = ssub.s32 64, 64
      %179 = vsyncadd [#allocation27], %s178
      %s181 = sshll.u32 [#allocation26], 4
      %s182 = int_to_ptr.vmem [resolvable:$true] %s181
      %184 = dma.hbm_to_vmem [thread:$0]  %s13, 64, %s182, [#allocation27]
    $region57: #{tpu_custom_call.1} parent=1 // pred_fallthru
      _
    // Predicated region
    $region58: #{tpu_custom_call.1} parent=1 // pred_check
      _
    $region59: #{tpu_custom_call.1} parent=1 // pred_check_branch
      %186 = sbr.rel (0) target = $region61
    $region60: #{tpu_custom_call.1} parent=1 // pred_region
      %s188 = ssub.s32 64, 64
      %189 = vsyncadd [#allocation27], %s188
      %s191 = sshll.u32 [#allocation28], 4
      %s192 = int_to_ptr.vmem [resolvable:$true] %s191
      %194 = dma.hbm_to_vmem [thread:$0]  %s14, 64, %s192, [#allocation27]
    $region61: #{tpu_custom_call.1} parent=1 // pred_fallthru
      _
    // Predicated region
    $region62: #{tpu_custom_call.1} parent=1 // pred_check
      _
    $region63: #{tpu_custom_call.1} parent=1 // pred_check_branch
      %196 = sbr.rel (0) target = $region65
    $region64: #{tpu_custom_call.1} parent=1 // pred_region
      %197 = dma.done [#allocation6], 32
    $region65: #{tpu_custom_call.1} parent=1 // pred_fallthru
      _
    // Predicated region
    $region66: #{tpu_custom_call.1} parent=1 // pred_check
      _
    $region67: #{tpu_custom_call.1} parent=1 // pred_check_branch
      %199 = sbr.rel (0) target = $region69
    $region68: #{tpu_custom_call.1} parent=1 // pred_region
      %200 = dma.done [#allocation9], 4096
    $region69: #{tpu_custom_call.1} parent=1 // pred_fallthru
      _
    // Predicated region
    $region70: #{tpu_custom_call.1} parent=1 // pred_check
      _
    $region71: #{tpu_custom_call.1} parent=1 // pred_check_branch
      %202 = sbr.rel (0) target = $region73
    $region72: #{tpu_custom_call.1} parent=1 // pred_region
      %203 = dma.done [#allocation9], 16
    $region73: #{tpu_custom_call.1} parent=1 // pred_fallthru
      _
    // Predicated region
    $region74: #{tpu_custom_call.1} parent=1 // pred_check
      _
    $region75: #{tpu_custom_call.1} parent=1 // pred_check_branch
      %205 = sbr.rel (0) target = $region77
    $region76: #{tpu_custom_call.1} parent=1 // pred_region
      %206 = dma.done [#allocation12], 1152
    $region77: #{tpu_custom_call.1} parent=1 // pred_fallthru
      _
    // Predicated region
    $region78: #{tpu_custom_call.1} parent=1 // pred_check
      _
    $region79: #{tpu_custom_call.1} parent=1 // pred_check_branch
      %208 = sbr.rel (0) target = $region81
    $region80: #{tpu_custom_call.1} parent=1 // pred_region
      %209 = dma.done [#allocation12], 1152
    $region81: #{tpu_custom_call.1} parent=1 // pred_fallthru
      _
    // Predicated region
    $region82: #{tpu_custom_call.1} parent=1 // pred_check
      _
    $region83: #{tpu_custom_call.1} parent=1 // pred_check_branch
      %211 = sbr.rel (0) target = $region85
    $region84: #{tpu_custom_call.1} parent=1 // pred_region
      %212 = dma.done [#allocation15], 9216
    $region85: #{tpu_custom_call.1} parent=1 // pred_fallthru
      _
    // Predicated region
    $region86: #{tpu_custom_call.1} parent=1 // pred_check
      _
    $region87: #{tpu_custom_call.1} parent=1 // pred_check_branch
      %214 = sbr.rel (0) target = $region89
    $region88: #{tpu_custom_call.1} parent=1 // pred_region
      %215 = dma.done [#allocation15], 16
    $region89: #{tpu_custom_call.1} parent=1 // pred_fallthru
      _
    // Predicated region
    $region90: #{tpu_custom_call.1} parent=1 // pred_check
      _
    $region91: #{tpu_custom_call.1} parent=1 // pred_check_branch
      %217 = sbr.rel (0) target = $region93
    $region92: #{tpu_custom_call.1} parent=1 // pred_region
      %218 = dma.done [#allocation18], 3200
    $region93: #{tpu_custom_call.1} parent=1 // pred_fallthru
      _
    // Predicated region
    $region94: #{tpu_custom_call.1} parent=1 // pred_check
      _
    $region95: #{tpu_custom_call.1} parent=1 // pred_check_branch
      %220 = sbr.rel (0) target = $region97
    $region96: #{tpu_custom_call.1} parent=1 // pred_region
      %221 = dma.done [#allocation18], 9216
    $region97: #{tpu_custom_call.1} parent=1 // pred_fallthru
      _
    // Predicated region
    $region98: #{tpu_custom_call.1} parent=1 // pred_check
      _
    $region99: #{tpu_custom_call.1} parent=1 // pred_check_branch
      %223 = sbr.rel (0) target = $region101
    $region100: #{tpu_custom_call.1} parent=1 // pred_region
      %224 = dma.done [#allocation21], 16
    $region101: #{tpu_custom_call.1} parent=1 // pred_fallthru
      _
    // Predicated region
    $region102: #{tpu_custom_call.1} parent=1 // pred_check
      _
    $region103: #{tpu_custom_call.1} parent=1 // pred_check_branch
      %226 = sbr.rel (0) target = $region105
    $region104: #{tpu_custom_call.1} parent=1 // pred_region
      %227 = dma.done [#allocation21], 3200
    $region105: #{tpu_custom_call.1} parent=1 // pred_fallthru
      _
    // Predicated region
    $region106: #{tpu_custom_call.1} parent=1 // pred_check
      _
    $region107: #{tpu_custom_call.1} parent=1 // pred_check_branch
      %229 = sbr.rel (0) target = $region109
    $region108: #{tpu_custom_call.1} parent=1 // pred_region
      %230 = dma.done [#allocation24], 4608
    $region109: #{tpu_custom_call.1} parent=1 // pred_fallthru
      _
    // Predicated region
    $region110: #{tpu_custom_call.1} parent=1 // pred_check
      _
    $region111: #{tpu_custom_call.1} parent=1 // pred_check_branch
      %232 = sbr.rel (0) target = $region113
    $region112: #{tpu_custom_call.1} parent=1 // pred_region
      %233 = dma.done [#allocation24], 16
    $region113: #{tpu_custom_call.1} parent=1 // pred_fallthru
      _
    // Predicated region
    $region114: #{tpu_custom_call.1} parent=1 // pred_check
      _
    $region115: #{tpu_custom_call.1} parent=1 // pred_check_branch
      %235 = sbr.rel (0) target = $region117
    $region116: #{tpu_custom_call.1} parent=1 // pred_region
      %236 = dma.done [#allocation27], 64
    $region117: #{tpu_custom_call.1} parent=1 // pred_fallthru
      _
    // Predicated region
    $region118: #{tpu_custom_call.1} parent=1 // pred_check
      _
    $region119: #{tpu_custom_call.1} parent=1 // pred_check_branch
      %238 = sbr.rel (0) target = $region121
    $region120: #{tpu_custom_call.1} parent=1 // pred_region
      %239 = dma.done [#allocation27], 64
    $region121: #{tpu_custom_call.1} parent=1 // pred_fallthru
      _
    %v240 = vld [vmem:[#allocation5] sm:$0x3]
    %v241 = vmul.f32 %v240, %v240
    %vm242 = vcmask 254976
    %v243 = vsel %vm242, %v241, 0.0
    %244 = vadd.xlane.f32.xlu0 %v243
    %v245 = vpop.xlane.xlu0 %244
    %v246 = vrcp.pop 32.0
    %v247 = vmul.f32 %v245, %v246
    %v248 = vadd.f32 %v247, 1e-08
    %v249 = vrsqrt.pop %v248
    %v250 = vmul.f32 %v240, %v249
    %v251 = vmul.f32 %v250, %v250
    %v252 = vsel %vm242, %v251, 0.0
    %253 = vadd.xlane.f32.xlu0 %v252
    %v254 = vpop.xlane.xlu0 %253
    %v255 = vmul.f32 %v254, %v246
    %v256 = vadd.f32 %v255, 1e-08
    %v257 = vrsqrt.pop %v256
    %v258 = vmul.f32 %v250, %v257
    %v259 = vld [vmem:[#allocation8] sm:$0xff]
    %v260 = vld [vmem:[#allocation8 + $0x8] sm:$0xff]
    %v261 = vld [vmem:[#allocation8 + $0x10] sm:$0xff]
    %v262 = vld [vmem:[#allocation8 + $0x18] sm:$0xff]
    %v263 = vld [vmem:[#allocation8 + $0x20] sm:$0xff]
    %v264 = vld [vmem:[#allocation8 + $0x28] sm:$0xff]
    %v265 = vld [vmem:[#allocation8 + $0x30] sm:$0xff]
    %v266 = vld [vmem:[#allocation8 + $0x38] sm:$0xff]
    %v267 = vld [vmem:[#allocation8 + $0x40] sm:$0xff]
    %v268 = vld [vmem:[#allocation8 + $0x48] sm:$0xff]
    %v269 = vld [vmem:[#allocation8 + $0x50] sm:$0xff]
    %v270 = vld [vmem:[#allocation8 + $0x58] sm:$0xff]
    %v271 = vld [vmem:[#allocation8 + $0x60] sm:$0xff]
    %v272 = vld [vmem:[#allocation8 + $0x68] sm:$0xff]
    %v273 = vld [vmem:[#allocation8 + $0x70] sm:$0xff]
    %v274 = vld [vmem:[#allocation8 + $0x78] sm:$0xff]
    %v275 = vld [vmem:[#allocation8 + $0x80] sm:$0xff]
    %v276 = vld [vmem:[#allocation8 + $0x88] sm:$0xff]
    %v277 = vld [vmem:[#allocation8 + $0x90] sm:$0xff]
    %v278 = vld [vmem:[#allocation8 + $0x98] sm:$0xff]
    %v279 = vld [vmem:[#allocation8 + $0xa0] sm:$0xff]
    %v280 = vld [vmem:[#allocation8 + $0xa8] sm:$0xff]
    %v281 = vld [vmem:[#allocation8 + $0xb0] sm:$0xff]
    %v282 = vld [vmem:[#allocation8 + $0xb8] sm:$0xff]
    %v283 = vld [vmem:[#allocation8 + $0xc0] sm:$0xff]
    %v284 = vld [vmem:[#allocation8 + $0xc8] sm:$0xff]
    %v285 = vld [vmem:[#allocation8 + $0xd0] sm:$0xff]
    %v286 = vld [vmem:[#allocation8 + $0xd8] sm:$0xff]
    %v287 = vld [vmem:[#allocation8 + $0xe0] sm:$0xff]
    %v288 = vld [vmem:[#allocation8 + $0xe8] sm:$0xff]
    %v289 = vld [vmem:[#allocation8 + $0xf0] sm:$0xff]
    %v290 = vld [vmem:[#allocation8 + $0xf8] sm:$0xff]
    %vm291 = vcmask 261120
    %v293 = vsel %vm291, %v258, 0
    %295 = vmatprep.subr.mxu0 %v260
    %296 = vmatpush1.msra.mxu0 %v259
    %297 = vmatprep.subr.mxu0 %v268
    %298 = vmatpush1.msra.mxu0 %v267
    %299 = vmatprep.subr.mxu0 %v276
    %300 = vmatpush1.msra.mxu0 %v275
    %301 = vmatprep.subr.mxu0 %v284
    %302 = vmatpush1.msra.mxu0 %v283
    %303 = vmatprep.subr.mxu0 0.0
    %304 = vmatpush1.msra.mxu0 0.0
    %305 = vmatprep.subr.mxu0 0.0
    %306 = vmatpush1.msra.mxu0 0.0
    %307 = vmatprep.subr.mxu0 0.0
    %308 = vmatpush1.msra.mxu0 0.0
    %309 = vmatprep.subr.mxu0 0.0
    %310 = vmatpush1.msra.mxu0 0.0
    %311 = vmatprep.subr.mxu0 0.0
    %312 = vmatpush1.msra.mxu0 0.0
    %313 = vmatprep.subr.mxu0 0.0
    %314 = vmatpush1.msra.mxu0 0.0
    %315 = vmatprep.subr.mxu0 0.0
    %316 = vmatpush1.msra.mxu0 0.0
    %317 = vmatprep.subr.mxu0 0.0
    %318 = vmatpush1.msra.mxu0 0.0
    %319 = vmatprep.subr.mxu0 0.0
    %320 = vmatpush1.msra.mxu0 0.0
    %321 = vmatprep.subr.mxu0 0.0
    %322 = vmatpush1.msra.mxu0 0.0
    %323 = vmatprep.subr.mxu0 0.0
    %324 = vmatpush1.msra.mxu0 0.0
    %325 = vmatprep.subr.mxu0 0.0
    %326 = vmatpush1.msra.mxu0 0.0
    %327 = vmatprep.subr.mxu0 0.0
    %328 = vmatpush1.msra.mxu0 0.0
    %329 = vmatprep.subr.mxu0 0.0
    %330 = vmatpush1.msra.mxu0 0.0
    %331 = vmatprep.subr.mxu0 0.0
    %332 = vmatpush1.msra.mxu0 0.0
    %333 = vmatprep.subr.mxu0 0.0
    %334 = vmatpush1.msra.mxu0 0.0
    %335 = vmatprep.subr.mxu0 0.0
    %336 = vmatpush1.msra.mxu0 0.0
    %337 = vmatprep.subr.mxu0 0.0
    %338 = vmatpush1.msra.mxu0 0.0
    %339 = vmatprep.subr.mxu0 0.0
    %340 = vmatpush1.msra.mxu0 0.0
    %341 = vmatprep.subr.mxu0 0.0
    %342 = vmatpush1.msra.mxu0 0.0
    %343 = vmatprep.subr.mxu0 0.0
    %344 = vmatpush1.msra.mxu0 0.0
    %345 = vmatprep.subr.mxu0 0.0
    %346 = vmatpush1.msra.mxu0 0.0
    %347 = vmatprep.subr.mxu0 0.0
    %348 = vmatpush1.msra.mxu0 0.0
    %349 = vmatprep.subr.mxu0 0.0
    %350 = vmatpush1.msra.mxu0 0.0
    %351 = vmatprep.subr.mxu0 0.0
    %352 = vmatpush1.msra.mxu0 0.0
    %353 = vmatprep.subr.mxu0 0.0
    %354 = vmatpush1.msra.mxu0 0.0
    %355 = vmatprep.subr.mxu0 0.0
    %356 = vmatpush1.msra.mxu0 0.0
    %357 = vmatprep.subr.mxu0 0.0
    %358 = vmatpush1.msra.mxu0 0.0
    %359 = vmatprep.mubr.f32.mxu0 0.0
    %360 = vmatmul.mubr.f32.gmra.mrb[0].mxu0 %v293
    %v361 = vpop.f32.mrb[0].mxu0
    %v362 = vadd.f32 0.0, %v361
    %v363 = vpop.f32.mrb[0].mxu0
    %v364 = vadd.f32 0.0, %v363
    %365 = vdwg.mxu0
    %366 = vmatprep.subr.mxu0 %v262
    %367 = vmatpush1.msra.mxu0 %v261
    %368 = vmatprep.subr.mxu0 %v270
    %369 = vmatpush1.msra.mxu0 %v269
    %370 = vmatprep.subr.mxu0 %v278
    %371 = vmatpush1.msra.mxu0 %v277
    %372 = vmatprep.subr.mxu0 %v286
    %373 = vmatpush1.msra.mxu0 %v285
    %374 = vmatprep.subr.mxu0 0.0
    %375 = vmatpush1.msra.mxu0 0.0
    %376 = vmatprep.subr.mxu0 0.0
    %377 = vmatpush1.msra.mxu0 0.0
    %378 = vmatprep.subr.mxu0 0.0
    %379 = vmatpush1.msra.mxu0 0.0
    %380 = vmatprep.subr.mxu0 0.0
    %381 = vmatpush1.msra.mxu0 0.0
    %382 = vmatprep.subr.mxu0 0.0
    %383 = vmatpush1.msra.mxu0 0.0
    %384 = vmatprep.subr.mxu0 0.0
    %385 = vmatpush1.msra.mxu0 0.0
    %386 = vmatprep.subr.mxu0 0.0
    %387 = vmatpush1.msra.mxu0 0.0
    %388 = vmatprep.subr.mxu0 0.0
    %389 = vmatpush1.msra.mxu0 0.0
    %390 = vmatprep.subr.mxu0 0.0
    %391 = vmatpush1.msra.mxu0 0.0
    %392 = vmatprep.subr.mxu0 0.0
    %393 = vmatpush1.msra.mxu0 0.0
    %394 = vmatprep.subr.mxu0 0.0
    %395 = vmatpush1.msra.mxu0 0.0
    %396 = vmatprep.subr.mxu0 0.0
    %397 = vmatpush1.msra.mxu0 0.0
    %398 = vmatprep.subr.mxu0 0.0
    %399 = vmatpush1.msra.mxu0 0.0
    %400 = vmatprep.subr.mxu0 0.0
    %401 = vmatpush1.msra.mxu0 0.0
    %402 = vmatprep.subr.mxu0 0.0
    %403 = vmatpush1.msra.mxu0 0.0
    %404 = vmatprep.subr.mxu0 0.0
    %405 = vmatpush1.msra.mxu0 0.0
    %406 = vmatprep.subr.mxu0 0.0
    %407 = vmatpush1.msra.mxu0 0.0
    %408 = vmatprep.subr.mxu0 0.0
    %409 = vmatpush1.msra.mxu0 0.0
    %410 = vmatprep.subr.mxu0 0.0
    %411 = vmatpush1.msra.mxu0 0.0
    %412 = vmatprep.subr.mxu0 0.0
    %413 = vmatpush1.msra.mxu0 0.0
    %414 = vmatprep.subr.mxu0 0.0
    %415 = vmatpush1.msra.mxu0 0.0
    %416 = vmatprep.subr.mxu0 0.0
    %417 = vmatpush1.msra.mxu0 0.0
    %418 = vmatprep.subr.mxu0 0.0
    %419 = vmatpush1.msra.mxu0 0.0
    %420 = vmatprep.subr.mxu0 0.0
    %421 = vmatpush1.msra.mxu0 0.0
    %422 = vmatprep.subr.mxu0 0.0
    %423 = vmatpush1.msra.mxu0 0.0
    %424 = vmatprep.subr.mxu0 0.0
    %425 = vmatpush1.msra.mxu0 0.0
    %426 = vmatprep.subr.mxu0 0.0
    %427 = vmatpush1.msra.mxu0 0.0
    %428 = vmatprep.subr.mxu0 0.0
    %429 = vmatpush1.msra.mxu0 0.0
    %430 = vmatprep.mubr.f32.mxu0 0.0
    %431 = vmatmul.mubr.f32.gmra.mrb[0].mxu0 %v293
    %v432 = vpop.f32.mrb[0].mxu0
    %v433 = vadd.f32 0.0, %v432
    %v434 = vpop.f32.mrb[0].mxu0
    %v435 = vadd.f32 0.0, %v434
    %436 = vdwg.mxu0
    %437 = vmatprep.subr.mxu0 %v264
    %438 = vmatpush1.msra.mxu0 %v263
    %439 = vmatprep.subr.mxu0 %v272
    %440 = vmatpush1.msra.mxu0 %v271
    %441 = vmatprep.subr.mxu0 %v280
    %442 = vmatpush1.msra.mxu0 %v279
    %443 = vmatprep.subr.mxu0 %v288
    %444 = vmatpush1.msra.mxu0 %v287
    %445 = vmatprep.subr.mxu0 0.0
    %446 = vmatpush1.msra.mxu0 0.0
    %447 = vmatprep.subr.mxu0 0.0
    %448 = vmatpush1.msra.mxu0 0.0
    %449 = vmatprep.subr.mxu0 0.0
    %450 = vmatpush1.msra.mxu0 0.0
    %451 = vmatprep.subr.mxu0 0.0
    %452 = vmatpush1.msra.mxu0 0.0
    %453 = vmatprep.subr.mxu0 0.0
    %454 = vmatpush1.msra.mxu0 0.0
    %455 = vmatprep.subr.mxu0 0.0
    %456 = vmatpush1.msra.mxu0 0.0
    %457 = vmatprep.subr.mxu0 0.0
    %458 = vmatpush1.msra.mxu0 0.0
    %459 = vmatprep.subr.mxu0 0.0
    %460 = vmatpush1.msra.mxu0 0.0
    %461 = vmatprep.subr.mxu0 0.0
    %462 = vmatpush1.msra.mxu0 0.0
    %463 = vmatprep.subr.mxu0 0.0
    %464 = vmatpush1.msra.mxu0 0.0
    %465 = vmatprep.subr.mxu0 0.0
    %466 = vmatpush1.msra.mxu0 0.0
    %467 = vmatprep.subr.mxu0 0.0
    %468 = vmatpush1.msra.mxu0 0.0
    %469 = vmatprep.subr.mxu0 0.0
    %470 = vmatpush1.msra.mxu0 0.0
    %471 = vmatprep.subr.mxu0 0.0
    %472 = vmatpush1.msra.mxu0 0.0
    %473 = vmatprep.subr.mxu0 0.0
    %474 = vmatpush1.msra.mxu0 0.0
    %475 = vmatprep.subr.mxu0 0.0
    %476 = vmatpush1.msra.mxu0 0.0
    %477 = vmatprep.subr.mxu0 0.0
    %478 = vmatpush1.msra.mxu0 0.0
    %479 = vmatprep.subr.mxu0 0.0
    %480 = vmatpush1.msra.mxu0 0.0
    %481 = vmatprep.subr.mxu0 0.0
    %482 = vmatpush1.msra.mxu0 0.0
    %483 = vmatprep.subr.mxu0 0.0
    %484 = vmatpush1.msra.mxu0 0.0
    %485 = vmatprep.subr.mxu0 0.0
    %486 = vmatpush1.msra.mxu0 0.0
    %487 = vmatprep.subr.mxu0 0.0
    %488 = vmatpush1.msra.mxu0 0.0
    %489 = vmatprep.subr.mxu0 0.0
    %490 = vmatpush1.msra.mxu0 0.0
    %491 = vmatprep.subr.mxu0 0.0
    %492 = vmatpush1.msra.mxu0 0.0
    %493 = vmatprep.subr.mxu0 0.0
    %494 = vmatpush1.msra.mxu0 0.0
    %495 = vmatprep.subr.mxu0 0.0
    %496 = vmatpush1.msra.mxu0 0.0
    %497 = vmatprep.subr.mxu0 0.0
    %498 = vmatpush1.msra.mxu0 0.0
    %499 = vmatprep.subr.mxu0 0.0
    %500 = vmatpush1.msra.mxu0 0.0
    %501 = vmatprep.mubr.f32.mxu0 0.0
    %502 = vmatmul.mubr.f32.gmra.mrb[0].mxu0 %v293
    %v503 = vpop.f32.mrb[0].mxu0
    %v504 = vadd.f32 0.0, %v503
    %v505 = vpop.f32.mrb[0].mxu0
    %v506 = vadd.f32 0.0, %v505
    %507 = vdwg.mxu0
    %508 = vmatprep.subr.mxu0 %v266
    %509 = vmatpush1.msra.mxu0 %v265
    %510 = vmatprep.subr.mxu0 %v274
    %511 = vmatpush1.msra.mxu0 %v273
    %512 = vmatprep.subr.mxu0 %v282
    %513 = vmatpush1.msra.mxu0 %v281
    %514 = vmatprep.subr.mxu0 %v290
    %515 = vmatpush1.msra.mxu0 %v289
    %516 = vmatprep.subr.mxu0 0.0
    %517 = vmatpush1.msra.mxu0 0.0
    %518 = vmatprep.subr.mxu0 0.0
    %519 = vmatpush1.msra.mxu0 0.0
    %520 = vmatprep.subr.mxu0 0.0
    %521 = vmatpush1.msra.mxu0 0.0
    %522 = vmatprep.subr.mxu0 0.0
    %523 = vmatpush1.msra.mxu0 0.0
    %524 = vmatprep.subr.mxu0 0.0
    %525 = vmatpush1.msra.mxu0 0.0
    %526 = vmatprep.subr.mxu0 0.0
    %527 = vmatpush1.msra.mxu0 0.0
    %528 = vmatprep.subr.mxu0 0.0
    %529 = vmatpush1.msra.mxu0 0.0
    %530 = vmatprep.subr.mxu0 0.0
    %531 = vmatpush1.msra.mxu0 0.0
    %532 = vmatprep.subr.mxu0 0.0
    %533 = vmatpush1.msra.mxu0 0.0
    %534 = vmatprep.subr.mxu0 0.0
    %535 = vmatpush1.msra.mxu0 0.0
    %536 = vmatprep.subr.mxu0 0.0
    %537 = vmatpush1.msra.mxu0 0.0
    %538 = vmatprep.subr.mxu0 0.0
    %539 = vmatpush1.msra.mxu0 0.0
    %540 = vmatprep.subr.mxu0 0.0
    %541 = vmatpush1.msra.mxu0 0.0
    %542 = vmatprep.subr.mxu0 0.0
    %543 = vmatpush1.msra.mxu0 0.0
    %544 = vmatprep.subr.mxu0 0.0
    %545 = vmatpush1.msra.mxu0 0.0
    %546 = vmatprep.subr.mxu0 0.0
    %547 = vmatpush1.msra.mxu0 0.0
    %548 = vmatprep.subr.mxu0 0.0
    %549 = vmatpush1.msra.mxu0 0.0
    %550 = vmatprep.subr.mxu0 0.0
    %551 = vmatpush1.msra.mxu0 0.0
    %552 = vmatprep.subr.mxu0 0.0
    %553 = vmatpush1.msra.mxu0 0.0
    %554 = vmatprep.subr.mxu0 0.0
    %555 = vmatpush1.msra.mxu0 0.0
    %556 = vmatprep.subr.mxu0 0.0
    %557 = vmatpush1.msra.mxu0 0.0
    %558 = vmatprep.subr.mxu0 0.0
    %559 = vmatpush1.msra.mxu0 0.0
    %560 = vmatprep.subr.mxu0 0.0
    %561 = vmatpush1.msra.mxu0 0.0
    %562 = vmatprep.subr.mxu0 0.0
    %563 = vmatpush1.msra.mxu0 0.0
    %564 = vmatprep.subr.mxu0 0.0
    %565 = vmatpush1.msra.mxu0 0.0
    %566 = vmatprep.subr.mxu0 0.0
    %567 = vmatpush1.msra.mxu0 0.0
    %568 = vmatprep.subr.mxu0 0.0
    %569 = vmatpush1.msra.mxu0 0.0
    %570 = vmatprep.subr.mxu0 0.0
    %571 = vmatpush1.msra.mxu0 0.0
    %572 = vmatprep.mubr.f32.mxu0 0.0
    %573 = vmatmul.mubr.f32.gmra.mrb[0].mxu0 %v293
    %v574 = vpop.f32.mrb[0].mxu0
    %v575 = vadd.f32 0.0, %v574
    %v576 = vpop.f32.mrb[0].mxu0
    %v577 = vadd.f32 0.0, %v576
    %578 = vdwg.mxu0
    %vm579 = vcmask 517120
    %580 = vst.msk [vmem:[#allocation4] sm:$0x3] %vm579, %v362
    %582 = vrot.lane.b32.xlu0 %v362, 64
    %v583 = vpop.permute.xlu0 %582
    %585 = vst.msk [vmem:[#allocation4 + $0x2] sm:$0x3] %vm579, %v583
    %586 = vst.msk [vmem:[#allocation4 + $0x4] sm:$0x3] %vm579, %v364
    %588 = vrot.lane.b32.xlu0 %v364, 64
    %v589 = vpop.permute.xlu0 %588
    %591 = vst.msk [vmem:[#allocation4 + $0x6] sm:$0x3] %vm579, %v589
    %592 = vst.msk [vmem:[#allocation4 + $0x8] sm:$0x3] %vm579, %v433
    %594 = vrot.lane.b32.xlu0 %v433, 64
    %v595 = vpop.permute.xlu0 %594
    %597 = vst.msk [vmem:[#allocation4 + $0xa] sm:$0x3] %vm579, %v595
    %598 = vst.msk [vmem:[#allocation4 + $0xc] sm:$0x3] %vm579, %v435
    %600 = vrot.lane.b32.xlu0 %v435, 64
    %v601 = vpop.permute.xlu0 %600
    %603 = vst.msk [vmem:[#allocation4 + $0xe] sm:$0x3] %vm579, %v601
    %604 = vst.msk [vmem:[#allocation4 + $0x10] sm:$0x3] %vm579, %v504
    %606 = vrot.lane.b32.xlu0 %v504, 64
    %v607 = vpop.permute.xlu0 %606
    %609 = vst.msk [vmem:[#allocation4 + $0x12] sm:$0x3] %vm579, %v607
    %610 = vst.msk [vmem:[#allocation4 + $0x14] sm:$0x3] %vm579, %v506
    %612 = vrot.lane.b32.xlu0 %v506, 64
    %v613 = vpop.permute.xlu0 %612
    %615 = vst.msk [vmem:[#allocation4 + $0x16] sm:$0x3] %vm579, %v613
    %616 = vst.msk [vmem:[#allocation4 + $0x18] sm:$0x3] %vm579, %v575
    %618 = vrot.lane.b32.xlu0 %v575, 64
    %v619 = vpop.permute.xlu0 %618
    %621 = vst.msk [vmem:[#allocation4 + $0x1a] sm:$0x3] %vm579, %v619
    %622 = vst.msk [vmem:[#allocation4 + $0x1c] sm:$0x3] %vm579, %v577
    %624 = vrot.lane.b32.xlu0 %v577, 64
    %v625 = vpop.permute.xlu0 %624
    %627 = vst.msk [vmem:[#allocation4 + $0x1e] sm:$0x3] %vm579, %v625
    %v628 = vld [vmem:[#allocation4] sm:$0xff]
    %v629 = vld [vmem:[#allocation4 + $0x8] sm:$0xff]
    %v630 = vld [vmem:[#allocation4 + $0x10] sm:$0xff]
    %v631 = vld [vmem:[#allocation4 + $0x18] sm:$0xff]
    %v632 = vld [vmem:[#allocation10] sm:$0x1]
    %v634 = vlaneseq
    %v635 = vshrl.u32 %v634, 7
    %v636 = vsub.s32 0, %v635
    %v637 = vrot.slane %v632, %v636
    %v639 = vadd.f32 %v628, %v637
    %v640 = vadd.f32 %v629, %v637
    %v641 = vadd.f32 %v630, %v637
    %v642 = vadd.f32 %v631, %v637
    %vm643 = vcmp.gt.f32.partialorder %v639, 0.0
    %vm644 = vcmp.gt.f32.partialorder %v640, 0.0
    %vm645 = vcmp.gt.f32.partialorder %v641, 0.0
    %vm646 = vcmp.gt.f32.partialorder %v642, 0.0
    %v647 = vmul.f32 %v639, 0.2
    %v648 = vmul.f32 %v640, 0.2
    %v649 = vmul.f32 %v641, 0.2
    %v650 = vmul.f32 %v642, 0.2
    %v651 = vsel %vm643, %v639, %v647
    %v652 = vsel %vm644, %v640, %v648
    %v653 = vsel %vm645, %v641, %v649
    %v654 = vsel %vm646, %v642, %v650
    %v655 = vmul.f32 %v651, %v651
    %v656 = vmul.f32 %v652, %v652
    %v657 = vmul.f32 %v653, %v653
    %v658 = vmul.f32 %v654, %v654
    %vm659 = vcmask 523264
    %v660 = vsel %vm659, %v655, 0.0
    %661 = vadd.xlane.f32.xlu0 %v660
    %v662 = vpop.xlane.xlu0 %661
    %v663 = vsel %vm659, %v656, 0.0
    %664 = vadd.xlane.f32.xlu0 %v663
    %v665 = vpop.xlane.xlu0 %664
    %v666 = vsel %vm659, %v657, 0.0
    %667 = vadd.xlane.f32.xlu0 %v666
    %v668 = vpop.xlane.xlu0 %667
    %v669 = vsel %vm659, %v658, 0.0
    %670 = vadd.xlane.f32.xlu0 %v669
    %v671 = vpop.xlane.xlu0 %670
    %v672 = vrcp.pop 64.0
    %v673 = vmul.f32 %v662, %v672
    %v674 = vmul.f32 %v665, %v672
    %v675 = vmul.f32 %v668, %v672
    %v676 = vmul.f32 %v671, %v672
    %v677 = vadd.f32 %v673, 1e-08
    %v678 = vadd.f32 %v674, 1e-08
    %v679 = vadd.f32 %v675, 1e-08
    %v680 = vadd.f32 %v676, 1e-08
    %v681 = vrsqrt.pop %v677
    %v682 = vrsqrt.pop %v678
    %v683 = vrsqrt.pop %v679
    %v684 = vrsqrt.pop %v680
    %v685 = vmul.f32 %v651, %v681
    %v686 = vmul.f32 %v652, %v682
    %v687 = vmul.f32 %v653, %v683
    %v688 = vmul.f32 %v654, %v684
    %v689 = vld [vmem:[#allocation11] sm:$0xff]
    %v690 = vld [vmem:[#allocation11 + $0x8] sm:$0xff]
    %v691 = vld [vmem:[#allocation11 + $0x10] sm:$0xff]
    %v692 = vld [vmem:[#allocation11 + $0x18] sm:$0xff]
    %v693 = vld [vmem:[#allocation11 + $0x20] sm:$0xff]
    %v694 = vld [vmem:[#allocation11 + $0x28] sm:$0xff]
    %v695 = vld [vmem:[#allocation11 + $0x30] sm:$0xff]
    %v696 = vld [vmem:[#allocation11 + $0x38] sm:$0xff]
    %v697 = vld [vmem:[#allocation11 + $0x40] sm:$0xff]
    %v699 = vsel %vm291, %v689, 0
    %v702 = vsel %vm291, %v690, 0
    %v705 = vsel %vm291, %v691, 0
    %v708 = vsel %vm291, %v692, 0
    %v711 = vsel %vm291, %v693, 0
    %v714 = vsel %vm291, %v694, 0
    %v717 = vsel %vm291, %v695, 0
    %v720 = vsel %vm291, %v696, 0
    %v723 = vsel %vm291, %v697, 0
    %725 = vmatprep.subr.mxu0 0.0
    %726 = vmatpush1.msra.mxu0 %v685
    %727 = vmatprep.subr.mxu0 0.0
    %728 = vmatpush1.msra.mxu0 %v686
    %729 = vmatprep.subr.mxu0 0.0
    %730 = vmatpush1.msra.mxu0 %v687
    %731 = vmatprep.subr.mxu0 0.0
    %732 = vmatpush1.msra.mxu0 %v688
    %733 = vmatprep.subr.mxu0 0.0
    %734 = vmatpush1.msra.mxu0 0.0
    %735 = vmatprep.subr.mxu0 0.0
    %736 = vmatpush1.msra.mxu0 0.0
    %737 = vmatprep.subr.mxu0 0.0
    %738 = vmatpush1.msra.mxu0 0.0
    %739 = vmatprep.subr.mxu0 0.0
    %740 = vmatpush1.msra.mxu0 0.0
    %741 = vmatprep.subr.mxu0 0.0
    %742 = vmatpush1.msra.mxu0 0.0
    %743 = vmatprep.subr.mxu0 0.0
    %744 = vmatpush1.msra.mxu0 0.0
    %745 = vmatprep.subr.mxu0 0.0
    %746 = vmatpush1.msra.mxu0 0.0
    %747 = vmatprep.subr.mxu0 0.0
    %748 = vmatpush1.msra.mxu0 0.0
    %749 = vmatprep.subr.mxu0 0.0
    %750 = vmatpush1.msra.mxu0 0.0
    %751 = vmatprep.subr.mxu0 0.0
    %752 = vmatpush1.msra.mxu0 0.0
    %753 = vmatprep.subr.mxu0 0.0
    %754 = vmatpush1.msra.mxu0 0.0
    %755 = vmatprep.subr.mxu0 0.0
    %756 = vmatpush1.msra.mxu0 0.0
    %757 = vmatprep.subr.mxu0 0.0
    %758 = vmatpush1.msra.mxu0 0.0
    %759 = vmatprep.subr.mxu0 0.0
    %760 = vmatpush1.msra.mxu0 0.0
    %761 = vmatprep.subr.mxu0 0.0
    %762 = vmatpush1.msra.mxu0 0.0
    %763 = vmatprep.subr.mxu0 0.0
    %764 = vmatpush1.msra.mxu0 0.0
    %765 = vmatprep.subr.mxu0 0.0
    %766 = vmatpush1.msra.mxu0 0.0
    %767 = vmatprep.subr.mxu0 0.0
    %768 = vmatpush1.msra.mxu0 0.0
    %769 = vmatprep.subr.mxu0 0.0
    %770 = vmatpush1.msra.mxu0 0.0
    %771 = vmatprep.subr.mxu0 0.0
    %772 = vmatpush1.msra.mxu0 0.0
    %773 = vmatprep.subr.mxu0 0.0
    %774 = vmatpush1.msra.mxu0 0.0
    %775 = vmatprep.subr.mxu0 0.0
    %776 = vmatpush1.msra.mxu0 0.0
    %777 = vmatprep.subr.mxu0 0.0
    %778 = vmatpush1.msra.mxu0 0.0
    %779 = vmatprep.subr.mxu0 0.0
    %780 = vmatpush1.msra.mxu0 0.0
    %781 = vmatprep.subr.mxu0 0.0
    %782 = vmatpush1.msra.mxu0 0.0
    %783 = vmatprep.subr.mxu0 0.0
    %784 = vmatpush1.msra.mxu0 0.0
    %785 = vmatprep.subr.mxu0 0.0
    %786 = vmatpush1.msra.mxu0 0.0
    %787 = vmatprep.subr.mxu0 0.0
    %788 = vmatpush1.msra.mxu0 0.0
    %789 = vmatprep.mubr.f32.mxu0 0.0
    %790 = vmatmul.mubr.f32.gmra.mrb[0].mxu0 %v699
    %v791 = vpop.f32.mrb[0].mxu0
    %v792 = vadd.f32 0.0, %v791
    %v793 = vpop.f32.mrb[0].mxu0
    %794 = vmatprep.mubr.f32.mxu0 0.0
    %795 = vmatmul.mubr.f32.gmra.mrb[0].mxu0 %v702
    %v796 = vpop.f32.mrb[0].mxu0
    %v797 = vadd.f32 0.0, %v796
    %v798 = vpop.f32.mrb[0].mxu0
    %799 = vmatprep.mubr.f32.mxu0 0.0
    %800 = vmatmul.mubr.f32.gmra.mrb[0].mxu0 %v705
    %v801 = vpop.f32.mrb[0].mxu0
    %v802 = vadd.f32 0.0, %v801
    %v803 = vpop.f32.mrb[0].mxu0
    %804 = vmatprep.mubr.f32.mxu0 0.0
    %805 = vmatmul.mubr.f32.gmra.mrb[0].mxu0 %v708
    %v806 = vpop.f32.mrb[0].mxu0
    %v807 = vadd.f32 0.0, %v806
    %v808 = vpop.f32.mrb[0].mxu0
    %809 = vmatprep.mubr.f32.mxu0 0.0
    %810 = vmatmul.mubr.f32.gmra.mrb[0].mxu0 %v711
    %v811 = vpop.f32.mrb[0].mxu0
    %v812 = vadd.f32 0.0, %v811
    %v813 = vpop.f32.mrb[0].mxu0
    %814 = vmatprep.mubr.f32.mxu0 0.0
    %815 = vmatmul.mubr.f32.gmra.mrb[0].mxu0 %v714
    %v816 = vpop.f32.mrb[0].mxu0
    %v817 = vadd.f32 0.0, %v816
    %v818 = vpop.f32.mrb[0].mxu0
    %819 = vmatprep.mubr.f32.mxu0 0.0
    %820 = vmatmul.mubr.f32.gmra.mrb[0].mxu0 %v717
    %v821 = vpop.f32.mrb[0].mxu0
    %v822 = vadd.f32 0.0, %v821
    %v823 = vpop.f32.mrb[0].mxu0
    %824 = vmatprep.mubr.f32.mxu0 0.0
    %825 = vmatmul.mubr.f32.gmra.mrb[0].mxu0 %v720
    %v826 = vpop.f32.mrb[0].mxu0
    %v827 = vadd.f32 0.0, %v826
    %v828 = vpop.f32.mrb[0].mxu0
    %829 = vmatprep.mubr.f32.mxu0 0.0
    %830 = vmatmul.mubr.f32.gmra.mrb[0].mxu0 %v723
    %v831 = vpop.f32.mrb[0].mxu0
    %v832 = vadd.f32 0.0, %v831
    %v833 = vpop.f32.mrb[0].mxu0
    %834 = vdwg.mxu0
    %835 = vst.msk [vmem:[#allocation2] sm:$0xff] %vm659, 0.0
    %836 = vst.msk [vmem:[#allocation2 + $0x8] sm:$0xff] %vm659, 0.0
    %837 = vst.msk [vmem:[#allocation2 + $0x10] sm:$0xff] %vm659, %v792
    %838 = vst.msk [vmem:[#allocation2 + $0x18] sm:$0xff] %vm659, %v797
    %839 = vst.msk [vmem:[#allocation2 + $0x20] sm:$0xff] %vm659, %v802
    %840 = vst.msk [vmem:[#allocation2 + $0x28] sm:$0xff] %vm659, %v807
    %841 = vst.msk [vmem:[#allocation2 + $0x30] sm:$0xff] %vm659, %v812
    %842 = vst.msk [vmem:[#allocation2 + $0x38] sm:$0xff] %vm659, %v817
    %843 = vst.msk [vmem:[#allocation2 + $0x40] sm:$0xff] %vm659, %v822
    %844 = vst.msk [vmem:[#allocation2 + $0x48] sm:$0xff] %vm659, %v827
    %845 = vst.msk [vmem:[#allocation2 + $0x50] sm:$0xff] %vm659, %v832
    %846 = vst.msk [vmem:[#allocation2 + $0x58] sm:$0xff] %vm659, 0.0
    %847 = vst.msk [vmem:[#allocation2 + $0x60] sm:$0xff] %vm659, 0.0
    %v848 = vld [vmem:[#allocation2 + $0x9] sm:$0xff]
    %v849 = vld [vmem:[#allocation2 + $0x11] sm:$0xff]
    %v850 = vld [vmem:[#allocation2 + $0x19] sm:$0xff]
    %v851 = vld [vmem:[#allocation2 + $0x21] sm:$0xff]
    %v852 = vld [vmem:[#allocation2 + $0x29] sm:$0xff]
    %v853 = vld [vmem:[#allocation2 + $0x31] sm:$0xff]
    %v854 = vld [vmem:[#allocation2 + $0x39] sm:$0xff]
    %v855 = vld [vmem:[#allocation2 + $0x41] sm:$0xff]
    %v856 = vld [vmem:[#allocation2 + $0x49] sm:$0xff]
    %v857 = vld [vmem:[#allocation14] sm:$0xff]
    %v858 = vld [vmem:[#allocation14 + $0x8] sm:$0xff]
    %v859 = vld [vmem:[#allocation14 + $0x10] sm:$0xff]
    %v860 = vld [vmem:[#allocation14 + $0x18] sm:$0xff]
    %v861 = vld [vmem:[#allocation14 + $0x20] sm:$0xff]
    %v862 = vld [vmem:[#allocation14 + $0x28] sm:$0xff]
    %v863 = vld [vmem:[#allocation14 + $0x30] sm:$0xff]
    %v864 = vld [vmem:[#allocation14 + $0x38] sm:$0xff]
    %v865 = vld [vmem:[#allocation2 + $0xa] sm:$0xff]
    %v866 = vld [vmem:[#allocation2 + $0x12] sm:$0xff]
    %v867 = vld [vmem:[#allocation2 + $0x1a] sm:$0xff]
    %v868 = vld [vmem:[#allocation2 + $0x22] sm:$0xff]
    %v869 = vld [vmem:[#allocation2 + $0x2a] sm:$0xff]
    %v870 = vld [vmem:[#allocation2 + $0x32] sm:$0xff]
    %v871 = vld [vmem:[#allocation2 + $0x3a] sm:$0xff]
    %v872 = vld [vmem:[#allocation2 + $0x42] sm:$0xff]
    %v873 = vld [vmem:[#allocation2 + $0x4a] sm:$0xff]
    %s874 = scalar_lea.vmem [#allocation14], 64
    %v875 = vld [vmem:[%s874] sm:$0xff]
    %v876 = vld [vmem:[%s874 + $0x8] sm:$0xff]
    %v877 = vld [vmem:[%s874 + $0x10] sm:$0xff]
    %v878 = vld [vmem:[%s874 + $0x18] sm:$0xff]
    %v879 = vld [vmem:[%s874 + $0x20] sm:$0xff]
    %v880 = vld [vmem:[%s874 + $0x28] sm:$0xff]
    %v881 = vld [vmem:[%s874 + $0x30] sm:$0xff]
    %v882 = vld [vmem:[%s874 + $0x38] sm:$0xff]
    %v884 = vsel %vm659, %v865, 0
    %v887 = vsel %vm659, %v866, 0
    %v890 = vsel %vm659, %v867, 0
    %v893 = vsel %vm659, %v868, 0
    %v896 = vsel %vm659, %v869, 0
    %v899 = vsel %vm659, %v870, 0
    %v902 = vsel %vm659, %v871, 0
    %v905 = vsel %vm659, %v872, 0
    %v908 = vsel %vm659, %v873, 0
    %910 = vmatprep.subr.mxu0 0.0
    %911 = vmatpush1.msra.mxu0 %v875
    %912 = vmatprep.subr.mxu0 0.0
    %913 = vmatpush1.msra.mxu0 %v876
    %914 = vmatprep.subr.mxu0 0.0
    %915 = vmatpush1.msra.mxu0 %v877
    %916 = vmatprep.subr.mxu0 0.0
    %917 = vmatpush1.msra.mxu0 %v878
    %918 = vmatprep.subr.mxu0 0.0
    %919 = vmatpush1.msra.mxu0 %v879
    %920 = vmatprep.subr.mxu0 0.0
    %921 = vmatpush1.msra.mxu0 %v880
    %922 = vmatprep.subr.mxu0 0.0
    %923 = vmatpush1.msra.mxu0 %v881
    %924 = vmatprep.subr.mxu0 0.0
    %925 = vmatpush1.msra.mxu0 %v882
    %926 = vmatprep.subr.mxu0 0.0
    %927 = vmatpush1.msra.mxu0 0.0
    %928 = vmatprep.subr.mxu0 0.0
    %929 = vmatpush1.msra.mxu0 0.0
    %930 = vmatprep.subr.mxu0 0.0
    %931 = vmatpush1.msra.mxu0 0.0
    %932 = vmatprep.subr.mxu0 0.0
    %933 = vmatpush1.msra.mxu0 0.0
    %934 = vmatprep.subr.mxu0 0.0
    %935 = vmatpush1.msra.mxu0 0.0
    %936 = vmatprep.subr.mxu0 0.0
    %937 = vmatpush1.msra.mxu0 0.0
    %938 = vmatprep.subr.mxu0 0.0
    %939 = vmatpush1.msra.mxu0 0.0
    %940 = vmatprep.subr.mxu0 0.0
    %941 = vmatpush1.msra.mxu0 0.0
    %942 = vmatprep.subr.mxu0 0.0
    %943 = vmatpush1.msra.mxu0 0.0
    %944 = vmatprep.subr.mxu0 0.0
    %945 = vmatpush1.msra.mxu0 0.0
    %946 = vmatprep.subr.mxu0 0.0
    %947 = vmatpush1.msra.mxu0 0.0
    %948 = vmatprep.subr.mxu0 0.0
    %949 = vmatpush1.msra.mxu0 0.0
    %950 = vmatprep.subr.mxu0 0.0
    %951 = vmatpush1.msra.mxu0 0.0
    %952 = vmatprep.subr.mxu0 0.0
    %953 = vmatpush1.msra.mxu0 0.0
    %954 = vmatprep.subr.mxu0 0.0
    %955 = vmatpush1.msra.mxu0 0.0
    %956 = vmatprep.subr.mxu0 0.0
    %957 = vmatpush1.msra.mxu0 0.0
    %958 = vmatprep.subr.mxu0 0.0
    %959 = vmatpush1.msra.mxu0 0.0
    %960 = vmatprep.subr.mxu0 0.0
    %961 = vmatpush1.msra.mxu0 0.0
    %962 = vmatprep.subr.mxu0 0.0
    %963 = vmatpush1.msra.mxu0 0.0
    %964 = vmatprep.subr.mxu0 0.0
    %965 = vmatpush1.msra.mxu0 0.0
    %966 = vmatprep.subr.mxu0 0.0
    %967 = vmatpush1.msra.mxu0 0.0
    %968 = vmatprep.subr.mxu0 0.0
    %969 = vmatpush1.msra.mxu0 0.0
    %970 = vmatprep.subr.mxu0 0.0
    %971 = vmatpush1.msra.mxu0 0.0
    %972 = vmatprep.subr.mxu0 0.0
    %973 = vmatpush1.msra.mxu0 0.0
    %974 = vmatprep.mubr.f32.mxu0 0.0
    %975 = vmatmul.mubr.f32.gmra.mrb[0].mxu0 %v884
    %v976 = vpop.f32.mrb[0].mxu0
    %v977 = vadd.f32 0.0, %v976
    %v978 = vpop.f32.mrb[0].mxu0
    %979 = vmatprep.mubr.f32.mxu0 0.0
    %980 = vmatmul.mubr.f32.gmra.mrb[0].mxu0 %v887
    %v981 = vpop.f32.mrb[0].mxu0
    %v982 = vadd.f32 0.0, %v981
    %v983 = vpop.f32.mrb[0].mxu0
    %984 = vmatprep.mubr.f32.mxu0 0.0
    %985 = vmatmul.mubr.f32.gmra.mrb[0].mxu0 %v890
    %v986 = vpop.f32.mrb[0].mxu0
    %v987 = vadd.f32 0.0, %v986
    %v988 = vpop.f32.mrb[0].mxu0
    %989 = vmatprep.mubr.f32.mxu0 0.0
    %990 = vmatmul.mubr.f32.gmra.mrb[0].mxu0 %v893
    %v991 = vpop.f32.mrb[0].mxu0
    %v992 = vadd.f32 0.0, %v991
    %v993 = vpop.f32.mrb[0].mxu0
    %994 = vmatprep.mubr.f32.mxu0 0.0
    %995 = vmatmul.mubr.f32.gmra.mrb[0].mxu0 %v896
    %v996 = vpop.f32.mrb[0].mxu0
    %v997 = vadd.f32 0.0, %v996
    %v998 = vpop.f32.mrb[0].mxu0
    %999 = vmatprep.mubr.f32.mxu0 0.0
    %1000 = vmatmul.mubr.f32.gmra.mrb[0].mxu0 %v899
    %v1001 = vpop.f32.mrb[0].mxu0
    %v1002 = vadd.f32 0.0, %v1001
    %v1003 = vpop.f32.mrb[0].mxu0
    %1004 = vmatprep.mubr.f32.mxu0 0.0
    %1005 = vmatmul.mubr.f32.gmra.mrb[0].mxu0 %v902
    %v1006 = vpop.f32.mrb[0].mxu0
    %v1007 = vadd.f32 0.0, %v1006
    %v1008 = vpop.f32.mrb[0].mxu0
    %1009 = vmatprep.mubr.f32.mxu0 0.0
    %1010 = vmatmul.mubr.f32.gmra.mrb[0].mxu0 %v905
    %v1011 = vpop.f32.mrb[0].mxu0
    %v1012 = vadd.f32 0.0, %v1011
    %v1013 = vpop.f32.mrb[0].mxu0
    %1014 = vmatprep.mubr.f32.mxu0 0.0
    %1015 = vmatmul.mubr.f32.gmra.mrb[0].mxu0 %v908
    %v1016 = vpop.f32.mrb[0].mxu0
    %v1017 = vadd.f32 0.0, %v1016
    %v1018 = vpop.f32.mrb[0].mxu0
    %1019 = vdwg.mxu0
    %v1021 = vsel %vm659, %v848, 0
    %v1024 = vsel %vm659, %v849, 0
    %v1027 = vsel %vm659, %v850, 0
    %v1030 = vsel %vm659, %v851, 0
    %v1033 = vsel %vm659, %v852, 0
    %v1036 = vsel %vm659, %v853, 0
    %v1039 = vsel %vm659, %v854, 0
    %v1042 = vsel %vm659, %v855, 0
    %v1045 = vsel %vm659, %v856, 0
    %1047 = vmatprep.subr.mxu0 0.0
    %1048 = vmatpush1.msra.mxu0 %v857
    %1049 = vmatprep.subr.mxu0 0.0
    %1050 = vmatpush1.msra.mxu0 %v858
    %1051 = vmatprep.subr.mxu0 0.0
    %1052 = vmatpush1.msra.mxu0 %v859
    %1053 = vmatprep.subr.mxu0 0.0
    %1054 = vmatpush1.msra.mxu0 %v860
    %1055 = vmatprep.subr.mxu0 0.0
    %1056 = vmatpush1.msra.mxu0 %v861
    %1057 = vmatprep.subr.mxu0 0.0
    %1058 = vmatpush1.msra.mxu0 %v862
    %1059 = vmatprep.subr.mxu0 0.0
    %1060 = vmatpush1.msra.mxu0 %v863
    %1061 = vmatprep.subr.mxu0 0.0
    %1062 = vmatpush1.msra.mxu0 %v864
    %1063 = vmatprep.subr.mxu0 0.0
    %1064 = vmatpush1.msra.mxu0 0.0
    %1065 = vmatprep.subr.mxu0 0.0
    %1066 = vmatpush1.msra.mxu0 0.0
    %1067 = vmatprep.subr.mxu0 0.0
    %1068 = vmatpush1.msra.mxu0 0.0
    %1069 = vmatprep.subr.mxu0 0.0
    %1070 = vmatpush1.msra.mxu0 0.0
    %1071 = vmatprep.subr.mxu0 0.0
    %1072 = vmatpush1.msra.mxu0 0.0
    %1073 = vmatprep.subr.mxu0 0.0
    %1074 = vmatpush1.msra.mxu0 0.0
    %1075 = vmatprep.subr.mxu0 0.0
    %1076 = vmatpush1.msra.mxu0 0.0
    %1077 = vmatprep.subr.mxu0 0.0
    %1078 = vmatpush1.msra.mxu0 0.0
    %1079 = vmatprep.subr.mxu0 0.0
    %1080 = vmatpush1.msra.mxu0 0.0
    %1081 = vmatprep.subr.mxu0 0.0
    %1082 = vmatpush1.msra.mxu0 0.0
    %1083 = vmatprep.subr.mxu0 0.0
    %1084 = vmatpush1.msra.mxu0 0.0
    %1085 = vmatprep.subr.mxu0 0.0
    %1086 = vmatpush1.msra.mxu0 0.0
    %1087 = vmatprep.subr.mxu0 0.0
    %1088 = vmatpush1.msra.mxu0 0.0
    %1089 = vmatprep.subr.mxu0 0.0
    %1090 = vmatpush1.msra.mxu0 0.0
    %1091 = vmatprep.subr.mxu0 0.0
    %1092 = vmatpush1.msra.mxu0 0.0
    %1093 = vmatprep.subr.mxu0 0.0
    %1094 = vmatpush1.msra.mxu0 0.0
    %1095 = vmatprep.subr.mxu0 0.0
    %1096 = vmatpush1.msra.mxu0 0.0
    %1097 = vmatprep.subr.mxu0 0.0
    %1098 = vmatpush1.msra.mxu0 0.0
    %1099 = vmatprep.subr.mxu0 0.0
    %1100 = vmatpush1.msra.mxu0 0.0
    %1101 = vmatprep.subr.mxu0 0.0
    %1102 = vmatpush1.msra.mxu0 0.0
    %1103 = vmatprep.subr.mxu0 0.0
    %1104 = vmatpush1.msra.mxu0 0.0
    %1105 = vmatprep.subr.mxu0 0.0
    %1106 = vmatpush1.msra.mxu0 0.0
    %1107 = vmatprep.subr.mxu0 0.0
    %1108 = vmatpush1.msra.mxu0 0.0
    %1109 = vmatprep.subr.mxu0 0.0
    %1110 = vmatpush1.msra.mxu0 0.0
    %1111 = vmatprep.mubr.f32.mxu0 0.0
    %1112 = vmatmul.mubr.f32.gmra.mrb[0].mxu0 %v1021
    %v1113 = vpop.f32.mrb[0].mxu0
    %v1114 = vadd.f32 %v977, %v1113
    %v1115 = vpop.f32.mrb[0].mxu0
    %1116 = vmatprep.mubr.f32.mxu0 0.0
    %1117 = vmatmul.mubr.f32.gmra.mrb[0].mxu0 %v1024
    %v1118 = vpop.f32.mrb[0].mxu0
    %v1119 = vadd.f32 %v982, %v1118
    %v1120 = vpop.f32.mrb[0].mxu0
    %1121 = vmatprep.mubr.f32.mxu0 0.0
    %1122 = vmatmul.mubr.f32.gmra.mrb[0].mxu0 %v1027
    %v1123 = vpop.f32.mrb[0].mxu0
    %v1124 = vadd.f32 %v987, %v1123
    %v1125 = vpop.f32.mrb[0].mxu0
    %1126 = vmatprep.mubr.f32.mxu0 0.0
    %1127 = vmatmul.mubr.f32.gmra.mrb[0].mxu0 %v1030
    %v1128 = vpop.f32.mrb[0].mxu0
    %v1129 = vadd.f32 %v992, %v1128
    %v1130 = vpop.f32.mrb[0].mxu0
    %1131 = vmatprep.mubr.f32.mxu0 0.0
    %1132 = vmatmul.mubr.f32.gmra.mrb[0].mxu0 %v1033
    %v1133 = vpop.f32.mrb[0].mxu0
    %v1134 = vadd.f32 %v997, %v1133
    %v1135 = vpop.f32.mrb[0].mxu0
    %1136 = vmatprep.mubr.f32.mxu0 0.0
    %1137 = vmatmul.mubr.f32.gmra.mrb[0].mxu0 %v1036
    %v1138 = vpop.f32.mrb[0].mxu0
    %v1139 = vadd.f32 %v1002, %v1138
    %v1140 = vpop.f32.mrb[0].mxu0
    %1141 = vmatprep.mubr.f32.mxu0 0.0
    %1142 = vmatmul.mubr.f32.gmra.mrb[0].mxu0 %v1039
    %v1143 = vpop.f32.mrb[0].mxu0
    %v1144 = vadd.f32 %v1007, %v1143
    %v1145 = vpop.f32.mrb[0].mxu0
    %1146 = vmatprep.mubr.f32.mxu0 0.0
    %1147 = vmatmul.mubr.f32.gmra.mrb[0].mxu0 %v1042
    %v1148 = vpop.f32.mrb[0].mxu0
    %v1149 = vadd.f32 %v1012, %v1148
    %v1150 = vpop.f32.mrb[0].mxu0
    %1151 = vmatprep.mubr.f32.mxu0 0.0
    %1152 = vmatmul.mubr.f32.gmra.mrb[0].mxu0 %v1045
    %v1153 = vpop.f32.mrb[0].mxu0
    %v1154 = vadd.f32 %v1017, %v1153
    %v1155 = vpop.f32.mrb[0].mxu0
    %1156 = vdwg.mxu0
    %v1157 = vld [vmem:[#allocation2 + $0xb] sm:$0xff]
    %v1158 = vld [vmem:[#allocation2 + $0x13] sm:$0xff]
    %v1159 = vld [vmem:[#allocation2 + $0x1b] sm:$0xff]
    %v1160 = vld [vmem:[#allocation2 + $0x23] sm:$0xff]
    %v1161 = vld [vmem:[#allocation2 + $0x2b] sm:$0xff]
    %v1162 = vld [vmem:[#allocation2 + $0x33] sm:$0xff]
    %v1163 = vld [vmem:[#allocation2 + $0x3b] sm:$0xff]
    %v1164 = vld [vmem:[#allocation2 + $0x43] sm:$0xff]
    %v1165 = vld [vmem:[#allocation2 + $0x4b] sm:$0xff]
    %s1166 = scalar_lea.vmem [#allocation14], 128
    %v1167 = vld [vmem:[%s1166] sm:$0xff]
    %v1168 = vld [vmem:[%s1166 + $0x8] sm:$0xff]
    %v1169 = vld [vmem:[%s1166 + $0x10] sm:$0xff]
    %v1170 = vld [vmem:[%s1166 + $0x18] sm:$0xff]
    %v1171 = vld [vmem:[%s1166 + $0x20] sm:$0xff]
    %v1172 = vld [vmem:[%s1166 + $0x28] sm:$0xff]
    %v1173 = vld [vmem:[%s1166 + $0x30] sm:$0xff]
    %v1174 = vld [vmem:[%s1166 + $0x38] sm:$0xff]
    %v1176 = vsel %vm659, %v1157, 0
    %v1179 = vsel %vm659, %v1158, 0
    %v1182 = vsel %vm659, %v1159, 0
    %v1185 = vsel %vm659, %v1160, 0
    %v1188 = vsel %vm659, %v1161, 0
    %v1191 = vsel %vm659, %v1162, 0
    %v1194 = vsel %vm659, %v1163, 0
    %v1197 = vsel %vm659, %v1164, 0
    %v1200 = vsel %vm659, %v1165, 0
    %1202 = vmatprep.subr.mxu0 0.0
    %1203 = vmatpush1.msra.mxu0 %v1167
    %1204 = vmatprep.subr.mxu0 0.0
    %1205 = vmatpush1.msra.mxu0 %v1168
    %1206 = vmatprep.subr.mxu0 0.0
    %1207 = vmatpush1.msra.mxu0 %v1169
    %1208 = vmatprep.subr.mxu0 0.0
    %1209 = vmatpush1.msra.mxu0 %v1170
    %1210 = vmatprep.subr.mxu0 0.0
    %1211 = vmatpush1.msra.mxu0 %v1171
    %1212 = vmatprep.subr.mxu0 0.0
    %1213 = vmatpush1.msra.mxu0 %v1172
    %1214 = vmatprep.subr.mxu0 0.0
    %1215 = vmatpush1.msra.mxu0 %v1173
    %1216 = vmatprep.subr.mxu0 0.0
    %1217 = vmatpush1.msra.mxu0 %v1174
    %1218 = vmatprep.subr.mxu0 0.0
    %1219 = vmatpush1.msra.mxu0 0.0
    %1220 = vmatprep.subr.mxu0 0.0
    %1221 = vmatpush1.msra.mxu0 0.0
    %1222 = vmatprep.subr.mxu0 0.0
    %1223 = vmatpush1.msra.mxu0 0.0
    %1224 = vmatprep.subr.mxu0 0.0
    %1225 = vmatpush1.msra.mxu0 0.0
    %1226 = vmatprep.subr.mxu0 0.0
    %1227 = vmatpush1.msra.mxu0 0.0
    %1228 = vmatprep.subr.mxu0 0.0
    %1229 = vmatpush1.msra.mxu0 0.0
    %1230 = vmatprep.subr.mxu0 0.0
    %1231 = vmatpush1.msra.mxu0 0.0
    %1232 = vmatprep.subr.mxu0 0.0
    %1233 = vmatpush1.msra.mxu0 0.0
    %1234 = vmatprep.subr.mxu0 0.0
    %1235 = vmatpush1.msra.mxu0 0.0
    %1236 = vmatprep.subr.mxu0 0.0
    %1237 = vmatpush1.msra.mxu0 0.0
    %1238 = vmatprep.subr.mxu0 0.0
    %1239 = vmatpush1.msra.mxu0 0.0
    %1240 = vmatprep.subr.mxu0 0.0
    %1241 = vmatpush1.msra.mxu0 0.0
    %1242 = vmatprep.subr.mxu0 0.0
    %1243 = vmatpush1.msra.mxu0 0.0
    %1244 = vmatprep.subr.mxu0 0.0
    %1245 = vmatpush1.msra.mxu0 0.0
    %1246 = vmatprep.subr.mxu0 0.0
    %1247 = vmatpush1.msra.mxu0 0.0
    %1248 = vmatprep.subr.mxu0 0.0
    %1249 = vmatpush1.msra.mxu0 0.0
    %1250 = vmatprep.subr.mxu0 0.0
    %1251 = vmatpush1.msra.mxu0 0.0
    %1252 = vmatprep.subr.mxu0 0.0
    %1253 = vmatpush1.msra.mxu0 0.0
    %1254 = vmatprep.subr.mxu0 0.0
    %1255 = vmatpush1.msra.mxu0 0.0
    %1256 = vmatprep.subr.mxu0 0.0
    %1257 = vmatpush1.msra.mxu0 0.0
    %1258 = vmatprep.subr.mxu0 0.0
    %1259 = vmatpush1.msra.mxu0 0.0
    %1260 = vmatprep.subr.mxu0 0.0
    %1261 = vmatpush1.msra.mxu0 0.0
    %1262 = vmatprep.subr.mxu0 0.0
    %1263 = vmatpush1.msra.mxu0 0.0
    %1264 = vmatprep.subr.mxu0 0.0
    %1265 = vmatpush1.msra.mxu0 0.0
    %1266 = vmatprep.mubr.f32.mxu0 0.0
    %1267 = vmatmul.mubr.f32.gmra.mrb[0].mxu0 %v1176
    %v1268 = vpop.f32.mrb[0].mxu0
    %v1269 = vadd.f32 0.0, %v1268
    %v1270 = vpop.f32.mrb[0].mxu0
    %1271 = vmatprep.mubr.f32.mxu0 0.0
    %1272 = vmatmul.mubr.f32.gmra.mrb[0].mxu0 %v1179
    %v1273 = vpop.f32.mrb[0].mxu0
    %v1274 = vadd.f32 0.0, %v1273
    %v1275 = vpop.f32.mrb[0].mxu0
    %1276 = vmatprep.mubr.f32.mxu0 0.0
    %1277 = vmatmul.mubr.f32.gmra.mrb[0].mxu0 %v1182
    %v1278 = vpop.f32.mrb[0].mxu0
    %v1279 = vadd.f32 0.0, %v1278
    %v1280 = vpop.f32.mrb[0].mxu0
    %1281 = vmatprep.mubr.f32.mxu0 0.0
    %1282 = vmatmul.mubr.f32.gmra.mrb[0].mxu0 %v1185
    %v1283 = vpop.f32.mrb[0].mxu0
    %v1284 = vadd.f32 0.0, %v1283
    %v1285 = vpop.f32.mrb[0].mxu0
    %1286 = vmatprep.mubr.f32.mxu0 0.0
    %1287 = vmatmul.mubr.f32.gmra.mrb[0].mxu0 %v1188
    %v1288 = vpop.f32.mrb[0].mxu0
    %v1289 = vadd.f32 0.0, %v1288
    %v1290 = vpop.f32.mrb[0].mxu0
    %1291 = vmatprep.mubr.f32.mxu0 0.0
    %1292 = vmatmul.mubr.f32.gmra.mrb[0].mxu0 %v1191
    %v1293 = vpop.f32.mrb[0].mxu0
    %v1294 = vadd.f32 0.0, %v1293
    %v1295 = vpop.f32.mrb[0].mxu0
    %1296 = vmatprep.mubr.f32.mxu0 0.0
    %1297 = vmatmul.mubr.f32.gmra.mrb[0].mxu0 %v1194
    %v1298 = vpop.f32.mrb[0].mxu0
    %v1299 = vadd.f32 0.0, %v1298
    %v1300 = vpop.f32.mrb[0].mxu0
    %1301 = vmatprep.mubr.f32.mxu0 0.0
    %1302 = vmatmul.mubr.f32.gmra.mrb[0].mxu0 %v1197
    %v1303 = vpop.f32.mrb[0].mxu0
    %v1304 = vadd.f32 0.0, %v1303
    %v1305 = vpop.f32.mrb[0].mxu0
    %1306 = vmatprep.mubr.f32.mxu0 0.0
    %1307 = vmatmul.mubr.f32.gmra.mrb[0].mxu0 %v1200
    %v1308 = vpop.f32.mrb[0].mxu0
    %v1309 = vadd.f32 0.0, %v1308
    %v1310 = vpop.f32.mrb[0].mxu0
    %1311 = vdwg.mxu0
    %v1312 = vadd.f32 %v1114, %v1269
    %v1313 = vadd.f32 %v1119, %v1274
    %v1314 = vadd.f32 %v1124, %v1279
    %v1315 = vadd.f32 %v1129, %v1284
    %v1316 = vadd.f32 %v1134, %v1289
    %v1317 = vadd.f32 %v1139, %v1294
    %v1318 = vadd.f32 %v1144, %v1299
    %v1319 = vadd.f32 %v1149, %v1304
    %v1320 = vadd.f32 %v1154, %v1309
    %v1321 = vld [vmem:[#allocation2 + $0xf] sm:$0xff]
    %v1322 = vld [vmem:[#allocation2 + $0x17] sm:$0xff]
    %v1323 = vld [vmem:[#allocation2 + $0x1f] sm:$0xff]
    %v1324 = vld [vmem:[#allocation2 + $0x27] sm:$0xff]
    %v1325 = vld [vmem:[#allocation2 + $0x2f] sm:$0xff]
    %v1326 = vld [vmem:[#allocation2 + $0x37] sm:$0xff]
    %v1327 = vld [vmem:[#allocation2 + $0x3f] sm:$0xff]
    %v1328 = vld [vmem:[#allocation2 + $0x47] sm:$0xff]
    %v1329 = vld [vmem:[#allocation2 + $0x4f] sm:$0xff]
    %s1330 = scalar_lea.vmem [#allocation14], 192
    %v1331 = vld [vmem:[%s1330] sm:$0xff]
    %v1332 = vld [vmem:[%s1330 + $0x8] sm:$0xff]
    %v1333 = vld [vmem:[%s1330 + $0x10] sm:$0xff]
    %v1334 = vld [vmem:[%s1330 + $0x18] sm:$0xff]
    %v1335 = vld [vmem:[%s1330 + $0x20] sm:$0xff]
    %v1336 = vld [vmem:[%s1330 + $0x28] sm:$0xff]
    %v1337 = vld [vmem:[%s1330 + $0x30] sm:$0xff]
    %v1338 = vld [vmem:[%s1330 + $0x38] sm:$0xff]
    %v1340 = vsel %vm659, %v1321, 0
    %v1343 = vsel %vm659, %v1322, 0
    %v1346 = vsel %vm659, %v1323, 0
    %v1349 = vsel %vm659, %v1324, 0
    %v1352 = vsel %vm659, %v1325, 0
    %v1355 = vsel %vm659, %v1326, 0
    %v1358 = vsel %vm659, %v1327, 0
    %v1361 = vsel %vm659, %v1328, 0
    %v1364 = vsel %vm659, %v1329, 0
    %1366 = vmatprep.subr.mxu0 0.0
    %1367 = vmatpush1.msra.mxu0 %v1331
    %1368 = vmatprep.subr.mxu0 0.0
    %1369 = vmatpush1.msra.mxu0 %v1332
    %1370 = vmatprep.subr.mxu0 0.0
    %1371 = vmatpush1.msra.mxu0 %v1333
    %1372 = vmatprep.subr.mxu0 0.0
    %1373 = vmatpush1.msra.mxu0 %v1334
    %1374 = vmatprep.subr.mxu0 0.0
    %1375 = vmatpush1.msra.mxu0 %v1335
    %1376 = vmatprep.subr.mxu0 0.0
    %1377 = vmatpush1.msra.mxu0 %v1336
    %1378 = vmatprep.subr.mxu0 0.0
    %1379 = vmatpush1.msra.mxu0 %v1337
    %1380 = vmatprep.subr.mxu0 0.0
    %1381 = vmatpush1.msra.mxu0 %v1338
    %1382 = vmatprep.subr.mxu0 0.0
    %1383 = vmatpush1.msra.mxu0 0.0
    %1384 = vmatprep.subr.mxu0 0.0
    %1385 = vmatpush1.msra.mxu0 0.0
    %1386 = vmatprep.subr.mxu0 0.0
    %1387 = vmatpush1.msra.mxu0 0.0
    %1388 = vmatprep.subr.mxu0 0.0
    %1389 = vmatpush1.msra.mxu0 0.0
    %1390 = vmatprep.subr.mxu0 0.0
    %1391 = vmatpush1.msra.mxu0 0.0
    %1392 = vmatprep.subr.mxu0 0.0
    %1393 = vmatpush1.msra.mxu0 0.0
    %1394 = vmatprep.subr.mxu0 0.0
    %1395 = vmatpush1.msra.mxu0 0.0
    %1396 = vmatprep.subr.mxu0 0.0
    %1397 = vmatpush1.msra.mxu0 0.0
    %1398 = vmatprep.subr.mxu0 0.0
    %1399 = vmatpush1.msra.mxu0 0.0
    %1400 = vmatprep.subr.mxu0 0.0
    %1401 = vmatpush1.msra.mxu0 0.0
    %1402 = vmatprep.subr.mxu0 0.0
    %1403 = vmatpush1.msra.mxu0 0.0
    %1404 = vmatprep.subr.mxu0 0.0
    %1405 = vmatpush1.msra.mxu0 0.0
    %1406 = vmatprep.subr.mxu0 0.0
    %1407 = vmatpush1.msra.mxu0 0.0
    %1408 = vmatprep.subr.mxu0 0.0
    %1409 = vmatpush1.msra.mxu0 0.0
    %1410 = vmatprep.subr.mxu0 0.0
    %1411 = vmatpush1.msra.mxu0 0.0
    %1412 = vmatprep.subr.mxu0 0.0
    %1413 = vmatpush1.msra.mxu0 0.0
    %1414 = vmatprep.subr.mxu0 0.0
    %1415 = vmatpush1.msra.mxu0 0.0
    %1416 = vmatprep.subr.mxu0 0.0
    %1417 = vmatpush1.msra.mxu0 0.0
    %1418 = vmatprep.subr.mxu0 0.0
    %1419 = vmatpush1.msra.mxu0 0.0
    %1420 = vmatprep.subr.mxu0 0.0
    %1421 = vmatpush1.msra.mxu0 0.0
    %1422 = vmatprep.subr.mxu0 0.0
    %1423 = vmatpush1.msra.mxu0 0.0
    %1424 = vmatprep.subr.mxu0 0.0
    %1425 = vmatpush1.msra.mxu0 0.0
    %1426 = vmatprep.subr.mxu0 0.0
    %1427 = vmatpush1.msra.mxu0 0.0
    %1428 = vmatprep.subr.mxu0 0.0
    %1429 = vmatpush1.msra.mxu0 0.0
    %1430 = vmatprep.mubr.f32.mxu0 0.0
    %1431 = vmatmul.mubr.f32.gmra.mrb[0].mxu0 %v1340
    %v1432 = vpop.f32.mrb[0].mxu0
    %v1433 = vadd.f32 0.0, %v1432
    %v1434 = vpop.f32.mrb[0].mxu0
    %1435 = vmatprep.mubr.f32.mxu0 0.0
    %1436 = vmatmul.mubr.f32.gmra.mrb[0].mxu0 %v1343
    %v1437 = vpop.f32.mrb[0].mxu0
    %v1438 = vadd.f32 0.0, %v1437
    %v1439 = vpop.f32.mrb[0].mxu0
    %1440 = vmatprep.mubr.f32.mxu0 0.0
    %1441 = vmatmul.mubr.f32.gmra.mrb[0].mxu0 %v1346
    %v1442 = vpop.f32.mrb[0].mxu0
    %v1443 = vadd.f32 0.0, %v1442
    %v1444 = vpop.f32.mrb[0].mxu0
    %1445 = vmatprep.mubr.f32.mxu0 0.0
    %1446 = vmatmul.mubr.f32.gmra.mrb[0].mxu0 %v1349
    %v1447 = vpop.f32.mrb[0].mxu0
    %v1448 = vadd.f32 0.0, %v1447
    %v1449 = vpop.f32.mrb[0].mxu0
    %1450 = vmatprep.mubr.f32.mxu0 0.0
    %1451 = vmatmul.mubr.f32.gmra.mrb[0].mxu0 %v1352
    %v1452 = vpop.f32.mrb[0].mxu0
    %v1453 = vadd.f32 0.0, %v1452
    %v1454 = vpop.f32.mrb[0].mxu0
    %1455 = vmatprep.mubr.f32.mxu0 0.0
    %1456 = vmatmul.mubr.f32.gmra.mrb[0].mxu0 %v1355
    %v1457 = vpop.f32.mrb[0].mxu0
    %v1458 = vadd.f32 0.0, %v1457
    %v1459 = vpop.f32.mrb[0].mxu0
    %1460 = vmatprep.mubr.f32.mxu0 0.0
    %1461 = vmatmul.mubr.f32.gmra.mrb[0].mxu0 %v1358
    %v1462 = vpop.f32.mrb[0].mxu0
    %v1463 = vadd.f32 0.0, %v1462
    %v1464 = vpop.f32.mrb[0].mxu0
    %1465 = vmatprep.mubr.f32.mxu0 0.0
    %1466 = vmatmul.mubr.f32.gmra.mrb[0].mxu0 %v1361
    %v1467 = vpop.f32.mrb[0].mxu0
    %v1468 = vadd.f32 0.0, %v1467
    %v1469 = vpop.f32.mrb[0].mxu0
    %1470 = vmatprep.mubr.f32.mxu0 0.0
    %1471 = vmatmul.mubr.f32.gmra.mrb[0].mxu0 %v1364
    %v1472 = vpop.f32.mrb[0].mxu0
    %v1473 = vadd.f32 0.0, %v1472
    %v1474 = vpop.f32.mrb[0].mxu0
    %1475 = vdwg.mxu0
    %v1476 = vadd.f32 %v1312, %v1433
    %v1477 = vadd.f32 %v1313, %v1438
    %v1478 = vadd.f32 %v1314, %v1443
    %v1479 = vadd.f32 %v1315, %v1448
    %v1480 = vadd.f32 %v1316, %v1453
    %v1481 = vadd.f32 %v1317, %v1458
    %v1482 = vadd.f32 %v1318, %v1463
    %v1483 = vadd.f32 %v1319, %v1468
    %v1484 = vadd.f32 %v1320, %v1473
    %v1485 = vld [vmem:[#allocation2 + $0x10] sm:$0xff]
    %v1486 = vld [vmem:[#allocation2 + $0x18] sm:$0xff]
    %v1487 = vld [vmem:[#allocation2 + $0x20] sm:$0xff]
    %v1488 = vld [vmem:[#allocation2 + $0x28] sm:$0xff]
    %v1489 = vld [vmem:[#allocation2 + $0x30] sm:$0xff]
    %v1490 = vld [vmem:[#allocation2 + $0x38] sm:$0xff]
    %v1491 = vld [vmem:[#allocation2 + $0x40] sm:$0xff]
    %v1492 = vld [vmem:[#allocation2 + $0x48] sm:$0xff]
    %v1493 = vld [vmem:[#allocation2 + $0x50] sm:$0xff]
    %s1494 = scalar_lea.vmem [#allocation14], 256
    %v1495 = vld [vmem:[%s1494] sm:$0xff]
    %v1496 = vld [vmem:[%s1494 + $0x8] sm:$0xff]
    %v1497 = vld [vmem:[%s1494 + $0x10] sm:$0xff]
    %v1498 = vld [vmem:[%s1494 + $0x18] sm:$0xff]
    %v1499 = vld [vmem:[%s1494 + $0x20] sm:$0xff]
    %v1500 = vld [vmem:[%s1494 + $0x28] sm:$0xff]
    %v1501 = vld [vmem:[%s1494 + $0x30] sm:$0xff]
    %v1502 = vld [vmem:[%s1494 + $0x38] sm:$0xff]
    %v1504 = vsel %vm659, %v1485, 0
    %v1507 = vsel %vm659, %v1486, 0
    %v1510 = vsel %vm659, %v1487, 0
    %v1513 = vsel %vm659, %v1488, 0
    %v1516 = vsel %vm659, %v1489, 0
    %v1519 = vsel %vm659, %v1490, 0
    %v1522 = vsel %vm659, %v1491, 0
    %v1525 = vsel %vm659, %v1492, 0
    %v1528 = vsel %vm659, %v1493, 0
    %1530 = vmatprep.subr.mxu0 0.0
    %1531 = vmatpush1.msra.mxu0 %v1495
    %1532 = vmatprep.subr.mxu0 0.0
    %1533 = vmatpush1.msra.mxu0 %v1496
    %1534 = vmatprep.subr.mxu0 0.0
    %1535 = vmatpush1.msra.mxu0 %v1497
    %1536 = vmatprep.subr.mxu0 0.0
    %1537 = vmatpush1.msra.mxu0 %v1498
    %1538 = vmatprep.subr.mxu0 0.0
    %1539 = vmatpush1.msra.mxu0 %v1499
    %1540 = vmatprep.subr.mxu0 0.0
    %1541 = vmatpush1.msra.mxu0 %v1500
    %1542 = vmatprep.subr.mxu0 0.0
    %1543 = vmatpush1.msra.mxu0 %v1501
    %1544 = vmatprep.subr.mxu0 0.0
    %1545 = vmatpush1.msra.mxu0 %v1502
    %1546 = vmatprep.subr.mxu0 0.0
    %1547 = vmatpush1.msra.mxu0 0.0
    %1548 = vmatprep.subr.mxu0 0.0
    %1549 = vmatpush1.msra.mxu0 0.0
    %1550 = vmatprep.subr.mxu0 0.0
    %1551 = vmatpush1.msra.mxu0 0.0
    %1552 = vmatprep.subr.mxu0 0.0
    %1553 = vmatpush1.msra.mxu0 0.0
    %1554 = vmatprep.subr.mxu0 0.0
    %1555 = vmatpush1.msra.mxu0 0.0
    %1556 = vmatprep.subr.mxu0 0.0
    %1557 = vmatpush1.msra.mxu0 0.0
    %1558 = vmatprep.subr.mxu0 0.0
    %1559 = vmatpush1.msra.mxu0 0.0
    %1560 = vmatprep.subr.mxu0 0.0
    %1561 = vmatpush1.msra.mxu0 0.0
    %1562 = vmatprep.subr.mxu0 0.0
    %1563 = vmatpush1.msra.mxu0 0.0
    %1564 = vmatprep.subr.mxu0 0.0
    %1565 = vmatpush1.msra.mxu0 0.0
    %1566 = vmatprep.subr.mxu0 0.0
    %1567 = vmatpush1.msra.mxu0 0.0
    %1568 = vmatprep.subr.mxu0 0.0
    %1569 = vmatpush1.msra.mxu0 0.0
    %1570 = vmatprep.subr.mxu0 0.0
    %1571 = vmatpush1.msra.mxu0 0.0
    %1572 = vmatprep.subr.mxu0 0.0
    %1573 = vmatpush1.msra.mxu0 0.0
    %1574 = vmatprep.subr.mxu0 0.0
    %1575 = vmatpush1.msra.mxu0 0.0
    %1576 = vmatprep.subr.mxu0 0.0
    %1577 = vmatpush1.msra.mxu0 0.0
    %1578 = vmatprep.subr.mxu0 0.0
    %1579 = vmatpush1.msra.mxu0 0.0
    %1580 = vmatprep.subr.mxu0 0.0
    %1581 = vmatpush1.msra.mxu0 0.0
    %1582 = vmatprep.subr.mxu0 0.0
    %1583 = vmatpush1.msra.mxu0 0.0
    %1584 = vmatprep.subr.mxu0 0.0
    %1585 = vmatpush1.msra.mxu0 0.0
    %1586 = vmatprep.subr.mxu0 0.0
    %1587 = vmatpush1.msra.mxu0 0.0
    %1588 = vmatprep.subr.mxu0 0.0
    %1589 = vmatpush1.msra.mxu0 0.0
    %1590 = vmatprep.subr.mxu0 0.0
    %1591 = vmatpush1.msra.mxu0 0.0
    %1592 = vmatprep.subr.mxu0 0.0
    %1593 = vmatpush1.msra.mxu0 0.0
    %1594 = vmatprep.mubr.f32.mxu0 0.0
    %1595 = vmatmul.mubr.f32.gmra.mrb[0].mxu0 %v1504
    %v1596 = vpop.f32.mrb[0].mxu0
    %v1597 = vadd.f32 0.0, %v1596
    %v1598 = vpop.f32.mrb[0].mxu0
    %1599 = vmatprep.mubr.f32.mxu0 0.0
    %1600 = vmatmul.mubr.f32.gmra.mrb[0].mxu0 %v1507
    %v1601 = vpop.f32.mrb[0].mxu0
    %v1602 = vadd.f32 0.0, %v1601
    %v1603 = vpop.f32.mrb[0].mxu0
    %1604 = vmatprep.mubr.f32.mxu0 0.0
    %1605 = vmatmul.mubr.f32.gmra.mrb[0].mxu0 %v1510
    %v1606 = vpop.f32.mrb[0].mxu0
    %v1607 = vadd.f32 0.0, %v1606
    %v1608 = vpop.f32.mrb[0].mxu0
    %1609 = vmatprep.mubr.f32.mxu0 0.0
    %1610 = vmatmul.mubr.f32.gmra.mrb[0].mxu0 %v1513
    %v1611 = vpop.f32.mrb[0].mxu0
    %v1612 = vadd.f32 0.0, %v1611
    %v1613 = vpop.f32.mrb[0].mxu0
    %1614 = vmatprep.mubr.f32.mxu0 0.0
    %1615 = vmatmul.mubr.f32.gmra.mrb[0].mxu0 %v1516
    %v1616 = vpop.f32.mrb[0].mxu0
    %v1617 = vadd.f32 0.0, %v1616
    %v1618 = vpop.f32.mrb[0].mxu0
    %1619 = vmatprep.mubr.f32.mxu0 0.0
    %1620 = vmatmul.mubr.f32.gmra.mrb[0].mxu0 %v1519
    %v1621 = vpop.f32.mrb[0].mxu0
    %v1622 = vadd.f32 0.0, %v1621
    %v1623 = vpop.f32.mrb[0].mxu0
    %1624 = vmatprep.mubr.f32.mxu0 0.0
    %1625 = vmatmul.mubr.f32.gmra.mrb[0].mxu0 %v1522
    %v1626 = vpop.f32.mrb[0].mxu0
    %v1627 = vadd.f32 0.0, %v1626
    %v1628 = vpop.f32.mrb[0].mxu0
    %1629 = vmatprep.mubr.f32.mxu0 0.0
    %1630 = vmatmul.mubr.f32.gmra.mrb[0].mxu0 %v1525
    %v1631 = vpop.f32.mrb[0].mxu0
    %v1632 = vadd.f32 0.0, %v1631
    %v1633 = vpop.f32.mrb[0].mxu0
    %1634 = vmatprep.mubr.f32.mxu0 0.0
    %1635 = vmatmul.mubr.f32.gmra.mrb[0].mxu0 %v1528
    %v1636 = vpop.f32.mrb[0].mxu0
    %v1637 = vadd.f32 0.0, %v1636
    %v1638 = vpop.f32.mrb[0].mxu0
    %1639 = vdwg.mxu0
    %v1640 = vadd.f32 %v1476, %v1597
    %v1641 = vadd.f32 %v1477, %v1602
    %v1642 = vadd.f32 %v1478, %v1607
    %v1643 = vadd.f32 %v1479, %v1612
    %v1644 = vadd.f32 %v1480, %v1617
    %v1645 = vadd.f32 %v1481, %v1622
    %v1646 = vadd.f32 %v1482, %v1627
    %v1647 = vadd.f32 %v1483, %v1632
    %v1648 = vadd.f32 %v1484, %v1637
    %v1649 = vld [vmem:[#allocation2 + $0x11] sm:$0xff]
    %v1650 = vld [vmem:[#allocation2 + $0x19] sm:$0xff]
    %v1651 = vld [vmem:[#allocation2 + $0x21] sm:$0xff]
    %v1652 = vld [vmem:[#allocation2 + $0x29] sm:$0xff]
    %v1653 = vld [vmem:[#allocation2 + $0x31] sm:$0xff]
    %v1654 = vld [vmem:[#allocation2 + $0x39] sm:$0xff]
    %v1655 = vld [vmem:[#allocation2 + $0x41] sm:$0xff]
    %v1656 = vld [vmem:[#allocation2 + $0x49] sm:$0xff]
    %v1657 = vld [vmem:[#allocation2 + $0x51] sm:$0xff]
    %s1658 = scalar_lea.vmem [#allocation14], 320
    %v1659 = vld [vmem:[%s1658] sm:$0xff]
    %v1660 = vld [vmem:[%s1658 + $0x8] sm:$0xff]
    %v1661 = vld [vmem:[%s1658 + $0x10] sm:$0xff]
    %v1662 = vld [vmem:[%s1658 + $0x18] sm:$0xff]
    %v1663 = vld [vmem:[%s1658 + $0x20] sm:$0xff]
    %v1664 = vld [vmem:[%s1658 + $0x28] sm:$0xff]
    %v1665 = vld [vmem:[%s1658 + $0x30] sm:$0xff]
    %v1666 = vld [vmem:[%s1658 + $0x38] sm:$0xff]
    %v1668 = vsel %vm659, %v1649, 0
    %v1671 = vsel %vm659, %v1650, 0
    %v1674 = vsel %vm659, %v1651, 0
    %v1677 = vsel %vm659, %v1652, 0
    %v1680 = vsel %vm659, %v1653, 0
    %v1683 = vsel %vm659, %v1654, 0
    %v1686 = vsel %vm659, %v1655, 0
    %v1689 = vsel %vm659, %v1656, 0
    %v1692 = vsel %vm659, %v1657, 0
    %1694 = vmatprep.subr.mxu0 0.0
    %1695 = vmatpush1.msra.mxu0 %v1659
    %1696 = vmatprep.subr.mxu0 0.0
    %1697 = vmatpush1.msra.mxu0 %v1660
    %1698 = vmatprep.subr.mxu0 0.0
    %1699 = vmatpush1.msra.mxu0 %v1661
    %1700 = vmatprep.subr.mxu0 0.0
    %1701 = vmatpush1.msra.mxu0 %v1662
    %1702 = vmatprep.subr.mxu0 0.0
    %1703 = vmatpush1.msra.mxu0 %v1663
    %1704 = vmatprep.subr.mxu0 0.0
    %1705 = vmatpush1.msra.mxu0 %v1664
    %1706 = vmatprep.subr.mxu0 0.0
    %1707 = vmatpush1.msra.mxu0 %v1665
    %1708 = vmatprep.subr.mxu0 0.0
    %1709 = vmatpush1.msra.mxu0 %v1666
    %1710 = vmatprep.subr.mxu0 0.0
    %1711 = vmatpush1.msra.mxu0 0.0
    %1712 = vmatprep.subr.mxu0 0.0
    %1713 = vmatpush1.msra.mxu0 0.0
    %1714 = vmatprep.subr.mxu0 0.0
    %1715 = vmatpush1.msra.mxu0 0.0
    %1716 = vmatprep.subr.mxu0 0.0
    %1717 = vmatpush1.msra.mxu0 0.0
    %1718 = vmatprep.subr.mxu0 0.0
    %1719 = vmatpush1.msra.mxu0 0.0
    %1720 = vmatprep.subr.mxu0 0.0
    %1721 = vmatpush1.msra.mxu0 0.0
    %1722 = vmatprep.subr.mxu0 0.0
    %1723 = vmatpush1.msra.mxu0 0.0
    %1724 = vmatprep.subr.mxu0 0.0
    %1725 = vmatpush1.msra.mxu0 0.0
    %1726 = vmatprep.subr.mxu0 0.0
    %1727 = vmatpush1.msra.mxu0 0.0
    %1728 = vmatprep.subr.mxu0 0.0
    %1729 = vmatpush1.msra.mxu0 0.0
    %1730 = vmatprep.subr.mxu0 0.0
    %1731 = vmatpush1.msra.mxu0 0.0
    %1732 = vmatprep.subr.mxu0 0.0
    %1733 = vmatpush1.msra.mxu0 0.0
    %1734 = vmatprep.subr.mxu0 0.0
    %1735 = vmatpush1.msra.mxu0 0.0
    %1736 = vmatprep.subr.mxu0 0.0
    %1737 = vmatpush1.msra.mxu0 0.0
    %1738 = vmatprep.subr.mxu0 0.0
    %1739 = vmatpush1.msra.mxu0 0.0
    %1740 = vmatprep.subr.mxu0 0.0
    %1741 = vmatpush1.msra.mxu0 0.0
    %1742 = vmatprep.subr.mxu0 0.0
    %1743 = vmatpush1.msra.mxu0 0.0
    %1744 = vmatprep.subr.mxu0 0.0
    %1745 = vmatpush1.msra.mxu0 0.0
    %1746 = vmatprep.subr.mxu0 0.0
    %1747 = vmatpush1.msra.mxu0 0.0
    %1748 = vmatprep.subr.mxu0 0.0
    %1749 = vmatpush1.msra.mxu0 0.0
    %1750 = vmatprep.subr.mxu0 0.0
    %1751 = vmatpush1.msra.mxu0 0.0
    %1752 = vmatprep.subr.mxu0 0.0
    %1753 = vmatpush1.msra.mxu0 0.0
    %1754 = vmatprep.subr.mxu0 0.0
    %1755 = vmatpush1.msra.mxu0 0.0
    %1756 = vmatprep.subr.mxu0 0.0
    %1757 = vmatpush1.msra.mxu0 0.0
    %1758 = vmatprep.mubr.f32.mxu0 0.0
    %1759 = vmatmul.mubr.f32.gmra.mrb[0].mxu0 %v1668
    %v1760 = vpop.f32.mrb[0].mxu0
    %v1761 = vadd.f32 0.0, %v1760
    %v1762 = vpop.f32.mrb[0].mxu0
    %1763 = vmatprep.mubr.f32.mxu0 0.0
    %1764 = vmatmul.mubr.f32.gmra.mrb[0].mxu0 %v1671
    %v1765 = vpop.f32.mrb[0].mxu0
    %v1766 = vadd.f32 0.0, %v1765
    %v1767 = vpop.f32.mrb[0].mxu0
    %1768 = vmatprep.mubr.f32.mxu0 0.0
    %1769 = vmatmul.mubr.f32.gmra.mrb[0].mxu0 %v1674
    %v1770 = vpop.f32.mrb[0].mxu0
    %v1771 = vadd.f32 0.0, %v1770
    %v1772 = vpop.f32.mrb[0].mxu0
    %1773 = vmatprep.mubr.f32.mxu0 0.0
    %1774 = vmatmul.mubr.f32.gmra.mrb[0].mxu0 %v1677
    %v1775 = vpop.f32.mrb[0].mxu0
    %v1776 = vadd.f32 0.0, %v1775
    %v1777 = vpop.f32.mrb[0].mxu0
    %1778 = vmatprep.mubr.f32.mxu0 0.0
    %1779 = vmatmul.mubr.f32.gmra.mrb[0].mxu0 %v1680
    %v1780 = vpop.f32.mrb[0].mxu0
    %v1781 = vadd.f32 0.0, %v1780
    %v1782 = vpop.f32.mrb[0].mxu0
    %1783 = vmatprep.mubr.f32.mxu0 0.0
    %1784 = vmatmul.mubr.f32.gmra.mrb[0].mxu0 %v1683
    %v1785 = vpop.f32.mrb[0].mxu0
    %v1786 = vadd.f32 0.0, %v1785
    %v1787 = vpop.f32.mrb[0].mxu0
    %1788 = vmatprep.mubr.f32.mxu0 0.0
    %1789 = vmatmul.mubr.f32.gmra.mrb[0].mxu0 %v1686
    %v1790 = vpop.f32.mrb[0].mxu0
    %v1791 = vadd.f32 0.0, %v1790
    %v1792 = vpop.f32.mrb[0].mxu0
    %1793 = vmatprep.mubr.f32.mxu0 0.0
    %1794 = vmatmul.mubr.f32.gmra.mrb[0].mxu0 %v1689
    %v1795 = vpop.f32.mrb[0].mxu0
    %v1796 = vadd.f32 0.0, %v1795
    %v1797 = vpop.f32.mrb[0].mxu0
    %1798 = vmatprep.mubr.f32.mxu0 0.0
    %1799 = vmatmul.mubr.f32.gmra.mrb[0].mxu0 %v1692
    %v1800 = vpop.f32.mrb[0].mxu0
    %v1801 = vadd.f32 0.0, %v1800
    %v1802 = vpop.f32.mrb[0].mxu0
    %1803 = vdwg.mxu0
    %v1804 = vadd.f32 %v1640, %v1761
    %v1805 = vadd.f32 %v1641, %v1766
    %v1806 = vadd.f32 %v1642, %v1771
    %v1807 = vadd.f32 %v1643, %v1776
    %v1808 = vadd.f32 %v1644, %v1781
    %v1809 = vadd.f32 %v1645, %v1786
    %v1810 = vadd.f32 %v1646, %v1791
    %v1811 = vadd.f32 %v1647, %v1796
    %v1812 = vadd.f32 %v1648, %v1801
    %v1813 = vld [vmem:[#allocation2 + $0x15] sm:$0xff]
    %v1814 = vld [vmem:[#allocation2 + $0x1d] sm:$0xff]
    %v1815 = vld [vmem:[#allocation2 + $0x25] sm:$0xff]
    %v1816 = vld [vmem:[#allocation2 + $0x2d] sm:$0xff]
    %v1817 = vld [vmem:[#allocation2 + $0x35] sm:$0xff]
    %v1818 = vld [vmem:[#allocation2 + $0x3d] sm:$0xff]
    %v1819 = vld [vmem:[#allocation2 + $0x45] sm:$0xff]
    %v1820 = vld [vmem:[#allocation2 + $0x4d] sm:$0xff]
    %v1821 = vld [vmem:[#allocation2 + $0x55] sm:$0xff]
    %s1822 = scalar_lea.vmem [#allocation14], 384
    %v1823 = vld [vmem:[%s1822] sm:$0xff]
    %v1824 = vld [vmem:[%s1822 + $0x8] sm:$0xff]
    %v1825 = vld [vmem:[%s1822 + $0x10] sm:$0xff]
    %v1826 = vld [vmem:[%s1822 + $0x18] sm:$0xff]
    %v1827 = vld [vmem:[%s1822 + $0x20] sm:$0xff]
    %v1828 = vld [vmem:[%s1822 + $0x28] sm:$0xff]
    %v1829 = vld [vmem:[%s1822 + $0x30] sm:$0xff]
    %v1830 = vld [vmem:[%s1822 + $0x38] sm:$0xff]
    %v1832 = vsel %vm659, %v1813, 0
    %v1835 = vsel %vm659, %v1814, 0
    %v1838 = vsel %vm659, %v1815, 0
    %v1841 = vsel %vm659, %v1816, 0
    %v1844 = vsel %vm659, %v1817, 0
    %v1847 = vsel %vm659, %v1818, 0
    %v1850 = vsel %vm659, %v1819, 0
    %v1853 = vsel %vm659, %v1820, 0
    %v1856 = vsel %vm659, %v1821, 0
    %1858 = vmatprep.subr.mxu0 0.0
    %1859 = vmatpush1.msra.mxu0 %v1823
    %1860 = vmatprep.subr.mxu0 0.0
    %1861 = vmatpush1.msra.mxu0 %v1824
    %1862 = vmatprep.subr.mxu0 0.0
    %1863 = vmatpush1.msra.mxu0 %v1825
    %1864 = vmatprep.subr.mxu0 0.0
    %1865 = vmatpush1.msra.mxu0 %v1826
    %1866 = vmatprep.subr.mxu0 0.0
    %1867 = vmatpush1.msra.mxu0 %v1827
    %1868 = vmatprep.subr.mxu0 0.0
    %1869 = vmatpush1.msra.mxu0 %v1828
    %1870 = vmatprep.subr.mxu0 0.0
    %1871 = vmatpush1.msra.mxu0 %v1829
    %1872 = vmatprep.subr.mxu0 0.0
    %1873 = vmatpush1.msra.mxu0 %v1830
    %1874 = vmatprep.subr.mxu0 0.0
    %1875 = vmatpush1.msra.mxu0 0.0
    %1876 = vmatprep.subr.mxu0 0.0
    %1877 = vmatpush1.msra.mxu0 0.0
    %1878 = vmatprep.subr.mxu0 0.0
    %1879 = vmatpush1.msra.mxu0 0.0
    %1880 = vmatprep.subr.mxu0 0.0
    %1881 = vmatpush1.msra.mxu0 0.0
    %1882 = vmatprep.subr.mxu0 0.0
    %1883 = vmatpush1.msra.mxu0 0.0
    %1884 = vmatprep.subr.mxu0 0.0
    %1885 = vmatpush1.msra.mxu0 0.0
    %1886 = vmatprep.subr.mxu0 0.0
    %1887 = vmatpush1.msra.mxu0 0.0
    %1888 = vmatprep.subr.mxu0 0.0
    %1889 = vmatpush1.msra.mxu0 0.0
    %1890 = vmatprep.subr.mxu0 0.0
    %1891 = vmatpush1.msra.mxu0 0.0
    %1892 = vmatprep.subr.mxu0 0.0
    %1893 = vmatpush1.msra.mxu0 0.0
    %1894 = vmatprep.subr.mxu0 0.0
    %1895 = vmatpush1.msra.mxu0 0.0
    %1896 = vmatprep.subr.mxu0 0.0
    %1897 = vmatpush1.msra.mxu0 0.0
    %1898 = vmatprep.subr.mxu0 0.0
    %1899 = vmatpush1.msra.mxu0 0.0
    %1900 = vmatprep.subr.mxu0 0.0
    %1901 = vmatpush1.msra.mxu0 0.0
    %1902 = vmatprep.subr.mxu0 0.0
    %1903 = vmatpush1.msra.mxu0 0.0
    %1904 = vmatprep.subr.mxu0 0.0
    %1905 = vmatpush1.msra.mxu0 0.0
    %1906 = vmatprep.subr.mxu0 0.0
    %1907 = vmatpush1.msra.mxu0 0.0
    %1908 = vmatprep.subr.mxu0 0.0
    %1909 = vmatpush1.msra.mxu0 0.0
    %1910 = vmatprep.subr.mxu0 0.0
    %1911 = vmatpush1.msra.mxu0 0.0
    %1912 = vmatprep.subr.mxu0 0.0
    %1913 = vmatpush1.msra.mxu0 0.0
    %1914 = vmatprep.subr.mxu0 0.0
    %1915 = vmatpush1.msra.mxu0 0.0
    %1916 = vmatprep.subr.mxu0 0.0
    %1917 = vmatpush1.msra.mxu0 0.0
    %1918 = vmatprep.subr.mxu0 0.0
    %1919 = vmatpush1.msra.mxu0 0.0
    %1920 = vmatprep.subr.mxu0 0.0
    %1921 = vmatpush1.msra.mxu0 0.0
    %1922 = vmatprep.mubr.f32.mxu0 0.0
    %1923 = vmatmul.mubr.f32.gmra.mrb[0].mxu0 %v1832
    %v1924 = vpop.f32.mrb[0].mxu0
    %v1925 = vadd.f32 0.0, %v1924
    %v1926 = vpop.f32.mrb[0].mxu0
    %1927 = vmatprep.mubr.f32.mxu0 0.0
    %1928 = vmatmul.mubr.f32.gmra.mrb[0].mxu0 %v1835
    %v1929 = vpop.f32.mrb[0].mxu0
    %v1930 = vadd.f32 0.0, %v1929
    %v1931 = vpop.f32.mrb[0].mxu0
    %1932 = vmatprep.mubr.f32.mxu0 0.0
    %1933 = vmatmul.mubr.f32.gmra.mrb[0].mxu0 %v1838
    %v1934 = vpop.f32.mrb[0].mxu0
    %v1935 = vadd.f32 0.0, %v1934
    %v1936 = vpop.f32.mrb[0].mxu0
    %1937 = vmatprep.mubr.f32.mxu0 0.0
    %1938 = vmatmul.mubr.f32.gmra.mrb[0].mxu0 %v1841
    %v1939 = vpop.f32.mrb[0].mxu0
    %v1940 = vadd.f32 0.0, %v1939
    %v1941 = vpop.f32.mrb[0].mxu0
    %1942 = vmatprep.mubr.f32.mxu0 0.0
    %1943 = vmatmul.mubr.f32.gmra.mrb[0].mxu0 %v1844
    %v1944 = vpop.f32.mrb[0].mxu0
    %v1945 = vadd.f32 0.0, %v1944
    %v1946 = vpop.f32.mrb[0].mxu0
    %1947 = vmatprep.mubr.f32.mxu0 0.0
    %1948 = vmatmul.mubr.f32.gmra.mrb[0].mxu0 %v1847
    %v1949 = vpop.f32.mrb[0].mxu0
    %v1950 = vadd.f32 0.0, %v1949
    %v1951 = vpop.f32.mrb[0].mxu0
    %1952 = vmatprep.mubr.f32.mxu0 0.0
    %1953 = vmatmul.mubr.f32.gmra.mrb[0].mxu0 %v1850
    %v1954 = vpop.f32.mrb[0].mxu0
    %v1955 = vadd.f32 0.0, %v1954
    %v1956 = vpop.f32.mrb[0].mxu0
    %1957 = vmatprep.mubr.f32.mxu0 0.0
    %1958 = vmatmul.mubr.f32.gmra.mrb[0].mxu0 %v1853
    %v1959 = vpop.f32.mrb[0].mxu0
    %v1960 = vadd.f32 0.0, %v1959
    %v1961 = vpop.f32.mrb[0].mxu0
    %1962 = vmatprep.mubr.f32.mxu0 0.0
    %1963 = vmatmul.mubr.f32.gmra.mrb[0].mxu0 %v1856
    %v1964 = vpop.f32.mrb[0].mxu0
    %v1965 = vadd.f32 0.0, %v1964
    %v1966 = vpop.f32.mrb[0].mxu0
    %1967 = vdwg.mxu0
    %v1968 = vadd.f32 %v1804, %v1925
    %v1969 = vadd.f32 %v1805, %v1930
    %v1970 = vadd.f32 %v1806, %v1935
    %v1971 = vadd.f32 %v1807, %v1940
    %v1972 = vadd.f32 %v1808, %v1945
    %v1973 = vadd.f32 %v1809, %v1950
    %v1974 = vadd.f32 %v1810, %v1955
    %v1975 = vadd.f32 %v1811, %v1960
    %v1976 = vadd.f32 %v1812, %v1965
    %v1977 = vld [vmem:[#allocation2 + $0x16] sm:$0xff]
    %v1978 = vld [vmem:[#allocation2 + $0x1e] sm:$0xff]
    %v1979 = vld [vmem:[#allocation2 + $0x26] sm:$0xff]
    %v1980 = vld [vmem:[#allocation2 + $0x2e] sm:$0xff]
    %v1981 = vld [vmem:[#allocation2 + $0x36] sm:$0xff]
    %v1982 = vld [vmem:[#allocation2 + $0x3e] sm:$0xff]
    %v1983 = vld [vmem:[#allocation2 + $0x46] sm:$0xff]
    %v1984 = vld [vmem:[#allocation2 + $0x4e] sm:$0xff]
    %v1985 = vld [vmem:[#allocation2 + $0x56] sm:$0xff]
    %s1986 = scalar_lea.vmem [#allocation14], 448
    %v1987 = vld [vmem:[%s1986] sm:$0xff]
    %v1988 = vld [vmem:[%s1986 + $0x8] sm:$0xff]
    %v1989 = vld [vmem:[%s1986 + $0x10] sm:$0xff]
    %v1990 = vld [vmem:[%s1986 + $0x18] sm:$0xff]
    %v1991 = vld [vmem:[%s1986 + $0x20] sm:$0xff]
    %v1992 = vld [vmem:[%s1986 + $0x28] sm:$0xff]
    %v1993 = vld [vmem:[%s1986 + $0x30] sm:$0xff]
    %v1994 = vld [vmem:[%s1986 + $0x38] sm:$0xff]
    %v1996 = vsel %vm659, %v1977, 0
    %v1999 = vsel %vm659, %v1978, 0
    %v2002 = vsel %vm659, %v1979, 0
    %v2005 = vsel %vm659, %v1980, 0
    %v2008 = vsel %vm659, %v1981, 0
    %v2011 = vsel %vm659, %v1982, 0
    %v2014 = vsel %vm659, %v1983, 0
    %v2017 = vsel %vm659, %v1984, 0
    %v2020 = vsel %vm659, %v1985, 0
    %2022 = vmatprep.subr.mxu0 0.0
    %2023 = vmatpush1.msra.mxu0 %v1987
    %2024 = vmatprep.subr.mxu0 0.0
    %2025 = vmatpush1.msra.mxu0 %v1988
    %2026 = vmatprep.subr.mxu0 0.0
    %2027 = vmatpush1.msra.mxu0 %v1989
    %2028 = vmatprep.subr.mxu0 0.0
    %2029 = vmatpush1.msra.mxu0 %v1990
    %2030 = vmatprep.subr.mxu0 0.0
    %2031 = vmatpush1.msra.mxu0 %v1991
    %2032 = vmatprep.subr.mxu0 0.0
    %2033 = vmatpush1.msra.mxu0 %v1992
    %2034 = vmatprep.subr.mxu0 0.0
    %2035 = vmatpush1.msra.mxu0 %v1993
    %2036 = vmatprep.subr.mxu0 0.0
    %2037 = vmatpush1.msra.mxu0 %v1994
    %2038 = vmatprep.subr.mxu0 0.0
    %2039 = vmatpush1.msra.mxu0 0.0
    %2040 = vmatprep.subr.mxu0 0.0
    %2041 = vmatpush1.msra.mxu0 0.0
    %2042 = vmatprep.subr.mxu0 0.0
    %2043 = vmatpush1.msra.mxu0 0.0
    %2044 = vmatprep.subr.mxu0 0.0
    %2045 = vmatpush1.msra.mxu0 0.0
    %2046 = vmatprep.subr.mxu0 0.0
    %2047 = vmatpush1.msra.mxu0 0.0
    %2048 = vmatprep.subr.mxu0 0.0
    %2049 = vmatpush1.msra.mxu0 0.0
    %2050 = vmatprep.subr.mxu0 0.0
    %2051 = vmatpush1.msra.mxu0 0.0
    %2052 = vmatprep.subr.mxu0 0.0
    %2053 = vmatpush1.msra.mxu0 0.0
    %2054 = vmatprep.subr.mxu0 0.0
    %2055 = vmatpush1.msra.mxu0 0.0
    %2056 = vmatprep.subr.mxu0 0.0
    %2057 = vmatpush1.msra.mxu0 0.0
    %2058 = vmatprep.subr.mxu0 0.0
    %2059 = vmatpush1.msra.mxu0 0.0
    %2060 = vmatprep.subr.mxu0 0.0
    %2061 = vmatpush1.msra.mxu0 0.0
    %2062 = vmatprep.subr.mxu0 0.0
    %2063 = vmatpush1.msra.mxu0 0.0
    %2064 = vmatprep.subr.mxu0 0.0
    %2065 = vmatpush1.msra.mxu0 0.0
    %2066 = vmatprep.subr.mxu0 0.0
    %2067 = vmatpush1.msra.mxu0 0.0
    %2068 = vmatprep.subr.mxu0 0.0
    %2069 = vmatpush1.msra.mxu0 0.0
    %2070 = vmatprep.subr.mxu0 0.0
    %2071 = vmatpush1.msra.mxu0 0.0
    %2072 = vmatprep.subr.mxu0 0.0
    %2073 = vmatpush1.msra.mxu0 0.0
    %2074 = vmatprep.subr.mxu0 0.0
    %2075 = vmatpush1.msra.mxu0 0.0
    %2076 = vmatprep.subr.mxu0 0.0
    %2077 = vmatpush1.msra.mxu0 0.0
    %2078 = vmatprep.subr.mxu0 0.0
    %2079 = vmatpush1.msra.mxu0 0.0
    %2080 = vmatprep.subr.mxu0 0.0
    %2081 = vmatpush1.msra.mxu0 0.0
    %2082 = vmatprep.subr.mxu0 0.0
    %2083 = vmatpush1.msra.mxu0 0.0
    %2084 = vmatprep.subr.mxu0 0.0
    %2085 = vmatpush1.msra.mxu0 0.0
    %2086 = vmatprep.mubr.f32.mxu0 0.0
    %2087 = vmatmul.mubr.f32.gmra.mrb[0].mxu0 %v1996
    %v2088 = vpop.f32.mrb[0].mxu0
    %v2089 = vadd.f32 0.0, %v2088
    %v2090 = vpop.f32.mrb[0].mxu0
    %2091 = vmatprep.mubr.f32.mxu0 0.0
    %2092 = vmatmul.mubr.f32.gmra.mrb[0].mxu0 %v1999
    %v2093 = vpop.f32.mrb[0].mxu0
    %v2094 = vadd.f32 0.0, %v2093
    %v2095 = vpop.f32.mrb[0].mxu0
    %2096 = vmatprep.mubr.f32.mxu0 0.0
    %2097 = vmatmul.mubr.f32.gmra.mrb[0].mxu0 %v2002
    %v2098 = vpop.f32.mrb[0].mxu0
    %v2099 = vadd.f32 0.0, %v2098
    %v2100 = vpop.f32.mrb[0].mxu0
    %2101 = vmatprep.mubr.f32.mxu0 0.0
    %2102 = vmatmul.mubr.f32.gmra.mrb[0].mxu0 %v2005
    %v2103 = vpop.f32.mrb[0].mxu0
    %v2104 = vadd.f32 0.0, %v2103
    %v2105 = vpop.f32.mrb[0].mxu0
    %2106 = vmatprep.mubr.f32.mxu0 0.0
    %2107 = vmatmul.mubr.f32.gmra.mrb[0].mxu0 %v2008
    %v2108 = vpop.f32.mrb[0].mxu0
    %v2109 = vadd.f32 0.0, %v2108
    %v2110 = vpop.f32.mrb[0].mxu0
    %2111 = vmatprep.mubr.f32.mxu0 0.0
    %2112 = vmatmul.mubr.f32.gmra.mrb[0].mxu0 %v2011
    %v2113 = vpop.f32.mrb[0].mxu0
    %v2114 = vadd.f32 0.0, %v2113
    %v2115 = vpop.f32.mrb[0].mxu0
    %2116 = vmatprep.mubr.f32.mxu0 0.0
    %2117 = vmatmul.mubr.f32.gmra.mrb[0].mxu0 %v2014
    %v2118 = vpop.f32.mrb[0].mxu0
    %v2119 = vadd.f32 0.0, %v2118
    %v2120 = vpop.f32.mrb[0].mxu0
    %2121 = vmatprep.mubr.f32.mxu0 0.0
    %2122 = vmatmul.mubr.f32.gmra.mrb[0].mxu0 %v2017
    %v2123 = vpop.f32.mrb[0].mxu0
    %v2124 = vadd.f32 0.0, %v2123
    %v2125 = vpop.f32.mrb[0].mxu0
    %2126 = vmatprep.mubr.f32.mxu0 0.0
    %2127 = vmatmul.mubr.f32.gmra.mrb[0].mxu0 %v2020
    %v2128 = vpop.f32.mrb[0].mxu0
    %v2129 = vadd.f32 0.0, %v2128
    %v2130 = vpop.f32.mrb[0].mxu0
    %2131 = vdwg.mxu0
    %v2132 = vadd.f32 %v1968, %v2089
    %v2133 = vadd.f32 %v1969, %v2094
    %v2134 = vadd.f32 %v1970, %v2099
    %v2135 = vadd.f32 %v1971, %v2104
    %v2136 = vadd.f32 %v1972, %v2109
    %v2137 = vadd.f32 %v1973, %v2114
    %v2138 = vadd.f32 %v1974, %v2119
    %v2139 = vadd.f32 %v1975, %v2124
    %v2140 = vadd.f32 %v1976, %v2129
    %v2141 = vld [vmem:[#allocation2 + $0x17] sm:$0xff]
    %v2142 = vld [vmem:[#allocation2 + $0x1f] sm:$0xff]
    %v2143 = vld [vmem:[#allocation2 + $0x27] sm:$0xff]
    %v2144 = vld [vmem:[#allocation2 + $0x2f] sm:$0xff]
    %v2145 = vld [vmem:[#allocation2 + $0x37] sm:$0xff]
    %v2146 = vld [vmem:[#allocation2 + $0x3f] sm:$0xff]
    %v2147 = vld [vmem:[#allocation2 + $0x47] sm:$0xff]
    %v2148 = vld [vmem:[#allocation2 + $0x4f] sm:$0xff]
    %v2149 = vld [vmem:[#allocation2 + $0x57] sm:$0xff]
    %s2150 = scalar_lea.vmem [#allocation14], 512
    %v2151 = vld [vmem:[%s2150] sm:$0xff]
    %v2152 = vld [vmem:[%s2150 + $0x8] sm:$0xff]
    %v2153 = vld [vmem:[%s2150 + $0x10] sm:$0xff]
    %v2154 = vld [vmem:[%s2150 + $0x18] sm:$0xff]
    %v2155 = vld [vmem:[%s2150 + $0x20] sm:$0xff]
    %v2156 = vld [vmem:[%s2150 + $0x28] sm:$0xff]
    %v2157 = vld [vmem:[%s2150 + $0x30] sm:$0xff]
    %v2158 = vld [vmem:[%s2150 + $0x38] sm:$0xff]
    %v2160 = vsel %vm659, %v2141, 0
    %v2163 = vsel %vm659, %v2142, 0
    %v2166 = vsel %vm659, %v2143, 0
    %v2169 = vsel %vm659, %v2144, 0
    %v2172 = vsel %vm659, %v2145, 0
    %v2175 = vsel %vm659, %v2146, 0
    %v2178 = vsel %vm659, %v2147, 0
    %v2181 = vsel %vm659, %v2148, 0
    %v2184 = vsel %vm659, %v2149, 0
    %2186 = vmatprep.subr.mxu0 0.0
    %2187 = vmatpush1.msra.mxu0 %v2151
    %2188 = vmatprep.subr.mxu0 0.0
    %2189 = vmatpush1.msra.mxu0 %v2152
    %2190 = vmatprep.subr.mxu0 0.0
    %2191 = vmatpush1.msra.mxu0 %v2153
    %2192 = vmatprep.subr.mxu0 0.0
    %2193 = vmatpush1.msra.mxu0 %v2154
    %2194 = vmatprep.subr.mxu0 0.0
    %2195 = vmatpush1.msra.mxu0 %v2155
    %2196 = vmatprep.subr.mxu0 0.0
    %2197 = vmatpush1.msra.mxu0 %v2156
    %2198 = vmatprep.subr.mxu0 0.0
    %2199 = vmatpush1.msra.mxu0 %v2157
    %2200 = vmatprep.subr.mxu0 0.0
    %2201 = vmatpush1.msra.mxu0 %v2158
    %2202 = vmatprep.subr.mxu0 0.0
    %2203 = vmatpush1.msra.mxu0 0.0
    %2204 = vmatprep.subr.mxu0 0.0
    %2205 = vmatpush1.msra.mxu0 0.0
    %2206 = vmatprep.subr.mxu0 0.0
    %2207 = vmatpush1.msra.mxu0 0.0
    %2208 = vmatprep.subr.mxu0 0.0
    %2209 = vmatpush1.msra.mxu0 0.0
    %2210 = vmatprep.subr.mxu0 0.0
    %2211 = vmatpush1.msra.mxu0 0.0
    %2212 = vmatprep.subr.mxu0 0.0
    %2213 = vmatpush1.msra.mxu0 0.0
    %2214 = vmatprep.subr.mxu0 0.0
    %2215 = vmatpush1.msra.mxu0 0.0
    %2216 = vmatprep.subr.mxu0 0.0
    %2217 = vmatpush1.msra.mxu0 0.0
    %2218 = vmatprep.subr.mxu0 0.0
    %2219 = vmatpush1.msra.mxu0 0.0
    %2220 = vmatprep.subr.mxu0 0.0
    %2221 = vmatpush1.msra.mxu0 0.0
    %2222 = vmatprep.subr.mxu0 0.0
    %2223 = vmatpush1.msra.mxu0 0.0
    %2224 = vmatprep.subr.mxu0 0.0
    %2225 = vmatpush1.msra.mxu0 0.0
    %2226 = vmatprep.subr.mxu0 0.0
    %2227 = vmatpush1.msra.mxu0 0.0
    %2228 = vmatprep.subr.mxu0 0.0
    %2229 = vmatpush1.msra.mxu0 0.0
    %2230 = vmatprep.subr.mxu0 0.0
    %2231 = vmatpush1.msra.mxu0 0.0
    %2232 = vmatprep.subr.mxu0 0.0
    %2233 = vmatpush1.msra.mxu0 0.0
    %2234 = vmatprep.subr.mxu0 0.0
    %2235 = vmatpush1.msra.mxu0 0.0
    %2236 = vmatprep.subr.mxu0 0.0
    %2237 = vmatpush1.msra.mxu0 0.0
    %2238 = vmatprep.subr.mxu0 0.0
    %2239 = vmatpush1.msra.mxu0 0.0
    %2240 = vmatprep.subr.mxu0 0.0
    %2241 = vmatpush1.msra.mxu0 0.0
    %2242 = vmatprep.subr.mxu0 0.0
    %2243 = vmatpush1.msra.mxu0 0.0
    %2244 = vmatprep.subr.mxu0 0.0
    %2245 = vmatpush1.msra.mxu0 0.0
    %2246 = vmatprep.subr.mxu0 0.0
    %2247 = vmatpush1.msra.mxu0 0.0
    %2248 = vmatprep.subr.mxu0 0.0
    %2249 = vmatpush1.msra.mxu0 0.0
    %2250 = vmatprep.mubr.f32.mxu0 0.0
    %2251 = vmatmul.mubr.f32.gmra.mrb[0].mxu0 %v2160
    %v2252 = vpop.f32.mrb[0].mxu0
    %v2253 = vadd.f32 0.0, %v2252
    %v2254 = vpop.f32.mrb[0].mxu0
    %2255 = vmatprep.mubr.f32.mxu0 0.0
    %2256 = vmatmul.mubr.f32.gmra.mrb[0].mxu0 %v2163
    %v2257 = vpop.f32.mrb[0].mxu0
    %v2258 = vadd.f32 0.0, %v2257
    %v2259 = vpop.f32.mrb[0].mxu0
    %2260 = vmatprep.mubr.f32.mxu0 0.0
    %2261 = vmatmul.mubr.f32.gmra.mrb[0].mxu0 %v2166
    %v2262 = vpop.f32.mrb[0].mxu0
    %v2263 = vadd.f32 0.0, %v2262
    %v2264 = vpop.f32.mrb[0].mxu0
    %2265 = vmatprep.mubr.f32.mxu0 0.0
    %2266 = vmatmul.mubr.f32.gmra.mrb[0].mxu0 %v2169
    %v2267 = vpop.f32.mrb[0].mxu0
    %v2268 = vadd.f32 0.0, %v2267
    %v2269 = vpop.f32.mrb[0].mxu0
    %2270 = vmatprep.mubr.f32.mxu0 0.0
    %2271 = vmatmul.mubr.f32.gmra.mrb[0].mxu0 %v2172
    %v2272 = vpop.f32.mrb[0].mxu0
    %v2273 = vadd.f32 0.0, %v2272
    %v2274 = vpop.f32.mrb[0].mxu0
    %2275 = vmatprep.mubr.f32.mxu0 0.0
    %2276 = vmatmul.mubr.f32.gmra.mrb[0].mxu0 %v2175
    %v2277 = vpop.f32.mrb[0].mxu0
    %v2278 = vadd.f32 0.0, %v2277
    %v2279 = vpop.f32.mrb[0].mxu0
    %2280 = vmatprep.mubr.f32.mxu0 0.0
    %2281 = vmatmul.mubr.f32.gmra.mrb[0].mxu0 %v2178
    %v2282 = vpop.f32.mrb[0].mxu0
    %v2283 = vadd.f32 0.0, %v2282
    %v2284 = vpop.f32.mrb[0].mxu0
    %2285 = vmatprep.mubr.f32.mxu0 0.0
    %2286 = vmatmul.mubr.f32.gmra.mrb[0].mxu0 %v2181
    %v2287 = vpop.f32.mrb[0].mxu0
    %v2288 = vadd.f32 0.0, %v2287
    %v2289 = vpop.f32.mrb[0].mxu0
    %2290 = vmatprep.mubr.f32.mxu0 0.0
    %2291 = vmatmul.mubr.f32.gmra.mrb[0].mxu0 %v2184
    %v2292 = vpop.f32.mrb[0].mxu0
    %v2293 = vadd.f32 0.0, %v2292
    %v2294 = vpop.f32.mrb[0].mxu0
    %2295 = vdwg.mxu0
    %v2296 = vadd.f32 %v2132, %v2253
    %v2297 = vadd.f32 %v2133, %v2258
    %v2298 = vadd.f32 %v2134, %v2263
    %v2299 = vadd.f32 %v2135, %v2268
    %v2300 = vadd.f32 %v2136, %v2273
    %v2301 = vadd.f32 %v2137, %v2278
    %v2302 = vadd.f32 %v2138, %v2283
    %v2303 = vadd.f32 %v2139, %v2288
    %v2304 = vadd.f32 %v2140, %v2293
    %v2305 = vld [vmem:[#allocation16] sm:$0x1]
    %v2307 = vlaneseq
    %v2308 = vshrl.u32 %v2307, 7
    %v2309 = vsub.s32 0, %v2308
    %v2310 = vrot.slane %v2305, %v2309
    %v2312 = vadd.f32 %v2296, %v2310
    %v2313 = vadd.f32 %v2297, %v2310
    %v2314 = vadd.f32 %v2298, %v2310
    %v2315 = vadd.f32 %v2299, %v2310
    %v2316 = vadd.f32 %v2300, %v2310
    %v2317 = vadd.f32 %v2301, %v2310
    %v2318 = vadd.f32 %v2302, %v2310
    %v2319 = vadd.f32 %v2303, %v2310
    %v2320 = vadd.f32 %v2304, %v2310
    %vm2321 = vcmp.gt.f32.partialorder %v2312, 0.0
    %vm2322 = vcmp.gt.f32.partialorder %v2313, 0.0
    %vm2323 = vcmp.gt.f32.partialorder %v2314, 0.0
    %vm2324 = vcmp.gt.f32.partialorder %v2315, 0.0
    %vm2325 = vcmp.gt.f32.partialorder %v2316, 0.0
    %vm2326 = vcmp.gt.f32.partialorder %v2317, 0.0
    %vm2327 = vcmp.gt.f32.partialorder %v2318, 0.0
    %vm2328 = vcmp.gt.f32.partialorder %v2319, 0.0
    %vm2329 = vcmp.gt.f32.partialorder %v2320, 0.0
    %v2330 = vmul.f32 %v2312, 0.2
    %v2331 = vmul.f32 %v2313, 0.2
    %v2332 = vmul.f32 %v2314, 0.2
    %v2333 = vmul.f32 %v2315, 0.2
    %v2334 = vmul.f32 %v2316, 0.2
    %v2335 = vmul.f32 %v2317, 0.2
    %v2336 = vmul.f32 %v2318, 0.2
    %v2337 = vmul.f32 %v2319, 0.2
    %v2338 = vmul.f32 %v2320, 0.2
    %v2339 = vsel %vm2321, %v2312, %v2330
    %v2340 = vsel %vm2322, %v2313, %v2331
    %v2341 = vsel %vm2323, %v2314, %v2332
    %v2342 = vsel %vm2324, %v2315, %v2333
    %v2343 = vsel %vm2325, %v2316, %v2334
    %v2344 = vsel %vm2326, %v2317, %v2335
    %v2345 = vsel %vm2327, %v2318, %v2336
    %v2346 = vsel %vm2328, %v2319, %v2337
    %v2347 = vsel %vm2329, %v2320, %v2338
    %v2348 = vmul.f32 %v2339, %v2339
    %v2349 = vmul.f32 %v2340, %v2340
    %v2350 = vmul.f32 %v2341, %v2341
    %v2351 = vmul.f32 %v2342, %v2342
    %v2352 = vmul.f32 %v2343, %v2343
    %v2353 = vmul.f32 %v2344, %v2344
    %v2354 = vmul.f32 %v2345, %v2345
    %v2355 = vmul.f32 %v2346, %v2346
    %v2356 = vmul.f32 %v2347, %v2347
    %v2357 = vsel %vm659, %v2348, 0.0
    %2358 = vadd.xlane.f32.xlu0 %v2357
    %v2359 = vpop.xlane.xlu0 %2358
    %v2360 = vsel %vm659, %v2349, 0.0
    %2361 = vadd.xlane.f32.xlu0 %v2360
    %v2362 = vpop.xlane.xlu0 %2361
    %v2363 = vsel %vm659, %v2350, 0.0
    %2364 = vadd.xlane.f32.xlu0 %v2363
    %v2365 = vpop.xlane.xlu0 %2364
    %v2366 = vsel %vm659, %v2351, 0.0
    %2367 = vadd.xlane.f32.xlu0 %v2366
    %v2368 = vpop.xlane.xlu0 %2367
    %v2369 = vsel %vm659, %v2352, 0.0
    %2370 = vadd.xlane.f32.xlu0 %v2369
    %v2371 = vpop.xlane.xlu0 %2370
    %v2372 = vsel %vm659, %v2353, 0.0
    %2373 = vadd.xlane.f32.xlu0 %v2372
    %v2374 = vpop.xlane.xlu0 %2373
    %v2375 = vsel %vm659, %v2354, 0.0
    %2376 = vadd.xlane.f32.xlu0 %v2375
    %v2377 = vpop.xlane.xlu0 %2376
    %v2378 = vsel %vm659, %v2355, 0.0
    %2379 = vadd.xlane.f32.xlu0 %v2378
    %v2380 = vpop.xlane.xlu0 %2379
    %v2381 = vsel %vm659, %v2356, 0.0
    %2382 = vadd.xlane.f32.xlu0 %v2381
    %v2383 = vpop.xlane.xlu0 %2382
    %v2384 = vmul.f32 %v2359, %v672
    %v2385 = vmul.f32 %v2362, %v672
    %v2386 = vmul.f32 %v2365, %v672
    %v2387 = vmul.f32 %v2368, %v672
    %v2388 = vmul.f32 %v2371, %v672
    %v2389 = vmul.f32 %v2374, %v672
    %v2390 = vmul.f32 %v2377, %v672
    %v2391 = vmul.f32 %v2380, %v672
    %v2392 = vmul.f32 %v2383, %v672
    %v2393 = vadd.f32 %v2384, 1e-08
    %v2394 = vadd.f32 %v2385, 1e-08
    %v2395 = vadd.f32 %v2386, 1e-08
    %v2396 = vadd.f32 %v2387, 1e-08
    %v2397 = vadd.f32 %v2388, 1e-08
    %v2398 = vadd.f32 %v2389, 1e-08
    %v2399 = vadd.f32 %v2390, 1e-08
    %v2400 = vadd.f32 %v2391, 1e-08
    %v2401 = vadd.f32 %v2392, 1e-08
    %v2402 = vrsqrt.pop %v2393
    %v2403 = vrsqrt.pop %v2394
    %v2404 = vrsqrt.pop %v2395
    %v2405 = vrsqrt.pop %v2396
    %v2406 = vrsqrt.pop %v2397
    %v2407 = vrsqrt.pop %v2398
    %v2408 = vrsqrt.pop %v2399
    %v2409 = vrsqrt.pop %v2400
    %v2410 = vrsqrt.pop %v2401
    %v2411 = vmul.f32 %v2339, %v2402
    %v2412 = vmul.f32 %v2340, %v2403
    %v2413 = vmul.f32 %v2341, %v2404
    %v2414 = vmul.f32 %v2342, %v2405
    %v2415 = vmul.f32 %v2343, %v2406
    %v2416 = vmul.f32 %v2344, %v2407
    %v2417 = vmul.f32 %v2345, %v2408
    %v2418 = vmul.f32 %v2346, %v2409
    %v2419 = vmul.f32 %v2347, %v2410
    %v2420 = vld [vmem:[#allocation13] sm:$0xff]
    %v2421 = vld [vmem:[#allocation13 + $0x8] sm:$0xff]
    %v2422 = vld [vmem:[#allocation13 + $0x10] sm:$0xff]
    %v2423 = vld [vmem:[#allocation13 + $0x18] sm:$0xff]
    %v2424 = vld [vmem:[#allocation13 + $0x20] sm:$0xff]
    %v2425 = vld [vmem:[#allocation13 + $0x28] sm:$0xff]
    %v2426 = vld [vmem:[#allocation13 + $0x30] sm:$0xff]
    %v2427 = vld [vmem:[#allocation13 + $0x38] sm:$0xff]
    %v2428 = vld [vmem:[#allocation13 + $0x40] sm:$0xff]
    %2430 = vset.pattern.permute.xlu0 0
    %2431 = vperm.xlu0 %2430, %v2420
    %v2432 = vpop.permute.xlu0 %2431
    %2435 = vset.pattern.permute.xlu0 0
    %2436 = vperm.xlu0 %2435, %v2421
    %v2437 = vpop.permute.xlu0 %2436
    %2440 = vset.pattern.permute.xlu0 0
    %2441 = vperm.xlu0 %2440, %v2422
    %v2442 = vpop.permute.xlu0 %2441
    %2445 = vset.pattern.permute.xlu0 0
    %2446 = vperm.xlu0 %2445, %v2423
    %v2447 = vpop.permute.xlu0 %2446
    %2450 = vset.pattern.permute.xlu0 0
    %2451 = vperm.xlu0 %2450, %v2424
    %v2452 = vpop.permute.xlu0 %2451
    %2455 = vset.pattern.permute.xlu0 0
    %2456 = vperm.xlu0 %2455, %v2425
    %v2457 = vpop.permute.xlu0 %2456
    %2460 = vset.pattern.permute.xlu0 0
    %2461 = vperm.xlu0 %2460, %v2426
    %v2462 = vpop.permute.xlu0 %2461
    %2465 = vset.pattern.permute.xlu0 0
    %2466 = vperm.xlu0 %2465, %v2427
    %v2467 = vpop.permute.xlu0 %2466
    %2470 = vset.pattern.permute.xlu0 0
    %2471 = vperm.xlu0 %2470, %v2428
    %v2472 = vpop.permute.xlu0 %2471
    %v2474 = vmul.f32 %v2411, %v2432
    %v2475 = vmul.f32 %v2412, %v2437
    %v2476 = vmul.f32 %v2413, %v2442
    %v2477 = vmul.f32 %v2414, %v2447
    %v2478 = vmul.f32 %v2415, %v2452
    %v2479 = vmul.f32 %v2416, %v2457
    %v2480 = vmul.f32 %v2417, %v2462
    %v2481 = vmul.f32 %v2418, %v2467
    %v2482 = vmul.f32 %v2419, %v2472
    %2483 = vst.msk [vmem:[#allocation3] sm:$0xff] %vm659, 0.0
    %2484 = vst.msk [vmem:[#allocation3 + $0x8] sm:$0xff] %vm659, 0.0
    %2485 = vst.msk [vmem:[#allocation3 + $0x10] sm:$0xff] %vm659, %v2474
    %2486 = vst.msk [vmem:[#allocation3 + $0x18] sm:$0xff] %vm659, %v2475
    %2487 = vst.msk [vmem:[#allocation3 + $0x20] sm:$0xff] %vm659, %v2476
    %2488 = vst.msk [vmem:[#allocation3 + $0x28] sm:$0xff] %vm659, %v2477
    %2489 = vst.msk [vmem:[#allocation3 + $0x30] sm:$0xff] %vm659, %v2478
    %2490 = vst.msk [vmem:[#allocation3 + $0x38] sm:$0xff] %vm659, %v2479
    %2491 = vst.msk [vmem:[#allocation3 + $0x40] sm:$0xff] %vm659, %v2480
    %2492 = vst.msk [vmem:[#allocation3 + $0x48] sm:$0xff] %vm659, %v2481
    %2493 = vst.msk [vmem:[#allocation3 + $0x50] sm:$0xff] %vm659, %v2482
    %2494 = vst.msk [vmem:[#allocation3 + $0x58] sm:$0xff] %vm659, 0.0
    %2495 = vst.msk [vmem:[#allocation3 + $0x60] sm:$0xff] %vm659, 0.0
    %v2496 = vld [vmem:[#allocation22] sm:$0xff]
    %v2497 = vld [vmem:[#allocation22 + $0x8] sm:$0xff]
    %v2498 = vld [vmem:[#allocation22 + $0x10] sm:$0xff]
    %v2499 = vld [vmem:[#allocation22 + $0x18] sm:$0xff]
    %v2500 = vld [vmem:[#allocation22 + $0x20] sm:$0xff]
    %v2501 = vld [vmem:[#allocation22 + $0x28] sm:$0xff]
    %v2502 = vld [vmem:[#allocation22 + $0x30] sm:$0xff]
    %v2503 = vld [vmem:[#allocation22 + $0x38] sm:$0xff]
    %v2504 = vld [vmem:[#allocation22 + $0x40] sm:$0xff]
    %v2505 = vld [vmem:[#allocation22 + $0x48] sm:$0xff]
    %v2506 = vld [vmem:[#allocation22 + $0x50] sm:$0xff]
    %v2507 = vld [vmem:[#allocation22 + $0x58] sm:$0xff]
    %v2508 = vld [vmem:[#allocation22 + $0x60] sm:$0xff]
    %v2509 = vld [vmem:[#allocation22 + $0x68] sm:$0xff]
    %v2510 = vld [vmem:[#allocation22 + $0x70] sm:$0xff]
    %v2511 = vld [vmem:[#allocation22 + $0x78] sm:$0xff]
    %v2512 = vld [vmem:[#allocation22 + $0x80] sm:$0xff]
    %v2513 = vld [vmem:[#allocation22 + $0x88] sm:$0xff]
    %v2514 = vld [vmem:[#allocation22 + $0x90] sm:$0xff]
    %v2515 = vld [vmem:[#allocation22 + $0x98] sm:$0xff]
    %v2516 = vld [vmem:[#allocation22 + $0xa0] sm:$0xff]
    %v2517 = vld [vmem:[#allocation22 + $0xa8] sm:$0xff]
    %v2518 = vld [vmem:[#allocation22 + $0xb0] sm:$0xff]
    %v2519 = vld [vmem:[#allocation22 + $0xb8] sm:$0xff]
    %v2520 = vld [vmem:[#allocation22 + $0xc0] sm:$0xff]
    %v2521 = vld [vmem:[#allocation3 + $0x10] sm:$0xff]
    %v2522 = vld [vmem:[#allocation3 + $0x18] sm:$0xff]
    %v2523 = vld [vmem:[#allocation3 + $0x20] sm:$0xff]
    %v2524 = vld [vmem:[#allocation3 + $0x28] sm:$0xff]
    %v2525 = vld [vmem:[#allocation3 + $0x30] sm:$0xff]
    %v2526 = vld [vmem:[#allocation3 + $0x38] sm:$0xff]
    %v2527 = vld [vmem:[#allocation3 + $0x40] sm:$0xff]
    %v2528 = vld [vmem:[#allocation3 + $0x48] sm:$0xff]
    %v2529 = vld [vmem:[#allocation3 + $0x50] sm:$0xff]
    %vm2530 = vcmask 588800
    %v2532 = vsel %vm2530, %v2496, 0
    %v2535 = vsel %vm2530, %v2497, 0
    %v2538 = vsel %vm2530, %v2498, 0
    %v2541 = vsel %vm2530, %v2499, 0
    %v2544 = vsel %vm2530, %v2500, 0
    %v2547 = vsel %vm2530, %v2501, 0
    %v2550 = vsel %vm2530, %v2502, 0
    %v2553 = vsel %vm2530, %v2503, 0
    %v2556 = vsel %vm2530, %v2504, 0
    %v2559 = vsel %vm2530, %v2505, 0
    %v2562 = vsel %vm2530, %v2506, 0
    %v2565 = vsel %vm2530, %v2507, 0
    %v2568 = vsel %vm2530, %v2508, 0
    %v2571 = vsel %vm2530, %v2509, 0
    %v2574 = vsel %vm2530, %v2510, 0
    %v2577 = vsel %vm2530, %v2511, 0
    %v2580 = vsel %vm2530, %v2512, 0
    %v2583 = vsel %vm2530, %v2513, 0
    %v2586 = vsel %vm2530, %v2514, 0
    %v2589 = vsel %vm2530, %v2515, 0
    %v2592 = vsel %vm2530, %v2516, 0
    %v2595 = vsel %vm2530, %v2517, 0
    %v2598 = vsel %vm2530, %v2518, 0
    %v2601 = vsel %vm2530, %v2519, 0
    %v2604 = vsel %vm2530, %v2520, 0
    %2606 = vmatprep.subr.mxu0 0.0
    %2607 = vmatpush1.msra.mxu0 %v2521
    %2608 = vmatprep.subr.mxu0 0.0
    %2609 = vmatpush1.msra.mxu0 %v2522
    %2610 = vmatprep.subr.mxu0 0.0
    %2611 = vmatpush1.msra.mxu0 %v2523
    %2612 = vmatprep.subr.mxu0 0.0
    %2613 = vmatpush1.msra.mxu0 %v2524
    %2614 = vmatprep.subr.mxu0 0.0
    %2615 = vmatpush1.msra.mxu0 %v2525
    %2616 = vmatprep.subr.mxu0 0.0
    %2617 = vmatpush1.msra.mxu0 %v2526
    %2618 = vmatprep.subr.mxu0 0.0
    %2619 = vmatpush1.msra.mxu0 %v2527
    %2620 = vmatprep.subr.mxu0 0.0
    %2621 = vmatpush1.msra.mxu0 %v2528
    %2622 = vmatprep.subr.mxu0 0.0
    %2623 = vmatpush1.msra.mxu0 %v2529
    %2624 = vmatprep.subr.mxu0 0.0
    %2625 = vmatpush1.msra.mxu0 0.0
    %2626 = vmatprep.subr.mxu0 0.0
    %2627 = vmatpush1.msra.mxu0 0.0
    %2628 = vmatprep.subr.mxu0 0.0
    %2629 = vmatpush1.msra.mxu0 0.0
    %2630 = vmatprep.subr.mxu0 0.0
    %2631 = vmatpush1.msra.mxu0 0.0
    %2632 = vmatprep.subr.mxu0 0.0
    %2633 = vmatpush1.msra.mxu0 0.0
    %2634 = vmatprep.subr.mxu0 0.0
    %2635 = vmatpush1.msra.mxu0 0.0
    %2636 = vmatprep.subr.mxu0 0.0
    %2637 = vmatpush1.msra.mxu0 0.0
    %2638 = vmatprep.subr.mxu0 0.0
    %2639 = vmatpush1.msra.mxu0 0.0
    %2640 = vmatprep.subr.mxu0 0.0
    %2641 = vmatpush1.msra.mxu0 0.0
    %2642 = vmatprep.subr.mxu0 0.0
    %2643 = vmatpush1.msra.mxu0 0.0
    %2644 = vmatprep.subr.mxu0 0.0
    %2645 = vmatpush1.msra.mxu0 0.0
    %2646 = vmatprep.subr.mxu0 0.0
    %2647 = vmatpush1.msra.mxu0 0.0
    %2648 = vmatprep.subr.mxu0 0.0
    %2649 = vmatpush1.msra.mxu0 0.0
    %2650 = vmatprep.subr.mxu0 0.0
    %2651 = vmatpush1.msra.mxu0 0.0
    %2652 = vmatprep.subr.mxu0 0.0
    %2653 = vmatpush1.msra.mxu0 0.0
    %2654 = vmatprep.subr.mxu0 0.0
    %2655 = vmatpush1.msra.mxu0 0.0
    %2656 = vmatprep.subr.mxu0 0.0
    %2657 = vmatpush1.msra.mxu0 0.0
    %2658 = vmatprep.subr.mxu0 0.0
    %2659 = vmatpush1.msra.mxu0 0.0
    %2660 = vmatprep.subr.mxu0 0.0
    %2661 = vmatpush1.msra.mxu0 0.0
    %2662 = vmatprep.subr.mxu0 0.0
    %2663 = vmatpush1.msra.mxu0 0.0
    %2664 = vmatprep.subr.mxu0 0.0
    %2665 = vmatpush1.msra.mxu0 0.0
    %2666 = vmatprep.subr.mxu0 0.0
    %2667 = vmatpush1.msra.mxu0 0.0
    %2668 = vmatprep.subr.mxu0 0.0
    %2669 = vmatpush1.msra.mxu0 0.0
    %2670 = vmatprep.mubr.f32.mxu0 0.0
    %2671 = vmatmul.mubr.f32.gmra.mrb[0].mxu0 %v2532
    %v2672 = vpop.f32.mrb[0].mxu0
    %v2673 = vadd.f32 0.0, %v2672
    %v2674 = vpop.f32.mrb[0].mxu0
    %2675 = vmatprep.mubr.f32.mxu0 0.0
    %2676 = vmatmul.mubr.f32.gmra.mrb[0].mxu0 %v2535
    %v2677 = vpop.f32.mrb[0].mxu0
    %v2678 = vadd.f32 0.0, %v2677
    %v2679 = vpop.f32.mrb[0].mxu0
    %2680 = vmatprep.mubr.f32.mxu0 0.0
    %2681 = vmatmul.mubr.f32.gmra.mrb[0].mxu0 %v2538
    %v2682 = vpop.f32.mrb[0].mxu0
    %v2683 = vadd.f32 0.0, %v2682
    %v2684 = vpop.f32.mrb[0].mxu0
    %2685 = vmatprep.mubr.f32.mxu0 0.0
    %2686 = vmatmul.mubr.f32.gmra.mrb[0].mxu0 %v2541
    %v2687 = vpop.f32.mrb[0].mxu0
    %v2688 = vadd.f32 0.0, %v2687
    %v2689 = vpop.f32.mrb[0].mxu0
    %2690 = vmatprep.mubr.f32.mxu0 0.0
    %2691 = vmatmul.mubr.f32.gmra.mrb[0].mxu0 %v2544
    %v2692 = vpop.f32.mrb[0].mxu0
    %v2693 = vadd.f32 0.0, %v2692
    %v2694 = vpop.f32.mrb[0].mxu0
    %2695 = vmatprep.mubr.f32.mxu0 0.0
    %2696 = vmatmul.mubr.f32.gmra.mrb[0].mxu0 %v2547
    %v2697 = vpop.f32.mrb[0].mxu0
    %v2698 = vadd.f32 0.0, %v2697
    %v2699 = vpop.f32.mrb[0].mxu0
    %2700 = vmatprep.mubr.f32.mxu0 0.0
    %2701 = vmatmul.mubr.f32.gmra.mrb[0].mxu0 %v2550
    %v2702 = vpop.f32.mrb[0].mxu0
    %v2703 = vadd.f32 0.0, %v2702
    %v2704 = vpop.f32.mrb[0].mxu0
    %2705 = vmatprep.mubr.f32.mxu0 0.0
    %2706 = vmatmul.mubr.f32.gmra.mrb[0].mxu0 %v2553
    %v2707 = vpop.f32.mrb[0].mxu0
    %v2708 = vadd.f32 0.0, %v2707
    %v2709 = vpop.f32.mrb[0].mxu0
    %2710 = vmatprep.mubr.f32.mxu0 0.0
    %2711 = vmatmul.mubr.f32.gmra.mrb[0].mxu0 %v2556
    %v2712 = vpop.f32.mrb[0].mxu0
    %v2713 = vadd.f32 0.0, %v2712
    %v2714 = vpop.f32.mrb[0].mxu0
    %2715 = vmatprep.mubr.f32.mxu0 0.0
    %2716 = vmatmul.mubr.f32.gmra.mrb[0].mxu0 %v2559
    %v2717 = vpop.f32.mrb[0].mxu0
    %v2718 = vadd.f32 0.0, %v2717
    %v2719 = vpop.f32.mrb[0].mxu0
    %2720 = vmatprep.mubr.f32.mxu0 0.0
    %2721 = vmatmul.mubr.f32.gmra.mrb[0].mxu0 %v2562
    %v2722 = vpop.f32.mrb[0].mxu0
    %v2723 = vadd.f32 0.0, %v2722
    %v2724 = vpop.f32.mrb[0].mxu0
    %2725 = vmatprep.mubr.f32.mxu0 0.0
    %2726 = vmatmul.mubr.f32.gmra.mrb[0].mxu0 %v2565
    %v2727 = vpop.f32.mrb[0].mxu0
    %v2728 = vadd.f32 0.0, %v2727
    %v2729 = vpop.f32.mrb[0].mxu0
    %2730 = vmatprep.mubr.f32.mxu0 0.0
    %2731 = vmatmul.mubr.f32.gmra.mrb[0].mxu0 %v2568
    %v2732 = vpop.f32.mrb[0].mxu0
    %v2733 = vadd.f32 0.0, %v2732
    %v2734 = vpop.f32.mrb[0].mxu0
    %2735 = vmatprep.mubr.f32.mxu0 0.0
    %2736 = vmatmul.mubr.f32.gmra.mrb[0].mxu0 %v2571
    %v2737 = vpop.f32.mrb[0].mxu0
    %v2738 = vadd.f32 0.0, %v2737
    %v2739 = vpop.f32.mrb[0].mxu0
    %2740 = vmatprep.mubr.f32.mxu0 0.0
    %2741 = vmatmul.mubr.f32.gmra.mrb[0].mxu0 %v2574
    %v2742 = vpop.f32.mrb[0].mxu0
    %v2743 = vadd.f32 0.0, %v2742
    %v2744 = vpop.f32.mrb[0].mxu0
    %2745 = vmatprep.mubr.f32.mxu0 0.0
    %2746 = vmatmul.mubr.f32.gmra.mrb[0].mxu0 %v2577
    %v2747 = vpop.f32.mrb[0].mxu0
    %v2748 = vadd.f32 0.0, %v2747
    %v2749 = vpop.f32.mrb[0].mxu0
    %2750 = vmatprep.mubr.f32.mxu0 0.0
    %2751 = vmatmul.mubr.f32.gmra.mrb[0].mxu0 %v2580
    %v2752 = vpop.f32.mrb[0].mxu0
    %v2753 = vadd.f32 0.0, %v2752
    %v2754 = vpop.f32.mrb[0].mxu0
    %2755 = vmatprep.mubr.f32.mxu0 0.0
    %2756 = vmatmul.mubr.f32.gmra.mrb[0].mxu0 %v2583
    %v2757 = vpop.f32.mrb[0].mxu0
    %v2758 = vadd.f32 0.0, %v2757
    %v2759 = vpop.f32.mrb[0].mxu0
    %2760 = vmatprep.mubr.f32.mxu0 0.0
    %2761 = vmatmul.mubr.f32.gmra.mrb[0].mxu0 %v2586
    %v2762 = vpop.f32.mrb[0].mxu0
    %v2763 = vadd.f32 0.0, %v2762
    %v2764 = vpop.f32.mrb[0].mxu0
    %2765 = vmatprep.mubr.f32.mxu0 0.0
    %2766 = vmatmul.mubr.f32.gmra.mrb[0].mxu0 %v2589
    %v2767 = vpop.f32.mrb[0].mxu0
    %v2768 = vadd.f32 0.0, %v2767
    %v2769 = vpop.f32.mrb[0].mxu0
    %2770 = vmatprep.mubr.f32.mxu0 0.0
    %2771 = vmatmul.mubr.f32.gmra.mrb[0].mxu0 %v2592
    %v2772 = vpop.f32.mrb[0].mxu0
    %v2773 = vadd.f32 0.0, %v2772
    %v2774 = vpop.f32.mrb[0].mxu0
    %2775 = vmatprep.mubr.f32.mxu0 0.0
    %2776 = vmatmul.mubr.f32.gmra.mrb[0].mxu0 %v2595
    %v2777 = vpop.f32.mrb[0].mxu0
    %v2778 = vadd.f32 0.0, %v2777
    %v2779 = vpop.f32.mrb[0].mxu0
    %2780 = vmatprep.mubr.f32.mxu0 0.0
    %2781 = vmatmul.mubr.f32.gmra.mrb[0].mxu0 %v2598
    %v2782 = vpop.f32.mrb[0].mxu0
    %v2783 = vadd.f32 0.0, %v2782
    %v2784 = vpop.f32.mrb[0].mxu0
    %2785 = vmatprep.mubr.f32.mxu0 0.0
    %2786 = vmatmul.mubr.f32.gmra.mrb[0].mxu0 %v2601
    %v2787 = vpop.f32.mrb[0].mxu0
    %v2788 = vadd.f32 0.0, %v2787
    %v2789 = vpop.f32.mrb[0].mxu0
    %2790 = vmatprep.mubr.f32.mxu0 0.0
    %2791 = vmatmul.mubr.f32.gmra.mrb[0].mxu0 %v2604
    %v2792 = vpop.f32.mrb[0].mxu0
    %v2793 = vadd.f32 0.0, %v2792
    %v2794 = vpop.f32.mrb[0].mxu0
    %2795 = vdwg.mxu0
    %2796 = vst.msk [vmem:[#allocation2] sm:$0xff] %vm659, 0.0
    %2797 = vst.msk [vmem:[#allocation2 + $0x8] sm:$0xff] %vm659, 0.0
    %2798 = vst.msk [vmem:[#allocation2 + $0x10] sm:$0xff] %vm659, %v2673
    %2799 = vst.msk [vmem:[#allocation2 + $0x18] sm:$0xff] %vm659, %v2678
    %2800 = vst.msk [vmem:[#allocation2 + $0x20] sm:$0xff] %vm659, %v2683
    %2801 = vst.msk [vmem:[#allocation2 + $0x28] sm:$0xff] %vm659, %v2688
    %2802 = vst.msk [vmem:[#allocation2 + $0x30] sm:$0xff] %vm659, %v2693
    %2803 = vst.msk [vmem:[#allocation2 + $0x38] sm:$0xff] %vm659, %v2698
    %2804 = vst.msk [vmem:[#allocation2 + $0x40] sm:$0xff] %vm659, %v2703
    %2805 = vst.msk [vmem:[#allocation2 + $0x48] sm:$0xff] %vm659, %v2708
    %2806 = vst.msk [vmem:[#allocation2 + $0x50] sm:$0xff] %vm659, %v2713
    %2807 = vst.msk [vmem:[#allocation2 + $0x58] sm:$0xff] %vm659, %v2718
    %2808 = vst.msk [vmem:[#allocation2 + $0x60] sm:$0xff] %vm659, %v2723
    %2809 = vst.msk [vmem:[#allocation2 + $0x68] sm:$0xff] %vm659, %v2728
    %2810 = vst.msk [vmem:[#allocation2 + $0x70] sm:$0xff] %vm659, %v2733
    %2811 = vst.msk [vmem:[#allocation2 + $0x78] sm:$0xff] %vm659, %v2738
    %2812 = vst.msk [vmem:[#allocation2 + $0x80] sm:$0xff] %vm659, %v2743
    %2813 = vst.msk [vmem:[#allocation2 + $0x88] sm:$0xff] %vm659, %v2748
    %2814 = vst.msk [vmem:[#allocation2 + $0x90] sm:$0xff] %vm659, %v2753
    %2815 = vst.msk [vmem:[#allocation2 + $0x98] sm:$0xff] %vm659, %v2758
    %2816 = vst.msk [vmem:[#allocation2 + $0xa0] sm:$0xff] %vm659, %v2763
    %2817 = vst.msk [vmem:[#allocation2 + $0xa8] sm:$0xff] %vm659, %v2768
    %2818 = vst.msk [vmem:[#allocation2 + $0xb0] sm:$0xff] %vm659, %v2773
    %2819 = vst.msk [vmem:[#allocation2 + $0xb8] sm:$0xff] %vm659, %v2778
    %2820 = vst.msk [vmem:[#allocation2 + $0xc0] sm:$0xff] %vm659, %v2783
    %2821 = vst.msk [vmem:[#allocation2 + $0xc8] sm:$0xff] %vm659, %v2788
    %2822 = vst.msk [vmem:[#allocation2 + $0xd0] sm:$0xff] %vm659, %v2793
    %2823 = vst.msk [vmem:[#allocation2 + $0xd8] sm:$0xff] %vm659, 0.0
    %2824 = vst.msk [vmem:[#allocation2 + $0xe0] sm:$0xff] %vm659, 0.0
    %v2825 = vld [vmem:[#allocation2 + $0x5] sm:$0xff]
    %v2826 = vld [vmem:[#allocation2 + $0xd] sm:$0xff]
    %v2827 = vld [vmem:[#allocation2 + $0x15] sm:$0xff]
    %v2828 = vld [vmem:[#allocation2 + $0x1d] sm:$0xff]
    %v2829 = vld [vmem:[#allocation2 + $0x25] sm:$0xff]
    %v2830 = vld [vmem:[#allocation2 + $0x2d] sm:$0xff]
    %v2831 = vld [vmem:[#allocation2 + $0x35] sm:$0xff]
    %v2832 = vld [vmem:[#allocation2 + $0x3d] sm:$0xff]
    %v2833 = vld [vmem:[#allocation2 + $0x45] sm:$0xff]
    %v2834 = vld [vmem:[#allocation2 + $0x4d] sm:$0xff]
    %v2835 = vld [vmem:[#allocation2 + $0x55] sm:$0xff]
    %v2836 = vld [vmem:[#allocation2 + $0x5d] sm:$0xff]
    %v2837 = vld [vmem:[#allocation2 + $0x65] sm:$0xff]
    %v2838 = vld [vmem:[#allocation2 + $0x6d] sm:$0xff]
    %v2839 = vld [vmem:[#allocation2 + $0x75] sm:$0xff]
    %v2840 = vld [vmem:[#allocation2 + $0x7d] sm:$0xff]
    %v2841 = vld [vmem:[#allocation2 + $0x85] sm:$0xff]
    %v2842 = vld [vmem:[#allocation2 + $0x8d] sm:$0xff]
    %v2843 = vld [vmem:[#allocation2 + $0x95] sm:$0xff]
    %v2844 = vld [vmem:[#allocation2 + $0x9d] sm:$0xff]
    %v2845 = vld [vmem:[#allocation2 + $0xa5] sm:$0xff]
    %v2846 = vld [vmem:[#allocation2 + $0xad] sm:$0xff]
    %v2847 = vld [vmem:[#allocation2 + $0xb5] sm:$0xff]
    %v2848 = vld [vmem:[#allocation2 + $0xbd] sm:$0xff]
    %v2849 = vld [vmem:[#allocation2 + $0xc5] sm:$0xff]
    %v2850 = vld [vmem:[#allocation19] sm:$0xff]
    %v2851 = vld [vmem:[#allocation19 + $0x8] sm:$0xff]
    %v2852 = vld [vmem:[#allocation19 + $0x10] sm:$0xff]
    %v2853 = vld [vmem:[#allocation19 + $0x18] sm:$0xff]
    %v2854 = vld [vmem:[#allocation19 + $0x20] sm:$0xff]
    %v2855 = vld [vmem:[#allocation19 + $0x28] sm:$0xff]
    %v2856 = vld [vmem:[#allocation19 + $0x30] sm:$0xff]
    %v2857 = vld [vmem:[#allocation19 + $0x38] sm:$0xff]
    %v2858 = vld [vmem:[#allocation2 + $0x6] sm:$0xff]
    %v2859 = vld [vmem:[#allocation2 + $0xe] sm:$0xff]
    %v2860 = vld [vmem:[#allocation2 + $0x16] sm:$0xff]
    %v2861 = vld [vmem:[#allocation2 + $0x1e] sm:$0xff]
    %v2862 = vld [vmem:[#allocation2 + $0x26] sm:$0xff]
    %v2863 = vld [vmem:[#allocation2 + $0x2e] sm:$0xff]
    %v2864 = vld [vmem:[#allocation2 + $0x36] sm:$0xff]
    %v2865 = vld [vmem:[#allocation2 + $0x3e] sm:$0xff]
    %v2866 = vld [vmem:[#allocation2 + $0x46] sm:$0xff]
    %v2867 = vld [vmem:[#allocation2 + $0x4e] sm:$0xff]
    %v2868 = vld [vmem:[#allocation2 + $0x56] sm:$0xff]
    %v2869 = vld [vmem:[#allocation2 + $0x5e] sm:$0xff]
    %v2870 = vld [vmem:[#allocation2 + $0x66] sm:$0xff]
    %v2871 = vld [vmem:[#allocation2 + $0x6e] sm:$0xff]
    %v2872 = vld [vmem:[#allocation2 + $0x76] sm:$0xff]
    %v2873 = vld [vmem:[#allocation2 + $0x7e] sm:$0xff]
    %v2874 = vld [vmem:[#allocation2 + $0x86] sm:$0xff]
    %v2875 = vld [vmem:[#allocation2 + $0x8e] sm:$0xff]
    %v2876 = vld [vmem:[#allocation2 + $0x96] sm:$0xff]
    %v2877 = vld [vmem:[#allocation2 + $0x9e] sm:$0xff]
    %v2878 = vld [vmem:[#allocation2 + $0xa6] sm:$0xff]
    %v2879 = vld [vmem:[#allocation2 + $0xae] sm:$0xff]
    %v2880 = vld [vmem:[#allocation2 + $0xb6] sm:$0xff]
    %v2881 = vld [vmem:[#allocation2 + $0xbe] sm:$0xff]
    %v2882 = vld [vmem:[#allocation2 + $0xc6] sm:$0xff]
    %s2883 = scalar_lea.vmem [#allocation19], 64
    %v2884 = vld [vmem:[%s2883] sm:$0xff]
    %v2885 = vld [vmem:[%s2883 + $0x8] sm:$0xff]
    %v2886 = vld [vmem:[%s2883 + $0x10] sm:$0xff]
    %v2887 = vld [vmem:[%s2883 + $0x18] sm:$0xff]
    %v2888 = vld [vmem:[%s2883 + $0x20] sm:$0xff]
    %v2889 = vld [vmem:[%s2883 + $0x28] sm:$0xff]
    %v2890 = vld [vmem:[%s2883 + $0x30] sm:$0xff]
    %v2891 = vld [vmem:[%s2883 + $0x38] sm:$0xff]
    %v2893 = vsel %vm659, %v2858, 0
    %v2896 = vsel %vm659, %v2859, 0
    %v2899 = vsel %vm659, %v2860, 0
    %v2902 = vsel %vm659, %v2861, 0
    %v2905 = vsel %vm659, %v2862, 0
    %v2908 = vsel %vm659, %v2863, 0
    %v2911 = vsel %vm659, %v2864, 0
    %v2914 = vsel %vm659, %v2865, 0
    %v2917 = vsel %vm659, %v2866, 0
    %v2920 = vsel %vm659, %v2867, 0
    %v2923 = vsel %vm659, %v2868, 0
    %v2926 = vsel %vm659, %v2869, 0
    %v2929 = vsel %vm659, %v2870, 0
    %v2932 = vsel %vm659, %v2871, 0
    %v2935 = vsel %vm659, %v2872, 0
    %v2938 = vsel %vm659, %v2873, 0
    %v2941 = vsel %vm659, %v2874, 0
    %v2944 = vsel %vm659, %v2875, 0
    %v2947 = vsel %vm659, %v2876, 0
    %v2950 = vsel %vm659, %v2877, 0
    %v2953 = vsel %vm659, %v2878, 0
    %v2956 = vsel %vm659, %v2879, 0
    %v2959 = vsel %vm659, %v2880, 0
    %v2962 = vsel %vm659, %v2881, 0
    %v2965 = vsel %vm659, %v2882, 0
    %2967 = vmatprep.subr.mxu0 0.0
    %2968 = vmatpush1.msra.mxu0 %v2884
    %2969 = vmatprep.subr.mxu0 0.0
    %2970 = vmatpush1.msra.mxu0 %v2885
    %2971 = vmatprep.subr.mxu0 0.0
    %2972 = vmatpush1.msra.mxu0 %v2886
    %2973 = vmatprep.subr.mxu0 0.0
    %2974 = vmatpush1.msra.mxu0 %v2887
    %2975 = vmatprep.subr.mxu0 0.0
    %2976 = vmatpush1.msra.mxu0 %v2888
    %2977 = vmatprep.subr.mxu0 0.0
    %2978 = vmatpush1.msra.mxu0 %v2889
    %2979 = vmatprep.subr.mxu0 0.0
    %2980 = vmatpush1.msra.mxu0 %v2890
    %2981 = vmatprep.subr.mxu0 0.0
    %2982 = vmatpush1.msra.mxu0 %v2891
    %2983 = vmatprep.subr.mxu0 0.0
    %2984 = vmatpush1.msra.mxu0 0.0
    %2985 = vmatprep.subr.mxu0 0.0
    %2986 = vmatpush1.msra.mxu0 0.0
    %2987 = vmatprep.subr.mxu0 0.0
    %2988 = vmatpush1.msra.mxu0 0.0
    %2989 = vmatprep.subr.mxu0 0.0
    %2990 = vmatpush1.msra.mxu0 0.0
    %2991 = vmatprep.subr.mxu0 0.0
    %2992 = vmatpush1.msra.mxu0 0.0
    %2993 = vmatprep.subr.mxu0 0.0
    %2994 = vmatpush1.msra.mxu0 0.0
    %2995 = vmatprep.subr.mxu0 0.0
    %2996 = vmatpush1.msra.mxu0 0.0
    %2997 = vmatprep.subr.mxu0 0.0
    %2998 = vmatpush1.msra.mxu0 0.0
    %2999 = vmatprep.subr.mxu0 0.0
    %3000 = vmatpush1.msra.mxu0 0.0
    %3001 = vmatprep.subr.mxu0 0.0
    %3002 = vmatpush1.msra.mxu0 0.0
    %3003 = vmatprep.subr.mxu0 0.0
    %3004 = vmatpush1.msra.mxu0 0.0
    %3005 = vmatprep.subr.mxu0 0.0
    %3006 = vmatpush1.msra.mxu0 0.0
    %3007 = vmatprep.subr.mxu0 0.0
    %3008 = vmatpush1.msra.mxu0 0.0
    %3009 = vmatprep.subr.mxu0 0.0
    %3010 = vmatpush1.msra.mxu0 0.0
    %3011 = vmatprep.subr.mxu0 0.0
    %3012 = vmatpush1.msra.mxu0 0.0
    %3013 = vmatprep.subr.mxu0 0.0
    %3014 = vmatpush1.msra.mxu0 0.0
    %3015 = vmatprep.subr.mxu0 0.0
    %3016 = vmatpush1.msra.mxu0 0.0
    %3017 = vmatprep.subr.mxu0 0.0
    %3018 = vmatpush1.msra.mxu0 0.0
    %3019 = vmatprep.subr.mxu0 0.0
    %3020 = vmatpush1.msra.mxu0 0.0
    %3021 = vmatprep.subr.mxu0 0.0
    %3022 = vmatpush1.msra.mxu0 0.0
    %3023 = vmatprep.subr.mxu0 0.0
    %3024 = vmatpush1.msra.mxu0 0.0
    %3025 = vmatprep.subr.mxu0 0.0
    %3026 = vmatpush1.msra.mxu0 0.0
    %3027 = vmatprep.subr.mxu0 0.0
    %3028 = vmatpush1.msra.mxu0 0.0
    %3029 = vmatprep.subr.mxu0 0.0
    %3030 = vmatpush1.msra.mxu0 0.0
    %3031 = vmatprep.mubr.f32.mxu0 0.0
    %3032 = vmatmul.mubr.f32.gmra.mrb[0].mxu0 %v2893
    %v3033 = vpop.f32.mrb[0].mxu0
    %v3034 = vadd.f32 0.0, %v3033
    %v3035 = vpop.f32.mrb[0].mxu0
    %3036 = vmatprep.mubr.f32.mxu0 0.0
    %3037 = vmatmul.mubr.f32.gmra.mrb[0].mxu0 %v2896
    %v3038 = vpop.f32.mrb[0].mxu0
    %v3039 = vadd.f32 0.0, %v3038
    %v3040 = vpop.f32.mrb[0].mxu0
    %3041 = vmatprep.mubr.f32.mxu0 0.0
    %3042 = vmatmul.mubr.f32.gmra.mrb[0].mxu0 %v2899
    %v3043 = vpop.f32.mrb[0].mxu0
    %v3044 = vadd.f32 0.0, %v3043
    %v3045 = vpop.f32.mrb[0].mxu0
    %3046 = vmatprep.mubr.f32.mxu0 0.0
    %3047 = vmatmul.mubr.f32.gmra.mrb[0].mxu0 %v2902
    %v3048 = vpop.f32.mrb[0].mxu0
    %v3049 = vadd.f32 0.0, %v3048
    %v3050 = vpop.f32.mrb[0].mxu0
    %3051 = vmatprep.mubr.f32.mxu0 0.0
    %3052 = vmatmul.mubr.f32.gmra.mrb[0].mxu0 %v2905
    %v3053 = vpop.f32.mrb[0].mxu0
    %v3054 = vadd.f32 0.0, %v3053
    %v3055 = vpop.f32.mrb[0].mxu0
    %3056 = vmatprep.mubr.f32.mxu0 0.0
    %3057 = vmatmul.mubr.f32.gmra.mrb[0].mxu0 %v2908
    %v3058 = vpop.f32.mrb[0].mxu0
    %v3059 = vadd.f32 0.0, %v3058
    %v3060 = vpop.f32.mrb[0].mxu0
    %3061 = vmatprep.mubr.f32.mxu0 0.0
    %3062 = vmatmul.mubr.f32.gmra.mrb[0].mxu0 %v2911
    %v3063 = vpop.f32.mrb[0].mxu0
    %v3064 = vadd.f32 0.0, %v3063
    %v3065 = vpop.f32.mrb[0].mxu0
    %3066 = vmatprep.mubr.f32.mxu0 0.0
    %3067 = vmatmul.mubr.f32.gmra.mrb[0].mxu0 %v2914
    %v3068 = vpop.f32.mrb[0].mxu0
    %v3069 = vadd.f32 0.0, %v3068
    %v3070 = vpop.f32.mrb[0].mxu0
    %3071 = vmatprep.mubr.f32.mxu0 0.0
    %3072 = vmatmul.mubr.f32.gmra.mrb[0].mxu0 %v2917
    %v3073 = vpop.f32.mrb[0].mxu0
    %v3074 = vadd.f32 0.0, %v3073
    %v3075 = vpop.f32.mrb[0].mxu0
    %3076 = vmatprep.mubr.f32.mxu0 0.0
    %3077 = vmatmul.mubr.f32.gmra.mrb[0].mxu0 %v2920
    %v3078 = vpop.f32.mrb[0].mxu0
    %v3079 = vadd.f32 0.0, %v3078
    %v3080 = vpop.f32.mrb[0].mxu0
    %3081 = vmatprep.mubr.f32.mxu0 0.0
    %3082 = vmatmul.mubr.f32.gmra.mrb[0].mxu0 %v2923
    %v3083 = vpop.f32.mrb[0].mxu0
    %v3084 = vadd.f32 0.0, %v3083
    %v3085 = vpop.f32.mrb[0].mxu0
    %3086 = vmatprep.mubr.f32.mxu0 0.0
    %3087 = vmatmul.mubr.f32.gmra.mrb[0].mxu0 %v2926
    %v3088 = vpop.f32.mrb[0].mxu0
    %v3089 = vadd.f32 0.0, %v3088
    %v3090 = vpop.f32.mrb[0].mxu0
    %3091 = vmatprep.mubr.f32.mxu0 0.0
    %3092 = vmatmul.mubr.f32.gmra.mrb[0].mxu0 %v2929
    %v3093 = vpop.f32.mrb[0].mxu0
    %v3094 = vadd.f32 0.0, %v3093
    %v3095 = vpop.f32.mrb[0].mxu0
    %3096 = vmatprep.mubr.f32.mxu0 0.0
    %3097 = vmatmul.mubr.f32.gmra.mrb[0].mxu0 %v2932
    %v3098 = vpop.f32.mrb[0].mxu0
    %v3099 = vadd.f32 0.0, %v3098
    %v3100 = vpop.f32.mrb[0].mxu0
    %3101 = vmatprep.mubr.f32.mxu0 0.0
    %3102 = vmatmul.mubr.f32.gmra.mrb[0].mxu0 %v2935
    %v3103 = vpop.f32.mrb[0].mxu0
    %v3104 = vadd.f32 0.0, %v3103
    %v3105 = vpop.f32.mrb[0].mxu0
    %3106 = vmatprep.mubr.f32.mxu0 0.0
    %3107 = vmatmul.mubr.f32.gmra.mrb[0].mxu0 %v2938
    %v3108 = vpop.f32.mrb[0].mxu0
    %v3109 = vadd.f32 0.0, %v3108
    %v3110 = vpop.f32.mrb[0].mxu0
    %3111 = vmatprep.mubr.f32.mxu0 0.0
    %3112 = vmatmul.mubr.f32.gmra.mrb[0].mxu0 %v2941
    %v3113 = vpop.f32.mrb[0].mxu0
    %v3114 = vadd.f32 0.0, %v3113
    %v3115 = vpop.f32.mrb[0].mxu0
    %3116 = vmatprep.mubr.f32.mxu0 0.0
    %3117 = vmatmul.mubr.f32.gmra.mrb[0].mxu0 %v2944
    %v3118 = vpop.f32.mrb[0].mxu0
    %v3119 = vadd.f32 0.0, %v3118
    %v3120 = vpop.f32.mrb[0].mxu0
    %3121 = vmatprep.mubr.f32.mxu0 0.0
    %3122 = vmatmul.mubr.f32.gmra.mrb[0].mxu0 %v2947
    %v3123 = vpop.f32.mrb[0].mxu0
    %v3124 = vadd.f32 0.0, %v3123
    %v3125 = vpop.f32.mrb[0].mxu0
    %3126 = vmatprep.mubr.f32.mxu0 0.0
    %3127 = vmatmul.mubr.f32.gmra.mrb[0].mxu0 %v2950
    %v3128 = vpop.f32.mrb[0].mxu0
    %v3129 = vadd.f32 0.0, %v3128
    %v3130 = vpop.f32.mrb[0].mxu0
    %3131 = vmatprep.mubr.f32.mxu0 0.0
    %3132 = vmatmul.mubr.f32.gmra.mrb[0].mxu0 %v2953
    %v3133 = vpop.f32.mrb[0].mxu0
    %v3134 = vadd.f32 0.0, %v3133
    %v3135 = vpop.f32.mrb[0].mxu0
    %3136 = vmatprep.mubr.f32.mxu0 0.0
    %3137 = vmatmul.mubr.f32.gmra.mrb[0].mxu0 %v2956
    %v3138 = vpop.f32.mrb[0].mxu0
    %v3139 = vadd.f32 0.0, %v3138
    %v3140 = vpop.f32.mrb[0].mxu0
    %3141 = vmatprep.mubr.f32.mxu0 0.0
    %3142 = vmatmul.mubr.f32.gmra.mrb[0].mxu0 %v2959
    %v3143 = vpop.f32.mrb[0].mxu0
    %v3144 = vadd.f32 0.0, %v3143
    %v3145 = vpop.f32.mrb[0].mxu0
    %3146 = vmatprep.mubr.f32.mxu0 0.0
    %3147 = vmatmul.mubr.f32.gmra.mrb[0].mxu0 %v2962
    %v3148 = vpop.f32.mrb[0].mxu0
    %v3149 = vadd.f32 0.0, %v3148
    %v3150 = vpop.f32.mrb[0].mxu0
    %3151 = vmatprep.mubr.f32.mxu0 0.0
    %3152 = vmatmul.mubr.f32.gmra.mrb[0].mxu0 %v2965
    %v3153 = vpop.f32.mrb[0].mxu0
    %v3154 = vadd.f32 0.0, %v3153
    %v3155 = vpop.f32.mrb[0].mxu0
    %3156 = vdwg.mxu0
    %v3158 = vsel %vm659, %v2825, 0
    %v3161 = vsel %vm659, %v2826, 0
    %v3164 = vsel %vm659, %v2827, 0
    %v3167 = vsel %vm659, %v2828, 0
    %v3170 = vsel %vm659, %v2829, 0
    %v3173 = vsel %vm659, %v2830, 0
    %v3176 = vsel %vm659, %v2831, 0
    %v3179 = vsel %vm659, %v2832, 0
    %v3182 = vsel %vm659, %v2833, 0
    %v3185 = vsel %vm659, %v2834, 0
    %v3188 = vsel %vm659, %v2835, 0
    %v3191 = vsel %vm659, %v2836, 0
    %v3194 = vsel %vm659, %v2837, 0
    %v3197 = vsel %vm659, %v2838, 0
    %v3200 = vsel %vm659, %v2839, 0
    %v3203 = vsel %vm659, %v2840, 0
    %v3206 = vsel %vm659, %v2841, 0
    %v3209 = vsel %vm659, %v2842, 0
    %v3212 = vsel %vm659, %v2843, 0
    %v3215 = vsel %vm659, %v2844, 0
    %v3218 = vsel %vm659, %v2845, 0
    %v3221 = vsel %vm659, %v2846, 0
    %v3224 = vsel %vm659, %v2847, 0
    %v3227 = vsel %vm659, %v2848, 0
    %v3230 = vsel %vm659, %v2849, 0
    %3232 = vmatprep.subr.mxu0 0.0
    %3233 = vmatpush1.msra.mxu0 %v2850
    %3234 = vmatprep.subr.mxu0 0.0
    %3235 = vmatpush1.msra.mxu0 %v2851
    %3236 = vmatprep.subr.mxu0 0.0
    %3237 = vmatpush1.msra.mxu0 %v2852
    %3238 = vmatprep.subr.mxu0 0.0
    %3239 = vmatpush1.msra.mxu0 %v2853
    %3240 = vmatprep.subr.mxu0 0.0
    %3241 = vmatpush1.msra.mxu0 %v2854
    %3242 = vmatprep.subr.mxu0 0.0
    %3243 = vmatpush1.msra.mxu0 %v2855
    %3244 = vmatprep.subr.mxu0 0.0
    %3245 = vmatpush1.msra.mxu0 %v2856
    %3246 = vmatprep.subr.mxu0 0.0
    %3247 = vmatpush1.msra.mxu0 %v2857
    %3248 = vmatprep.subr.mxu0 0.0
    %3249 = vmatpush1.msra.mxu0 0.0
    %3250 = vmatprep.subr.mxu0 0.0
    %3251 = vmatpush1.msra.mxu0 0.0
    %3252 = vmatprep.subr.mxu0 0.0
    %3253 = vmatpush1.msra.mxu0 0.0
    %3254 = vmatprep.subr.mxu0 0.0
    %3255 = vmatpush1.msra.mxu0 0.0
    %3256 = vmatprep.subr.mxu0 0.0
    %3257 = vmatpush1.msra.mxu0 0.0
    %3258 = vmatprep.subr.mxu0 0.0
    %3259 = vmatpush1.msra.mxu0 0.0
    %3260 = vmatprep.subr.mxu0 0.0
    %3261 = vmatpush1.msra.mxu0 0.0
    %3262 = vmatprep.subr.mxu0 0.0
    %3263 = vmatpush1.msra.mxu0 0.0
    %3264 = vmatprep.subr.mxu0 0.0
    %3265 = vmatpush1.msra.mxu0 0.0
    %3266 = vmatprep.subr.mxu0 0.0
    %3267 = vmatpush1.msra.mxu0 0.0
    %3268 = vmatprep.subr.mxu0 0.0
    %3269 = vmatpush1.msra.mxu0 0.0
    %3270 = vmatprep.subr.mxu0 0.0
    %3271 = vmatpush1.msra.mxu0 0.0
    %3272 = vmatprep.subr.mxu0 0.0
    %3273 = vmatpush1.msra.mxu0 0.0
    %3274 = vmatprep.subr.mxu0 0.0
    %3275 = vmatpush1.msra.mxu0 0.0
    %3276 = vmatprep.subr.mxu0 0.0
    %3277 = vmatpush1.msra.mxu0 0.0
    %3278 = vmatprep.subr.mxu0 0.0
    %3279 = vmatpush1.msra.mxu0 0.0
    %3280 = vmatprep.subr.mxu0 0.0
    %3281 = vmatpush1.msra.mxu0 0.0
    %3282 = vmatprep.subr.mxu0 0.0
    %3283 = vmatpush1.msra.mxu0 0.0
    %3284 = vmatprep.subr.mxu0 0.0
    %3285 = vmatpush1.msra.mxu0 0.0
    %3286 = vmatprep.subr.mxu0 0.0
    %3287 = vmatpush1.msra.mxu0 0.0
    %3288 = vmatprep.subr.mxu0 0.0
    %3289 = vmatpush1.msra.mxu0 0.0
    %3290 = vmatprep.subr.mxu0 0.0
    %3291 = vmatpush1.msra.mxu0 0.0
    %3292 = vmatprep.subr.mxu0 0.0
    %3293 = vmatpush1.msra.mxu0 0.0
    %3294 = vmatprep.subr.mxu0 0.0
    %3295 = vmatpush1.msra.mxu0 0.0
    %3296 = vmatprep.mubr.f32.mxu0 0.0
    %3297 = vmatmul.mubr.f32.gmra.mrb[0].mxu0 %v3158
    %v3298 = vpop.f32.mrb[0].mxu0
    %v3299 = vadd.f32 %v3034, %v3298
    %v3300 = vpop.f32.mrb[0].mxu0
    %3301 = vmatprep.mubr.f32.mxu0 0.0
    %3302 = vmatmul.mubr.f32.gmra.mrb[0].mxu0 %v3161
    %v3303 = vpop.f32.mrb[0].mxu0
    %v3304 = vadd.f32 %v3039, %v3303
    %v3305 = vpop.f32.mrb[0].mxu0
    %3306 = vmatprep.mubr.f32.mxu0 0.0
    %3307 = vmatmul.mubr.f32.gmra.mrb[0].mxu0 %v3164
    %v3308 = vpop.f32.mrb[0].mxu0
    %v3309 = vadd.f32 %v3044, %v3308
    %v3310 = vpop.f32.mrb[0].mxu0
    %3311 = vmatprep.mubr.f32.mxu0 0.0
    %3312 = vmatmul.mubr.f32.gmra.mrb[0].mxu0 %v3167
    %v3313 = vpop.f32.mrb[0].mxu0
    %v3314 = vadd.f32 %v3049, %v3313
    %v3315 = vpop.f32.mrb[0].mxu0
    %3316 = vmatprep.mubr.f32.mxu0 0.0
    %3317 = vmatmul.mubr.f32.gmra.mrb[0].mxu0 %v3170
    %v3318 = vpop.f32.mrb[0].mxu0
    %v3319 = vadd.f32 %v3054, %v3318
    %v3320 = vpop.f32.mrb[0].mxu0
    %3321 = vmatprep.mubr.f32.mxu0 0.0
    %3322 = vmatmul.mubr.f32.gmra.mrb[0].mxu0 %v3173
    %v3323 = vpop.f32.mrb[0].mxu0
    %v3324 = vadd.f32 %v3059, %v3323
    %v3325 = vpop.f32.mrb[0].mxu0
    %3326 = vmatprep.mubr.f32.mxu0 0.0
    %3327 = vmatmul.mubr.f32.gmra.mrb[0].mxu0 %v3176
    %v3328 = vpop.f32.mrb[0].mxu0
    %v3329 = vadd.f32 %v3064, %v3328
    %v3330 = vpop.f32.mrb[0].mxu0
    %3331 = vmatprep.mubr.f32.mxu0 0.0
    %3332 = vmatmul.mubr.f32.gmra.mrb[0].mxu0 %v3179
    %v3333 = vpop.f32.mrb[0].mxu0
    %v3334 = vadd.f32 %v3069, %v3333
    %v3335 = vpop.f32.mrb[0].mxu0
    %3336 = vmatprep.mubr.f32.mxu0 0.0
    %3337 = vmatmul.mubr.f32.gmra.mrb[0].mxu0 %v3182
    %v3338 = vpop.f32.mrb[0].mxu0
    %v3339 = vadd.f32 %v3074, %v3338
    %v3340 = vpop.f32.mrb[0].mxu0
    %3341 = vmatprep.mubr.f32.mxu0 0.0
    %3342 = vmatmul.mubr.f32.gmra.mrb[0].mxu0 %v3185
    %v3343 = vpop.f32.mrb[0].mxu0
    %v3344 = vadd.f32 %v3079, %v3343
    %v3345 = vpop.f32.mrb[0].mxu0
    %3346 = vmatprep.mubr.f32.mxu0 0.0
    %3347 = vmatmul.mubr.f32.gmra.mrb[0].mxu0 %v3188
    %v3348 = vpop.f32.mrb[0].mxu0
    %v3349 = vadd.f32 %v3084, %v3348
    %v3350 = vpop.f32.mrb[0].mxu0
    %3351 = vmatprep.mubr.f32.mxu0 0.0
    %3352 = vmatmul.mubr.f32.gmra.mrb[0].mxu0 %v3191
    %v3353 = vpop.f32.mrb[0].mxu0
    %v3354 = vadd.f32 %v3089, %v3353
    %v3355 = vpop.f32.mrb[0].mxu0
    %3356 = vmatprep.mubr.f32.mxu0 0.0
    %3357 = vmatmul.mubr.f32.gmra.mrb[0].mxu0 %v3194
    %v3358 = vpop.f32.mrb[0].mxu0
    %v3359 = vadd.f32 %v3094, %v3358
    %v3360 = vpop.f32.mrb[0].mxu0
    %3361 = vmatprep.mubr.f32.mxu0 0.0
    %3362 = vmatmul.mubr.f32.gmra.mrb[0].mxu0 %v3197
    %v3363 = vpop.f32.mrb[0].mxu0
    %v3364 = vadd.f32 %v3099, %v3363
    %v3365 = vpop.f32.mrb[0].mxu0
    %3366 = vmatprep.mubr.f32.mxu0 0.0
    %3367 = vmatmul.mubr.f32.gmra.mrb[0].mxu0 %v3200
    %v3368 = vpop.f32.mrb[0].mxu0
    %v3369 = vadd.f32 %v3104, %v3368
    %v3370 = vpop.f32.mrb[0].mxu0
    %3371 = vmatprep.mubr.f32.mxu0 0.0
    %3372 = vmatmul.mubr.f32.gmra.mrb[0].mxu0 %v3203
    %v3373 = vpop.f32.mrb[0].mxu0
    %v3374 = vadd.f32 %v3109, %v3373
    %v3375 = vpop.f32.mrb[0].mxu0
    %3376 = vmatprep.mubr.f32.mxu0 0.0
    %3377 = vmatmul.mubr.f32.gmra.mrb[0].mxu0 %v3206
    %v3378 = vpop.f32.mrb[0].mxu0
    %v3379 = vadd.f32 %v3114, %v3378
    %v3380 = vpop.f32.mrb[0].mxu0
    %3381 = vmatprep.mubr.f32.mxu0 0.0
    %3382 = vmatmul.mubr.f32.gmra.mrb[0].mxu0 %v3209
    %v3383 = vpop.f32.mrb[0].mxu0
    %v3384 = vadd.f32 %v3119, %v3383
    %v3385 = vpop.f32.mrb[0].mxu0
    %3386 = vmatprep.mubr.f32.mxu0 0.0
    %3387 = vmatmul.mubr.f32.gmra.mrb[0].mxu0 %v3212
    %v3388 = vpop.f32.mrb[0].mxu0
    %v3389 = vadd.f32 %v3124, %v3388
    %v3390 = vpop.f32.mrb[0].mxu0
    %3391 = vmatprep.mubr.f32.mxu0 0.0
    %3392 = vmatmul.mubr.f32.gmra.mrb[0].mxu0 %v3215
    %v3393 = vpop.f32.mrb[0].mxu0
    %v3394 = vadd.f32 %v3129, %v3393
    %v3395 = vpop.f32.mrb[0].mxu0
    %3396 = vmatprep.mubr.f32.mxu0 0.0
    %3397 = vmatmul.mubr.f32.gmra.mrb[0].mxu0 %v3218
    %v3398 = vpop.f32.mrb[0].mxu0
    %v3399 = vadd.f32 %v3134, %v3398
    %v3400 = vpop.f32.mrb[0].mxu0
    %3401 = vmatprep.mubr.f32.mxu0 0.0
    %3402 = vmatmul.mubr.f32.gmra.mrb[0].mxu0 %v3221
    %v3403 = vpop.f32.mrb[0].mxu0
    %v3404 = vadd.f32 %v3139, %v3403
    %v3405 = vpop.f32.mrb[0].mxu0
    %3406 = vmatprep.mubr.f32.mxu0 0.0
    %3407 = vmatmul.mubr.f32.gmra.mrb[0].mxu0 %v3224
    %v3408 = vpop.f32.mrb[0].mxu0
    %v3409 = vadd.f32 %v3144, %v3408
    %v3410 = vpop.f32.mrb[0].mxu0
    %3411 = vmatprep.mubr.f32.mxu0 0.0
    %3412 = vmatmul.mubr.f32.gmra.mrb[0].mxu0 %v3227
    %v3413 = vpop.f32.mrb[0].mxu0
    %v3414 = vadd.f32 %v3149, %v3413
    %v3415 = vpop.f32.mrb[0].mxu0
    %3416 = vmatprep.mubr.f32.mxu0 0.0
    %3417 = vmatmul.mubr.f32.gmra.mrb[0].mxu0 %v3230
    %v3418 = vpop.f32.mrb[0].mxu0
    %v3419 = vadd.f32 %v3154, %v3418
    %v3420 = vpop.f32.mrb[0].mxu0
    %3421 = vdwg.mxu0
    %v3422 = vld [vmem:[#allocation2 + $0x7] sm:$0xff]
    %v3423 = vld [vmem:[#allocation2 + $0xf] sm:$0xff]
    %v3424 = vld [vmem:[#allocation2 + $0x17] sm:$0xff]
    %v3425 = vld [vmem:[#allocation2 + $0x1f] sm:$0xff]
    %v3426 = vld [vmem:[#allocation2 + $0x27] sm:$0xff]
    %v3427 = vld [vmem:[#allocation2 + $0x2f] sm:$0xff]
    %v3428 = vld [vmem:[#allocation2 + $0x37] sm:$0xff]
    %v3429 = vld [vmem:[#allocation2 + $0x3f] sm:$0xff]
    %v3430 = vld [vmem:[#allocation2 + $0x47] sm:$0xff]
    %v3431 = vld [vmem:[#allocation2 + $0x4f] sm:$0xff]
    %v3432 = vld [vmem:[#allocation2 + $0x57] sm:$0xff]
    %v3433 = vld [vmem:[#allocation2 + $0x5f] sm:$0xff]
    %v3434 = vld [vmem:[#allocation2 + $0x67] sm:$0xff]
    %v3435 = vld [vmem:[#allocation2 + $0x6f] sm:$0xff]
    %v3436 = vld [vmem:[#allocation2 + $0x77] sm:$0xff]
    %v3437 = vld [vmem:[#allocation2 + $0x7f] sm:$0xff]
    %v3438 = vld [vmem:[#allocation2 + $0x87] sm:$0xff]
    %v3439 = vld [vmem:[#allocation2 + $0x8f] sm:$0xff]
    %v3440 = vld [vmem:[#allocation2 + $0x97] sm:$0xff]
    %v3441 = vld [vmem:[#allocation2 + $0x9f] sm:$0xff]
    %v3442 = vld [vmem:[#allocation2 + $0xa7] sm:$0xff]
    %v3443 = vld [vmem:[#allocation2 + $0xaf] sm:$0xff]
    %v3444 = vld [vmem:[#allocation2 + $0xb7] sm:$0xff]
    %v3445 = vld [vmem:[#allocation2 + $0xbf] sm:$0xff]
    %v3446 = vld [vmem:[#allocation2 + $0xc7] sm:$0xff]
    %s3447 = scalar_lea.vmem [#allocation19], 128
    %v3448 = vld [vmem:[%s3447] sm:$0xff]
    %v3449 = vld [vmem:[%s3447 + $0x8] sm:$0xff]
    %v3450 = vld [vmem:[%s3447 + $0x10] sm:$0xff]
    %v3451 = vld [vmem:[%s3447 + $0x18] sm:$0xff]
    %v3452 = vld [vmem:[%s3447 + $0x20] sm:$0xff]
    %v3453 = vld [vmem:[%s3447 + $0x28] sm:$0xff]
    %v3454 = vld [vmem:[%s3447 + $0x30] sm:$0xff]
    %v3455 = vld [vmem:[%s3447 + $0x38] sm:$0xff]
    %v3457 = vsel %vm659, %v3422, 0
    %v3460 = vsel %vm659, %v3423, 0
    %v3463 = vsel %vm659, %v3424, 0
    %v3466 = vsel %vm659, %v3425, 0
    %v3469 = vsel %vm659, %v3426, 0
    %v3472 = vsel %vm659, %v3427, 0
    %v3475 = vsel %vm659, %v3428, 0
    %v3478 = vsel %vm659, %v3429, 0
    %v3481 = vsel %vm659, %v3430, 0
    %v3484 = vsel %vm659, %v3431, 0
    %v3487 = vsel %vm659, %v3432, 0
    %v3490 = vsel %vm659, %v3433, 0
    %v3493 = vsel %vm659, %v3434, 0
    %v3496 = vsel %vm659, %v3435, 0
    %v3499 = vsel %vm659, %v3436, 0
    %v3502 = vsel %vm659, %v3437, 0
    %v3505 = vsel %vm659, %v3438, 0
    %v3508 = vsel %vm659, %v3439, 0
    %v3511 = vsel %vm659, %v3440, 0
    %v3514 = vsel %vm659, %v3441, 0
    %v3517 = vsel %vm659, %v3442, 0
    %v3520 = vsel %vm659, %v3443, 0
    %v3523 = vsel %vm659, %v3444, 0
    %v3526 = vsel %vm659, %v3445, 0
    %v3529 = vsel %vm659, %v3446, 0
    %3531 = vmatprep.subr.mxu0 0.0
    %3532 = vmatpush1.msra.mxu0 %v3448
    %3533 = vmatprep.subr.mxu0 0.0
    %3534 = vmatpush1.msra.mxu0 %v3449
    %3535 = vmatprep.subr.mxu0 0.0
    %3536 = vmatpush1.msra.mxu0 %v3450
    %3537 = vmatprep.subr.mxu0 0.0
    %3538 = vmatpush1.msra.mxu0 %v3451
    %3539 = vmatprep.subr.mxu0 0.0
    %3540 = vmatpush1.msra.mxu0 %v3452
    %3541 = vmatprep.subr.mxu0 0.0
    %3542 = vmatpush1.msra.mxu0 %v3453
    %3543 = vmatprep.subr.mxu0 0.0
    %3544 = vmatpush1.msra.mxu0 %v3454
    %3545 = vmatprep.subr.mxu0 0.0
    %3546 = vmatpush1.msra.mxu0 %v3455
    %3547 = vmatprep.subr.mxu0 0.0
    %3548 = vmatpush1.msra.mxu0 0.0
    %3549 = vmatprep.subr.mxu0 0.0
    %3550 = vmatpush1.msra.mxu0 0.0
    %3551 = vmatprep.subr.mxu0 0.0
    %3552 = vmatpush1.msra.mxu0 0.0
    %3553 = vmatprep.subr.mxu0 0.0
    %3554 = vmatpush1.msra.mxu0 0.0
    %3555 = vmatprep.subr.mxu0 0.0
    %3556 = vmatpush1.msra.mxu0 0.0
    %3557 = vmatprep.subr.mxu0 0.0
    %3558 = vmatpush1.msra.mxu0 0.0
    %3559 = vmatprep.subr.mxu0 0.0
    %3560 = vmatpush1.msra.mxu0 0.0
    %3561 = vmatprep.subr.mxu0 0.0
    %3562 = vmatpush1.msra.mxu0 0.0
    %3563 = vmatprep.subr.mxu0 0.0
    %3564 = vmatpush1.msra.mxu0 0.0
    %3565 = vmatprep.subr.mxu0 0.0
    %3566 = vmatpush1.msra.mxu0 0.0
    %3567 = vmatprep.subr.mxu0 0.0
    %3568 = vmatpush1.msra.mxu0 0.0
    %3569 = vmatprep.subr.mxu0 0.0
    %3570 = vmatpush1.msra.mxu0 0.0
    %3571 = vmatprep.subr.mxu0 0.0
    %3572 = vmatpush1.msra.mxu0 0.0
    %3573 = vmatprep.subr.mxu0 0.0
    %3574 = vmatpush1.msra.mxu0 0.0
    %3575 = vmatprep.subr.mxu0 0.0
    %3576 = vmatpush1.msra.mxu0 0.0
    %3577 = vmatprep.subr.mxu0 0.0
    %3578 = vmatpush1.msra.mxu0 0.0
    %3579 = vmatprep.subr.mxu0 0.0
    %3580 = vmatpush1.msra.mxu0 0.0
    %3581 = vmatprep.subr.mxu0 0.0
    %3582 = vmatpush1.msra.mxu0 0.0
    %3583 = vmatprep.subr.mxu0 0.0
    %3584 = vmatpush1.msra.mxu0 0.0
    %3585 = vmatprep.subr.mxu0 0.0
    %3586 = vmatpush1.msra.mxu0 0.0
    %3587 = vmatprep.subr.mxu0 0.0
    %3588 = vmatpush1.msra.mxu0 0.0
    %3589 = vmatprep.subr.mxu0 0.0
    %3590 = vmatpush1.msra.mxu0 0.0
    %3591 = vmatprep.subr.mxu0 0.0
    %3592 = vmatpush1.msra.mxu0 0.0
    %3593 = vmatprep.subr.mxu0 0.0
    %3594 = vmatpush1.msra.mxu0 0.0
    %3595 = vmatprep.mubr.f32.mxu0 0.0
    %3596 = vmatmul.mubr.f32.gmra.mrb[0].mxu0 %v3457
    %v3597 = vpop.f32.mrb[0].mxu0
    %v3598 = vadd.f32 0.0, %v3597
    %v3599 = vpop.f32.mrb[0].mxu0
    %3600 = vmatprep.mubr.f32.mxu0 0.0
    %3601 = vmatmul.mubr.f32.gmra.mrb[0].mxu0 %v3460
    %v3602 = vpop.f32.mrb[0].mxu0
    %v3603 = vadd.f32 0.0, %v3602
    %v3604 = vpop.f32.mrb[0].mxu0
    %3605 = vmatprep.mubr.f32.mxu0 0.0
    %3606 = vmatmul.mubr.f32.gmra.mrb[0].mxu0 %v3463
    %v3607 = vpop.f32.mrb[0].mxu0
    %v3608 = vadd.f32 0.0, %v3607
    %v3609 = vpop.f32.mrb[0].mxu0
    %3610 = vmatprep.mubr.f32.mxu0 0.0
    %3611 = vmatmul.mubr.f32.gmra.mrb[0].mxu0 %v3466
    %v3612 = vpop.f32.mrb[0].mxu0
    %v3613 = vadd.f32 0.0, %v3612
    %v3614 = vpop.f32.mrb[0].mxu0
    %3615 = vmatprep.mubr.f32.mxu0 0.0
    %3616 = vmatmul.mubr.f32.gmra.mrb[0].mxu0 %v3469
    %v3617 = vpop.f32.mrb[0].mxu0
    %v3618 = vadd.f32 0.0, %v3617
    %v3619 = vpop.f32.mrb[0].mxu0
    %3620 = vmatprep.mubr.f32.mxu0 0.0
    %3621 = vmatmul.mubr.f32.gmra.mrb[0].mxu0 %v3472
    %v3622 = vpop.f32.mrb[0].mxu0
    %v3623 = vadd.f32 0.0, %v3622
    %v3624 = vpop.f32.mrb[0].mxu0
    %3625 = vmatprep.mubr.f32.mxu0 0.0
    %3626 = vmatmul.mubr.f32.gmra.mrb[0].mxu0 %v3475
    %v3627 = vpop.f32.mrb[0].mxu0
    %v3628 = vadd.f32 0.0, %v3627
    %v3629 = vpop.f32.mrb[0].mxu0
    %3630 = vmatprep.mubr.f32.mxu0 0.0
    %3631 = vmatmul.mubr.f32.gmra.mrb[0].mxu0 %v3478
    %v3632 = vpop.f32.mrb[0].mxu0
    %v3633 = vadd.f32 0.0, %v3632
    %v3634 = vpop.f32.mrb[0].mxu0
    %3635 = vmatprep.mubr.f32.mxu0 0.0
    %3636 = vmatmul.mubr.f32.gmra.mrb[0].mxu0 %v3481
    %v3637 = vpop.f32.mrb[0].mxu0
    %v3638 = vadd.f32 0.0, %v3637
    %v3639 = vpop.f32.mrb[0].mxu0
    %3640 = vmatprep.mubr.f32.mxu0 0.0
    %3641 = vmatmul.mubr.f32.gmra.mrb[0].mxu0 %v3484
    %v3642 = vpop.f32.mrb[0].mxu0
    %v3643 = vadd.f32 0.0, %v3642
    %v3644 = vpop.f32.mrb[0].mxu0
    %3645 = vmatprep.mubr.f32.mxu0 0.0
    %3646 = vmatmul.mubr.f32.gmra.mrb[0].mxu0 %v3487
    %v3647 = vpop.f32.mrb[0].mxu0
    %v3648 = vadd.f32 0.0, %v3647
    %v3649 = vpop.f32.mrb[0].mxu0
    %3650 = vmatprep.mubr.f32.mxu0 0.0
    %3651 = vmatmul.mubr.f32.gmra.mrb[0].mxu0 %v3490
    %v3652 = vpop.f32.mrb[0].mxu0
    %v3653 = vadd.f32 0.0, %v3652
    %v3654 = vpop.f32.mrb[0].mxu0
    %3655 = vmatprep.mubr.f32.mxu0 0.0
    %3656 = vmatmul.mubr.f32.gmra.mrb[0].mxu0 %v3493
    %v3657 = vpop.f32.mrb[0].mxu0
    %v3658 = vadd.f32 0.0, %v3657
    %v3659 = vpop.f32.mrb[0].mxu0
    %3660 = vmatprep.mubr.f32.mxu0 0.0
    %3661 = vmatmul.mubr.f32.gmra.mrb[0].mxu0 %v3496
    %v3662 = vpop.f32.mrb[0].mxu0
    %v3663 = vadd.f32 0.0, %v3662
    %v3664 = vpop.f32.mrb[0].mxu0
    %3665 = vmatprep.mubr.f32.mxu0 0.0
    %3666 = vmatmul.mubr.f32.gmra.mrb[0].mxu0 %v3499
    %v3667 = vpop.f32.mrb[0].mxu0
    %v3668 = vadd.f32 0.0, %v3667
    %v3669 = vpop.f32.mrb[0].mxu0
    %3670 = vmatprep.mubr.f32.mxu0 0.0
    %3671 = vmatmul.mubr.f32.gmra.mrb[0].mxu0 %v3502
    %v3672 = vpop.f32.mrb[0].mxu0
    %v3673 = vadd.f32 0.0, %v3672
    %v3674 = vpop.f32.mrb[0].mxu0
    %3675 = vmatprep.mubr.f32.mxu0 0.0
    %3676 = vmatmul.mubr.f32.gmra.mrb[0].mxu0 %v3505
    %v3677 = vpop.f32.mrb[0].mxu0
    %v3678 = vadd.f32 0.0, %v3677
    %v3679 = vpop.f32.mrb[0].mxu0
    %3680 = vmatprep.mubr.f32.mxu0 0.0
    %3681 = vmatmul.mubr.f32.gmra.mrb[0].mxu0 %v3508
    %v3682 = vpop.f32.mrb[0].mxu0
    %v3683 = vadd.f32 0.0, %v3682
    %v3684 = vpop.f32.mrb[0].mxu0
    %3685 = vmatprep.mubr.f32.mxu0 0.0
    %3686 = vmatmul.mubr.f32.gmra.mrb[0].mxu0 %v3511
    %v3687 = vpop.f32.mrb[0].mxu0
    %v3688 = vadd.f32 0.0, %v3687
    %v3689 = vpop.f32.mrb[0].mxu0
    %3690 = vmatprep.mubr.f32.mxu0 0.0
    %3691 = vmatmul.mubr.f32.gmra.mrb[0].mxu0 %v3514
    %v3692 = vpop.f32.mrb[0].mxu0
    %v3693 = vadd.f32 0.0, %v3692
    %v3694 = vpop.f32.mrb[0].mxu0
    %3695 = vmatprep.mubr.f32.mxu0 0.0
    %3696 = vmatmul.mubr.f32.gmra.mrb[0].mxu0 %v3517
    %v3697 = vpop.f32.mrb[0].mxu0
    %v3698 = vadd.f32 0.0, %v3697
    %v3699 = vpop.f32.mrb[0].mxu0
    %3700 = vmatprep.mubr.f32.mxu0 0.0
    %3701 = vmatmul.mubr.f32.gmra.mrb[0].mxu0 %v3520
    %v3702 = vpop.f32.mrb[0].mxu0
    %v3703 = vadd.f32 0.0, %v3702
    %v3704 = vpop.f32.mrb[0].mxu0
    %3705 = vmatprep.mubr.f32.mxu0 0.0
    %3706 = vmatmul.mubr.f32.gmra.mrb[0].mxu0 %v3523
    %v3707 = vpop.f32.mrb[0].mxu0
    %v3708 = vadd.f32 0.0, %v3707
    %v3709 = vpop.f32.mrb[0].mxu0
    %3710 = vmatprep.mubr.f32.mxu0 0.0
    %3711 = vmatmul.mubr.f32.gmra.mrb[0].mxu0 %v3526
    %v3712 = vpop.f32.mrb[0].mxu0
    %v3713 = vadd.f32 0.0, %v3712
    %v3714 = vpop.f32.mrb[0].mxu0
    %3715 = vmatprep.mubr.f32.mxu0 0.0
    %3716 = vmatmul.mubr.f32.gmra.mrb[0].mxu0 %v3529
    %v3717 = vpop.f32.mrb[0].mxu0
    %v3718 = vadd.f32 0.0, %v3717
    %v3719 = vpop.f32.mrb[0].mxu0
    %3720 = vdwg.mxu0
    %v3721 = vadd.f32 %v3299, %v3598
    %v3722 = vadd.f32 %v3304, %v3603
    %v3723 = vadd.f32 %v3309, %v3608
    %v3724 = vadd.f32 %v3314, %v3613
    %v3725 = vadd.f32 %v3319, %v3618
    %v3726 = vadd.f32 %v3324, %v3623
    %v3727 = vadd.f32 %v3329, %v3628
    %v3728 = vadd.f32 %v3334, %v3633
    %v3729 = vadd.f32 %v3339, %v3638
    %v3730 = vadd.f32 %v3344, %v3643
    %v3731 = vadd.f32 %v3349, %v3648
    %v3732 = vadd.f32 %v3354, %v3653
    %v3733 = vadd.f32 %v3359, %v3658
    %v3734 = vadd.f32 %v3364, %v3663
    %v3735 = vadd.f32 %v3369, %v3668
    %v3736 = vadd.f32 %v3374, %v3673
    %v3737 = vadd.f32 %v3379, %v3678
    %v3738 = vadd.f32 %v3384, %v3683
    %v3739 = vadd.f32 %v3389, %v3688
    %v3740 = vadd.f32 %v3394, %v3693
    %v3741 = vadd.f32 %v3399, %v3698
    %v3742 = vadd.f32 %v3404, %v3703
    %v3743 = vadd.f32 %v3409, %v3708
    %v3744 = vadd.f32 %v3414, %v3713
    %v3745 = vadd.f32 %v3419, %v3718
    %v3746 = vld [vmem:[#allocation2 + $0xf] sm:$0xff]
    %v3747 = vld [vmem:[#allocation2 + $0x17] sm:$0xff]
    %v3748 = vld [vmem:[#allocation2 + $0x1f] sm:$0xff]
    %v3749 = vld [vmem:[#allocation2 + $0x27] sm:$0xff]
    %v3750 = vld [vmem:[#allocation2 + $0x2f] sm:$0xff]
    %v3751 = vld [vmem:[#allocation2 + $0x37] sm:$0xff]
    %v3752 = vld [vmem:[#allocation2 + $0x3f] sm:$0xff]
    %v3753 = vld [vmem:[#allocation2 + $0x47] sm:$0xff]
    %v3754 = vld [vmem:[#allocation2 + $0x4f] sm:$0xff]
    %v3755 = vld [vmem:[#allocation2 + $0x57] sm:$0xff]
    %v3756 = vld [vmem:[#allocation2 + $0x5f] sm:$0xff]
    %v3757 = vld [vmem:[#allocation2 + $0x67] sm:$0xff]
    %v3758 = vld [vmem:[#allocation2 + $0x6f] sm:$0xff]
    %v3759 = vld [vmem:[#allocation2 + $0x77] sm:$0xff]
    %v3760 = vld [vmem:[#allocation2 + $0x7f] sm:$0xff]
    %v3761 = vld [vmem:[#allocation2 + $0x87] sm:$0xff]
    %v3762 = vld [vmem:[#allocation2 + $0x8f] sm:$0xff]
    %v3763 = vld [vmem:[#allocation2 + $0x97] sm:$0xff]
    %v3764 = vld [vmem:[#allocation2 + $0x9f] sm:$0xff]
    %v3765 = vld [vmem:[#allocation2 + $0xa7] sm:$0xff]
    %v3766 = vld [vmem:[#allocation2 + $0xaf] sm:$0xff]
    %v3767 = vld [vmem:[#allocation2 + $0xb7] sm:$0xff]
    %v3768 = vld [vmem:[#allocation2 + $0xbf] sm:$0xff]
    %v3769 = vld [vmem:[#allocation2 + $0xc7] sm:$0xff]
    %v3770 = vld [vmem:[#allocation2 + $0xcf] sm:$0xff]
    %s3771 = scalar_lea.vmem [#allocation19], 192
    %v3772 = vld [vmem:[%s3771] sm:$0xff]
    %v3773 = vld [vmem:[%s3771 + $0x8] sm:$0xff]
    %v3774 = vld [vmem:[%s3771 + $0x10] sm:$0xff]
    %v3775 = vld [vmem:[%s3771 + $0x18] sm:$0xff]
    %v3776 = vld [vmem:[%s3771 + $0x20] sm:$0xff]
    %v3777 = vld [vmem:[%s3771 + $0x28] sm:$0xff]
    %v3778 = vld [vmem:[%s3771 + $0x30] sm:$0xff]
    %v3779 = vld [vmem:[%s3771 + $0x38] sm:$0xff]
    %v3781 = vsel %vm659, %v3746, 0
    %v3784 = vsel %vm659, %v3747, 0
    %v3787 = vsel %vm659, %v3748, 0
    %v3790 = vsel %vm659, %v3749, 0
    %v3793 = vsel %vm659, %v3750, 0
    %v3796 = vsel %vm659, %v3751, 0
    %v3799 = vsel %vm659, %v3752, 0
    %v3802 = vsel %vm659, %v3753, 0
    %v3805 = vsel %vm659, %v3754, 0
    %v3808 = vsel %vm659, %v3755, 0
    %v3811 = vsel %vm659, %v3756, 0
    %v3814 = vsel %vm659, %v3757, 0
    %v3817 = vsel %vm659, %v3758, 0
    %v3820 = vsel %vm659, %v3759, 0
    %v3823 = vsel %vm659, %v3760, 0
    %v3826 = vsel %vm659, %v3761, 0
    %v3829 = vsel %vm659, %v3762, 0
    %v3832 = vsel %vm659, %v3763, 0
    %v3835 = vsel %vm659, %v3764, 0
    %v3838 = vsel %vm659, %v3765, 0
    %v3841 = vsel %vm659, %v3766, 0
    %v3844 = vsel %vm659, %v3767, 0
    %v3847 = vsel %vm659, %v3768, 0
    %v3850 = vsel %vm659, %v3769, 0
    %v3853 = vsel %vm659, %v3770, 0
    %3855 = vmatprep.subr.mxu0 0.0
    %3856 = vmatpush1.msra.mxu0 %v3772
    %3857 = vmatprep.subr.mxu0 0.0
    %3858 = vmatpush1.msra.mxu0 %v3773
    %3859 = vmatprep.subr.mxu0 0.0
    %3860 = vmatpush1.msra.mxu0 %v3774
    %3861 = vmatprep.subr.mxu0 0.0
    %3862 = vmatpush1.msra.mxu0 %v3775
    %3863 = vmatprep.subr.mxu0 0.0
    %3864 = vmatpush1.msra.mxu0 %v3776
    %3865 = vmatprep.subr.mxu0 0.0
    %3866 = vmatpush1.msra.mxu0 %v3777
    %3867 = vmatprep.subr.mxu0 0.0
    %3868 = vmatpush1.msra.mxu0 %v3778
    %3869 = vmatprep.subr.mxu0 0.0
    %3870 = vmatpush1.msra.mxu0 %v3779
    %3871 = vmatprep.subr.mxu0 0.0
    %3872 = vmatpush1.msra.mxu0 0.0
    %3873 = vmatprep.subr.mxu0 0.0
    %3874 = vmatpush1.msra.mxu0 0.0
    %3875 = vmatprep.subr.mxu0 0.0
    %3876 = vmatpush1.msra.mxu0 0.0
    %3877 = vmatprep.subr.mxu0 0.0
    %3878 = vmatpush1.msra.mxu0 0.0
    %3879 = vmatprep.subr.mxu0 0.0
    %3880 = vmatpush1.msra.mxu0 0.0
    %3881 = vmatprep.subr.mxu0 0.0
    %3882 = vmatpush1.msra.mxu0 0.0
    %3883 = vmatprep.subr.mxu0 0.0
    %3884 = vmatpush1.msra.mxu0 0.0
    %3885 = vmatprep.subr.mxu0 0.0
    %3886 = vmatpush1.msra.mxu0 0.0
    %3887 = vmatprep.subr.mxu0 0.0
    %3888 = vmatpush1.msra.mxu0 0.0
    %3889 = vmatprep.subr.mxu0 0.0
    %3890 = vmatpush1.msra.mxu0 0.0
    %3891 = vmatprep.subr.mxu0 0.0
    %3892 = vmatpush1.msra.mxu0 0.0
    %3893 = vmatprep.subr.mxu0 0.0
    %3894 = vmatpush1.msra.mxu0 0.0
    %3895 = vmatprep.subr.mxu0 0.0
    %3896 = vmatpush1.msra.mxu0 0.0
    %3897 = vmatprep.subr.mxu0 0.0
    %3898 = vmatpush1.msra.mxu0 0.0
    %3899 = vmatprep.subr.mxu0 0.0
    %3900 = vmatpush1.msra.mxu0 0.0
    %3901 = vmatprep.subr.mxu0 0.0
    %3902 = vmatpush1.msra.mxu0 0.0
    %3903 = vmatprep.subr.mxu0 0.0
    %3904 = vmatpush1.msra.mxu0 0.0
    %3905 = vmatprep.subr.mxu0 0.0
    %3906 = vmatpush1.msra.mxu0 0.0
    %3907 = vmatprep.subr.mxu0 0.0
    %3908 = vmatpush1.msra.mxu0 0.0
    %3909 = vmatprep.subr.mxu0 0.0
    %3910 = vmatpush1.msra.mxu0 0.0
    %3911 = vmatprep.subr.mxu0 0.0
    %3912 = vmatpush1.msra.mxu0 0.0
    %3913 = vmatprep.subr.mxu0 0.0
    %3914 = vmatpush1.msra.mxu0 0.0
    %3915 = vmatprep.subr.mxu0 0.0
    %3916 = vmatpush1.msra.mxu0 0.0
    %3917 = vmatprep.subr.mxu0 0.0
    %3918 = vmatpush1.msra.mxu0 0.0
    %3919 = vmatprep.mubr.f32.mxu0 0.0
    %3920 = vmatmul.mubr.f32.gmra.mrb[0].mxu0 %v3781
    %v3921 = vpop.f32.mrb[0].mxu0
    %v3922 = vadd.f32 0.0, %v3921
    %v3923 = vpop.f32.mrb[0].mxu0
    %3924 = vmatprep.mubr.f32.mxu0 0.0
    %3925 = vmatmul.mubr.f32.gmra.mrb[0].mxu0 %v3784
    %v3926 = vpop.f32.mrb[0].mxu0
    %v3927 = vadd.f32 0.0, %v3926
    %v3928 = vpop.f32.mrb[0].mxu0
    %3929 = vmatprep.mubr.f32.mxu0 0.0
    %3930 = vmatmul.mubr.f32.gmra.mrb[0].mxu0 %v3787
    %v3931 = vpop.f32.mrb[0].mxu0
    %v3932 = vadd.f32 0.0, %v3931
    %v3933 = vpop.f32.mrb[0].mxu0
    %3934 = vmatprep.mubr.f32.mxu0 0.0
    %3935 = vmatmul.mubr.f32.gmra.mrb[0].mxu0 %v3790
    %v3936 = vpop.f32.mrb[0].mxu0
    %v3937 = vadd.f32 0.0, %v3936
    %v3938 = vpop.f32.mrb[0].mxu0
    %3939 = vmatprep.mubr.f32.mxu0 0.0
    %3940 = vmatmul.mubr.f32.gmra.mrb[0].mxu0 %v3793
    %v3941 = vpop.f32.mrb[0].mxu0
    %v3942 = vadd.f32 0.0, %v3941
    %v3943 = vpop.f32.mrb[0].mxu0
    %3944 = vmatprep.mubr.f32.mxu0 0.0
    %3945 = vmatmul.mubr.f32.gmra.mrb[0].mxu0 %v3796
    %v3946 = vpop.f32.mrb[0].mxu0
    %v3947 = vadd.f32 0.0, %v3946
    %v3948 = vpop.f32.mrb[0].mxu0
    %3949 = vmatprep.mubr.f32.mxu0 0.0
    %3950 = vmatmul.mubr.f32.gmra.mrb[0].mxu0 %v3799
    %v3951 = vpop.f32.mrb[0].mxu0
    %v3952 = vadd.f32 0.0, %v3951
    %v3953 = vpop.f32.mrb[0].mxu0
    %3954 = vmatprep.mubr.f32.mxu0 0.0
    %3955 = vmatmul.mubr.f32.gmra.mrb[0].mxu0 %v3802
    %v3956 = vpop.f32.mrb[0].mxu0
    %v3957 = vadd.f32 0.0, %v3956
    %v3958 = vpop.f32.mrb[0].mxu0
    %3959 = vmatprep.mubr.f32.mxu0 0.0
    %3960 = vmatmul.mubr.f32.gmra.mrb[0].mxu0 %v3805
    %v3961 = vpop.f32.mrb[0].mxu0
    %v3962 = vadd.f32 0.0, %v3961
    %v3963 = vpop.f32.mrb[0].mxu0
    %3964 = vmatprep.mubr.f32.mxu0 0.0
    %3965 = vmatmul.mubr.f32.gmra.mrb[0].mxu0 %v3808
    %v3966 = vpop.f32.mrb[0].mxu0
    %v3967 = vadd.f32 0.0, %v3966
    %v3968 = vpop.f32.mrb[0].mxu0
    %3969 = vmatprep.mubr.f32.mxu0 0.0
    %3970 = vmatmul.mubr.f32.gmra.mrb[0].mxu0 %v3811
    %v3971 = vpop.f32.mrb[0].mxu0
    %v3972 = vadd.f32 0.0, %v3971
    %v3973 = vpop.f32.mrb[0].mxu0
    %3974 = vmatprep.mubr.f32.mxu0 0.0
    %3975 = vmatmul.mubr.f32.gmra.mrb[0].mxu0 %v3814
    %v3976 = vpop.f32.mrb[0].mxu0
    %v3977 = vadd.f32 0.0, %v3976
    %v3978 = vpop.f32.mrb[0].mxu0
    %3979 = vmatprep.mubr.f32.mxu0 0.0
    %3980 = vmatmul.mubr.f32.gmra.mrb[0].mxu0 %v3817
    %v3981 = vpop.f32.mrb[0].mxu0
    %v3982 = vadd.f32 0.0, %v3981
    %v3983 = vpop.f32.mrb[0].mxu0
    %3984 = vmatprep.mubr.f32.mxu0 0.0
    %3985 = vmatmul.mubr.f32.gmra.mrb[0].mxu0 %v3820
    %v3986 = vpop.f32.mrb[0].mxu0
    %v3987 = vadd.f32 0.0, %v3986
    %v3988 = vpop.f32.mrb[0].mxu0
    %3989 = vmatprep.mubr.f32.mxu0 0.0
    %3990 = vmatmul.mubr.f32.gmra.mrb[0].mxu0 %v3823
    %v3991 = vpop.f32.mrb[0].mxu0
    %v3992 = vadd.f32 0.0, %v3991
    %v3993 = vpop.f32.mrb[0].mxu0
    %3994 = vmatprep.mubr.f32.mxu0 0.0
    %3995 = vmatmul.mubr.f32.gmra.mrb[0].mxu0 %v3826
    %v3996 = vpop.f32.mrb[0].mxu0
    %v3997 = vadd.f32 0.0, %v3996
    %v3998 = vpop.f32.mrb[0].mxu0
    %3999 = vmatprep.mubr.f32.mxu0 0.0
    %4000 = vmatmul.mubr.f32.gmra.mrb[0].mxu0 %v3829
    %v4001 = vpop.f32.mrb[0].mxu0
    %v4002 = vadd.f32 0.0, %v4001
    %v4003 = vpop.f32.mrb[0].mxu0
    %4004 = vmatprep.mubr.f32.mxu0 0.0
    %4005 = vmatmul.mubr.f32.gmra.mrb[0].mxu0 %v3832
    %v4006 = vpop.f32.mrb[0].mxu0
    %v4007 = vadd.f32 0.0, %v4006
    %v4008 = vpop.f32.mrb[0].mxu0
    %4009 = vmatprep.mubr.f32.mxu0 0.0
    %4010 = vmatmul.mubr.f32.gmra.mrb[0].mxu0 %v3835
    %v4011 = vpop.f32.mrb[0].mxu0
    %v4012 = vadd.f32 0.0, %v4011
    %v4013 = vpop.f32.mrb[0].mxu0
    %4014 = vmatprep.mubr.f32.mxu0 0.0
    %4015 = vmatmul.mubr.f32.gmra.mrb[0].mxu0 %v3838
    %v4016 = vpop.f32.mrb[0].mxu0
    %v4017 = vadd.f32 0.0, %v4016
    %v4018 = vpop.f32.mrb[0].mxu0
    %4019 = vmatprep.mubr.f32.mxu0 0.0
    %4020 = vmatmul.mubr.f32.gmra.mrb[0].mxu0 %v3841
    %v4021 = vpop.f32.mrb[0].mxu0
    %v4022 = vadd.f32 0.0, %v4021
    %v4023 = vpop.f32.mrb[0].mxu0
    %4024 = vmatprep.mubr.f32.mxu0 0.0
    %4025 = vmatmul.mubr.f32.gmra.mrb[0].mxu0 %v3844
    %v4026 = vpop.f32.mrb[0].mxu0
    %v4027 = vadd.f32 0.0, %v4026
    %v4028 = vpop.f32.mrb[0].mxu0
    %4029 = vmatprep.mubr.f32.mxu0 0.0
    %4030 = vmatmul.mubr.f32.gmra.mrb[0].mxu0 %v3847
    %v4031 = vpop.f32.mrb[0].mxu0
    %v4032 = vadd.f32 0.0, %v4031
    %v4033 = vpop.f32.mrb[0].mxu0
    %4034 = vmatprep.mubr.f32.mxu0 0.0
    %4035 = vmatmul.mubr.f32.gmra.mrb[0].mxu0 %v3850
    %v4036 = vpop.f32.mrb[0].mxu0
    %v4037 = vadd.f32 0.0, %v4036
    %v4038 = vpop.f32.mrb[0].mxu0
    %4039 = vmatprep.mubr.f32.mxu0 0.0
    %4040 = vmatmul.mubr.f32.gmra.mrb[0].mxu0 %v3853
    %v4041 = vpop.f32.mrb[0].mxu0
    %v4042 = vadd.f32 0.0, %v4041
    %v4043 = vpop.f32.mrb[0].mxu0
    %4044 = vdwg.mxu0
    %v4045 = vadd.f32 %v3721, %v3922
    %v4046 = vadd.f32 %v3722, %v3927
    %v4047 = vadd.f32 %v3723, %v3932
    %v4048 = vadd.f32 %v3724, %v3937
    %v4049 = vadd.f32 %v3725, %v3942
    %v4050 = vadd.f32 %v3726, %v3947
    %v4051 = vadd.f32 %v3727, %v3952
    %v4052 = vadd.f32 %v3728, %v3957
    %v4053 = vadd.f32 %v3729, %v3962
    %v4054 = vadd.f32 %v3730, %v3967
    %v4055 = vadd.f32 %v3731, %v3972
    %v4056 = vadd.f32 %v3732, %v3977
    %v4057 = vadd.f32 %v3733, %v3982
    %v4058 = vadd.f32 %v3734, %v3987
    %v4059 = vadd.f32 %v3735, %v3992
    %v4060 = vadd.f32 %v3736, %v3997
    %v4061 = vadd.f32 %v3737, %v4002
    %v4062 = vadd.f32 %v3738, %v4007
    %v4063 = vadd.f32 %v3739, %v4012
    %v4064 = vadd.f32 %v3740, %v4017
    %v4065 = vadd.f32 %v3741, %v4022
    %v4066 = vadd.f32 %v3742, %v4027
    %v4067 = vadd.f32 %v3743, %v4032
    %v4068 = vadd.f32 %v3744, %v4037
    %v4069 = vadd.f32 %v3745, %v4042
    %v4070 = vld [vmem:[#allocation2 + $0x10] sm:$0xff]
    %v4071 = vld [vmem:[#allocation2 + $0x18] sm:$0xff]
    %v4072 = vld [vmem:[#allocation2 + $0x20] sm:$0xff]
    %v4073 = vld [vmem:[#allocation2 + $0x28] sm:$0xff]
    %v4074 = vld [vmem:[#allocation2 + $0x30] sm:$0xff]
    %v4075 = vld [vmem:[#allocation2 + $0x38] sm:$0xff]
    %v4076 = vld [vmem:[#allocation2 + $0x40] sm:$0xff]
    %v4077 = vld [vmem:[#allocation2 + $0x48] sm:$0xff]
    %v4078 = vld [vmem:[#allocation2 + $0x50] sm:$0xff]
    %v4079 = vld [vmem:[#allocation2 + $0x58] sm:$0xff]
    %v4080 = vld [vmem:[#allocation2 + $0x60] sm:$0xff]
    %v4081 = vld [vmem:[#allocation2 + $0x68] sm:$0xff]
    %v4082 = vld [vmem:[#allocation2 + $0x70] sm:$0xff]
    %v4083 = vld [vmem:[#allocation2 + $0x78] sm:$0xff]
    %v4084 = vld [vmem:[#allocation2 + $0x80] sm:$0xff]
    %v4085 = vld [vmem:[#allocation2 + $0x88] sm:$0xff]
    %v4086 = vld [vmem:[#allocation2 + $0x90] sm:$0xff]
    %v4087 = vld [vmem:[#allocation2 + $0x98] sm:$0xff]
    %v4088 = vld [vmem:[#allocation2 + $0xa0] sm:$0xff]
    %v4089 = vld [vmem:[#allocation2 + $0xa8] sm:$0xff]
    %v4090 = vld [vmem:[#allocation2 + $0xb0] sm:$0xff]
    %v4091 = vld [vmem:[#allocation2 + $0xb8] sm:$0xff]
    %v4092 = vld [vmem:[#allocation2 + $0xc0] sm:$0xff]
    %v4093 = vld [vmem:[#allocation2 + $0xc8] sm:$0xff]
    %v4094 = vld [vmem:[#allocation2 + $0xd0] sm:$0xff]
    %s4095 = scalar_lea.vmem [#allocation19], 256
    %v4096 = vld [vmem:[%s4095] sm:$0xff]
    %v4097 = vld [vmem:[%s4095 + $0x8] sm:$0xff]
    %v4098 = vld [vmem:[%s4095 + $0x10] sm:$0xff]
    %v4099 = vld [vmem:[%s4095 + $0x18] sm:$0xff]
    %v4100 = vld [vmem:[%s4095 + $0x20] sm:$0xff]
    %v4101 = vld [vmem:[%s4095 + $0x28] sm:$0xff]
    %v4102 = vld [vmem:[%s4095 + $0x30] sm:$0xff]
    %v4103 = vld [vmem:[%s4095 + $0x38] sm:$0xff]
    %v4105 = vsel %vm659, %v4070, 0
    %v4108 = vsel %vm659, %v4071, 0
    %v4111 = vsel %vm659, %v4072, 0
    %v4114 = vsel %vm659, %v4073, 0
    %v4117 = vsel %vm659, %v4074, 0
    %v4120 = vsel %vm659, %v4075, 0
    %v4123 = vsel %vm659, %v4076, 0
    %v4126 = vsel %vm659, %v4077, 0
    %v4129 = vsel %vm659, %v4078, 0
    %v4132 = vsel %vm659, %v4079, 0
    %v4135 = vsel %vm659, %v4080, 0
    %v4138 = vsel %vm659, %v4081, 0
    %v4141 = vsel %vm659, %v4082, 0
    %v4144 = vsel %vm659, %v4083, 0
    %v4147 = vsel %vm659, %v4084, 0
    %v4150 = vsel %vm659, %v4085, 0
    %v4153 = vsel %vm659, %v4086, 0
    %v4156 = vsel %vm659, %v4087, 0
    %v4159 = vsel %vm659, %v4088, 0
    %v4162 = vsel %vm659, %v4089, 0
    %v4165 = vsel %vm659, %v4090, 0
    %v4168 = vsel %vm659, %v4091, 0
    %v4171 = vsel %vm659, %v4092, 0
    %v4174 = vsel %vm659, %v4093, 0
    %v4177 = vsel %vm659, %v4094, 0
    %4179 = vmatprep.subr.mxu0 0.0
    %4180 = vmatpush1.msra.mxu0 %v4096
    %4181 = vmatprep.subr.mxu0 0.0
    %4182 = vmatpush1.msra.mxu0 %v4097
    %4183 = vmatprep.subr.mxu0 0.0
    %4184 = vmatpush1.msra.mxu0 %v4098
    %4185 = vmatprep.subr.mxu0 0.0
    %4186 = vmatpush1.msra.mxu0 %v4099
    %4187 = vmatprep.subr.mxu0 0.0
    %4188 = vmatpush1.msra.mxu0 %v4100
    %4189 = vmatprep.subr.mxu0 0.0
    %4190 = vmatpush1.msra.mxu0 %v4101
    %4191 = vmatprep.subr.mxu0 0.0
    %4192 = vmatpush1.msra.mxu0 %v4102
    %4193 = vmatprep.subr.mxu0 0.0
    %4194 = vmatpush1.msra.mxu0 %v4103
    %4195 = vmatprep.subr.mxu0 0.0
    %4196 = vmatpush1.msra.mxu0 0.0
    %4197 = vmatprep.subr.mxu0 0.0
    %4198 = vmatpush1.msra.mxu0 0.0
    %4199 = vmatprep.subr.mxu0 0.0
    %4200 = vmatpush1.msra.mxu0 0.0
    %4201 = vmatprep.subr.mxu0 0.0
    %4202 = vmatpush1.msra.mxu0 0.0
    %4203 = vmatprep.subr.mxu0 0.0
    %4204 = vmatpush1.msra.mxu0 0.0
    %4205 = vmatprep.subr.mxu0 0.0
    %4206 = vmatpush1.msra.mxu0 0.0
    %4207 = vmatprep.subr.mxu0 0.0
    %4208 = vmatpush1.msra.mxu0 0.0
    %4209 = vmatprep.subr.mxu0 0.0
    %4210 = vmatpush1.msra.mxu0 0.0
    %4211 = vmatprep.subr.mxu0 0.0
    %4212 = vmatpush1.msra.mxu0 0.0
    %4213 = vmatprep.subr.mxu0 0.0
    %4214 = vmatpush1.msra.mxu0 0.0
    %4215 = vmatprep.subr.mxu0 0.0
    %4216 = vmatpush1.msra.mxu0 0.0
    %4217 = vmatprep.subr.mxu0 0.0
    %4218 = vmatpush1.msra.mxu0 0.0
    %4219 = vmatprep.subr.mxu0 0.0
    %4220 = vmatpush1.msra.mxu0 0.0
    %4221 = vmatprep.subr.mxu0 0.0
    %4222 = vmatpush1.msra.mxu0 0.0
    %4223 = vmatprep.subr.mxu0 0.0
    %4224 = vmatpush1.msra.mxu0 0.0
    %4225 = vmatprep.subr.mxu0 0.0
    %4226 = vmatpush1.msra.mxu0 0.0
    %4227 = vmatprep.subr.mxu0 0.0
    %4228 = vmatpush1.msra.mxu0 0.0
    %4229 = vmatprep.subr.mxu0 0.0
    %4230 = vmatpush1.msra.mxu0 0.0
    %4231 = vmatprep.subr.mxu0 0.0
    %4232 = vmatpush1.msra.mxu0 0.0
    %4233 = vmatprep.subr.mxu0 0.0
    %4234 = vmatpush1.msra.mxu0 0.0
    %4235 = vmatprep.subr.mxu0 0.0
    %4236 = vmatpush1.msra.mxu0 0.0
    %4237 = vmatprep.subr.mxu0 0.0
    %4238 = vmatpush1.msra.mxu0 0.0
    %4239 = vmatprep.subr.mxu0 0.0
    %4240 = vmatpush1.msra.mxu0 0.0
    %4241 = vmatprep.subr.mxu0 0.0
    %4242 = vmatpush1.msra.mxu0 0.0
    %4243 = vmatprep.mubr.f32.mxu0 0.0
    %4244 = vmatmul.mubr.f32.gmra.mrb[0].mxu0 %v4105
    %v4245 = vpop.f32.mrb[0].mxu0
    %v4246 = vadd.f32 0.0, %v4245
    %v4247 = vpop.f32.mrb[0].mxu0
    %4248 = vmatprep.mubr.f32.mxu0 0.0
    %4249 = vmatmul.mubr.f32.gmra.mrb[0].mxu0 %v4108
    %v4250 = vpop.f32.mrb[0].mxu0
    %v4251 = vadd.f32 0.0, %v4250
    %v4252 = vpop.f32.mrb[0].mxu0
    %4253 = vmatprep.mubr.f32.mxu0 0.0
    %4254 = vmatmul.mubr.f32.gmra.mrb[0].mxu0 %v4111
    %v4255 = vpop.f32.mrb[0].mxu0
    %v4256 = vadd.f32 0.0, %v4255
    %v4257 = vpop.f32.mrb[0].mxu0
    %4258 = vmatprep.mubr.f32.mxu0 0.0
    %4259 = vmatmul.mubr.f32.gmra.mrb[0].mxu0 %v4114
    %v4260 = vpop.f32.mrb[0].mxu0
    %v4261 = vadd.f32 0.0, %v4260
    %v4262 = vpop.f32.mrb[0].mxu0
    %4263 = vmatprep.mubr.f32.mxu0 0.0
    %4264 = vmatmul.mubr.f32.gmra.mrb[0].mxu0 %v4117
    %v4265 = vpop.f32.mrb[0].mxu0
    %v4266 = vadd.f32 0.0, %v4265
    %v4267 = vpop.f32.mrb[0].mxu0
    %4268 = vmatprep.mubr.f32.mxu0 0.0
    %4269 = vmatmul.mubr.f32.gmra.mrb[0].mxu0 %v4120
    %v4270 = vpop.f32.mrb[0].mxu0
    %v4271 = vadd.f32 0.0, %v4270
    %v4272 = vpop.f32.mrb[0].mxu0
    %4273 = vmatprep.mubr.f32.mxu0 0.0
    %4274 = vmatmul.mubr.f32.gmra.mrb[0].mxu0 %v4123
    %v4275 = vpop.f32.mrb[0].mxu0
    %v4276 = vadd.f32 0.0, %v4275
    %v4277 = vpop.f32.mrb[0].mxu0
    %4278 = vmatprep.mubr.f32.mxu0 0.0
    %4279 = vmatmul.mubr.f32.gmra.mrb[0].mxu0 %v4126
    %v4280 = vpop.f32.mrb[0].mxu0
    %v4281 = vadd.f32 0.0, %v4280
    %v4282 = vpop.f32.mrb[0].mxu0
    %4283 = vmatprep.mubr.f32.mxu0 0.0
    %4284 = vmatmul.mubr.f32.gmra.mrb[0].mxu0 %v4129
    %v4285 = vpop.f32.mrb[0].mxu0
    %v4286 = vadd.f32 0.0, %v4285
    %v4287 = vpop.f32.mrb[0].mxu0
    %4288 = vmatprep.mubr.f32.mxu0 0.0
    %4289 = vmatmul.mubr.f32.gmra.mrb[0].mxu0 %v4132
    %v4290 = vpop.f32.mrb[0].mxu0
    %v4291 = vadd.f32 0.0, %v4290
    %v4292 = vpop.f32.mrb[0].mxu0
    %4293 = vmatprep.mubr.f32.mxu0 0.0
    %4294 = vmatmul.mubr.f32.gmra.mrb[0].mxu0 %v4135
    %v4295 = vpop.f32.mrb[0].mxu0
    %v4296 = vadd.f32 0.0, %v4295
    %v4297 = vpop.f32.mrb[0].mxu0
    %4298 = vmatprep.mubr.f32.mxu0 0.0
    %4299 = vmatmul.mubr.f32.gmra.mrb[0].mxu0 %v4138
    %v4300 = vpop.f32.mrb[0].mxu0
    %v4301 = vadd.f32 0.0, %v4300
    %v4302 = vpop.f32.mrb[0].mxu0
    %4303 = vmatprep.mubr.f32.mxu0 0.0
    %4304 = vmatmul.mubr.f32.gmra.mrb[0].mxu0 %v4141
    %v4305 = vpop.f32.mrb[0].mxu0
    %v4306 = vadd.f32 0.0, %v4305
    %v4307 = vpop.f32.mrb[0].mxu0
    %4308 = vmatprep.mubr.f32.mxu0 0.0
    %4309 = vmatmul.mubr.f32.gmra.mrb[0].mxu0 %v4144
    %v4310 = vpop.f32.mrb[0].mxu0
    %v4311 = vadd.f32 0.0, %v4310
    %v4312 = vpop.f32.mrb[0].mxu0
    %4313 = vmatprep.mubr.f32.mxu0 0.0
    %4314 = vmatmul.mubr.f32.gmra.mrb[0].mxu0 %v4147
    %v4315 = vpop.f32.mrb[0].mxu0
    %v4316 = vadd.f32 0.0, %v4315
    %v4317 = vpop.f32.mrb[0].mxu0
    %4318 = vmatprep.mubr.f32.mxu0 0.0
    %4319 = vmatmul.mubr.f32.gmra.mrb[0].mxu0 %v4150
    %v4320 = vpop.f32.mrb[0].mxu0
    %v4321 = vadd.f32 0.0, %v4320
    %v4322 = vpop.f32.mrb[0].mxu0
    %4323 = vmatprep.mubr.f32.mxu0 0.0
    %4324 = vmatmul.mubr.f32.gmra.mrb[0].mxu0 %v4153
    %v4325 = vpop.f32.mrb[0].mxu0
    %v4326 = vadd.f32 0.0, %v4325
    %v4327 = vpop.f32.mrb[0].mxu0
    %4328 = vmatprep.mubr.f32.mxu0 0.0
    %4329 = vmatmul.mubr.f32.gmra.mrb[0].mxu0 %v4156
    %v4330 = vpop.f32.mrb[0].mxu0
    %v4331 = vadd.f32 0.0, %v4330
    %v4332 = vpop.f32.mrb[0].mxu0
    %4333 = vmatprep.mubr.f32.mxu0 0.0
    %4334 = vmatmul.mubr.f32.gmra.mrb[0].mxu0 %v4159
    %v4335 = vpop.f32.mrb[0].mxu0
    %v4336 = vadd.f32 0.0, %v4335
    %v4337 = vpop.f32.mrb[0].mxu0
    %4338 = vmatprep.mubr.f32.mxu0 0.0
    %4339 = vmatmul.mubr.f32.gmra.mrb[0].mxu0 %v4162
    %v4340 = vpop.f32.mrb[0].mxu0
    %v4341 = vadd.f32 0.0, %v4340
    %v4342 = vpop.f32.mrb[0].mxu0
    %4343 = vmatprep.mubr.f32.mxu0 0.0
    %4344 = vmatmul.mubr.f32.gmra.mrb[0].mxu0 %v4165
    %v4345 = vpop.f32.mrb[0].mxu0
    %v4346 = vadd.f32 0.0, %v4345
    %v4347 = vpop.f32.mrb[0].mxu0
    %4348 = vmatprep.mubr.f32.mxu0 0.0
    %4349 = vmatmul.mubr.f32.gmra.mrb[0].mxu0 %v4168
    %v4350 = vpop.f32.mrb[0].mxu0
    %v4351 = vadd.f32 0.0, %v4350
    %v4352 = vpop.f32.mrb[0].mxu0
    %4353 = vmatprep.mubr.f32.mxu0 0.0
    %4354 = vmatmul.mubr.f32.gmra.mrb[0].mxu0 %v4171
    %v4355 = vpop.f32.mrb[0].mxu0
    %v4356 = vadd.f32 0.0, %v4355
    %v4357 = vpop.f32.mrb[0].mxu0
    %4358 = vmatprep.mubr.f32.mxu0 0.0
    %4359 = vmatmul.mubr.f32.gmra.mrb[0].mxu0 %v4174
    %v4360 = vpop.f32.mrb[0].mxu0
    %v4361 = vadd.f32 0.0, %v4360
    %v4362 = vpop.f32.mrb[0].mxu0
    %4363 = vmatprep.mubr.f32.mxu0 0.0
    %4364 = vmatmul.mubr.f32.gmra.mrb[0].mxu0 %v4177
    %v4365 = vpop.f32.mrb[0].mxu0
    %v4366 = vadd.f32 0.0, %v4365
    %v4367 = vpop.f32.mrb[0].mxu0
    %4368 = vdwg.mxu0
    %v4369 = vadd.f32 %v4045, %v4246
    %v4370 = vadd.f32 %v4046, %v4251
    %v4371 = vadd.f32 %v4047, %v4256
    %v4372 = vadd.f32 %v4048, %v4261
    %v4373 = vadd.f32 %v4049, %v4266
    %v4374 = vadd.f32 %v4050, %v4271
    %v4375 = vadd.f32 %v4051, %v4276
    %v4376 = vadd.f32 %v4052, %v4281
    %v4377 = vadd.f32 %v4053, %v4286
    %v4378 = vadd.f32 %v4054, %v4291
    %v4379 = vadd.f32 %v4055, %v4296
    %v4380 = vadd.f32 %v4056, %v4301
    %v4381 = vadd.f32 %v4057, %v4306
    %v4382 = vadd.f32 %v4058, %v4311
    %v4383 = vadd.f32 %v4059, %v4316
    %v4384 = vadd.f32 %v4060, %v4321
    %v4385 = vadd.f32 %v4061, %v4326
    %v4386 = vadd.f32 %v4062, %v4331
    %v4387 = vadd.f32 %v4063, %v4336
    %v4388 = vadd.f32 %v4064, %v4341
    %v4389 = vadd.f32 %v4065, %v4346
    %v4390 = vadd.f32 %v4066, %v4351
    %v4391 = vadd.f32 %v4067, %v4356
    %v4392 = vadd.f32 %v4068, %v4361
    %v4393 = vadd.f32 %v4069, %v4366
    %v4394 = vld [vmem:[#allocation2 + $0x11] sm:$0xff]
    %v4395 = vld [vmem:[#allocation2 + $0x19] sm:$0xff]
    %v4396 = vld [vmem:[#allocation2 + $0x21] sm:$0xff]
    %v4397 = vld [vmem:[#allocation2 + $0x29] sm:$0xff]
    %v4398 = vld [vmem:[#allocation2 + $0x31] sm:$0xff]
    %v4399 = vld [vmem:[#allocation2 + $0x39] sm:$0xff]
    %v4400 = vld [vmem:[#allocation2 + $0x41] sm:$0xff]
    %v4401 = vld [vmem:[#allocation2 + $0x49] sm:$0xff]
    %v4402 = vld [vmem:[#allocation2 + $0x51] sm:$0xff]
    %v4403 = vld [vmem:[#allocation2 + $0x59] sm:$0xff]
    %v4404 = vld [vmem:[#allocation2 + $0x61] sm:$0xff]
    %v4405 = vld [vmem:[#allocation2 + $0x69] sm:$0xff]
    %v4406 = vld [vmem:[#allocation2 + $0x71] sm:$0xff]
    %v4407 = vld [vmem:[#allocation2 + $0x79] sm:$0xff]
    %v4408 = vld [vmem:[#allocation2 + $0x81] sm:$0xff]
    %v4409 = vld [vmem:[#allocation2 + $0x89] sm:$0xff]
    %v4410 = vld [vmem:[#allocation2 + $0x91] sm:$0xff]
    %v4411 = vld [vmem:[#allocation2 + $0x99] sm:$0xff]
    %v4412 = vld [vmem:[#allocation2 + $0xa1] sm:$0xff]
    %v4413 = vld [vmem:[#allocation2 + $0xa9] sm:$0xff]
    %v4414 = vld [vmem:[#allocation2 + $0xb1] sm:$0xff]
    %v4415 = vld [vmem:[#allocation2 + $0xb9] sm:$0xff]
    %v4416 = vld [vmem:[#allocation2 + $0xc1] sm:$0xff]
    %v4417 = vld [vmem:[#allocation2 + $0xc9] sm:$0xff]
    %v4418 = vld [vmem:[#allocation2 + $0xd1] sm:$0xff]
    %s4419 = scalar_lea.vmem [#allocation19], 320
    %v4420 = vld [vmem:[%s4419] sm:$0xff]
    %v4421 = vld [vmem:[%s4419 + $0x8] sm:$0xff]
    %v4422 = vld [vmem:[%s4419 + $0x10] sm:$0xff]
    %v4423 = vld [vmem:[%s4419 + $0x18] sm:$0xff]
    %v4424 = vld [vmem:[%s4419 + $0x20] sm:$0xff]
    %v4425 = vld [vmem:[%s4419 + $0x28] sm:$0xff]
    %v4426 = vld [vmem:[%s4419 + $0x30] sm:$0xff]
    %v4427 = vld [vmem:[%s4419 + $0x38] sm:$0xff]
    %v4429 = vsel %vm659, %v4394, 0
    %v4432 = vsel %vm659, %v4395, 0
    %v4435 = vsel %vm659, %v4396, 0
    %v4438 = vsel %vm659, %v4397, 0
    %v4441 = vsel %vm659, %v4398, 0
    %v4444 = vsel %vm659, %v4399, 0
    %v4447 = vsel %vm659, %v4400, 0
    %v4450 = vsel %vm659, %v4401, 0
    %v4453 = vsel %vm659, %v4402, 0
    %v4456 = vsel %vm659, %v4403, 0
    %v4459 = vsel %vm659, %v4404, 0
    %v4462 = vsel %vm659, %v4405, 0
    %v4465 = vsel %vm659, %v4406, 0
    %v4468 = vsel %vm659, %v4407, 0
    %v4471 = vsel %vm659, %v4408, 0
    %v4474 = vsel %vm659, %v4409, 0
    %v4477 = vsel %vm659, %v4410, 0
    %v4480 = vsel %vm659, %v4411, 0
    %v4483 = vsel %vm659, %v4412, 0
    %v4486 = vsel %vm659, %v4413, 0
    %v4489 = vsel %vm659, %v4414, 0
    %v4492 = vsel %vm659, %v4415, 0
    %v4495 = vsel %vm659, %v4416, 0
    %v4498 = vsel %vm659, %v4417, 0
    %v4501 = vsel %vm659, %v4418, 0
    %4503 = vmatprep.subr.mxu0 0.0
    %4504 = vmatpush1.msra.mxu0 %v4420
    %4505 = vmatprep.subr.mxu0 0.0
    %4506 = vmatpush1.msra.mxu0 %v4421
    %4507 = vmatprep.subr.mxu0 0.0
    %4508 = vmatpush1.msra.mxu0 %v4422
    %4509 = vmatprep.subr.mxu0 0.0
    %4510 = vmatpush1.msra.mxu0 %v4423
    %4511 = vmatprep.subr.mxu0 0.0
    %4512 = vmatpush1.msra.mxu0 %v4424
    %4513 = vmatprep.subr.mxu0 0.0
    %4514 = vmatpush1.msra.mxu0 %v4425
    %4515 = vmatprep.subr.mxu0 0.0
    %4516 = vmatpush1.msra.mxu0 %v4426
    %4517 = vmatprep.subr.mxu0 0.0
    %4518 = vmatpush1.msra.mxu0 %v4427
    %4519 = vmatprep.subr.mxu0 0.0
    %4520 = vmatpush1.msra.mxu0 0.0
    %4521 = vmatprep.subr.mxu0 0.0
    %4522 = vmatpush1.msra.mxu0 0.0
    %4523 = vmatprep.subr.mxu0 0.0
    %4524 = vmatpush1.msra.mxu0 0.0
    %4525 = vmatprep.subr.mxu0 0.0
    %4526 = vmatpush1.msra.mxu0 0.0
    %4527 = vmatprep.subr.mxu0 0.0
    %4528 = vmatpush1.msra.mxu0 0.0
    %4529 = vmatprep.subr.mxu0 0.0
    %4530 = vmatpush1.msra.mxu0 0.0
    %4531 = vmatprep.subr.mxu0 0.0
    %4532 = vmatpush1.msra.mxu0 0.0
    %4533 = vmatprep.subr.mxu0 0.0
    %4534 = vmatpush1.msra.mxu0 0.0
    %4535 = vmatprep.subr.mxu0 0.0
    %4536 = vmatpush1.msra.mxu0 0.0
    %4537 = vmatprep.subr.mxu0 0.0
    %4538 = vmatpush1.msra.mxu0 0.0
    %4539 = vmatprep.subr.mxu0 0.0
    %4540 = vmatpush1.msra.mxu0 0.0
    %4541 = vmatprep.subr.mxu0 0.0
    %4542 = vmatpush1.msra.mxu0 0.0
    %4543 = vmatprep.subr.mxu0 0.0
    %4544 = vmatpush1.msra.mxu0 0.0
    %4545 = vmatprep.subr.mxu0 0.0
    %4546 = vmatpush1.msra.mxu0 0.0
    %4547 = vmatprep.subr.mxu0 0.0
    %4548 = vmatpush1.msra.mxu0 0.0
    %4549 = vmatprep.subr.mxu0 0.0
    %4550 = vmatpush1.msra.mxu0 0.0
    %4551 = vmatprep.subr.mxu0 0.0
    %4552 = vmatpush1.msra.mxu0 0.0
    %4553 = vmatprep.subr.mxu0 0.0
    %4554 = vmatpush1.msra.mxu0 0.0
    %4555 = vmatprep.subr.mxu0 0.0
    %4556 = vmatpush1.msra.mxu0 0.0
    %4557 = vmatprep.subr.mxu0 0.0
    %4558 = vmatpush1.msra.mxu0 0.0
    %4559 = vmatprep.subr.mxu0 0.0
    %4560 = vmatpush1.msra.mxu0 0.0
    %4561 = vmatprep.subr.mxu0 0.0
    %4562 = vmatpush1.msra.mxu0 0.0
    %4563 = vmatprep.subr.mxu0 0.0
    %4564 = vmatpush1.msra.mxu0 0.0
    %4565 = vmatprep.subr.mxu0 0.0
    %4566 = vmatpush1.msra.mxu0 0.0
    %4567 = vmatprep.mubr.f32.mxu0 0.0
    %4568 = vmatmul.mubr.f32.gmra.mrb[0].mxu0 %v4429
    %v4569 = vpop.f32.mrb[0].mxu0
    %v4570 = vadd.f32 0.0, %v4569
    %v4571 = vpop.f32.mrb[0].mxu0
    %4572 = vmatprep.mubr.f32.mxu0 0.0
    %4573 = vmatmul.mubr.f32.gmra.mrb[0].mxu0 %v4432
    %v4574 = vpop.f32.mrb[0].mxu0
    %v4575 = vadd.f32 0.0, %v4574
    %v4576 = vpop.f32.mrb[0].mxu0
    %4577 = vmatprep.mubr.f32.mxu0 0.0
    %4578 = vmatmul.mubr.f32.gmra.mrb[0].mxu0 %v4435
    %v4579 = vpop.f32.mrb[0].mxu0
    %v4580 = vadd.f32 0.0, %v4579
    %v4581 = vpop.f32.mrb[0].mxu0
    %4582 = vmatprep.mubr.f32.mxu0 0.0
    %4583 = vmatmul.mubr.f32.gmra.mrb[0].mxu0 %v4438
    %v4584 = vpop.f32.mrb[0].mxu0
    %v4585 = vadd.f32 0.0, %v4584
    %v4586 = vpop.f32.mrb[0].mxu0
    %4587 = vmatprep.mubr.f32.mxu0 0.0
    %4588 = vmatmul.mubr.f32.gmra.mrb[0].mxu0 %v4441
    %v4589 = vpop.f32.mrb[0].mxu0
    %v4590 = vadd.f32 0.0, %v4589
    %v4591 = vpop.f32.mrb[0].mxu0
    %4592 = vmatprep.mubr.f32.mxu0 0.0
    %4593 = vmatmul.mubr.f32.gmra.mrb[0].mxu0 %v4444
    %v4594 = vpop.f32.mrb[0].mxu0
    %v4595 = vadd.f32 0.0, %v4594
    %v4596 = vpop.f32.mrb[0].mxu0
    %4597 = vmatprep.mubr.f32.mxu0 0.0
    %4598 = vmatmul.mubr.f32.gmra.mrb[0].mxu0 %v4447
    %v4599 = vpop.f32.mrb[0].mxu0
    %v4600 = vadd.f32 0.0, %v4599
    %v4601 = vpop.f32.mrb[0].mxu0
    %4602 = vmatprep.mubr.f32.mxu0 0.0
    %4603 = vmatmul.mubr.f32.gmra.mrb[0].mxu0 %v4450
    %v4604 = vpop.f32.mrb[0].mxu0
    %v4605 = vadd.f32 0.0, %v4604
    %v4606 = vpop.f32.mrb[0].mxu0
    %4607 = vmatprep.mubr.f32.mxu0 0.0
    %4608 = vmatmul.mubr.f32.gmra.mrb[0].mxu0 %v4453
    %v4609 = vpop.f32.mrb[0].mxu0
    %v4610 = vadd.f32 0.0, %v4609
    %v4611 = vpop.f32.mrb[0].mxu0
    %4612 = vmatprep.mubr.f32.mxu0 0.0
    %4613 = vmatmul.mubr.f32.gmra.mrb[0].mxu0 %v4456
    %v4614 = vpop.f32.mrb[0].mxu0
    %v4615 = vadd.f32 0.0, %v4614
    %v4616 = vpop.f32.mrb[0].mxu0
    %4617 = vmatprep.mubr.f32.mxu0 0.0
    %4618 = vmatmul.mubr.f32.gmra.mrb[0].mxu0 %v4459
    %v4619 = vpop.f32.mrb[0].mxu0
    %v4620 = vadd.f32 0.0, %v4619
    %v4621 = vpop.f32.mrb[0].mxu0
    %4622 = vmatprep.mubr.f32.mxu0 0.0
    %4623 = vmatmul.mubr.f32.gmra.mrb[0].mxu0 %v4462
    %v4624 = vpop.f32.mrb[0].mxu0
    %v4625 = vadd.f32 0.0, %v4624
    %v4626 = vpop.f32.mrb[0].mxu0
    %4627 = vmatprep.mubr.f32.mxu0 0.0
    %4628 = vmatmul.mubr.f32.gmra.mrb[0].mxu0 %v4465
    %v4629 = vpop.f32.mrb[0].mxu0
    %v4630 = vadd.f32 0.0, %v4629
    %v4631 = vpop.f32.mrb[0].mxu0
    %4632 = vmatprep.mubr.f32.mxu0 0.0
    %4633 = vmatmul.mubr.f32.gmra.mrb[0].mxu0 %v4468
    %v4634 = vpop.f32.mrb[0].mxu0
    %v4635 = vadd.f32 0.0, %v4634
    %v4636 = vpop.f32.mrb[0].mxu0
    %4637 = vmatprep.mubr.f32.mxu0 0.0
    %4638 = vmatmul.mubr.f32.gmra.mrb[0].mxu0 %v4471
    %v4639 = vpop.f32.mrb[0].mxu0
    %v4640 = vadd.f32 0.0, %v4639
    %v4641 = vpop.f32.mrb[0].mxu0
    %4642 = vmatprep.mubr.f32.mxu0 0.0
    %4643 = vmatmul.mubr.f32.gmra.mrb[0].mxu0 %v4474
    %v4644 = vpop.f32.mrb[0].mxu0
    %v4645 = vadd.f32 0.0, %v4644
    %v4646 = vpop.f32.mrb[0].mxu0
    %4647 = vmatprep.mubr.f32.mxu0 0.0
    %4648 = vmatmul.mubr.f32.gmra.mrb[0].mxu0 %v4477
    %v4649 = vpop.f32.mrb[0].mxu0
    %v4650 = vadd.f32 0.0, %v4649
    %v4651 = vpop.f32.mrb[0].mxu0
    %4652 = vmatprep.mubr.f32.mxu0 0.0
    %4653 = vmatmul.mubr.f32.gmra.mrb[0].mxu0 %v4480
    %v4654 = vpop.f32.mrb[0].mxu0
    %v4655 = vadd.f32 0.0, %v4654
    %v4656 = vpop.f32.mrb[0].mxu0
    %4657 = vmatprep.mubr.f32.mxu0 0.0
    %4658 = vmatmul.mubr.f32.gmra.mrb[0].mxu0 %v4483
    %v4659 = vpop.f32.mrb[0].mxu0
    %v4660 = vadd.f32 0.0, %v4659
    %v4661 = vpop.f32.mrb[0].mxu0
    %4662 = vmatprep.mubr.f32.mxu0 0.0
    %4663 = vmatmul.mubr.f32.gmra.mrb[0].mxu0 %v4486
    %v4664 = vpop.f32.mrb[0].mxu0
    %v4665 = vadd.f32 0.0, %v4664
    %v4666 = vpop.f32.mrb[0].mxu0
    %4667 = vmatprep.mubr.f32.mxu0 0.0
    %4668 = vmatmul.mubr.f32.gmra.mrb[0].mxu0 %v4489
    %v4669 = vpop.f32.mrb[0].mxu0
    %v4670 = vadd.f32 0.0, %v4669
    %v4671 = vpop.f32.mrb[0].mxu0
    %4672 = vmatprep.mubr.f32.mxu0 0.0
    %4673 = vmatmul.mubr.f32.gmra.mrb[0].mxu0 %v4492
    %v4674 = vpop.f32.mrb[0].mxu0
    %v4675 = vadd.f32 0.0, %v4674
    %v4676 = vpop.f32.mrb[0].mxu0
    %4677 = vmatprep.mubr.f32.mxu0 0.0
    %4678 = vmatmul.mubr.f32.gmra.mrb[0].mxu0 %v4495
    %v4679 = vpop.f32.mrb[0].mxu0
    %v4680 = vadd.f32 0.0, %v4679
    %v4681 = vpop.f32.mrb[0].mxu0
    %4682 = vmatprep.mubr.f32.mxu0 0.0
    %4683 = vmatmul.mubr.f32.gmra.mrb[0].mxu0 %v4498
    %v4684 = vpop.f32.mrb[0].mxu0
    %v4685 = vadd.f32 0.0, %v4684
    %v4686 = vpop.f32.mrb[0].mxu0
    %4687 = vmatprep.mubr.f32.mxu0 0.0
    %4688 = vmatmul.mubr.f32.gmra.mrb[0].mxu0 %v4501
    %v4689 = vpop.f32.mrb[0].mxu0
    %v4690 = vadd.f32 0.0, %v4689
    %v4691 = vpop.f32.mrb[0].mxu0
    %4692 = vdwg.mxu0
    %v4693 = vadd.f32 %v4369, %v4570
    %v4694 = vadd.f32 %v4370, %v4575
    %v4695 = vadd.f32 %v4371, %v4580
    %v4696 = vadd.f32 %v4372, %v4585
    %v4697 = vadd.f32 %v4373, %v4590
    %v4698 = vadd.f32 %v4374, %v4595
    %v4699 = vadd.f32 %v4375, %v4600
    %v4700 = vadd.f32 %v4376, %v4605
    %v4701 = vadd.f32 %v4377, %v4610
    %v4702 = vadd.f32 %v4378, %v4615
    %v4703 = vadd.f32 %v4379, %v4620
    %v4704 = vadd.f32 %v4380, %v4625
    %v4705 = vadd.f32 %v4381, %v4630
    %v4706 = vadd.f32 %v4382, %v4635
    %v4707 = vadd.f32 %v4383, %v4640
    %v4708 = vadd.f32 %v4384, %v4645
    %v4709 = vadd.f32 %v4385, %v4650
    %v4710 = vadd.f32 %v4386, %v4655
    %v4711 = vadd.f32 %v4387, %v4660
    %v4712 = vadd.f32 %v4388, %v4665
    %v4713 = vadd.f32 %v4389, %v4670
    %v4714 = vadd.f32 %v4390, %v4675
    %v4715 = vadd.f32 %v4391, %v4680
    %v4716 = vadd.f32 %v4392, %v4685
    %v4717 = vadd.f32 %v4393, %v4690
    %v4718 = vld [vmem:[#allocation2 + $0x19] sm:$0xff]
    %v4719 = vld [vmem:[#allocation2 + $0x21] sm:$0xff]
    %v4720 = vld [vmem:[#allocation2 + $0x29] sm:$0xff]
    %v4721 = vld [vmem:[#allocation2 + $0x31] sm:$0xff]
    %v4722 = vld [vmem:[#allocation2 + $0x39] sm:$0xff]
    %v4723 = vld [vmem:[#allocation2 + $0x41] sm:$0xff]
    %v4724 = vld [vmem:[#allocation2 + $0x49] sm:$0xff]
    %v4725 = vld [vmem:[#allocation2 + $0x51] sm:$0xff]
    %v4726 = vld [vmem:[#allocation2 + $0x59] sm:$0xff]
    %v4727 = vld [vmem:[#allocation2 + $0x61] sm:$0xff]
    %v4728 = vld [vmem:[#allocation2 + $0x69] sm:$0xff]
    %v4729 = vld [vmem:[#allocation2 + $0x71] sm:$0xff]
    %v4730 = vld [vmem:[#allocation2 + $0x79] sm:$0xff]
    %v4731 = vld [vmem:[#allocation2 + $0x81] sm:$0xff]
    %v4732 = vld [vmem:[#allocation2 + $0x89] sm:$0xff]
    %v4733 = vld [vmem:[#allocation2 + $0x91] sm:$0xff]
    %v4734 = vld [vmem:[#allocation2 + $0x99] sm:$0xff]
    %v4735 = vld [vmem:[#allocation2 + $0xa1] sm:$0xff]
    %v4736 = vld [vmem:[#allocation2 + $0xa9] sm:$0xff]
    %v4737 = vld [vmem:[#allocation2 + $0xb1] sm:$0xff]
    %v4738 = vld [vmem:[#allocation2 + $0xb9] sm:$0xff]
    %v4739 = vld [vmem:[#allocation2 + $0xc1] sm:$0xff]
    %v4740 = vld [vmem:[#allocation2 + $0xc9] sm:$0xff]
    %v4741 = vld [vmem:[#allocation2 + $0xd1] sm:$0xff]
    %v4742 = vld [vmem:[#allocation2 + $0xd9] sm:$0xff]
    %s4743 = scalar_lea.vmem [#allocation19], 384
    %v4744 = vld [vmem:[%s4743] sm:$0xff]
    %v4745 = vld [vmem:[%s4743 + $0x8] sm:$0xff]
    %v4746 = vld [vmem:[%s4743 + $0x10] sm:$0xff]
    %v4747 = vld [vmem:[%s4743 + $0x18] sm:$0xff]
    %v4748 = vld [vmem:[%s4743 + $0x20] sm:$0xff]
    %v4749 = vld [vmem:[%s4743 + $0x28] sm:$0xff]
    %v4750 = vld [vmem:[%s4743 + $0x30] sm:$0xff]
    %v4751 = vld [vmem:[%s4743 + $0x38] sm:$0xff]
    %v4753 = vsel %vm659, %v4718, 0
    %v4756 = vsel %vm659, %v4719, 0
    %v4759 = vsel %vm659, %v4720, 0
    %v4762 = vsel %vm659, %v4721, 0
    %v4765 = vsel %vm659, %v4722, 0
    %v4768 = vsel %vm659, %v4723, 0
    %v4771 = vsel %vm659, %v4724, 0
    %v4774 = vsel %vm659, %v4725, 0
    %v4777 = vsel %vm659, %v4726, 0
    %v4780 = vsel %vm659, %v4727, 0
    %v4783 = vsel %vm659, %v4728, 0
    %v4786 = vsel %vm659, %v4729, 0
    %v4789 = vsel %vm659, %v4730, 0
    %v4792 = vsel %vm659, %v4731, 0
    %v4795 = vsel %vm659, %v4732, 0
    %v4798 = vsel %vm659, %v4733, 0
    %v4801 = vsel %vm659, %v4734, 0
    %v4804 = vsel %vm659, %v4735, 0
    %v4807 = vsel %vm659, %v4736, 0
    %v4810 = vsel %vm659, %v4737, 0
    %v4813 = vsel %vm659, %v4738, 0
    %v4816 = vsel %vm659, %v4739, 0
    %v4819 = vsel %vm659, %v4740, 0
    %v4822 = vsel %vm659, %v4741, 0
    %v4825 = vsel %vm659, %v4742, 0
    %4827 = vmatprep.subr.mxu0 0.0
    %4828 = vmatpush1.msra.mxu0 %v4744
    %4829 = vmatprep.subr.mxu0 0.0
    %4830 = vmatpush1.msra.mxu0 %v4745
    %4831 = vmatprep.subr.mxu0 0.0
    %4832 = vmatpush1.msra.mxu0 %v4746
    %4833 = vmatprep.subr.mxu0 0.0
    %4834 = vmatpush1.msra.mxu0 %v4747
    %4835 = vmatprep.subr.mxu0 0.0
    %4836 = vmatpush1.msra.mxu0 %v4748
    %4837 = vmatprep.subr.mxu0 0.0
    %4838 = vmatpush1.msra.mxu0 %v4749
    %4839 = vmatprep.subr.mxu0 0.0
    %4840 = vmatpush1.msra.mxu0 %v4750
    %4841 = vmatprep.subr.mxu0 0.0
    %4842 = vmatpush1.msra.mxu0 %v4751
    %4843 = vmatprep.subr.mxu0 0.0
    %4844 = vmatpush1.msra.mxu0 0.0
    %4845 = vmatprep.subr.mxu0 0.0
    %4846 = vmatpush1.msra.mxu0 0.0
    %4847 = vmatprep.subr.mxu0 0.0
    %4848 = vmatpush1.msra.mxu0 0.0
    %4849 = vmatprep.subr.mxu0 0.0
    %4850 = vmatpush1.msra.mxu0 0.0
    %4851 = vmatprep.subr.mxu0 0.0
    %4852 = vmatpush1.msra.mxu0 0.0
    %4853 = vmatprep.subr.mxu0 0.0
    %4854 = vmatpush1.msra.mxu0 0.0
    %4855 = vmatprep.subr.mxu0 0.0
    %4856 = vmatpush1.msra.mxu0 0.0
    %4857 = vmatprep.subr.mxu0 0.0
    %4858 = vmatpush1.msra.mxu0 0.0
    %4859 = vmatprep.subr.mxu0 0.0
    %4860 = vmatpush1.msra.mxu0 0.0
    %4861 = vmatprep.subr.mxu0 0.0
    %4862 = vmatpush1.msra.mxu0 0.0
    %4863 = vmatprep.subr.mxu0 0.0
    %4864 = vmatpush1.msra.mxu0 0.0
    %4865 = vmatprep.subr.mxu0 0.0
    %4866 = vmatpush1.msra.mxu0 0.0
    %4867 = vmatprep.subr.mxu0 0.0
    %4868 = vmatpush1.msra.mxu0 0.0
    %4869 = vmatprep.subr.mxu0 0.0
    %4870 = vmatpush1.msra.mxu0 0.0
    %4871 = vmatprep.subr.mxu0 0.0
    %4872 = vmatpush1.msra.mxu0 0.0
    %4873 = vmatprep.subr.mxu0 0.0
    %4874 = vmatpush1.msra.mxu0 0.0
    %4875 = vmatprep.subr.mxu0 0.0
    %4876 = vmatpush1.msra.mxu0 0.0
    %4877 = vmatprep.subr.mxu0 0.0
    %4878 = vmatpush1.msra.mxu0 0.0
    %4879 = vmatprep.subr.mxu0 0.0
    %4880 = vmatpush1.msra.mxu0 0.0
    %4881 = vmatprep.subr.mxu0 0.0
    %4882 = vmatpush1.msra.mxu0 0.0
    %4883 = vmatprep.subr.mxu0 0.0
    %4884 = vmatpush1.msra.mxu0 0.0
    %4885 = vmatprep.subr.mxu0 0.0
    %4886 = vmatpush1.msra.mxu0 0.0
    %4887 = vmatprep.subr.mxu0 0.0
    %4888 = vmatpush1.msra.mxu0 0.0
    %4889 = vmatprep.subr.mxu0 0.0
    %4890 = vmatpush1.msra.mxu0 0.0
    %4891 = vmatprep.mubr.f32.mxu0 0.0
    %4892 = vmatmul.mubr.f32.gmra.mrb[0].mxu0 %v4753
    %v4893 = vpop.f32.mrb[0].mxu0
    %v4894 = vadd.f32 0.0, %v4893
    %v4895 = vpop.f32.mrb[0].mxu0
    %4896 = vmatprep.mubr.f32.mxu0 0.0
    %4897 = vmatmul.mubr.f32.gmra.mrb[0].mxu0 %v4756
    %v4898 = vpop.f32.mrb[0].mxu0
    %v4899 = vadd.f32 0.0, %v4898
    %v4900 = vpop.f32.mrb[0].mxu0
    %4901 = vmatprep.mubr.f32.mxu0 0.0
    %4902 = vmatmul.mubr.f32.gmra.mrb[0].mxu0 %v4759
    %v4903 = vpop.f32.mrb[0].mxu0
    %v4904 = vadd.f32 0.0, %v4903
    %v4905 = vpop.f32.mrb[0].mxu0
    %4906 = vmatprep.mubr.f32.mxu0 0.0
    %4907 = vmatmul.mubr.f32.gmra.mrb[0].mxu0 %v4762
    %v4908 = vpop.f32.mrb[0].mxu0
    %v4909 = vadd.f32 0.0, %v4908
    %v4910 = vpop.f32.mrb[0].mxu0
    %4911 = vmatprep.mubr.f32.mxu0 0.0
    %4912 = vmatmul.mubr.f32.gmra.mrb[0].mxu0 %v4765
    %v4913 = vpop.f32.mrb[0].mxu0
    %v4914 = vadd.f32 0.0, %v4913
    %v4915 = vpop.f32.mrb[0].mxu0
    %4916 = vmatprep.mubr.f32.mxu0 0.0
    %4917 = vmatmul.mubr.f32.gmra.mrb[0].mxu0 %v4768
    %v4918 = vpop.f32.mrb[0].mxu0
    %v4919 = vadd.f32 0.0, %v4918
    %v4920 = vpop.f32.mrb[0].mxu0
    %4921 = vmatprep.mubr.f32.mxu0 0.0
    %4922 = vmatmul.mubr.f32.gmra.mrb[0].mxu0 %v4771
    %v4923 = vpop.f32.mrb[0].mxu0
    %v4924 = vadd.f32 0.0, %v4923
    %v4925 = vpop.f32.mrb[0].mxu0
    %4926 = vmatprep.mubr.f32.mxu0 0.0
    %4927 = vmatmul.mubr.f32.gmra.mrb[0].mxu0 %v4774
    %v4928 = vpop.f32.mrb[0].mxu0
    %v4929 = vadd.f32 0.0, %v4928
    %v4930 = vpop.f32.mrb[0].mxu0
    %4931 = vmatprep.mubr.f32.mxu0 0.0
    %4932 = vmatmul.mubr.f32.gmra.mrb[0].mxu0 %v4777
    %v4933 = vpop.f32.mrb[0].mxu0
    %v4934 = vadd.f32 0.0, %v4933
    %v4935 = vpop.f32.mrb[0].mxu0
    %4936 = vmatprep.mubr.f32.mxu0 0.0
    %4937 = vmatmul.mubr.f32.gmra.mrb[0].mxu0 %v4780
    %v4938 = vpop.f32.mrb[0].mxu0
    %v4939 = vadd.f32 0.0, %v4938
    %v4940 = vpop.f32.mrb[0].mxu0
    %4941 = vmatprep.mubr.f32.mxu0 0.0
    %4942 = vmatmul.mubr.f32.gmra.mrb[0].mxu0 %v4783
    %v4943 = vpop.f32.mrb[0].mxu0
    %v4944 = vadd.f32 0.0, %v4943
    %v4945 = vpop.f32.mrb[0].mxu0
    %4946 = vmatprep.mubr.f32.mxu0 0.0
    %4947 = vmatmul.mubr.f32.gmra.mrb[0].mxu0 %v4786
    %v4948 = vpop.f32.mrb[0].mxu0
    %v4949 = vadd.f32 0.0, %v4948
    %v4950 = vpop.f32.mrb[0].mxu0
    %4951 = vmatprep.mubr.f32.mxu0 0.0
    %4952 = vmatmul.mubr.f32.gmra.mrb[0].mxu0 %v4789
    %v4953 = vpop.f32.mrb[0].mxu0
    %v4954 = vadd.f32 0.0, %v4953
    %v4955 = vpop.f32.mrb[0].mxu0
    %4956 = vmatprep.mubr.f32.mxu0 0.0
    %4957 = vmatmul.mubr.f32.gmra.mrb[0].mxu0 %v4792
    %v4958 = vpop.f32.mrb[0].mxu0
    %v4959 = vadd.f32 0.0, %v4958
    %v4960 = vpop.f32.mrb[0].mxu0
    %4961 = vmatprep.mubr.f32.mxu0 0.0
    %4962 = vmatmul.mubr.f32.gmra.mrb[0].mxu0 %v4795
    %v4963 = vpop.f32.mrb[0].mxu0
    %v4964 = vadd.f32 0.0, %v4963
    %v4965 = vpop.f32.mrb[0].mxu0
    %4966 = vmatprep.mubr.f32.mxu0 0.0
    %4967 = vmatmul.mubr.f32.gmra.mrb[0].mxu0 %v4798
    %v4968 = vpop.f32.mrb[0].mxu0
    %v4969 = vadd.f32 0.0, %v4968
    %v4970 = vpop.f32.mrb[0].mxu0
    %4971 = vmatprep.mubr.f32.mxu0 0.0
    %4972 = vmatmul.mubr.f32.gmra.mrb[0].mxu0 %v4801
    %v4973 = vpop.f32.mrb[0].mxu0
    %v4974 = vadd.f32 0.0, %v4973
    %v4975 = vpop.f32.mrb[0].mxu0
    %4976 = vmatprep.mubr.f32.mxu0 0.0
    %4977 = vmatmul.mubr.f32.gmra.mrb[0].mxu0 %v4804
    %v4978 = vpop.f32.mrb[0].mxu0
    %v4979 = vadd.f32 0.0, %v4978
    %v4980 = vpop.f32.mrb[0].mxu0
    %4981 = vmatprep.mubr.f32.mxu0 0.0
    %4982 = vmatmul.mubr.f32.gmra.mrb[0].mxu0 %v4807
    %v4983 = vpop.f32.mrb[0].mxu0
    %v4984 = vadd.f32 0.0, %v4983
    %v4985 = vpop.f32.mrb[0].mxu0
    %4986 = vmatprep.mubr.f32.mxu0 0.0
    %4987 = vmatmul.mubr.f32.gmra.mrb[0].mxu0 %v4810
    %v4988 = vpop.f32.mrb[0].mxu0
    %v4989 = vadd.f32 0.0, %v4988
    %v4990 = vpop.f32.mrb[0].mxu0
    %4991 = vmatprep.mubr.f32.mxu0 0.0
    %4992 = vmatmul.mubr.f32.gmra.mrb[0].mxu0 %v4813
    %v4993 = vpop.f32.mrb[0].mxu0
    %v4994 = vadd.f32 0.0, %v4993
    %v4995 = vpop.f32.mrb[0].mxu0
    %4996 = vmatprep.mubr.f32.mxu0 0.0
    %4997 = vmatmul.mubr.f32.gmra.mrb[0].mxu0 %v4816
    %v4998 = vpop.f32.mrb[0].mxu0
    %v4999 = vadd.f32 0.0, %v4998
    %v5000 = vpop.f32.mrb[0].mxu0
    %5001 = vmatprep.mubr.f32.mxu0 0.0
    %5002 = vmatmul.mubr.f32.gmra.mrb[0].mxu0 %v4819
    %v5003 = vpop.f32.mrb[0].mxu0
    %v5004 = vadd.f32 0.0, %v5003
    %v5005 = vpop.f32.mrb[0].mxu0
    %5006 = vmatprep.mubr.f32.mxu0 0.0
    %5007 = vmatmul.mubr.f32.gmra.mrb[0].mxu0 %v4822
    %v5008 = vpop.f32.mrb[0].mxu0
    %v5009 = vadd.f32 0.0, %v5008
    %v5010 = vpop.f32.mrb[0].mxu0
    %5011 = vmatprep.mubr.f32.mxu0 0.0
    %5012 = vmatmul.mubr.f32.gmra.mrb[0].mxu0 %v4825
    %v5013 = vpop.f32.mrb[0].mxu0
    %v5014 = vadd.f32 0.0, %v5013
    %v5015 = vpop.f32.mrb[0].mxu0
    %5016 = vdwg.mxu0
    %v5017 = vadd.f32 %v4693, %v4894
    %v5018 = vadd.f32 %v4694, %v4899
    %v5019 = vadd.f32 %v4695, %v4904
    %v5020 = vadd.f32 %v4696, %v4909
    %v5021 = vadd.f32 %v4697, %v4914
    %v5022 = vadd.f32 %v4698, %v4919
    %v5023 = vadd.f32 %v4699, %v4924
    %v5024 = vadd.f32 %v4700, %v4929
    %v5025 = vadd.f32 %v4701, %v4934
    %v5026 = vadd.f32 %v4702, %v4939
    %v5027 = vadd.f32 %v4703, %v4944
    %v5028 = vadd.f32 %v4704, %v4949
    %v5029 = vadd.f32 %v4705, %v4954
    %v5030 = vadd.f32 %v4706, %v4959
    %v5031 = vadd.f32 %v4707, %v4964
    %v5032 = vadd.f32 %v4708, %v4969
    %v5033 = vadd.f32 %v4709, %v4974
    %v5034 = vadd.f32 %v4710, %v4979
    %v5035 = vadd.f32 %v4711, %v4984
    %v5036 = vadd.f32 %v4712, %v4989
    %v5037 = vadd.f32 %v4713, %v4994
    %v5038 = vadd.f32 %v4714, %v4999
    %v5039 = vadd.f32 %v4715, %v5004
    %v5040 = vadd.f32 %v4716, %v5009
    %v5041 = vadd.f32 %v4717, %v5014
    %v5042 = vld [vmem:[#allocation2 + $0x1a] sm:$0xff]
    %v5043 = vld [vmem:[#allocation2 + $0x22] sm:$0xff]
    %v5044 = vld [vmem:[#allocation2 + $0x2a] sm:$0xff]
    %v5045 = vld [vmem:[#allocation2 + $0x32] sm:$0xff]
    %v5046 = vld [vmem:[#allocation2 + $0x3a] sm:$0xff]
    %v5047 = vld [vmem:[#allocation2 + $0x42] sm:$0xff]
    %v5048 = vld [vmem:[#allocation2 + $0x4a] sm:$0xff]
    %v5049 = vld [vmem:[#allocation2 + $0x52] sm:$0xff]
    %v5050 = vld [vmem:[#allocation2 + $0x5a] sm:$0xff]
    %v5051 = vld [vmem:[#allocation2 + $0x62] sm:$0xff]
    %v5052 = vld [vmem:[#allocation2 + $0x6a] sm:$0xff]
    %v5053 = vld [vmem:[#allocation2 + $0x72] sm:$0xff]
    %v5054 = vld [vmem:[#allocation2 + $0x7a] sm:$0xff]
    %v5055 = vld [vmem:[#allocation2 + $0x82] sm:$0xff]
    %v5056 = vld [vmem:[#allocation2 + $0x8a] sm:$0xff]
    %v5057 = vld [vmem:[#allocation2 + $0x92] sm:$0xff]
    %v5058 = vld [vmem:[#allocation2 + $0x9a] sm:$0xff]
    %v5059 = vld [vmem:[#allocation2 + $0xa2] sm:$0xff]
    %v5060 = vld [vmem:[#allocation2 + $0xaa] sm:$0xff]
    %v5061 = vld [vmem:[#allocation2 + $0xb2] sm:$0xff]
    %v5062 = vld [vmem:[#allocation2 + $0xba] sm:$0xff]
    %v5063 = vld [vmem:[#allocation2 + $0xc2] sm:$0xff]
    %v5064 = vld [vmem:[#allocation2 + $0xca] sm:$0xff]
    %v5065 = vld [vmem:[#allocation2 + $0xd2] sm:$0xff]
    %v5066 = vld [vmem:[#allocation2 + $0xda] sm:$0xff]
    %s5067 = scalar_lea.vmem [#allocation19], 448
    %v5068 = vld [vmem:[%s5067] sm:$0xff]
    %v5069 = vld [vmem:[%s5067 + $0x8] sm:$0xff]
    %v5070 = vld [vmem:[%s5067 + $0x10] sm:$0xff]
    %v5071 = vld [vmem:[%s5067 + $0x18] sm:$0xff]
    %v5072 = vld [vmem:[%s5067 + $0x20] sm:$0xff]
    %v5073 = vld [vmem:[%s5067 + $0x28] sm:$0xff]
    %v5074 = vld [vmem:[%s5067 + $0x30] sm:$0xff]
    %v5075 = vld [vmem:[%s5067 + $0x38] sm:$0xff]
    %v5077 = vsel %vm659, %v5042, 0
    %v5080 = vsel %vm659, %v5043, 0
    %v5083 = vsel %vm659, %v5044, 0
    %v5086 = vsel %vm659, %v5045, 0
    %v5089 = vsel %vm659, %v5046, 0
    %v5092 = vsel %vm659, %v5047, 0
    %v5095 = vsel %vm659, %v5048, 0
    %v5098 = vsel %vm659, %v5049, 0
    %v5101 = vsel %vm659, %v5050, 0
    %v5104 = vsel %vm659, %v5051, 0
    %v5107 = vsel %vm659, %v5052, 0
    %v5110 = vsel %vm659, %v5053, 0
    %v5113 = vsel %vm659, %v5054, 0
    %v5116 = vsel %vm659, %v5055, 0
    %v5119 = vsel %vm659, %v5056, 0
    %v5122 = vsel %vm659, %v5057, 0
    %v5125 = vsel %vm659, %v5058, 0
    %v5128 = vsel %vm659, %v5059, 0
    %v5131 = vsel %vm659, %v5060, 0
    %v5134 = vsel %vm659, %v5061, 0
    %v5137 = vsel %vm659, %v5062, 0
    %v5140 = vsel %vm659, %v5063, 0
    %v5143 = vsel %vm659, %v5064, 0
    %v5146 = vsel %vm659, %v5065, 0
    %v5149 = vsel %vm659, %v5066, 0
    %5151 = vmatprep.subr.mxu0 0.0
    %5152 = vmatpush1.msra.mxu0 %v5068
    %5153 = vmatprep.subr.mxu0 0.0
    %5154 = vmatpush1.msra.mxu0 %v5069
    %5155 = vmatprep.subr.mxu0 0.0
    %5156 = vmatpush1.msra.mxu0 %v5070
    %5157 = vmatprep.subr.mxu0 0.0
    %5158 = vmatpush1.msra.mxu0 %v5071
    %5159 = vmatprep.subr.mxu0 0.0
    %5160 = vmatpush1.msra.mxu0 %v5072
    %5161 = vmatprep.subr.mxu0 0.0
    %5162 = vmatpush1.msra.mxu0 %v5073
    %5163 = vmatprep.subr.mxu0 0.0
    %5164 = vmatpush1.msra.mxu0 %v5074
    %5165 = vmatprep.subr.mxu0 0.0
    %5166 = vmatpush1.msra.mxu0 %v5075
    %5167 = vmatprep.subr.mxu0 0.0
    %5168 = vmatpush1.msra.mxu0 0.0
    %5169 = vmatprep.subr.mxu0 0.0
    %5170 = vmatpush1.msra.mxu0 0.0
    %5171 = vmatprep.subr.mxu0 0.0
    %5172 = vmatpush1.msra.mxu0 0.0
    %5173 = vmatprep.subr.mxu0 0.0
    %5174 = vmatpush1.msra.mxu0 0.0
    %5175 = vmatprep.subr.mxu0 0.0
    %5176 = vmatpush1.msra.mxu0 0.0
    %5177 = vmatprep.subr.mxu0 0.0
    %5178 = vmatpush1.msra.mxu0 0.0
    %5179 = vmatprep.subr.mxu0 0.0
    %5180 = vmatpush1.msra.mxu0 0.0
    %5181 = vmatprep.subr.mxu0 0.0
    %5182 = vmatpush1.msra.mxu0 0.0
    %5183 = vmatprep.subr.mxu0 0.0
    %5184 = vmatpush1.msra.mxu0 0.0
    %5185 = vmatprep.subr.mxu0 0.0
    %5186 = vmatpush1.msra.mxu0 0.0
    %5187 = vmatprep.subr.mxu0 0.0
    %5188 = vmatpush1.msra.mxu0 0.0
    %5189 = vmatprep.subr.mxu0 0.0
    %5190 = vmatpush1.msra.mxu0 0.0
    %5191 = vmatprep.subr.mxu0 0.0
    %5192 = vmatpush1.msra.mxu0 0.0
    %5193 = vmatprep.subr.mxu0 0.0
    %5194 = vmatpush1.msra.mxu0 0.0
    %5195 = vmatprep.subr.mxu0 0.0
    %5196 = vmatpush1.msra.mxu0 0.0
    %5197 = vmatprep.subr.mxu0 0.0
    %5198 = vmatpush1.msra.mxu0 0.0
    %5199 = vmatprep.subr.mxu0 0.0
    %5200 = vmatpush1.msra.mxu0 0.0
    %5201 = vmatprep.subr.mxu0 0.0
    %5202 = vmatpush1.msra.mxu0 0.0
    %5203 = vmatprep.subr.mxu0 0.0
    %5204 = vmatpush1.msra.mxu0 0.0
    %5205 = vmatprep.subr.mxu0 0.0
    %5206 = vmatpush1.msra.mxu0 0.0
    %5207 = vmatprep.subr.mxu0 0.0
    %5208 = vmatpush1.msra.mxu0 0.0
    %5209 = vmatprep.subr.mxu0 0.0
    %5210 = vmatpush1.msra.mxu0 0.0
    %5211 = vmatprep.subr.mxu0 0.0
    %5212 = vmatpush1.msra.mxu0 0.0
    %5213 = vmatprep.subr.mxu0 0.0
    %5214 = vmatpush1.msra.mxu0 0.0
    %5215 = vmatprep.mubr.f32.mxu0 0.0
    %5216 = vmatmul.mubr.f32.gmra.mrb[0].mxu0 %v5077
    %v5217 = vpop.f32.mrb[0].mxu0
    %v5218 = vadd.f32 0.0, %v5217
    %v5219 = vpop.f32.mrb[0].mxu0
    %5220 = vmatprep.mubr.f32.mxu0 0.0
    %5221 = vmatmul.mubr.f32.gmra.mrb[0].mxu0 %v5080
    %v5222 = vpop.f32.mrb[0].mxu0
    %v5223 = vadd.f32 0.0, %v5222
    %v5224 = vpop.f32.mrb[0].mxu0
    %5225 = vmatprep.mubr.f32.mxu0 0.0
    %5226 = vmatmul.mubr.f32.gmra.mrb[0].mxu0 %v5083
    %v5227 = vpop.f32.mrb[0].mxu0
    %v5228 = vadd.f32 0.0, %v5227
    %v5229 = vpop.f32.mrb[0].mxu0
    %5230 = vmatprep.mubr.f32.mxu0 0.0
    %5231 = vmatmul.mubr.f32.gmra.mrb[0].mxu0 %v5086
    %v5232 = vpop.f32.mrb[0].mxu0
    %v5233 = vadd.f32 0.0, %v5232
    %v5234 = vpop.f32.mrb[0].mxu0
    %5235 = vmatprep.mubr.f32.mxu0 0.0
    %5236 = vmatmul.mubr.f32.gmra.mrb[0].mxu0 %v5089
    %v5237 = vpop.f32.mrb[0].mxu0
    %v5238 = vadd.f32 0.0, %v5237
    %v5239 = vpop.f32.mrb[0].mxu0
    %5240 = vmatprep.mubr.f32.mxu0 0.0
    %5241 = vmatmul.mubr.f32.gmra.mrb[0].mxu0 %v5092
    %v5242 = vpop.f32.mrb[0].mxu0
    %v5243 = vadd.f32 0.0, %v5242
    %v5244 = vpop.f32.mrb[0].mxu0
    %5245 = vmatprep.mubr.f32.mxu0 0.0
    %5246 = vmatmul.mubr.f32.gmra.mrb[0].mxu0 %v5095
    %v5247 = vpop.f32.mrb[0].mxu0
    %v5248 = vadd.f32 0.0, %v5247
    %v5249 = vpop.f32.mrb[0].mxu0
    %5250 = vmatprep.mubr.f32.mxu0 0.0
    %5251 = vmatmul.mubr.f32.gmra.mrb[0].mxu0 %v5098
    %v5252 = vpop.f32.mrb[0].mxu0
    %v5253 = vadd.f32 0.0, %v5252
    %v5254 = vpop.f32.mrb[0].mxu0
    %5255 = vmatprep.mubr.f32.mxu0 0.0
    %5256 = vmatmul.mubr.f32.gmra.mrb[0].mxu0 %v5101
    %v5257 = vpop.f32.mrb[0].mxu0
    %v5258 = vadd.f32 0.0, %v5257
    %v5259 = vpop.f32.mrb[0].mxu0
    %5260 = vmatprep.mubr.f32.mxu0 0.0
    %5261 = vmatmul.mubr.f32.gmra.mrb[0].mxu0 %v5104
    %v5262 = vpop.f32.mrb[0].mxu0
    %v5263 = vadd.f32 0.0, %v5262
    %v5264 = vpop.f32.mrb[0].mxu0
    %5265 = vmatprep.mubr.f32.mxu0 0.0
    %5266 = vmatmul.mubr.f32.gmra.mrb[0].mxu0 %v5107
    %v5267 = vpop.f32.mrb[0].mxu0
    %v5268 = vadd.f32 0.0, %v5267
    %v5269 = vpop.f32.mrb[0].mxu0
    %5270 = vmatprep.mubr.f32.mxu0 0.0
    %5271 = vmatmul.mubr.f32.gmra.mrb[0].mxu0 %v5110
    %v5272 = vpop.f32.mrb[0].mxu0
    %v5273 = vadd.f32 0.0, %v5272
    %v5274 = vpop.f32.mrb[0].mxu0
    %5275 = vmatprep.mubr.f32.mxu0 0.0
    %5276 = vmatmul.mubr.f32.gmra.mrb[0].mxu0 %v5113
    %v5277 = vpop.f32.mrb[0].mxu0
    %v5278 = vadd.f32 0.0, %v5277
    %v5279 = vpop.f32.mrb[0].mxu0
    %5280 = vmatprep.mubr.f32.mxu0 0.0
    %5281 = vmatmul.mubr.f32.gmra.mrb[0].mxu0 %v5116
    %v5282 = vpop.f32.mrb[0].mxu0
    %v5283 = vadd.f32 0.0, %v5282
    %v5284 = vpop.f32.mrb[0].mxu0
    %5285 = vmatprep.mubr.f32.mxu0 0.0
    %5286 = vmatmul.mubr.f32.gmra.mrb[0].mxu0 %v5119
    %v5287 = vpop.f32.mrb[0].mxu0
    %v5288 = vadd.f32 0.0, %v5287
    %v5289 = vpop.f32.mrb[0].mxu0
    %5290 = vmatprep.mubr.f32.mxu0 0.0
    %5291 = vmatmul.mubr.f32.gmra.mrb[0].mxu0 %v5122
    %v5292 = vpop.f32.mrb[0].mxu0
    %v5293 = vadd.f32 0.0, %v5292
    %v5294 = vpop.f32.mrb[0].mxu0
    %5295 = vmatprep.mubr.f32.mxu0 0.0
    %5296 = vmatmul.mubr.f32.gmra.mrb[0].mxu0 %v5125
    %v5297 = vpop.f32.mrb[0].mxu0
    %v5298 = vadd.f32 0.0, %v5297
    %v5299 = vpop.f32.mrb[0].mxu0
    %5300 = vmatprep.mubr.f32.mxu0 0.0
    %5301 = vmatmul.mubr.f32.gmra.mrb[0].mxu0 %v5128
    %v5302 = vpop.f32.mrb[0].mxu0
    %v5303 = vadd.f32 0.0, %v5302
    %v5304 = vpop.f32.mrb[0].mxu0
    %5305 = vmatprep.mubr.f32.mxu0 0.0
    %5306 = vmatmul.mubr.f32.gmra.mrb[0].mxu0 %v5131
    %v5307 = vpop.f32.mrb[0].mxu0
    %v5308 = vadd.f32 0.0, %v5307
    %v5309 = vpop.f32.mrb[0].mxu0
    %5310 = vmatprep.mubr.f32.mxu0 0.0
    %5311 = vmatmul.mubr.f32.gmra.mrb[0].mxu0 %v5134
    %v5312 = vpop.f32.mrb[0].mxu0
    %v5313 = vadd.f32 0.0, %v5312
    %v5314 = vpop.f32.mrb[0].mxu0
    %5315 = vmatprep.mubr.f32.mxu0 0.0
    %5316 = vmatmul.mubr.f32.gmra.mrb[0].mxu0 %v5137
    %v5317 = vpop.f32.mrb[0].mxu0
    %v5318 = vadd.f32 0.0, %v5317
    %v5319 = vpop.f32.mrb[0].mxu0
    %5320 = vmatprep.mubr.f32.mxu0 0.0
    %5321 = vmatmul.mubr.f32.gmra.mrb[0].mxu0 %v5140
    %v5322 = vpop.f32.mrb[0].mxu0
    %v5323 = vadd.f32 0.0, %v5322
    %v5324 = vpop.f32.mrb[0].mxu0
    %5325 = vmatprep.mubr.f32.mxu0 0.0
    %5326 = vmatmul.mubr.f32.gmra.mrb[0].mxu0 %v5143
    %v5327 = vpop.f32.mrb[0].mxu0
    %v5328 = vadd.f32 0.0, %v5327
    %v5329 = vpop.f32.mrb[0].mxu0
    %5330 = vmatprep.mubr.f32.mxu0 0.0
    %5331 = vmatmul.mubr.f32.gmra.mrb[0].mxu0 %v5146
    %v5332 = vpop.f32.mrb[0].mxu0
    %v5333 = vadd.f32 0.0, %v5332
    %v5334 = vpop.f32.mrb[0].mxu0
    %5335 = vmatprep.mubr.f32.mxu0 0.0
    %5336 = vmatmul.mubr.f32.gmra.mrb[0].mxu0 %v5149
    %v5337 = vpop.f32.mrb[0].mxu0
    %v5338 = vadd.f32 0.0, %v5337
    %v5339 = vpop.f32.mrb[0].mxu0
    %5340 = vdwg.mxu0
    %v5341 = vadd.f32 %v5017, %v5218
    %v5342 = vadd.f32 %v5018, %v5223
    %v5343 = vadd.f32 %v5019, %v5228
    %v5344 = vadd.f32 %v5020, %v5233
    %v5345 = vadd.f32 %v5021, %v5238
    %v5346 = vadd.f32 %v5022, %v5243
    %v5347 = vadd.f32 %v5023, %v5248
    %v5348 = vadd.f32 %v5024, %v5253
    %v5349 = vadd.f32 %v5025, %v5258
    %v5350 = vadd.f32 %v5026, %v5263
    %v5351 = vadd.f32 %v5027, %v5268
    %v5352 = vadd.f32 %v5028, %v5273
    %v5353 = vadd.f32 %v5029, %v5278
    %v5354 = vadd.f32 %v5030, %v5283
    %v5355 = vadd.f32 %v5031, %v5288
    %v5356 = vadd.f32 %v5032, %v5293
    %v5357 = vadd.f32 %v5033, %v5298
    %v5358 = vadd.f32 %v5034, %v5303
    %v5359 = vadd.f32 %v5035, %v5308
    %v5360 = vadd.f32 %v5036, %v5313
    %v5361 = vadd.f32 %v5037, %v5318
    %v5362 = vadd.f32 %v5038, %v5323
    %v5363 = vadd.f32 %v5039, %v5328
    %v5364 = vadd.f32 %v5040, %v5333
    %v5365 = vadd.f32 %v5041, %v5338
    %v5366 = vld [vmem:[#allocation2 + $0x1b] sm:$0xff]
    %v5367 = vld [vmem:[#allocation2 + $0x23] sm:$0xff]
    %v5368 = vld [vmem:[#allocation2 + $0x2b] sm:$0xff]
    %v5369 = vld [vmem:[#allocation2 + $0x33] sm:$0xff]
    %v5370 = vld [vmem:[#allocation2 + $0x3b] sm:$0xff]
    %v5371 = vld [vmem:[#allocation2 + $0x43] sm:$0xff]
    %v5372 = vld [vmem:[#allocation2 + $0x4b] sm:$0xff]
    %v5373 = vld [vmem:[#allocation2 + $0x53] sm:$0xff]
    %v5374 = vld [vmem:[#allocation2 + $0x5b] sm:$0xff]
    %v5375 = vld [vmem:[#allocation2 + $0x63] sm:$0xff]
    %v5376 = vld [vmem:[#allocation2 + $0x6b] sm:$0xff]
    %v5377 = vld [vmem:[#allocation2 + $0x73] sm:$0xff]
    %v5378 = vld [vmem:[#allocation2 + $0x7b] sm:$0xff]
    %v5379 = vld [vmem:[#allocation2 + $0x83] sm:$0xff]
    %v5380 = vld [vmem:[#allocation2 + $0x8b] sm:$0xff]
    %v5381 = vld [vmem:[#allocation2 + $0x93] sm:$0xff]
    %v5382 = vld [vmem:[#allocation2 + $0x9b] sm:$0xff]
    %v5383 = vld [vmem:[#allocation2 + $0xa3] sm:$0xff]
    %v5384 = vld [vmem:[#allocation2 + $0xab] sm:$0xff]
    %v5385 = vld [vmem:[#allocation2 + $0xb3] sm:$0xff]
    %v5386 = vld [vmem:[#allocation2 + $0xbb] sm:$0xff]
    %v5387 = vld [vmem:[#allocation2 + $0xc3] sm:$0xff]
    %v5388 = vld [vmem:[#allocation2 + $0xcb] sm:$0xff]
    %v5389 = vld [vmem:[#allocation2 + $0xd3] sm:$0xff]
    %v5390 = vld [vmem:[#allocation2 + $0xdb] sm:$0xff]
    %s5391 = scalar_lea.vmem [#allocation19], 512
    %v5392 = vld [vmem:[%s5391] sm:$0xff]
    %v5393 = vld [vmem:[%s5391 + $0x8] sm:$0xff]
    %v5394 = vld [vmem:[%s5391 + $0x10] sm:$0xff]
    %v5395 = vld [vmem:[%s5391 + $0x18] sm:$0xff]
    %v5396 = vld [vmem:[%s5391 + $0x20] sm:$0xff]
    %v5397 = vld [vmem:[%s5391 + $0x28] sm:$0xff]
    %v5398 = vld [vmem:[%s5391 + $0x30] sm:$0xff]
    %v5399 = vld [vmem:[%s5391 + $0x38] sm:$0xff]
    %v5401 = vsel %vm659, %v5366, 0
    %v5404 = vsel %vm659, %v5367, 0
    %v5407 = vsel %vm659, %v5368, 0
    %v5410 = vsel %vm659, %v5369, 0
    %v5413 = vsel %vm659, %v5370, 0
    %v5416 = vsel %vm659, %v5371, 0
    %v5419 = vsel %vm659, %v5372, 0
    %v5422 = vsel %vm659, %v5373, 0
    %v5425 = vsel %vm659, %v5374, 0
    %v5428 = vsel %vm659, %v5375, 0
    %v5431 = vsel %vm659, %v5376, 0
    %v5434 = vsel %vm659, %v5377, 0
    %v5437 = vsel %vm659, %v5378, 0
    %v5440 = vsel %vm659, %v5379, 0
    %v5443 = vsel %vm659, %v5380, 0
    %v5446 = vsel %vm659, %v5381, 0
    %v5449 = vsel %vm659, %v5382, 0
    %v5452 = vsel %vm659, %v5383, 0
    %v5455 = vsel %vm659, %v5384, 0
    %v5458 = vsel %vm659, %v5385, 0
    %v5461 = vsel %vm659, %v5386, 0
    %v5464 = vsel %vm659, %v5387, 0
    %v5467 = vsel %vm659, %v5388, 0
    %v5470 = vsel %vm659, %v5389, 0
    %v5473 = vsel %vm659, %v5390, 0
    %5475 = vmatprep.subr.mxu0 0.0
    %5476 = vmatpush1.msra.mxu0 %v5392
    %5477 = vmatprep.subr.mxu0 0.0
    %5478 = vmatpush1.msra.mxu0 %v5393
    %5479 = vmatprep.subr.mxu0 0.0
    %5480 = vmatpush1.msra.mxu0 %v5394
    %5481 = vmatprep.subr.mxu0 0.0
    %5482 = vmatpush1.msra.mxu0 %v5395
    %5483 = vmatprep.subr.mxu0 0.0
    %5484 = vmatpush1.msra.mxu0 %v5396
    %5485 = vmatprep.subr.mxu0 0.0
    %5486 = vmatpush1.msra.mxu0 %v5397
    %5487 = vmatprep.subr.mxu0 0.0
    %5488 = vmatpush1.msra.mxu0 %v5398
    %5489 = vmatprep.subr.mxu0 0.0
    %5490 = vmatpush1.msra.mxu0 %v5399
    %5491 = vmatprep.subr.mxu0 0.0
    %5492 = vmatpush1.msra.mxu0 0.0
    %5493 = vmatprep.subr.mxu0 0.0
    %5494 = vmatpush1.msra.mxu0 0.0
    %5495 = vmatprep.subr.mxu0 0.0
    %5496 = vmatpush1.msra.mxu0 0.0
    %5497 = vmatprep.subr.mxu0 0.0
    %5498 = vmatpush1.msra.mxu0 0.0
    %5499 = vmatprep.subr.mxu0 0.0
    %5500 = vmatpush1.msra.mxu0 0.0
    %5501 = vmatprep.subr.mxu0 0.0
    %5502 = vmatpush1.msra.mxu0 0.0
    %5503 = vmatprep.subr.mxu0 0.0
    %5504 = vmatpush1.msra.mxu0 0.0
    %5505 = vmatprep.subr.mxu0 0.0
    %5506 = vmatpush1.msra.mxu0 0.0
    %5507 = vmatprep.subr.mxu0 0.0
    %5508 = vmatpush1.msra.mxu0 0.0
    %5509 = vmatprep.subr.mxu0 0.0
    %5510 = vmatpush1.msra.mxu0 0.0
    %5511 = vmatprep.subr.mxu0 0.0
    %5512 = vmatpush1.msra.mxu0 0.0
    %5513 = vmatprep.subr.mxu0 0.0
    %5514 = vmatpush1.msra.mxu0 0.0
    %5515 = vmatprep.subr.mxu0 0.0
    %5516 = vmatpush1.msra.mxu0 0.0
    %5517 = vmatprep.subr.mxu0 0.0
    %5518 = vmatpush1.msra.mxu0 0.0
    %5519 = vmatprep.subr.mxu0 0.0
    %5520 = vmatpush1.msra.mxu0 0.0
    %5521 = vmatprep.subr.mxu0 0.0
    %5522 = vmatpush1.msra.mxu0 0.0
    %5523 = vmatprep.subr.mxu0 0.0
    %5524 = vmatpush1.msra.mxu0 0.0
    %5525 = vmatprep.subr.mxu0 0.0
    %5526 = vmatpush1.msra.mxu0 0.0
    %5527 = vmatprep.subr.mxu0 0.0
    %5528 = vmatpush1.msra.mxu0 0.0
    %5529 = vmatprep.subr.mxu0 0.0
    %5530 = vmatpush1.msra.mxu0 0.0
    %5531 = vmatprep.subr.mxu0 0.0
    %5532 = vmatpush1.msra.mxu0 0.0
    %5533 = vmatprep.subr.mxu0 0.0
    %5534 = vmatpush1.msra.mxu0 0.0
    %5535 = vmatprep.subr.mxu0 0.0
    %5536 = vmatpush1.msra.mxu0 0.0
    %5537 = vmatprep.subr.mxu0 0.0
    %5538 = vmatpush1.msra.mxu0 0.0
    %5539 = vmatprep.mubr.f32.mxu0 0.0
    %5540 = vmatmul.mubr.f32.gmra.mrb[0].mxu0 %v5401
    %v5541 = vpop.f32.mrb[0].mxu0
    %v5542 = vadd.f32 0.0, %v5541
    %v5543 = vpop.f32.mrb[0].mxu0
    %5544 = vmatprep.mubr.f32.mxu0 0.0
    %5545 = vmatmul.mubr.f32.gmra.mrb[0].mxu0 %v5404
    %v5546 = vpop.f32.mrb[0].mxu0
    %v5547 = vadd.f32 0.0, %v5546
    %v5548 = vpop.f32.mrb[0].mxu0
    %5549 = vmatprep.mubr.f32.mxu0 0.0
    %5550 = vmatmul.mubr.f32.gmra.mrb[0].mxu0 %v5407
    %v5551 = vpop.f32.mrb[0].mxu0
    %v5552 = vadd.f32 0.0, %v5551
    %v5553 = vpop.f32.mrb[0].mxu0
    %5554 = vmatprep.mubr.f32.mxu0 0.0
    %5555 = vmatmul.mubr.f32.gmra.mrb[0].mxu0 %v5410
    %v5556 = vpop.f32.mrb[0].mxu0
    %v5557 = vadd.f32 0.0, %v5556
    %v5558 = vpop.f32.mrb[0].mxu0
    %5559 = vmatprep.mubr.f32.mxu0 0.0
    %5560 = vmatmul.mubr.f32.gmra.mrb[0].mxu0 %v5413
    %v5561 = vpop.f32.mrb[0].mxu0
    %v5562 = vadd.f32 0.0, %v5561
    %v5563 = vpop.f32.mrb[0].mxu0
    %5564 = vmatprep.mubr.f32.mxu0 0.0
    %5565 = vmatmul.mubr.f32.gmra.mrb[0].mxu0 %v5416
    %v5566 = vpop.f32.mrb[0].mxu0
    %v5567 = vadd.f32 0.0, %v5566
    %v5568 = vpop.f32.mrb[0].mxu0
    %5569 = vmatprep.mubr.f32.mxu0 0.0
    %5570 = vmatmul.mubr.f32.gmra.mrb[0].mxu0 %v5419
    %v5571 = vpop.f32.mrb[0].mxu0
    %v5572 = vadd.f32 0.0, %v5571
    %v5573 = vpop.f32.mrb[0].mxu0
    %5574 = vmatprep.mubr.f32.mxu0 0.0
    %5575 = vmatmul.mubr.f32.gmra.mrb[0].mxu0 %v5422
    %v5576 = vpop.f32.mrb[0].mxu0
    %v5577 = vadd.f32 0.0, %v5576
    %v5578 = vpop.f32.mrb[0].mxu0
    %5579 = vmatprep.mubr.f32.mxu0 0.0
    %5580 = vmatmul.mubr.f32.gmra.mrb[0].mxu0 %v5425
    %v5581 = vpop.f32.mrb[0].mxu0
    %v5582 = vadd.f32 0.0, %v5581
    %v5583 = vpop.f32.mrb[0].mxu0
    %5584 = vmatprep.mubr.f32.mxu0 0.0
    %5585 = vmatmul.mubr.f32.gmra.mrb[0].mxu0 %v5428
    %v5586 = vpop.f32.mrb[0].mxu0
    %v5587 = vadd.f32 0.0, %v5586
    %v5588 = vpop.f32.mrb[0].mxu0
    %5589 = vmatprep.mubr.f32.mxu0 0.0
    %5590 = vmatmul.mubr.f32.gmra.mrb[0].mxu0 %v5431
    %v5591 = vpop.f32.mrb[0].mxu0
    %v5592 = vadd.f32 0.0, %v5591
    %v5593 = vpop.f32.mrb[0].mxu0
    %5594 = vmatprep.mubr.f32.mxu0 0.0
    %5595 = vmatmul.mubr.f32.gmra.mrb[0].mxu0 %v5434
    %v5596 = vpop.f32.mrb[0].mxu0
    %v5597 = vadd.f32 0.0, %v5596
    %v5598 = vpop.f32.mrb[0].mxu0
    %5599 = vmatprep.mubr.f32.mxu0 0.0
    %5600 = vmatmul.mubr.f32.gmra.mrb[0].mxu0 %v5437
    %v5601 = vpop.f32.mrb[0].mxu0
    %v5602 = vadd.f32 0.0, %v5601
    %v5603 = vpop.f32.mrb[0].mxu0
    %5604 = vmatprep.mubr.f32.mxu0 0.0
    %5605 = vmatmul.mubr.f32.gmra.mrb[0].mxu0 %v5440
    %v5606 = vpop.f32.mrb[0].mxu0
    %v5607 = vadd.f32 0.0, %v5606
    %v5608 = vpop.f32.mrb[0].mxu0
    %5609 = vmatprep.mubr.f32.mxu0 0.0
    %5610 = vmatmul.mubr.f32.gmra.mrb[0].mxu0 %v5443
    %v5611 = vpop.f32.mrb[0].mxu0
    %v5612 = vadd.f32 0.0, %v5611
    %v5613 = vpop.f32.mrb[0].mxu0
    %5614 = vmatprep.mubr.f32.mxu0 0.0
    %5615 = vmatmul.mubr.f32.gmra.mrb[0].mxu0 %v5446
    %v5616 = vpop.f32.mrb[0].mxu0
    %v5617 = vadd.f32 0.0, %v5616
    %v5618 = vpop.f32.mrb[0].mxu0
    %5619 = vmatprep.mubr.f32.mxu0 0.0
    %5620 = vmatmul.mubr.f32.gmra.mrb[0].mxu0 %v5449
    %v5621 = vpop.f32.mrb[0].mxu0
    %v5622 = vadd.f32 0.0, %v5621
    %v5623 = vpop.f32.mrb[0].mxu0
    %5624 = vmatprep.mubr.f32.mxu0 0.0
    %5625 = vmatmul.mubr.f32.gmra.mrb[0].mxu0 %v5452
    %v5626 = vpop.f32.mrb[0].mxu0
    %v5627 = vadd.f32 0.0, %v5626
    %v5628 = vpop.f32.mrb[0].mxu0
    %5629 = vmatprep.mubr.f32.mxu0 0.0
    %5630 = vmatmul.mubr.f32.gmra.mrb[0].mxu0 %v5455
    %v5631 = vpop.f32.mrb[0].mxu0
    %v5632 = vadd.f32 0.0, %v5631
    %v5633 = vpop.f32.mrb[0].mxu0
    %5634 = vmatprep.mubr.f32.mxu0 0.0
    %5635 = vmatmul.mubr.f32.gmra.mrb[0].mxu0 %v5458
    %v5636 = vpop.f32.mrb[0].mxu0
    %v5637 = vadd.f32 0.0, %v5636
    %v5638 = vpop.f32.mrb[0].mxu0
    %5639 = vmatprep.mubr.f32.mxu0 0.0
    %5640 = vmatmul.mubr.f32.gmra.mrb[0].mxu0 %v5461
    %v5641 = vpop.f32.mrb[0].mxu0
    %v5642 = vadd.f32 0.0, %v5641
    %v5643 = vpop.f32.mrb[0].mxu0
    %5644 = vmatprep.mubr.f32.mxu0 0.0
    %5645 = vmatmul.mubr.f32.gmra.mrb[0].mxu0 %v5464
    %v5646 = vpop.f32.mrb[0].mxu0
    %v5647 = vadd.f32 0.0, %v5646
    %v5648 = vpop.f32.mrb[0].mxu0
    %5649 = vmatprep.mubr.f32.mxu0 0.0
    %5650 = vmatmul.mubr.f32.gmra.mrb[0].mxu0 %v5467
    %v5651 = vpop.f32.mrb[0].mxu0
    %v5652 = vadd.f32 0.0, %v5651
    %v5653 = vpop.f32.mrb[0].mxu0
    %5654 = vmatprep.mubr.f32.mxu0 0.0
    %5655 = vmatmul.mubr.f32.gmra.mrb[0].mxu0 %v5470
    %v5656 = vpop.f32.mrb[0].mxu0
    %v5657 = vadd.f32 0.0, %v5656
    %v5658 = vpop.f32.mrb[0].mxu0
    %5659 = vmatprep.mubr.f32.mxu0 0.0
    %5660 = vmatmul.mubr.f32.gmra.mrb[0].mxu0 %v5473
    %v5661 = vpop.f32.mrb[0].mxu0
    %v5662 = vadd.f32 0.0, %v5661
    %v5663 = vpop.f32.mrb[0].mxu0
    %5664 = vdwg.mxu0
    %v5665 = vadd.f32 %v5341, %v5542
    %v5666 = vadd.f32 %v5342, %v5547
    %v5667 = vadd.f32 %v5343, %v5552
    %v5668 = vadd.f32 %v5344, %v5557
    %v5669 = vadd.f32 %v5345, %v5562
    %v5670 = vadd.f32 %v5346, %v5567
    %v5671 = vadd.f32 %v5347, %v5572
    %v5672 = vadd.f32 %v5348, %v5577
    %v5673 = vadd.f32 %v5349, %v5582
    %v5674 = vadd.f32 %v5350, %v5587
    %v5675 = vadd.f32 %v5351, %v5592
    %v5676 = vadd.f32 %v5352, %v5597
    %v5677 = vadd.f32 %v5353, %v5602
    %v5678 = vadd.f32 %v5354, %v5607
    %v5679 = vadd.f32 %v5355, %v5612
    %v5680 = vadd.f32 %v5356, %v5617
    %v5681 = vadd.f32 %v5357, %v5622
    %v5682 = vadd.f32 %v5358, %v5627
    %v5683 = vadd.f32 %v5359, %v5632
    %v5684 = vadd.f32 %v5360, %v5637
    %v5685 = vadd.f32 %v5361, %v5642
    %v5686 = vadd.f32 %v5362, %v5647
    %v5687 = vadd.f32 %v5363, %v5652
    %v5688 = vadd.f32 %v5364, %v5657
    %v5689 = vadd.f32 %v5365, %v5662
    %v5690 = vld [vmem:[#allocation20] sm:$0x1]
    %v5692 = vlaneseq
    %v5693 = vshrl.u32 %v5692, 7
    %v5694 = vsub.s32 0, %v5693
    %v5695 = vrot.slane %v5690, %v5694
    %v5697 = vadd.f32 %v5665, %v5695
    %v5698 = vadd.f32 %v5666, %v5695
    %v5699 = vadd.f32 %v5667, %v5695
    %v5700 = vadd.f32 %v5668, %v5695
    %v5701 = vadd.f32 %v5669, %v5695
    %v5702 = vadd.f32 %v5670, %v5695
    %v5703 = vadd.f32 %v5671, %v5695
    %v5704 = vadd.f32 %v5672, %v5695
    %v5705 = vadd.f32 %v5673, %v5695
    %v5706 = vadd.f32 %v5674, %v5695
    %v5707 = vadd.f32 %v5675, %v5695
    %v5708 = vadd.f32 %v5676, %v5695
    %v5709 = vadd.f32 %v5677, %v5695
    %v5710 = vadd.f32 %v5678, %v5695
    %v5711 = vadd.f32 %v5679, %v5695
    %v5712 = vadd.f32 %v5680, %v5695
    %v5713 = vadd.f32 %v5681, %v5695
    %v5714 = vadd.f32 %v5682, %v5695
    %v5715 = vadd.f32 %v5683, %v5695
    %v5716 = vadd.f32 %v5684, %v5695
    %v5717 = vadd.f32 %v5685, %v5695
    %v5718 = vadd.f32 %v5686, %v5695
    %v5719 = vadd.f32 %v5687, %v5695
    %v5720 = vadd.f32 %v5688, %v5695
    %v5721 = vadd.f32 %v5689, %v5695
    %vm5722 = vcmp.gt.f32.partialorder %v5697, 0.0
    %vm5723 = vcmp.gt.f32.partialorder %v5698, 0.0
    %vm5724 = vcmp.gt.f32.partialorder %v5699, 0.0
    %vm5725 = vcmp.gt.f32.partialorder %v5700, 0.0
    %vm5726 = vcmp.gt.f32.partialorder %v5701, 0.0
    %vm5727 = vcmp.gt.f32.partialorder %v5702, 0.0
    %vm5728 = vcmp.gt.f32.partialorder %v5703, 0.0
    %vm5729 = vcmp.gt.f32.partialorder %v5704, 0.0
    %vm5730 = vcmp.gt.f32.partialorder %v5705, 0.0
    %vm5731 = vcmp.gt.f32.partialorder %v5706, 0.0
    %vm5732 = vcmp.gt.f32.partialorder %v5707, 0.0
    %vm5733 = vcmp.gt.f32.partialorder %v5708, 0.0
    %vm5734 = vcmp.gt.f32.partialorder %v5709, 0.0
    %vm5735 = vcmp.gt.f32.partialorder %v5710, 0.0
    %vm5736 = vcmp.gt.f32.partialorder %v5711, 0.0
    %vm5737 = vcmp.gt.f32.partialorder %v5712, 0.0
    %vm5738 = vcmp.gt.f32.partialorder %v5713, 0.0
    %vm5739 = vcmp.gt.f32.partialorder %v5714, 0.0
    %vm5740 = vcmp.gt.f32.partialorder %v5715, 0.0
    %vm5741 = vcmp.gt.f32.partialorder %v5716, 0.0
    %vm5742 = vcmp.gt.f32.partialorder %v5717, 0.0
    %vm5743 = vcmp.gt.f32.partialorder %v5718, 0.0
    %vm5744 = vcmp.gt.f32.partialorder %v5719, 0.0
    %vm5745 = vcmp.gt.f32.partialorder %v5720, 0.0
    %vm5746 = vcmp.gt.f32.partialorder %v5721, 0.0
    %v5747 = vmul.f32 %v5697, 0.2
    %v5748 = vmul.f32 %v5698, 0.2
    %v5749 = vmul.f32 %v5699, 0.2
    %v5750 = vmul.f32 %v5700, 0.2
    %v5751 = vmul.f32 %v5701, 0.2
    %v5752 = vmul.f32 %v5702, 0.2
    %v5753 = vmul.f32 %v5703, 0.2
    %v5754 = vmul.f32 %v5704, 0.2
    %v5755 = vmul.f32 %v5705, 0.2
    %v5756 = vmul.f32 %v5706, 0.2
    %v5757 = vmul.f32 %v5707, 0.2
    %v5758 = vmul.f32 %v5708, 0.2
    %v5759 = vmul.f32 %v5709, 0.2
    %v5760 = vmul.f32 %v5710, 0.2
    %v5761 = vmul.f32 %v5711, 0.2
    %v5762 = vmul.f32 %v5712, 0.2
    %v5763 = vmul.f32 %v5713, 0.2
    %v5764 = vmul.f32 %v5714, 0.2
    %v5765 = vmul.f32 %v5715, 0.2
    %v5766 = vmul.f32 %v5716, 0.2
    %v5767 = vmul.f32 %v5717, 0.2
    %v5768 = vmul.f32 %v5718, 0.2
    %v5769 = vmul.f32 %v5719, 0.2
    %v5770 = vmul.f32 %v5720, 0.2
    %v5771 = vmul.f32 %v5721, 0.2
    %v5772 = vsel %vm5722, %v5697, %v5747
    %v5773 = vsel %vm5723, %v5698, %v5748
    %v5774 = vsel %vm5724, %v5699, %v5749
    %v5775 = vsel %vm5725, %v5700, %v5750
    %v5776 = vsel %vm5726, %v5701, %v5751
    %v5777 = vsel %vm5727, %v5702, %v5752
    %v5778 = vsel %vm5728, %v5703, %v5753
    %v5779 = vsel %vm5729, %v5704, %v5754
    %v5780 = vsel %vm5730, %v5705, %v5755
    %v5781 = vsel %vm5731, %v5706, %v5756
    %v5782 = vsel %vm5732, %v5707, %v5757
    %v5783 = vsel %vm5733, %v5708, %v5758
    %v5784 = vsel %vm5734, %v5709, %v5759
    %v5785 = vsel %vm5735, %v5710, %v5760
    %v5786 = vsel %vm5736, %v5711, %v5761
    %v5787 = vsel %vm5737, %v5712, %v5762
    %v5788 = vsel %vm5738, %v5713, %v5763
    %v5789 = vsel %vm5739, %v5714, %v5764
    %v5790 = vsel %vm5740, %v5715, %v5765
    %v5791 = vsel %vm5741, %v5716, %v5766
    %v5792 = vsel %vm5742, %v5717, %v5767
    %v5793 = vsel %vm5743, %v5718, %v5768
    %v5794 = vsel %vm5744, %v5719, %v5769
    %v5795 = vsel %vm5745, %v5720, %v5770
    %v5796 = vsel %vm5746, %v5721, %v5771
    %v5797 = vmul.f32 %v5772, %v5772
    %v5798 = vmul.f32 %v5773, %v5773
    %v5799 = vmul.f32 %v5774, %v5774
    %v5800 = vmul.f32 %v5775, %v5775
    %v5801 = vmul.f32 %v5776, %v5776
    %v5802 = vmul.f32 %v5777, %v5777
    %v5803 = vmul.f32 %v5778, %v5778
    %v5804 = vmul.f32 %v5779, %v5779
    %v5805 = vmul.f32 %v5780, %v5780
    %v5806 = vmul.f32 %v5781, %v5781
    %v5807 = vmul.f32 %v5782, %v5782
    %v5808 = vmul.f32 %v5783, %v5783
    %v5809 = vmul.f32 %v5784, %v5784
    %v5810 = vmul.f32 %v5785, %v5785
    %v5811 = vmul.f32 %v5786, %v5786
    %v5812 = vmul.f32 %v5787, %v5787
    %v5813 = vmul.f32 %v5788, %v5788
    %v5814 = vmul.f32 %v5789, %v5789
    %v5815 = vmul.f32 %v5790, %v5790
    %v5816 = vmul.f32 %v5791, %v5791
    %v5817 = vmul.f32 %v5792, %v5792
    %v5818 = vmul.f32 %v5793, %v5793
    %v5819 = vmul.f32 %v5794, %v5794
    %v5820 = vmul.f32 %v5795, %v5795
    %v5821 = vmul.f32 %v5796, %v5796
    %v5822 = vsel %vm291, %v5797, 0.0
    %5823 = vadd.xlane.f32.xlu0 %v5822
    %v5824 = vpop.xlane.xlu0 %5823
    %v5825 = vsel %vm291, %v5798, 0.0
    %5826 = vadd.xlane.f32.xlu0 %v5825
    %v5827 = vpop.xlane.xlu0 %5826
    %v5828 = vsel %vm291, %v5799, 0.0
    %5829 = vadd.xlane.f32.xlu0 %v5828
    %v5830 = vpop.xlane.xlu0 %5829
    %v5831 = vsel %vm291, %v5800, 0.0
    %5832 = vadd.xlane.f32.xlu0 %v5831
    %v5833 = vpop.xlane.xlu0 %5832
    %v5834 = vsel %vm291, %v5801, 0.0
    %5835 = vadd.xlane.f32.xlu0 %v5834
    %v5836 = vpop.xlane.xlu0 %5835
    %v5837 = vsel %vm291, %v5802, 0.0
    %5838 = vadd.xlane.f32.xlu0 %v5837
    %v5839 = vpop.xlane.xlu0 %5838
    %v5840 = vsel %vm291, %v5803, 0.0
    %5841 = vadd.xlane.f32.xlu0 %v5840
    %v5842 = vpop.xlane.xlu0 %5841
    %v5843 = vsel %vm291, %v5804, 0.0
    %5844 = vadd.xlane.f32.xlu0 %v5843
    %v5845 = vpop.xlane.xlu0 %5844
    %v5846 = vsel %vm291, %v5805, 0.0
    %5847 = vadd.xlane.f32.xlu0 %v5846
    %v5848 = vpop.xlane.xlu0 %5847
    %v5849 = vsel %vm291, %v5806, 0.0
    %5850 = vadd.xlane.f32.xlu0 %v5849
    %v5851 = vpop.xlane.xlu0 %5850
    %v5852 = vsel %vm291, %v5807, 0.0
    %5853 = vadd.xlane.f32.xlu0 %v5852
    %v5854 = vpop.xlane.xlu0 %5853
    %v5855 = vsel %vm291, %v5808, 0.0
    %5856 = vadd.xlane.f32.xlu0 %v5855
    %v5857 = vpop.xlane.xlu0 %5856
    %v5858 = vsel %vm291, %v5809, 0.0
    %5859 = vadd.xlane.f32.xlu0 %v5858
    %v5860 = vpop.xlane.xlu0 %5859
    %v5861 = vsel %vm291, %v5810, 0.0
    %5862 = vadd.xlane.f32.xlu0 %v5861
    %v5863 = vpop.xlane.xlu0 %5862
    %v5864 = vsel %vm291, %v5811, 0.0
    %5865 = vadd.xlane.f32.xlu0 %v5864
    %v5866 = vpop.xlane.xlu0 %5865
    %v5867 = vsel %vm291, %v5812, 0.0
    %5868 = vadd.xlane.f32.xlu0 %v5867
    %v5869 = vpop.xlane.xlu0 %5868
    %v5870 = vsel %vm291, %v5813, 0.0
    %5871 = vadd.xlane.f32.xlu0 %v5870
    %v5872 = vpop.xlane.xlu0 %5871
    %v5873 = vsel %vm291, %v5814, 0.0
    %5874 = vadd.xlane.f32.xlu0 %v5873
    %v5875 = vpop.xlane.xlu0 %5874
    %v5876 = vsel %vm291, %v5815, 0.0
    %5877 = vadd.xlane.f32.xlu0 %v5876
    %v5878 = vpop.xlane.xlu0 %5877
    %v5879 = vsel %vm291, %v5816, 0.0
    %5880 = vadd.xlane.f32.xlu0 %v5879
    %v5881 = vpop.xlane.xlu0 %5880
    %v5882 = vsel %vm291, %v5817, 0.0
    %5883 = vadd.xlane.f32.xlu0 %v5882
    %v5884 = vpop.xlane.xlu0 %5883
    %v5885 = vsel %vm291, %v5818, 0.0
    %5886 = vadd.xlane.f32.xlu0 %v5885
    %v5887 = vpop.xlane.xlu0 %5886
    %v5888 = vsel %vm291, %v5819, 0.0
    %5889 = vadd.xlane.f32.xlu0 %v5888
    %v5890 = vpop.xlane.xlu0 %5889
    %v5891 = vsel %vm291, %v5820, 0.0
    %5892 = vadd.xlane.f32.xlu0 %v5891
    %v5893 = vpop.xlane.xlu0 %5892
    %v5894 = vsel %vm291, %v5821, 0.0
    %5895 = vadd.xlane.f32.xlu0 %v5894
    %v5896 = vpop.xlane.xlu0 %5895
    %v5897 = vmul.f32 %v5824, %v246
    %v5898 = vmul.f32 %v5827, %v246
    %v5899 = vmul.f32 %v5830, %v246
    %v5900 = vmul.f32 %v5833, %v246
    %v5901 = vmul.f32 %v5836, %v246
    %v5902 = vmul.f32 %v5839, %v246
    %v5903 = vmul.f32 %v5842, %v246
    %v5904 = vmul.f32 %v5845, %v246
    %v5905 = vmul.f32 %v5848, %v246
    %v5906 = vmul.f32 %v5851, %v246
    %v5907 = vmul.f32 %v5854, %v246
    %v5908 = vmul.f32 %v5857, %v246
    %v5909 = vmul.f32 %v5860, %v246
    %v5910 = vmul.f32 %v5863, %v246
    %v5911 = vmul.f32 %v5866, %v246
    %v5912 = vmul.f32 %v5869, %v246
    %v5913 = vmul.f32 %v5872, %v246
    %v5914 = vmul.f32 %v5875, %v246
    %v5915 = vmul.f32 %v5878, %v246
    %v5916 = vmul.f32 %v5881, %v246
    %v5917 = vmul.f32 %v5884, %v246
    %v5918 = vmul.f32 %v5887, %v246
    %v5919 = vmul.f32 %v5890, %v246
    %v5920 = vmul.f32 %v5893, %v246
    %v5921 = vmul.f32 %v5896, %v246
    %v5922 = vadd.f32 %v5897, 1e-08
    %v5923 = vadd.f32 %v5898, 1e-08
    %v5924 = vadd.f32 %v5899, 1e-08
    %v5925 = vadd.f32 %v5900, 1e-08
    %v5926 = vadd.f32 %v5901, 1e-08
    %v5927 = vadd.f32 %v5902, 1e-08
    %v5928 = vadd.f32 %v5903, 1e-08
    %v5929 = vadd.f32 %v5904, 1e-08
    %v5930 = vadd.f32 %v5905, 1e-08
    %v5931 = vadd.f32 %v5906, 1e-08
    %v5932 = vadd.f32 %v5907, 1e-08
    %v5933 = vadd.f32 %v5908, 1e-08
    %v5934 = vadd.f32 %v5909, 1e-08
    %v5935 = vadd.f32 %v5910, 1e-08
    %v5936 = vadd.f32 %v5911, 1e-08
    %v5937 = vadd.f32 %v5912, 1e-08
    %v5938 = vadd.f32 %v5913, 1e-08
    %v5939 = vadd.f32 %v5914, 1e-08
    %v5940 = vadd.f32 %v5915, 1e-08
    %v5941 = vadd.f32 %v5916, 1e-08
    %v5942 = vadd.f32 %v5917, 1e-08
    %v5943 = vadd.f32 %v5918, 1e-08
    %v5944 = vadd.f32 %v5919, 1e-08
    %v5945 = vadd.f32 %v5920, 1e-08
    %v5946 = vadd.f32 %v5921, 1e-08
    %v5947 = vrsqrt.pop %v5922
    %v5948 = vrsqrt.pop %v5923
    %v5949 = vrsqrt.pop %v5924
    %v5950 = vrsqrt.pop %v5925
    %v5951 = vrsqrt.pop %v5926
    %v5952 = vrsqrt.pop %v5927
    %v5953 = vrsqrt.pop %v5928
    %v5954 = vrsqrt.pop %v5929
    %v5955 = vrsqrt.pop %v5930
    %v5956 = vrsqrt.pop %v5931
    %v5957 = vrsqrt.pop %v5932
    %v5958 = vrsqrt.pop %v5933
    %v5959 = vrsqrt.pop %v5934
    %v5960 = vrsqrt.pop %v5935
    %v5961 = vrsqrt.pop %v5936
    %v5962 = vrsqrt.pop %v5937
    %v5963 = vrsqrt.pop %v5938
    %v5964 = vrsqrt.pop %v5939
    %v5965 = vrsqrt.pop %v5940
    %v5966 = vrsqrt.pop %v5941
    %v5967 = vrsqrt.pop %v5942
    %v5968 = vrsqrt.pop %v5943
    %v5969 = vrsqrt.pop %v5944
    %v5970 = vrsqrt.pop %v5945
    %v5971 = vrsqrt.pop %v5946
    %v5972 = vmul.f32 %v5772, %v5947
    %v5973 = vmul.f32 %v5773, %v5948
    %v5974 = vmul.f32 %v5774, %v5949
    %v5975 = vmul.f32 %v5775, %v5950
    %v5976 = vmul.f32 %v5776, %v5951
    %v5977 = vmul.f32 %v5777, %v5952
    %v5978 = vmul.f32 %v5778, %v5953
    %v5979 = vmul.f32 %v5779, %v5954
    %v5980 = vmul.f32 %v5780, %v5955
    %v5981 = vmul.f32 %v5781, %v5956
    %v5982 = vmul.f32 %v5782, %v5957
    %v5983 = vmul.f32 %v5783, %v5958
    %v5984 = vmul.f32 %v5784, %v5959
    %v5985 = vmul.f32 %v5785, %v5960
    %v5986 = vmul.f32 %v5786, %v5961
    %v5987 = vmul.f32 %v5787, %v5962
    %v5988 = vmul.f32 %v5788, %v5963
    %v5989 = vmul.f32 %v5789, %v5964
    %v5990 = vmul.f32 %v5790, %v5965
    %v5991 = vmul.f32 %v5791, %v5966
    %v5992 = vmul.f32 %v5792, %v5967
    %v5993 = vmul.f32 %v5793, %v5968
    %v5994 = vmul.f32 %v5794, %v5969
    %v5995 = vmul.f32 %v5795, %v5970
    %v5996 = vmul.f32 %v5796, %v5971
    %v5997 = vld [vmem:[#allocation17] sm:$0xff]
    %v5998 = vld [vmem:[#allocation17 + $0x8] sm:$0xff]
    %v5999 = vld [vmem:[#allocation17 + $0x10] sm:$0xff]
    %v6000 = vld [vmem:[#allocation17 + $0x18] sm:$0xff]
    %v6001 = vld [vmem:[#allocation17 + $0x20] sm:$0xff]
    %v6002 = vld [vmem:[#allocation17 + $0x28] sm:$0xff]
    %v6003 = vld [vmem:[#allocation17 + $0x30] sm:$0xff]
    %v6004 = vld [vmem:[#allocation17 + $0x38] sm:$0xff]
    %v6005 = vld [vmem:[#allocation17 + $0x40] sm:$0xff]
    %v6006 = vld [vmem:[#allocation17 + $0x48] sm:$0xff]
    %v6007 = vld [vmem:[#allocation17 + $0x50] sm:$0xff]
    %v6008 = vld [vmem:[#allocation17 + $0x58] sm:$0xff]
    %v6009 = vld [vmem:[#allocation17 + $0x60] sm:$0xff]
    %v6010 = vld [vmem:[#allocation17 + $0x68] sm:$0xff]
    %v6011 = vld [vmem:[#allocation17 + $0x70] sm:$0xff]
    %v6012 = vld [vmem:[#allocation17 + $0x78] sm:$0xff]
    %v6013 = vld [vmem:[#allocation17 + $0x80] sm:$0xff]
    %v6014 = vld [vmem:[#allocation17 + $0x88] sm:$0xff]
    %v6015 = vld [vmem:[#allocation17 + $0x90] sm:$0xff]
    %v6016 = vld [vmem:[#allocation17 + $0x98] sm:$0xff]
    %v6017 = vld [vmem:[#allocation17 + $0xa0] sm:$0xff]
    %v6018 = vld [vmem:[#allocation17 + $0xa8] sm:$0xff]
    %v6019 = vld [vmem:[#allocation17 + $0xb0] sm:$0xff]
    %v6020 = vld [vmem:[#allocation17 + $0xb8] sm:$0xff]
    %v6021 = vld [vmem:[#allocation17 + $0xc0] sm:$0xff]
    %6023 = vset.pattern.permute.xlu0 0
    %6024 = vperm.xlu0 %6023, %v5997
    %v6025 = vpop.permute.xlu0 %6024
    %6028 = vset.pattern.permute.xlu0 0
    %6029 = vperm.xlu0 %6028, %v5998
    %v6030 = vpop.permute.xlu0 %6029
    %6033 = vset.pattern.permute.xlu0 0
    %6034 = vperm.xlu0 %6033, %v5999
    %v6035 = vpop.permute.xlu0 %6034
    %6038 = vset.pattern.permute.xlu0 0
    %6039 = vperm.xlu0 %6038, %v6000
    %v6040 = vpop.permute.xlu0 %6039
    %6043 = vset.pattern.permute.xlu0 0
    %6044 = vperm.xlu0 %6043, %v6001
    %v6045 = vpop.permute.xlu0 %6044
    %6048 = vset.pattern.permute.xlu0 0
    %6049 = vperm.xlu0 %6048, %v6002
    %v6050 = vpop.permute.xlu0 %6049
    %6053 = vset.pattern.permute.xlu0 0
    %6054 = vperm.xlu0 %6053, %v6003
    %v6055 = vpop.permute.xlu0 %6054
    %6058 = vset.pattern.permute.xlu0 0
    %6059 = vperm.xlu0 %6058, %v6004
    %v6060 = vpop.permute.xlu0 %6059
    %6063 = vset.pattern.permute.xlu0 0
    %6064 = vperm.xlu0 %6063, %v6005
    %v6065 = vpop.permute.xlu0 %6064
    %6068 = vset.pattern.permute.xlu0 0
    %6069 = vperm.xlu0 %6068, %v6006
    %v6070 = vpop.permute.xlu0 %6069
    %6073 = vset.pattern.permute.xlu0 0
    %6074 = vperm.xlu0 %6073, %v6007
    %v6075 = vpop.permute.xlu0 %6074
    %6078 = vset.pattern.permute.xlu0 0
    %6079 = vperm.xlu0 %6078, %v6008
    %v6080 = vpop.permute.xlu0 %6079
    %6083 = vset.pattern.permute.xlu0 0
    %6084 = vperm.xlu0 %6083, %v6009
    %v6085 = vpop.permute.xlu0 %6084
    %6088 = vset.pattern.permute.xlu0 0
    %6089 = vperm.xlu0 %6088, %v6010
    %v6090 = vpop.permute.xlu0 %6089
    %6093 = vset.pattern.permute.xlu0 0
    %6094 = vperm.xlu0 %6093, %v6011
    %v6095 = vpop.permute.xlu0 %6094
    %6098 = vset.pattern.permute.xlu0 0
    %6099 = vperm.xlu0 %6098, %v6012
    %v6100 = vpop.permute.xlu0 %6099
    %6103 = vset.pattern.permute.xlu0 0
    %6104 = vperm.xlu0 %6103, %v6013
    %v6105 = vpop.permute.xlu0 %6104
    %6108 = vset.pattern.permute.xlu0 0
    %6109 = vperm.xlu0 %6108, %v6014
    %v6110 = vpop.permute.xlu0 %6109
    %6113 = vset.pattern.permute.xlu0 0
    %6114 = vperm.xlu0 %6113, %v6015
    %v6115 = vpop.permute.xlu0 %6114
    %6118 = vset.pattern.permute.xlu0 0
    %6119 = vperm.xlu0 %6118, %v6016
    %v6120 = vpop.permute.xlu0 %6119
    %6123 = vset.pattern.permute.xlu0 0
    %6124 = vperm.xlu0 %6123, %v6017
    %v6125 = vpop.permute.xlu0 %6124
    %6128 = vset.pattern.permute.xlu0 0
    %6129 = vperm.xlu0 %6128, %v6018
    %v6130 = vpop.permute.xlu0 %6129
    %6133 = vset.pattern.permute.xlu0 0
    %6134 = vperm.xlu0 %6133, %v6019
    %v6135 = vpop.permute.xlu0 %6134
    %6138 = vset.pattern.permute.xlu0 0
    %6139 = vperm.xlu0 %6138, %v6020
    %v6140 = vpop.permute.xlu0 %6139
    %6143 = vset.pattern.permute.xlu0 0
    %6144 = vperm.xlu0 %6143, %v6021
    %v6145 = vpop.permute.xlu0 %6144
    %v6147 = vmul.f32 %v5972, %v6025
    %v6148 = vmul.f32 %v5973, %v6030
    %v6149 = vmul.f32 %v5974, %v6035
    %v6150 = vmul.f32 %v5975, %v6040
    %v6151 = vmul.f32 %v5976, %v6045
    %v6152 = vmul.f32 %v5977, %v6050
    %v6153 = vmul.f32 %v5978, %v6055
    %v6154 = vmul.f32 %v5979, %v6060
    %v6155 = vmul.f32 %v5980, %v6065
    %v6156 = vmul.f32 %v5981, %v6070
    %v6157 = vmul.f32 %v5982, %v6075
    %v6158 = vmul.f32 %v5983, %v6080
    %v6159 = vmul.f32 %v5984, %v6085
    %v6160 = vmul.f32 %v5985, %v6090
    %v6161 = vmul.f32 %v5986, %v6095
    %v6162 = vmul.f32 %v5987, %v6100
    %v6163 = vmul.f32 %v5988, %v6105
    %v6164 = vmul.f32 %v5989, %v6110
    %v6165 = vmul.f32 %v5990, %v6115
    %v6166 = vmul.f32 %v5991, %v6120
    %v6167 = vmul.f32 %v5992, %v6125
    %v6168 = vmul.f32 %v5993, %v6130
    %v6169 = vmul.f32 %v5994, %v6135
    %v6170 = vmul.f32 %v5995, %v6140
    %v6171 = vmul.f32 %v5996, %v6145
    %6172 = vst.msk [vmem:[#allocation3] sm:$0xff] %vm659, 0.0
    %6173 = vst.msk [vmem:[#allocation3 + $0x8] sm:$0xff] %vm659, 0.0
    %6174 = vst.msk [vmem:[#allocation3 + $0x10] sm:$0xff] %vm291, %v6147
    %6175 = vst.msk [vmem:[#allocation3 + $0x18] sm:$0xff] %vm291, %v6148
    %6176 = vst.msk [vmem:[#allocation3 + $0x20] sm:$0xff] %vm291, %v6149
    %6177 = vst.msk [vmem:[#allocation3 + $0x28] sm:$0xff] %vm291, %v6150
    %6178 = vst.msk [vmem:[#allocation3 + $0x30] sm:$0xff] %vm291, %v6151
    %6179 = vst.msk [vmem:[#allocation3 + $0x38] sm:$0xff] %vm291, %v6152
    %6180 = vst.msk [vmem:[#allocation3 + $0x40] sm:$0xff] %vm291, %v6153
    %6181 = vst.msk [vmem:[#allocation3 + $0x48] sm:$0xff] %vm291, %v6154
    %6182 = vst.msk [vmem:[#allocation3 + $0x50] sm:$0xff] %vm291, %v6155
    %6183 = vst.msk [vmem:[#allocation3 + $0x58] sm:$0xff] %vm291, %v6156
    %6184 = vst.msk [vmem:[#allocation3 + $0x60] sm:$0xff] %vm291, %v6157
    %6185 = vst.msk [vmem:[#allocation3 + $0x68] sm:$0xff] %vm291, %v6158
    %6186 = vst.msk [vmem:[#allocation3 + $0x70] sm:$0xff] %vm291, %v6159
    %6187 = vst.msk [vmem:[#allocation3 + $0x78] sm:$0xff] %vm291, %v6160
    %6188 = vst.msk [vmem:[#allocation3 + $0x80] sm:$0xff] %vm291, %v6161
    %6189 = vst.msk [vmem:[#allocation3 + $0x88] sm:$0xff] %vm291, %v6162
    %6190 = vst.msk [vmem:[#allocation3 + $0x90] sm:$0xff] %vm291, %v6163
    %6191 = vst.msk [vmem:[#allocation3 + $0x98] sm:$0xff] %vm291, %v6164
    %6192 = vst.msk [vmem:[#allocation3 + $0xa0] sm:$0xff] %vm291, %v6165
    %6193 = vst.msk [vmem:[#allocation3 + $0xa8] sm:$0xff] %vm291, %v6166
    %6194 = vst.msk [vmem:[#allocation3 + $0xb0] sm:$0xff] %vm291, %v6167
    %6195 = vst.msk [vmem:[#allocation3 + $0xb8] sm:$0xff] %vm291, %v6168
    %6196 = vst.msk [vmem:[#allocation3 + $0xc0] sm:$0xff] %vm291, %v6169
    %6197 = vst.msk [vmem:[#allocation3 + $0xc8] sm:$0xff] %vm291, %v6170
    %6198 = vst.msk [vmem:[#allocation3 + $0xd0] sm:$0xff] %vm291, %v6171
    %6199 = vst.msk [vmem:[#allocation3 + $0xd8] sm:$0xff] %vm659, 0.0
    %6200 = vst.msk [vmem:[#allocation3 + $0xe0] sm:$0xff] %vm659, 0.0
    %v6201 = vld [vmem:[#allocation3 + $0x5] sm:$0xff]
    %v6202 = vld [vmem:[#allocation3 + $0xd] sm:$0xff]
    %v6203 = vld [vmem:[#allocation3 + $0x15] sm:$0xff]
    %v6204 = vld [vmem:[#allocation3 + $0x1d] sm:$0xff]
    %v6205 = vld [vmem:[#allocation3 + $0x25] sm:$0xff]
    %v6206 = vld [vmem:[#allocation3 + $0x2d] sm:$0xff]
    %v6207 = vld [vmem:[#allocation3 + $0x35] sm:$0xff]
    %v6208 = vld [vmem:[#allocation3 + $0x3d] sm:$0xff]
    %v6209 = vld [vmem:[#allocation3 + $0x45] sm:$0xff]
    %v6210 = vld [vmem:[#allocation3 + $0x4d] sm:$0xff]
    %v6211 = vld [vmem:[#allocation3 + $0x55] sm:$0xff]
    %v6212 = vld [vmem:[#allocation3 + $0x5d] sm:$0xff]
    %v6213 = vld [vmem:[#allocation3 + $0x65] sm:$0xff]
    %v6214 = vld [vmem:[#allocation3 + $0x6d] sm:$0xff]
    %v6215 = vld [vmem:[#allocation3 + $0x75] sm:$0xff]
    %v6216 = vld [vmem:[#allocation3 + $0x7d] sm:$0xff]
    %v6217 = vld [vmem:[#allocation3 + $0x85] sm:$0xff]
    %v6218 = vld [vmem:[#allocation3 + $0x8d] sm:$0xff]
    %v6219 = vld [vmem:[#allocation3 + $0x95] sm:$0xff]
    %v6220 = vld [vmem:[#allocation3 + $0x9d] sm:$0xff]
    %v6221 = vld [vmem:[#allocation3 + $0xa5] sm:$0xff]
    %v6222 = vld [vmem:[#allocation3 + $0xad] sm:$0xff]
    %v6223 = vld [vmem:[#allocation3 + $0xb5] sm:$0xff]
    %v6224 = vld [vmem:[#allocation3 + $0xbd] sm:$0xff]
    %v6225 = vld [vmem:[#allocation3 + $0xc5] sm:$0xff]
    %v6226 = vld [vmem:[#allocation23] sm:$0xff]
    %v6227 = vld [vmem:[#allocation23 + $0x8] sm:$0xff]
    %v6228 = vld [vmem:[#allocation23 + $0x10] sm:$0xff]
    %v6229 = vld [vmem:[#allocation23 + $0x18] sm:$0xff]
    %v6230 = vld [vmem:[#allocation3 + $0x6] sm:$0xff]
    %v6231 = vld [vmem:[#allocation3 + $0xe] sm:$0xff]
    %v6232 = vld [vmem:[#allocation3 + $0x16] sm:$0xff]
    %v6233 = vld [vmem:[#allocation3 + $0x1e] sm:$0xff]
    %v6234 = vld [vmem:[#allocation3 + $0x26] sm:$0xff]
    %v6235 = vld [vmem:[#allocation3 + $0x2e] sm:$0xff]
    %v6236 = vld [vmem:[#allocation3 + $0x36] sm:$0xff]
    %v6237 = vld [vmem:[#allocation3 + $0x3e] sm:$0xff]
    %v6238 = vld [vmem:[#allocation3 + $0x46] sm:$0xff]
    %v6239 = vld [vmem:[#allocation3 + $0x4e] sm:$0xff]
    %v6240 = vld [vmem:[#allocation3 + $0x56] sm:$0xff]
    %v6241 = vld [vmem:[#allocation3 + $0x5e] sm:$0xff]
    %v6242 = vld [vmem:[#allocation3 + $0x66] sm:$0xff]
    %v6243 = vld [vmem:[#allocation3 + $0x6e] sm:$0xff]
    %v6244 = vld [vmem:[#allocation3 + $0x76] sm:$0xff]
    %v6245 = vld [vmem:[#allocation3 + $0x7e] sm:$0xff]
    %v6246 = vld [vmem:[#allocation3 + $0x86] sm:$0xff]
    %v6247 = vld [vmem:[#allocation3 + $0x8e] sm:$0xff]
    %v6248 = vld [vmem:[#allocation3 + $0x96] sm:$0xff]
    %v6249 = vld [vmem:[#allocation3 + $0x9e] sm:$0xff]
    %v6250 = vld [vmem:[#allocation3 + $0xa6] sm:$0xff]
    %v6251 = vld [vmem:[#allocation3 + $0xae] sm:$0xff]
    %v6252 = vld [vmem:[#allocation3 + $0xb6] sm:$0xff]
    %v6253 = vld [vmem:[#allocation3 + $0xbe] sm:$0xff]
    %v6254 = vld [vmem:[#allocation3 + $0xc6] sm:$0xff]
    %s6255 = scalar_lea.vmem [#allocation23], 32
    %v6256 = vld [vmem:[%s6255] sm:$0xff]
    %v6257 = vld [vmem:[%s6255 + $0x8] sm:$0xff]
    %v6258 = vld [vmem:[%s6255 + $0x10] sm:$0xff]
    %v6259 = vld [vmem:[%s6255 + $0x18] sm:$0xff]
    %v6261 = vsel %vm291, %v6230, 0
    %v6264 = vsel %vm291, %v6231, 0
    %v6267 = vsel %vm291, %v6232, 0
    %v6270 = vsel %vm291, %v6233, 0
    %v6273 = vsel %vm291, %v6234, 0
    %v6276 = vsel %vm291, %v6235, 0
    %v6279 = vsel %vm291, %v6236, 0
    %v6282 = vsel %vm291, %v6237, 0
    %v6285 = vsel %vm291, %v6238, 0
    %v6288 = vsel %vm291, %v6239, 0
    %v6291 = vsel %vm291, %v6240, 0
    %v6294 = vsel %vm291, %v6241, 0
    %v6297 = vsel %vm291, %v6242, 0
    %v6300 = vsel %vm291, %v6243, 0
    %v6303 = vsel %vm291, %v6244, 0
    %v6306 = vsel %vm291, %v6245, 0
    %v6309 = vsel %vm291, %v6246, 0
    %v6312 = vsel %vm291, %v6247, 0
    %v6315 = vsel %vm291, %v6248, 0
    %v6318 = vsel %vm291, %v6249, 0
    %v6321 = vsel %vm291, %v6250, 0
    %v6324 = vsel %vm291, %v6251, 0
    %v6327 = vsel %vm291, %v6252, 0
    %v6330 = vsel %vm291, %v6253, 0
    %v6333 = vsel %vm291, %v6254, 0
    %6335 = vmatprep.subr.mxu0 0.0
    %6336 = vmatpush1.msra.mxu0 %v6256
    %6337 = vmatprep.subr.mxu0 0.0
    %6338 = vmatpush1.msra.mxu0 %v6257
    %6339 = vmatprep.subr.mxu0 0.0
    %6340 = vmatpush1.msra.mxu0 %v6258
    %6341 = vmatprep.subr.mxu0 0.0
    %6342 = vmatpush1.msra.mxu0 %v6259
    %6343 = vmatprep.subr.mxu0 0.0
    %6344 = vmatpush1.msra.mxu0 0.0
    %6345 = vmatprep.subr.mxu0 0.0
    %6346 = vmatpush1.msra.mxu0 0.0
    %6347 = vmatprep.subr.mxu0 0.0
    %6348 = vmatpush1.msra.mxu0 0.0
    %6349 = vmatprep.subr.mxu0 0.0
    %6350 = vmatpush1.msra.mxu0 0.0
    %6351 = vmatprep.subr.mxu0 0.0
    %6352 = vmatpush1.msra.mxu0 0.0
    %6353 = vmatprep.subr.mxu0 0.0
    %6354 = vmatpush1.msra.mxu0 0.0
    %6355 = vmatprep.subr.mxu0 0.0
    %6356 = vmatpush1.msra.mxu0 0.0
    %6357 = vmatprep.subr.mxu0 0.0
    %6358 = vmatpush1.msra.mxu0 0.0
    %6359 = vmatprep.subr.mxu0 0.0
    %6360 = vmatpush1.msra.mxu0 0.0
    %6361 = vmatprep.subr.mxu0 0.0
    %6362 = vmatpush1.msra.mxu0 0.0
    %6363 = vmatprep.subr.mxu0 0.0
    %6364 = vmatpush1.msra.mxu0 0.0
    %6365 = vmatprep.subr.mxu0 0.0
    %6366 = vmatpush1.msra.mxu0 0.0
    %6367 = vmatprep.subr.mxu0 0.0
    %6368 = vmatpush1.msra.mxu0 0.0
    %6369 = vmatprep.subr.mxu0 0.0
    %6370 = vmatpush1.msra.mxu0 0.0
    %6371 = vmatprep.subr.mxu0 0.0
    %6372 = vmatpush1.msra.mxu0 0.0
    %6373 = vmatprep.subr.mxu0 0.0
    %6374 = vmatpush1.msra.mxu0 0.0
    %6375 = vmatprep.subr.mxu0 0.0
    %6376 = vmatpush1.msra.mxu0 0.0
    %6377 = vmatprep.subr.mxu0 0.0
    %6378 = vmatpush1.msra.mxu0 0.0
    %6379 = vmatprep.subr.mxu0 0.0
    %6380 = vmatpush1.msra.mxu0 0.0
    %6381 = vmatprep.subr.mxu0 0.0
    %6382 = vmatpush1.msra.mxu0 0.0
    %6383 = vmatprep.subr.mxu0 0.0
    %6384 = vmatpush1.msra.mxu0 0.0
    %6385 = vmatprep.subr.mxu0 0.0
    %6386 = vmatpush1.msra.mxu0 0.0
    %6387 = vmatprep.subr.mxu0 0.0
    %6388 = vmatpush1.msra.mxu0 0.0
    %6389 = vmatprep.subr.mxu0 0.0
    %6390 = vmatpush1.msra.mxu0 0.0
    %6391 = vmatprep.subr.mxu0 0.0
    %6392 = vmatpush1.msra.mxu0 0.0
    %6393 = vmatprep.subr.mxu0 0.0
    %6394 = vmatpush1.msra.mxu0 0.0
    %6395 = vmatprep.subr.mxu0 0.0
    %6396 = vmatpush1.msra.mxu0 0.0
    %6397 = vmatprep.subr.mxu0 0.0
    %6398 = vmatpush1.msra.mxu0 0.0
    %6399 = vmatprep.mubr.f32.mxu0 0.0
    %6400 = vmatmul.mubr.f32.gmra.mrb[0].mxu0 %v6261
    %v6401 = vpop.f32.mrb[0].mxu0
    %v6402 = vadd.f32 0.0, %v6401
    %v6403 = vpop.f32.mrb[0].mxu0
    %6404 = vmatprep.mubr.f32.mxu0 0.0
    %6405 = vmatmul.mubr.f32.gmra.mrb[0].mxu0 %v6264
    %v6406 = vpop.f32.mrb[0].mxu0
    %v6407 = vadd.f32 0.0, %v6406
    %v6408 = vpop.f32.mrb[0].mxu0
    %6409 = vmatprep.mubr.f32.mxu0 0.0
    %6410 = vmatmul.mubr.f32.gmra.mrb[0].mxu0 %v6267
    %v6411 = vpop.f32.mrb[0].mxu0
    %v6412 = vadd.f32 0.0, %v6411
    %v6413 = vpop.f32.mrb[0].mxu0
    %6414 = vmatprep.mubr.f32.mxu0 0.0
    %6415 = vmatmul.mubr.f32.gmra.mrb[0].mxu0 %v6270
    %v6416 = vpop.f32.mrb[0].mxu0
    %v6417 = vadd.f32 0.0, %v6416
    %v6418 = vpop.f32.mrb[0].mxu0
    %6419 = vmatprep.mubr.f32.mxu0 0.0
    %6420 = vmatmul.mubr.f32.gmra.mrb[0].mxu0 %v6273
    %v6421 = vpop.f32.mrb[0].mxu0
    %v6422 = vadd.f32 0.0, %v6421
    %v6423 = vpop.f32.mrb[0].mxu0
    %6424 = vmatprep.mubr.f32.mxu0 0.0
    %6425 = vmatmul.mubr.f32.gmra.mrb[0].mxu0 %v6276
    %v6426 = vpop.f32.mrb[0].mxu0
    %v6427 = vadd.f32 0.0, %v6426
    %v6428 = vpop.f32.mrb[0].mxu0
    %6429 = vmatprep.mubr.f32.mxu0 0.0
    %6430 = vmatmul.mubr.f32.gmra.mrb[0].mxu0 %v6279
    %v6431 = vpop.f32.mrb[0].mxu0
    %v6432 = vadd.f32 0.0, %v6431
    %v6433 = vpop.f32.mrb[0].mxu0
    %6434 = vmatprep.mubr.f32.mxu0 0.0
    %6435 = vmatmul.mubr.f32.gmra.mrb[0].mxu0 %v6282
    %v6436 = vpop.f32.mrb[0].mxu0
    %v6437 = vadd.f32 0.0, %v6436
    %v6438 = vpop.f32.mrb[0].mxu0
    %6439 = vmatprep.mubr.f32.mxu0 0.0
    %6440 = vmatmul.mubr.f32.gmra.mrb[0].mxu0 %v6285
    %v6441 = vpop.f32.mrb[0].mxu0
    %v6442 = vadd.f32 0.0, %v6441
    %v6443 = vpop.f32.mrb[0].mxu0
    %6444 = vmatprep.mubr.f32.mxu0 0.0
    %6445 = vmatmul.mubr.f32.gmra.mrb[0].mxu0 %v6288
    %v6446 = vpop.f32.mrb[0].mxu0
    %v6447 = vadd.f32 0.0, %v6446
    %v6448 = vpop.f32.mrb[0].mxu0
    %6449 = vmatprep.mubr.f32.mxu0 0.0
    %6450 = vmatmul.mubr.f32.gmra.mrb[0].mxu0 %v6291
    %v6451 = vpop.f32.mrb[0].mxu0
    %v6452 = vadd.f32 0.0, %v6451
    %v6453 = vpop.f32.mrb[0].mxu0
    %6454 = vmatprep.mubr.f32.mxu0 0.0
    %6455 = vmatmul.mubr.f32.gmra.mrb[0].mxu0 %v6294
    %v6456 = vpop.f32.mrb[0].mxu0
    %v6457 = vadd.f32 0.0, %v6456
    %v6458 = vpop.f32.mrb[0].mxu0
    %6459 = vmatprep.mubr.f32.mxu0 0.0
    %6460 = vmatmul.mubr.f32.gmra.mrb[0].mxu0 %v6297
    %v6461 = vpop.f32.mrb[0].mxu0
    %v6462 = vadd.f32 0.0, %v6461
    %v6463 = vpop.f32.mrb[0].mxu0
    %6464 = vmatprep.mubr.f32.mxu0 0.0
    %6465 = vmatmul.mubr.f32.gmra.mrb[0].mxu0 %v6300
    %v6466 = vpop.f32.mrb[0].mxu0
    %v6467 = vadd.f32 0.0, %v6466
    %v6468 = vpop.f32.mrb[0].mxu0
    %6469 = vmatprep.mubr.f32.mxu0 0.0
    %6470 = vmatmul.mubr.f32.gmra.mrb[0].mxu0 %v6303
    %v6471 = vpop.f32.mrb[0].mxu0
    %v6472 = vadd.f32 0.0, %v6471
    %v6473 = vpop.f32.mrb[0].mxu0
    %6474 = vmatprep.mubr.f32.mxu0 0.0
    %6475 = vmatmul.mubr.f32.gmra.mrb[0].mxu0 %v6306
    %v6476 = vpop.f32.mrb[0].mxu0
    %v6477 = vadd.f32 0.0, %v6476
    %v6478 = vpop.f32.mrb[0].mxu0
    %6479 = vmatprep.mubr.f32.mxu0 0.0
    %6480 = vmatmul.mubr.f32.gmra.mrb[0].mxu0 %v6309
    %v6481 = vpop.f32.mrb[0].mxu0
    %v6482 = vadd.f32 0.0, %v6481
    %v6483 = vpop.f32.mrb[0].mxu0
    %6484 = vmatprep.mubr.f32.mxu0 0.0
    %6485 = vmatmul.mubr.f32.gmra.mrb[0].mxu0 %v6312
    %v6486 = vpop.f32.mrb[0].mxu0
    %v6487 = vadd.f32 0.0, %v6486
    %v6488 = vpop.f32.mrb[0].mxu0
    %6489 = vmatprep.mubr.f32.mxu0 0.0
    %6490 = vmatmul.mubr.f32.gmra.mrb[0].mxu0 %v6315
    %v6491 = vpop.f32.mrb[0].mxu0
    %v6492 = vadd.f32 0.0, %v6491
    %v6493 = vpop.f32.mrb[0].mxu0
    %6494 = vmatprep.mubr.f32.mxu0 0.0
    %6495 = vmatmul.mubr.f32.gmra.mrb[0].mxu0 %v6318
    %v6496 = vpop.f32.mrb[0].mxu0
    %v6497 = vadd.f32 0.0, %v6496
    %v6498 = vpop.f32.mrb[0].mxu0
    %6499 = vmatprep.mubr.f32.mxu0 0.0
    %6500 = vmatmul.mubr.f32.gmra.mrb[0].mxu0 %v6321
    %v6501 = vpop.f32.mrb[0].mxu0
    %v6502 = vadd.f32 0.0, %v6501
    %v6503 = vpop.f32.mrb[0].mxu0
    %6504 = vmatprep.mubr.f32.mxu0 0.0
    %6505 = vmatmul.mubr.f32.gmra.mrb[0].mxu0 %v6324
    %v6506 = vpop.f32.mrb[0].mxu0
    %v6507 = vadd.f32 0.0, %v6506
    %v6508 = vpop.f32.mrb[0].mxu0
    %6509 = vmatprep.mubr.f32.mxu0 0.0
    %6510 = vmatmul.mubr.f32.gmra.mrb[0].mxu0 %v6327
    %v6511 = vpop.f32.mrb[0].mxu0
    %v6512 = vadd.f32 0.0, %v6511
    %v6513 = vpop.f32.mrb[0].mxu0
    %6514 = vmatprep.mubr.f32.mxu0 0.0
    %6515 = vmatmul.mubr.f32.gmra.mrb[0].mxu0 %v6330
    %v6516 = vpop.f32.mrb[0].mxu0
    %v6517 = vadd.f32 0.0, %v6516
    %v6518 = vpop.f32.mrb[0].mxu0
    %6519 = vmatprep.mubr.f32.mxu0 0.0
    %6520 = vmatmul.mubr.f32.gmra.mrb[0].mxu0 %v6333
    %v6521 = vpop.f32.mrb[0].mxu0
    %v6522 = vadd.f32 0.0, %v6521
    %v6523 = vpop.f32.mrb[0].mxu0
    %6524 = vdwg.mxu0
    %v6526 = vsel %vm291, %v6201, 0
    %v6529 = vsel %vm291, %v6202, 0
    %v6532 = vsel %vm291, %v6203, 0
    %v6535 = vsel %vm291, %v6204, 0
    %v6538 = vsel %vm291, %v6205, 0
    %v6541 = vsel %vm291, %v6206, 0
    %v6544 = vsel %vm291, %v6207, 0
    %v6547 = vsel %vm291, %v6208, 0
    %v6550 = vsel %vm291, %v6209, 0
    %v6553 = vsel %vm291, %v6210, 0
    %v6556 = vsel %vm291, %v6211, 0
    %v6559 = vsel %vm291, %v6212, 0
    %v6562 = vsel %vm291, %v6213, 0
    %v6565 = vsel %vm291, %v6214, 0
    %v6568 = vsel %vm291, %v6215, 0
    %v6571 = vsel %vm291, %v6216, 0
    %v6574 = vsel %vm291, %v6217, 0
    %v6577 = vsel %vm291, %v6218, 0
    %v6580 = vsel %vm291, %v6219, 0
    %v6583 = vsel %vm291, %v6220, 0
    %v6586 = vsel %vm291, %v6221, 0
    %v6589 = vsel %vm291, %v6222, 0
    %v6592 = vsel %vm291, %v6223, 0
    %v6595 = vsel %vm291, %v6224, 0
    %v6598 = vsel %vm291, %v6225, 0
    %6600 = vmatprep.subr.mxu0 0.0
    %6601 = vmatpush1.msra.mxu0 %v6226
    %6602 = vmatprep.subr.mxu0 0.0
    %6603 = vmatpush1.msra.mxu0 %v6227
    %6604 = vmatprep.subr.mxu0 0.0
    %6605 = vmatpush1.msra.mxu0 %v6228
    %6606 = vmatprep.subr.mxu0 0.0
    %6607 = vmatpush1.msra.mxu0 %v6229
    %6608 = vmatprep.subr.mxu0 0.0
    %6609 = vmatpush1.msra.mxu0 0.0
    %6610 = vmatprep.subr.mxu0 0.0
    %6611 = vmatpush1.msra.mxu0 0.0
    %6612 = vmatprep.subr.mxu0 0.0
    %6613 = vmatpush1.msra.mxu0 0.0
    %6614 = vmatprep.subr.mxu0 0.0
    %6615 = vmatpush1.msra.mxu0 0.0
    %6616 = vmatprep.subr.mxu0 0.0
    %6617 = vmatpush1.msra.mxu0 0.0
    %6618 = vmatprep.subr.mxu0 0.0
    %6619 = vmatpush1.msra.mxu0 0.0
    %6620 = vmatprep.subr.mxu0 0.0
    %6621 = vmatpush1.msra.mxu0 0.0
    %6622 = vmatprep.subr.mxu0 0.0
    %6623 = vmatpush1.msra.mxu0 0.0
    %6624 = vmatprep.subr.mxu0 0.0
    %6625 = vmatpush1.msra.mxu0 0.0
    %6626 = vmatprep.subr.mxu0 0.0
    %6627 = vmatpush1.msra.mxu0 0.0
    %6628 = vmatprep.subr.mxu0 0.0
    %6629 = vmatpush1.msra.mxu0 0.0
    %6630 = vmatprep.subr.mxu0 0.0
    %6631 = vmatpush1.msra.mxu0 0.0
    %6632 = vmatprep.subr.mxu0 0.0
    %6633 = vmatpush1.msra.mxu0 0.0
    %6634 = vmatprep.subr.mxu0 0.0
    %6635 = vmatpush1.msra.mxu0 0.0
    %6636 = vmatprep.subr.mxu0 0.0
    %6637 = vmatpush1.msra.mxu0 0.0
    %6638 = vmatprep.subr.mxu0 0.0
    %6639 = vmatpush1.msra.mxu0 0.0
    %6640 = vmatprep.subr.mxu0 0.0
    %6641 = vmatpush1.msra.mxu0 0.0
    %6642 = vmatprep.subr.mxu0 0.0
    %6643 = vmatpush1.msra.mxu0 0.0
    %6644 = vmatprep.subr.mxu0 0.0
    %6645 = vmatpush1.msra.mxu0 0.0
    %6646 = vmatprep.subr.mxu0 0.0
    %6647 = vmatpush1.msra.mxu0 0.0
    %6648 = vmatprep.subr.mxu0 0.0
    %6649 = vmatpush1.msra.mxu0 0.0
    %6650 = vmatprep.subr.mxu0 0.0
    %6651 = vmatpush1.msra.mxu0 0.0
    %6652 = vmatprep.subr.mxu0 0.0
    %6653 = vmatpush1.msra.mxu0 0.0
    %6654 = vmatprep.subr.mxu0 0.0
    %6655 = vmatpush1.msra.mxu0 0.0
    %6656 = vmatprep.subr.mxu0 0.0
    %6657 = vmatpush1.msra.mxu0 0.0
    %6658 = vmatprep.subr.mxu0 0.0
    %6659 = vmatpush1.msra.mxu0 0.0
    %6660 = vmatprep.subr.mxu0 0.0
    %6661 = vmatpush1.msra.mxu0 0.0
    %6662 = vmatprep.subr.mxu0 0.0
    %6663 = vmatpush1.msra.mxu0 0.0
    %6664 = vmatprep.mubr.f32.mxu0 0.0
    %6665 = vmatmul.mubr.f32.gmra.mrb[0].mxu0 %v6526
    %v6666 = vpop.f32.mrb[0].mxu0
    %v6667 = vadd.f32 %v6402, %v6666
    %v6668 = vpop.f32.mrb[0].mxu0
    %6669 = vmatprep.mubr.f32.mxu0 0.0
    %6670 = vmatmul.mubr.f32.gmra.mrb[0].mxu0 %v6529
    %v6671 = vpop.f32.mrb[0].mxu0
    %v6672 = vadd.f32 %v6407, %v6671
    %v6673 = vpop.f32.mrb[0].mxu0
    %6674 = vmatprep.mubr.f32.mxu0 0.0
    %6675 = vmatmul.mubr.f32.gmra.mrb[0].mxu0 %v6532
    %v6676 = vpop.f32.mrb[0].mxu0
    %v6677 = vadd.f32 %v6412, %v6676
    %v6678 = vpop.f32.mrb[0].mxu0
    %6679 = vmatprep.mubr.f32.mxu0 0.0
    %6680 = vmatmul.mubr.f32.gmra.mrb[0].mxu0 %v6535
    %v6681 = vpop.f32.mrb[0].mxu0
    %v6682 = vadd.f32 %v6417, %v6681
    %v6683 = vpop.f32.mrb[0].mxu0
    %6684 = vmatprep.mubr.f32.mxu0 0.0
    %6685 = vmatmul.mubr.f32.gmra.mrb[0].mxu0 %v6538
    %v6686 = vpop.f32.mrb[0].mxu0
    %v6687 = vadd.f32 %v6422, %v6686
    %v6688 = vpop.f32.mrb[0].mxu0
    %6689 = vmatprep.mubr.f32.mxu0 0.0
    %6690 = vmatmul.mubr.f32.gmra.mrb[0].mxu0 %v6541
    %v6691 = vpop.f32.mrb[0].mxu0
    %v6692 = vadd.f32 %v6427, %v6691
    %v6693 = vpop.f32.mrb[0].mxu0
    %6694 = vmatprep.mubr.f32.mxu0 0.0
    %6695 = vmatmul.mubr.f32.gmra.mrb[0].mxu0 %v6544
    %v6696 = vpop.f32.mrb[0].mxu0
    %v6697 = vadd.f32 %v6432, %v6696
    %v6698 = vpop.f32.mrb[0].mxu0
    %6699 = vmatprep.mubr.f32.mxu0 0.0
    %6700 = vmatmul.mubr.f32.gmra.mrb[0].mxu0 %v6547
    %v6701 = vpop.f32.mrb[0].mxu0
    %v6702 = vadd.f32 %v6437, %v6701
    %v6703 = vpop.f32.mrb[0].mxu0
    %6704 = vmatprep.mubr.f32.mxu0 0.0
    %6705 = vmatmul.mubr.f32.gmra.mrb[0].mxu0 %v6550
    %v6706 = vpop.f32.mrb[0].mxu0
    %v6707 = vadd.f32 %v6442, %v6706
    %v6708 = vpop.f32.mrb[0].mxu0
    %6709 = vmatprep.mubr.f32.mxu0 0.0
    %6710 = vmatmul.mubr.f32.gmra.mrb[0].mxu0 %v6553
    %v6711 = vpop.f32.mrb[0].mxu0
    %v6712 = vadd.f32 %v6447, %v6711
    %v6713 = vpop.f32.mrb[0].mxu0
    %6714 = vmatprep.mubr.f32.mxu0 0.0
    %6715 = vmatmul.mubr.f32.gmra.mrb[0].mxu0 %v6556
    %v6716 = vpop.f32.mrb[0].mxu0
    %v6717 = vadd.f32 %v6452, %v6716
    %v6718 = vpop.f32.mrb[0].mxu0
    %6719 = vmatprep.mubr.f32.mxu0 0.0
    %6720 = vmatmul.mubr.f32.gmra.mrb[0].mxu0 %v6559
    %v6721 = vpop.f32.mrb[0].mxu0
    %v6722 = vadd.f32 %v6457, %v6721
    %v6723 = vpop.f32.mrb[0].mxu0
    %6724 = vmatprep.mubr.f32.mxu0 0.0
    %6725 = vmatmul.mubr.f32.gmra.mrb[0].mxu0 %v6562
    %v6726 = vpop.f32.mrb[0].mxu0
    %v6727 = vadd.f32 %v6462, %v6726
    %v6728 = vpop.f32.mrb[0].mxu0
    %6729 = vmatprep.mubr.f32.mxu0 0.0
    %6730 = vmatmul.mubr.f32.gmra.mrb[0].mxu0 %v6565
    %v6731 = vpop.f32.mrb[0].mxu0
    %v6732 = vadd.f32 %v6467, %v6731
    %v6733 = vpop.f32.mrb[0].mxu0
    %6734 = vmatprep.mubr.f32.mxu0 0.0
    %6735 = vmatmul.mubr.f32.gmra.mrb[0].mxu0 %v6568
    %v6736 = vpop.f32.mrb[0].mxu0
    %v6737 = vadd.f32 %v6472, %v6736
    %v6738 = vpop.f32.mrb[0].mxu0
    %6739 = vmatprep.mubr.f32.mxu0 0.0
    %6740 = vmatmul.mubr.f32.gmra.mrb[0].mxu0 %v6571
    %v6741 = vpop.f32.mrb[0].mxu0
    %v6742 = vadd.f32 %v6477, %v6741
    %v6743 = vpop.f32.mrb[0].mxu0
    %6744 = vmatprep.mubr.f32.mxu0 0.0
    %6745 = vmatmul.mubr.f32.gmra.mrb[0].mxu0 %v6574
    %v6746 = vpop.f32.mrb[0].mxu0
    %v6747 = vadd.f32 %v6482, %v6746
    %v6748 = vpop.f32.mrb[0].mxu0
    %6749 = vmatprep.mubr.f32.mxu0 0.0
    %6750 = vmatmul.mubr.f32.gmra.mrb[0].mxu0 %v6577
    %v6751 = vpop.f32.mrb[0].mxu0
    %v6752 = vadd.f32 %v6487, %v6751
    %v6753 = vpop.f32.mrb[0].mxu0
    %6754 = vmatprep.mubr.f32.mxu0 0.0
    %6755 = vmatmul.mubr.f32.gmra.mrb[0].mxu0 %v6580
    %v6756 = vpop.f32.mrb[0].mxu0
    %v6757 = vadd.f32 %v6492, %v6756
    %v6758 = vpop.f32.mrb[0].mxu0
    %6759 = vmatprep.mubr.f32.mxu0 0.0
    %6760 = vmatmul.mubr.f32.gmra.mrb[0].mxu0 %v6583
    %v6761 = vpop.f32.mrb[0].mxu0
    %v6762 = vadd.f32 %v6497, %v6761
    %v6763 = vpop.f32.mrb[0].mxu0
    %6764 = vmatprep.mubr.f32.mxu0 0.0
    %6765 = vmatmul.mubr.f32.gmra.mrb[0].mxu0 %v6586
    %v6766 = vpop.f32.mrb[0].mxu0
    %v6767 = vadd.f32 %v6502, %v6766
    %v6768 = vpop.f32.mrb[0].mxu0
    %6769 = vmatprep.mubr.f32.mxu0 0.0
    %6770 = vmatmul.mubr.f32.gmra.mrb[0].mxu0 %v6589
    %v6771 = vpop.f32.mrb[0].mxu0
    %v6772 = vadd.f32 %v6507, %v6771
    %v6773 = vpop.f32.mrb[0].mxu0
    %6774 = vmatprep.mubr.f32.mxu0 0.0
    %6775 = vmatmul.mubr.f32.gmra.mrb[0].mxu0 %v6592
    %v6776 = vpop.f32.mrb[0].mxu0
    %v6777 = vadd.f32 %v6512, %v6776
    %v6778 = vpop.f32.mrb[0].mxu0
    %6779 = vmatprep.mubr.f32.mxu0 0.0
    %6780 = vmatmul.mubr.f32.gmra.mrb[0].mxu0 %v6595
    %v6781 = vpop.f32.mrb[0].mxu0
    %v6782 = vadd.f32 %v6517, %v6781
    %v6783 = vpop.f32.mrb[0].mxu0
    %6784 = vmatprep.mubr.f32.mxu0 0.0
    %6785 = vmatmul.mubr.f32.gmra.mrb[0].mxu0 %v6598
    %v6786 = vpop.f32.mrb[0].mxu0
    %v6787 = vadd.f32 %v6522, %v6786
    %v6788 = vpop.f32.mrb[0].mxu0
    %6789 = vdwg.mxu0
    %v6790 = vld [vmem:[#allocation3 + $0x7] sm:$0xff]
    %v6791 = vld [vmem:[#allocation3 + $0xf] sm:$0xff]
    %v6792 = vld [vmem:[#allocation3 + $0x17] sm:$0xff]
    %v6793 = vld [vmem:[#allocation3 + $0x1f] sm:$0xff]
    %v6794 = vld [vmem:[#allocation3 + $0x27] sm:$0xff]
    %v6795 = vld [vmem:[#allocation3 + $0x2f] sm:$0xff]
    %v6796 = vld [vmem:[#allocation3 + $0x37] sm:$0xff]
    %v6797 = vld [vmem:[#allocation3 + $0x3f] sm:$0xff]
    %v6798 = vld [vmem:[#allocation3 + $0x47] sm:$0xff]
    %v6799 = vld [vmem:[#allocation3 + $0x4f] sm:$0xff]
    %v6800 = vld [vmem:[#allocation3 + $0x57] sm:$0xff]
    %v6801 = vld [vmem:[#allocation3 + $0x5f] sm:$0xff]
    %v6802 = vld [vmem:[#allocation3 + $0x67] sm:$0xff]
    %v6803 = vld [vmem:[#allocation3 + $0x6f] sm:$0xff]
    %v6804 = vld [vmem:[#allocation3 + $0x77] sm:$0xff]
    %v6805 = vld [vmem:[#allocation3 + $0x7f] sm:$0xff]
    %v6806 = vld [vmem:[#allocation3 + $0x87] sm:$0xff]
    %v6807 = vld [vmem:[#allocation3 + $0x8f] sm:$0xff]
    %v6808 = vld [vmem:[#allocation3 + $0x97] sm:$0xff]
    %v6809 = vld [vmem:[#allocation3 + $0x9f] sm:$0xff]
    %v6810 = vld [vmem:[#allocation3 + $0xa7] sm:$0xff]
    %v6811 = vld [vmem:[#allocation3 + $0xaf] sm:$0xff]
    %v6812 = vld [vmem:[#allocation3 + $0xb7] sm:$0xff]
    %v6813 = vld [vmem:[#allocation3 + $0xbf] sm:$0xff]
    %v6814 = vld [vmem:[#allocation3 + $0xc7] sm:$0xff]
    %s6815 = scalar_lea.vmem [#allocation23], 64
    %v6816 = vld [vmem:[%s6815] sm:$0xff]
    %v6817 = vld [vmem:[%s6815 + $0x8] sm:$0xff]
    %v6818 = vld [vmem:[%s6815 + $0x10] sm:$0xff]
    %v6819 = vld [vmem:[%s6815 + $0x18] sm:$0xff]
    %v6821 = vsel %vm291, %v6790, 0
    %v6824 = vsel %vm291, %v6791, 0
    %v6827 = vsel %vm291, %v6792, 0
    %v6830 = vsel %vm291, %v6793, 0
    %v6833 = vsel %vm291, %v6794, 0
    %v6836 = vsel %vm291, %v6795, 0
    %v6839 = vsel %vm291, %v6796, 0
    %v6842 = vsel %vm291, %v6797, 0
    %v6845 = vsel %vm291, %v6798, 0
    %v6848 = vsel %vm291, %v6799, 0
    %v6851 = vsel %vm291, %v6800, 0
    %v6854 = vsel %vm291, %v6801, 0
    %v6857 = vsel %vm291, %v6802, 0
    %v6860 = vsel %vm291, %v6803, 0
    %v6863 = vsel %vm291, %v6804, 0
    %v6866 = vsel %vm291, %v6805, 0
    %v6869 = vsel %vm291, %v6806, 0
    %v6872 = vsel %vm291, %v6807, 0
    %v6875 = vsel %vm291, %v6808, 0
    %v6878 = vsel %vm291, %v6809, 0
    %v6881 = vsel %vm291, %v6810, 0
    %v6884 = vsel %vm291, %v6811, 0
    %v6887 = vsel %vm291, %v6812, 0
    %v6890 = vsel %vm291, %v6813, 0
    %v6893 = vsel %vm291, %v6814, 0
    %6895 = vmatprep.subr.mxu0 0.0
    %6896 = vmatpush1.msra.mxu0 %v6816
    %6897 = vmatprep.subr.mxu0 0.0
    %6898 = vmatpush1.msra.mxu0 %v6817
    %6899 = vmatprep.subr.mxu0 0.0
    %6900 = vmatpush1.msra.mxu0 %v6818
    %6901 = vmatprep.subr.mxu0 0.0
    %6902 = vmatpush1.msra.mxu0 %v6819
    %6903 = vmatprep.subr.mxu0 0.0
    %6904 = vmatpush1.msra.mxu0 0.0
    %6905 = vmatprep.subr.mxu0 0.0
    %6906 = vmatpush1.msra.mxu0 0.0
    %6907 = vmatprep.subr.mxu0 0.0
    %6908 = vmatpush1.msra.mxu0 0.0
    %6909 = vmatprep.subr.mxu0 0.0
    %6910 = vmatpush1.msra.mxu0 0.0
    %6911 = vmatprep.subr.mxu0 0.0
    %6912 = vmatpush1.msra.mxu0 0.0
    %6913 = vmatprep.subr.mxu0 0.0
    %6914 = vmatpush1.msra.mxu0 0.0
    %6915 = vmatprep.subr.mxu0 0.0
    %6916 = vmatpush1.msra.mxu0 0.0
    %6917 = vmatprep.subr.mxu0 0.0
    %6918 = vmatpush1.msra.mxu0 0.0
    %6919 = vmatprep.subr.mxu0 0.0
    %6920 = vmatpush1.msra.mxu0 0.0
    %6921 = vmatprep.subr.mxu0 0.0
    %6922 = vmatpush1.msra.mxu0 0.0
    %6923 = vmatprep.subr.mxu0 0.0
    %6924 = vmatpush1.msra.mxu0 0.0
    %6925 = vmatprep.subr.mxu0 0.0
    %6926 = vmatpush1.msra.mxu0 0.0
    %6927 = vmatprep.subr.mxu0 0.0
    %6928 = vmatpush1.msra.mxu0 0.0
    %6929 = vmatprep.subr.mxu0 0.0
    %6930 = vmatpush1.msra.mxu0 0.0
    %6931 = vmatprep.subr.mxu0 0.0
    %6932 = vmatpush1.msra.mxu0 0.0
    %6933 = vmatprep.subr.mxu0 0.0
    %6934 = vmatpush1.msra.mxu0 0.0
    %6935 = vmatprep.subr.mxu0 0.0
    %6936 = vmatpush1.msra.mxu0 0.0
    %6937 = vmatprep.subr.mxu0 0.0
    %6938 = vmatpush1.msra.mxu0 0.0
    %6939 = vmatprep.subr.mxu0 0.0
    %6940 = vmatpush1.msra.mxu0 0.0
    %6941 = vmatprep.subr.mxu0 0.0
    %6942 = vmatpush1.msra.mxu0 0.0
    %6943 = vmatprep.subr.mxu0 0.0
    %6944 = vmatpush1.msra.mxu0 0.0
    %6945 = vmatprep.subr.mxu0 0.0
    %6946 = vmatpush1.msra.mxu0 0.0
    %6947 = vmatprep.subr.mxu0 0.0
    %6948 = vmatpush1.msra.mxu0 0.0
    %6949 = vmatprep.subr.mxu0 0.0
    %6950 = vmatpush1.msra.mxu0 0.0
    %6951 = vmatprep.subr.mxu0 0.0
    %6952 = vmatpush1.msra.mxu0 0.0
    %6953 = vmatprep.subr.mxu0 0.0
    %6954 = vmatpush1.msra.mxu0 0.0
    %6955 = vmatprep.subr.mxu0 0.0
    %6956 = vmatpush1.msra.mxu0 0.0
    %6957 = vmatprep.subr.mxu0 0.0
    %6958 = vmatpush1.msra.mxu0 0.0
    %6959 = vmatprep.mubr.f32.mxu0 0.0
    %6960 = vmatmul.mubr.f32.gmra.mrb[0].mxu0 %v6821
    %v6961 = vpop.f32.mrb[0].mxu0
    %v6962 = vadd.f32 0.0, %v6961
    %v6963 = vpop.f32.mrb[0].mxu0
    %6964 = vmatprep.mubr.f32.mxu0 0.0
    %6965 = vmatmul.mubr.f32.gmra.mrb[0].mxu0 %v6824
    %v6966 = vpop.f32.mrb[0].mxu0
    %v6967 = vadd.f32 0.0, %v6966
    %v6968 = vpop.f32.mrb[0].mxu0
    %6969 = vmatprep.mubr.f32.mxu0 0.0
    %6970 = vmatmul.mubr.f32.gmra.mrb[0].mxu0 %v6827
    %v6971 = vpop.f32.mrb[0].mxu0
    %v6972 = vadd.f32 0.0, %v6971
    %v6973 = vpop.f32.mrb[0].mxu0
    %6974 = vmatprep.mubr.f32.mxu0 0.0
    %6975 = vmatmul.mubr.f32.gmra.mrb[0].mxu0 %v6830
    %v6976 = vpop.f32.mrb[0].mxu0
    %v6977 = vadd.f32 0.0, %v6976
    %v6978 = vpop.f32.mrb[0].mxu0
    %6979 = vmatprep.mubr.f32.mxu0 0.0
    %6980 = vmatmul.mubr.f32.gmra.mrb[0].mxu0 %v6833
    %v6981 = vpop.f32.mrb[0].mxu0
    %v6982 = vadd.f32 0.0, %v6981
    %v6983 = vpop.f32.mrb[0].mxu0
    %6984 = vmatprep.mubr.f32.mxu0 0.0
    %6985 = vmatmul.mubr.f32.gmra.mrb[0].mxu0 %v6836
    %v6986 = vpop.f32.mrb[0].mxu0
    %v6987 = vadd.f32 0.0, %v6986
    %v6988 = vpop.f32.mrb[0].mxu0
    %6989 = vmatprep.mubr.f32.mxu0 0.0
    %6990 = vmatmul.mubr.f32.gmra.mrb[0].mxu0 %v6839
    %v6991 = vpop.f32.mrb[0].mxu0
    %v6992 = vadd.f32 0.0, %v6991
    %v6993 = vpop.f32.mrb[0].mxu0
    %6994 = vmatprep.mubr.f32.mxu0 0.0
    %6995 = vmatmul.mubr.f32.gmra.mrb[0].mxu0 %v6842
    %v6996 = vpop.f32.mrb[0].mxu0
    %v6997 = vadd.f32 0.0, %v6996
    %v6998 = vpop.f32.mrb[0].mxu0
    %6999 = vmatprep.mubr.f32.mxu0 0.0
    %7000 = vmatmul.mubr.f32.gmra.mrb[0].mxu0 %v6845
    %v7001 = vpop.f32.mrb[0].mxu0
    %v7002 = vadd.f32 0.0, %v7001
    %v7003 = vpop.f32.mrb[0].mxu0
    %7004 = vmatprep.mubr.f32.mxu0 0.0
    %7005 = vmatmul.mubr.f32.gmra.mrb[0].mxu0 %v6848
    %v7006 = vpop.f32.mrb[0].mxu0
    %v7007 = vadd.f32 0.0, %v7006
    %v7008 = vpop.f32.mrb[0].mxu0
    %7009 = vmatprep.mubr.f32.mxu0 0.0
    %7010 = vmatmul.mubr.f32.gmra.mrb[0].mxu0 %v6851
    %v7011 = vpop.f32.mrb[0].mxu0
    %v7012 = vadd.f32 0.0, %v7011
    %v7013 = vpop.f32.mrb[0].mxu0
    %7014 = vmatprep.mubr.f32.mxu0 0.0
    %7015 = vmatmul.mubr.f32.gmra.mrb[0].mxu0 %v6854
    %v7016 = vpop.f32.mrb[0].mxu0
    %v7017 = vadd.f32 0.0, %v7016
    %v7018 = vpop.f32.mrb[0].mxu0
    %7019 = vmatprep.mubr.f32.mxu0 0.0
    %7020 = vmatmul.mubr.f32.gmra.mrb[0].mxu0 %v6857
    %v7021 = vpop.f32.mrb[0].mxu0
    %v7022 = vadd.f32 0.0, %v7021
    %v7023 = vpop.f32.mrb[0].mxu0
    %7024 = vmatprep.mubr.f32.mxu0 0.0
    %7025 = vmatmul.mubr.f32.gmra.mrb[0].mxu0 %v6860
    %v7026 = vpop.f32.mrb[0].mxu0
    %v7027 = vadd.f32 0.0, %v7026
    %v7028 = vpop.f32.mrb[0].mxu0
    %7029 = vmatprep.mubr.f32.mxu0 0.0
    %7030 = vmatmul.mubr.f32.gmra.mrb[0].mxu0 %v6863
    %v7031 = vpop.f32.mrb[0].mxu0
    %v7032 = vadd.f32 0.0, %v7031
    %v7033 = vpop.f32.mrb[0].mxu0
    %7034 = vmatprep.mubr.f32.mxu0 0.0
    %7035 = vmatmul.mubr.f32.gmra.mrb[0].mxu0 %v6866
    %v7036 = vpop.f32.mrb[0].mxu0
    %v7037 = vadd.f32 0.0, %v7036
    %v7038 = vpop.f32.mrb[0].mxu0
    %7039 = vmatprep.mubr.f32.mxu0 0.0
    %7040 = vmatmul.mubr.f32.gmra.mrb[0].mxu0 %v6869
    %v7041 = vpop.f32.mrb[0].mxu0
    %v7042 = vadd.f32 0.0, %v7041
    %v7043 = vpop.f32.mrb[0].mxu0
    %7044 = vmatprep.mubr.f32.mxu0 0.0
    %7045 = vmatmul.mubr.f32.gmra.mrb[0].mxu0 %v6872
    %v7046 = vpop.f32.mrb[0].mxu0
    %v7047 = vadd.f32 0.0, %v7046
    %v7048 = vpop.f32.mrb[0].mxu0
    %7049 = vmatprep.mubr.f32.mxu0 0.0
    %7050 = vmatmul.mubr.f32.gmra.mrb[0].mxu0 %v6875
    %v7051 = vpop.f32.mrb[0].mxu0
    %v7052 = vadd.f32 0.0, %v7051
    %v7053 = vpop.f32.mrb[0].mxu0
    %7054 = vmatprep.mubr.f32.mxu0 0.0
    %7055 = vmatmul.mubr.f32.gmra.mrb[0].mxu0 %v6878
    %v7056 = vpop.f32.mrb[0].mxu0
    %v7057 = vadd.f32 0.0, %v7056
    %v7058 = vpop.f32.mrb[0].mxu0
    %7059 = vmatprep.mubr.f32.mxu0 0.0
    %7060 = vmatmul.mubr.f32.gmra.mrb[0].mxu0 %v6881
    %v7061 = vpop.f32.mrb[0].mxu0
    %v7062 = vadd.f32 0.0, %v7061
    %v7063 = vpop.f32.mrb[0].mxu0
    %7064 = vmatprep.mubr.f32.mxu0 0.0
    %7065 = vmatmul.mubr.f32.gmra.mrb[0].mxu0 %v6884
    %v7066 = vpop.f32.mrb[0].mxu0
    %v7067 = vadd.f32 0.0, %v7066
    %v7068 = vpop.f32.mrb[0].mxu0
    %7069 = vmatprep.mubr.f32.mxu0 0.0
    %7070 = vmatmul.mubr.f32.gmra.mrb[0].mxu0 %v6887
    %v7071 = vpop.f32.mrb[0].mxu0
    %v7072 = vadd.f32 0.0, %v7071
    %v7073 = vpop.f32.mrb[0].mxu0
    %7074 = vmatprep.mubr.f32.mxu0 0.0
    %7075 = vmatmul.mubr.f32.gmra.mrb[0].mxu0 %v6890
    %v7076 = vpop.f32.mrb[0].mxu0
    %v7077 = vadd.f32 0.0, %v7076
    %v7078 = vpop.f32.mrb[0].mxu0
    %7079 = vmatprep.mubr.f32.mxu0 0.0
    %7080 = vmatmul.mubr.f32.gmra.mrb[0].mxu0 %v6893
    %v7081 = vpop.f32.mrb[0].mxu0
    %v7082 = vadd.f32 0.0, %v7081
    %v7083 = vpop.f32.mrb[0].mxu0
    %7084 = vdwg.mxu0
    %v7085 = vadd.f32 %v6667, %v6962
    %v7086 = vadd.f32 %v6672, %v6967
    %v7087 = vadd.f32 %v6677, %v6972
    %v7088 = vadd.f32 %v6682, %v6977
    %v7089 = vadd.f32 %v6687, %v6982
    %v7090 = vadd.f32 %v6692, %v6987
    %v7091 = vadd.f32 %v6697, %v6992
    %v7092 = vadd.f32 %v6702, %v6997
    %v7093 = vadd.f32 %v6707, %v7002
    %v7094 = vadd.f32 %v6712, %v7007
    %v7095 = vadd.f32 %v6717, %v7012
    %v7096 = vadd.f32 %v6722, %v7017
    %v7097 = vadd.f32 %v6727, %v7022
    %v7098 = vadd.f32 %v6732, %v7027
    %v7099 = vadd.f32 %v6737, %v7032
    %v7100 = vadd.f32 %v6742, %v7037
    %v7101 = vadd.f32 %v6747, %v7042
    %v7102 = vadd.f32 %v6752, %v7047
    %v7103 = vadd.f32 %v6757, %v7052
    %v7104 = vadd.f32 %v6762, %v7057
    %v7105 = vadd.f32 %v6767, %v7062
    %v7106 = vadd.f32 %v6772, %v7067
    %v7107 = vadd.f32 %v6777, %v7072
    %v7108 = vadd.f32 %v6782, %v7077
    %v7109 = vadd.f32 %v6787, %v7082
    %v7110 = vld [vmem:[#allocation3 + $0xf] sm:$0xff]
    %v7111 = vld [vmem:[#allocation3 + $0x17] sm:$0xff]
    %v7112 = vld [vmem:[#allocation3 + $0x1f] sm:$0xff]
    %v7113 = vld [vmem:[#allocation3 + $0x27] sm:$0xff]
    %v7114 = vld [vmem:[#allocation3 + $0x2f] sm:$0xff]
    %v7115 = vld [vmem:[#allocation3 + $0x37] sm:$0xff]
    %v7116 = vld [vmem:[#allocation3 + $0x3f] sm:$0xff]
    %v7117 = vld [vmem:[#allocation3 + $0x47] sm:$0xff]
    %v7118 = vld [vmem:[#allocation3 + $0x4f] sm:$0xff]
    %v7119 = vld [vmem:[#allocation3 + $0x57] sm:$0xff]
    %v7120 = vld [vmem:[#allocation3 + $0x5f] sm:$0xff]
    %v7121 = vld [vmem:[#allocation3 + $0x67] sm:$0xff]
    %v7122 = vld [vmem:[#allocation3 + $0x6f] sm:$0xff]
    %v7123 = vld [vmem:[#allocation3 + $0x77] sm:$0xff]
    %v7124 = vld [vmem:[#allocation3 + $0x7f] sm:$0xff]
    %v7125 = vld [vmem:[#allocation3 + $0x87] sm:$0xff]
    %v7126 = vld [vmem:[#allocation3 + $0x8f] sm:$0xff]
    %v7127 = vld [vmem:[#allocation3 + $0x97] sm:$0xff]
    %v7128 = vld [vmem:[#allocation3 + $0x9f] sm:$0xff]
    %v7129 = vld [vmem:[#allocation3 + $0xa7] sm:$0xff]
    %v7130 = vld [vmem:[#allocation3 + $0xaf] sm:$0xff]
    %v7131 = vld [vmem:[#allocation3 + $0xb7] sm:$0xff]
    %v7132 = vld [vmem:[#allocation3 + $0xbf] sm:$0xff]
    %v7133 = vld [vmem:[#allocation3 + $0xc7] sm:$0xff]
    %v7134 = vld [vmem:[#allocation3 + $0xcf] sm:$0xff]
    %s7135 = scalar_lea.vmem [#allocation23], 96
    %v7136 = vld [vmem:[%s7135] sm:$0xff]
    %v7137 = vld [vmem:[%s7135 + $0x8] sm:$0xff]
    %v7138 = vld [vmem:[%s7135 + $0x10] sm:$0xff]
    %v7139 = vld [vmem:[%s7135 + $0x18] sm:$0xff]
    %v7141 = vsel %vm291, %v7110, 0
    %v7144 = vsel %vm291, %v7111, 0
    %v7147 = vsel %vm291, %v7112, 0
    %v7150 = vsel %vm291, %v7113, 0
    %v7153 = vsel %vm291, %v7114, 0
    %v7156 = vsel %vm291, %v7115, 0
    %v7159 = vsel %vm291, %v7116, 0
    %v7162 = vsel %vm291, %v7117, 0
    %v7165 = vsel %vm291, %v7118, 0
    %v7168 = vsel %vm291, %v7119, 0
    %v7171 = vsel %vm291, %v7120, 0
    %v7174 = vsel %vm291, %v7121, 0
    %v7177 = vsel %vm291, %v7122, 0
    %v7180 = vsel %vm291, %v7123, 0
    %v7183 = vsel %vm291, %v7124, 0
    %v7186 = vsel %vm291, %v7125, 0
    %v7189 = vsel %vm291, %v7126, 0
    %v7192 = vsel %vm291, %v7127, 0
    %v7195 = vsel %vm291, %v7128, 0
    %v7198 = vsel %vm291, %v7129, 0
    %v7201 = vsel %vm291, %v7130, 0
    %v7204 = vsel %vm291, %v7131, 0
    %v7207 = vsel %vm291, %v7132, 0
    %v7210 = vsel %vm291, %v7133, 0
    %v7213 = vsel %vm291, %v7134, 0
    %7215 = vmatprep.subr.mxu0 0.0
    %7216 = vmatpush1.msra.mxu0 %v7136
    %7217 = vmatprep.subr.mxu0 0.0
    %7218 = vmatpush1.msra.mxu0 %v7137
    %7219 = vmatprep.subr.mxu0 0.0
    %7220 = vmatpush1.msra.mxu0 %v7138
    %7221 = vmatprep.subr.mxu0 0.0
    %7222 = vmatpush1.msra.mxu0 %v7139
    %7223 = vmatprep.subr.mxu0 0.0
    %7224 = vmatpush1.msra.mxu0 0.0
    %7225 = vmatprep.subr.mxu0 0.0
    %7226 = vmatpush1.msra.mxu0 0.0
    %7227 = vmatprep.subr.mxu0 0.0
    %7228 = vmatpush1.msra.mxu0 0.0
    %7229 = vmatprep.subr.mxu0 0.0
    %7230 = vmatpush1.msra.mxu0 0.0
    %7231 = vmatprep.subr.mxu0 0.0
    %7232 = vmatpush1.msra.mxu0 0.0
    %7233 = vmatprep.subr.mxu0 0.0
    %7234 = vmatpush1.msra.mxu0 0.0
    %7235 = vmatprep.subr.mxu0 0.0
    %7236 = vmatpush1.msra.mxu0 0.0
    %7237 = vmatprep.subr.mxu0 0.0
    %7238 = vmatpush1.msra.mxu0 0.0
    %7239 = vmatprep.subr.mxu0 0.0
    %7240 = vmatpush1.msra.mxu0 0.0
    %7241 = vmatprep.subr.mxu0 0.0
    %7242 = vmatpush1.msra.mxu0 0.0
    %7243 = vmatprep.subr.mxu0 0.0
    %7244 = vmatpush1.msra.mxu0 0.0
    %7245 = vmatprep.subr.mxu0 0.0
    %7246 = vmatpush1.msra.mxu0 0.0
    %7247 = vmatprep.subr.mxu0 0.0
    %7248 = vmatpush1.msra.mxu0 0.0
    %7249 = vmatprep.subr.mxu0 0.0
    %7250 = vmatpush1.msra.mxu0 0.0
    %7251 = vmatprep.subr.mxu0 0.0
    %7252 = vmatpush1.msra.mxu0 0.0
    %7253 = vmatprep.subr.mxu0 0.0
    %7254 = vmatpush1.msra.mxu0 0.0
    %7255 = vmatprep.subr.mxu0 0.0
    %7256 = vmatpush1.msra.mxu0 0.0
    %7257 = vmatprep.subr.mxu0 0.0
    %7258 = vmatpush1.msra.mxu0 0.0
    %7259 = vmatprep.subr.mxu0 0.0
    %7260 = vmatpush1.msra.mxu0 0.0
    %7261 = vmatprep.subr.mxu0 0.0
    %7262 = vmatpush1.msra.mxu0 0.0
    %7263 = vmatprep.subr.mxu0 0.0
    %7264 = vmatpush1.msra.mxu0 0.0
    %7265 = vmatprep.subr.mxu0 0.0
    %7266 = vmatpush1.msra.mxu0 0.0
    %7267 = vmatprep.subr.mxu0 0.0
    %7268 = vmatpush1.msra.mxu0 0.0
    %7269 = vmatprep.subr.mxu0 0.0
    %7270 = vmatpush1.msra.mxu0 0.0
    %7271 = vmatprep.subr.mxu0 0.0
    %7272 = vmatpush1.msra.mxu0 0.0
    %7273 = vmatprep.subr.mxu0 0.0
    %7274 = vmatpush1.msra.mxu0 0.0
    %7275 = vmatprep.subr.mxu0 0.0
    %7276 = vmatpush1.msra.mxu0 0.0
    %7277 = vmatprep.subr.mxu0 0.0
    %7278 = vmatpush1.msra.mxu0 0.0
    %7279 = vmatprep.mubr.f32.mxu0 0.0
    %7280 = vmatmul.mubr.f32.gmra.mrb[0].mxu0 %v7141
    %v7281 = vpop.f32.mrb[0].mxu0
    %v7282 = vadd.f32 0.0, %v7281
    %v7283 = vpop.f32.mrb[0].mxu0
    %7284 = vmatprep.mubr.f32.mxu0 0.0
    %7285 = vmatmul.mubr.f32.gmra.mrb[0].mxu0 %v7144
    %v7286 = vpop.f32.mrb[0].mxu0
    %v7287 = vadd.f32 0.0, %v7286
    %v7288 = vpop.f32.mrb[0].mxu0
    %7289 = vmatprep.mubr.f32.mxu0 0.0
    %7290 = vmatmul.mubr.f32.gmra.mrb[0].mxu0 %v7147
    %v7291 = vpop.f32.mrb[0].mxu0
    %v7292 = vadd.f32 0.0, %v7291
    %v7293 = vpop.f32.mrb[0].mxu0
    %7294 = vmatprep.mubr.f32.mxu0 0.0
    %7295 = vmatmul.mubr.f32.gmra.mrb[0].mxu0 %v7150
    %v7296 = vpop.f32.mrb[0].mxu0
    %v7297 = vadd.f32 0.0, %v7296
    %v7298 = vpop.f32.mrb[0].mxu0
    %7299 = vmatprep.mubr.f32.mxu0 0.0
    %7300 = vmatmul.mubr.f32.gmra.mrb[0].mxu0 %v7153
    %v7301 = vpop.f32.mrb[0].mxu0
    %v7302 = vadd.f32 0.0, %v7301
    %v7303 = vpop.f32.mrb[0].mxu0
    %7304 = vmatprep.mubr.f32.mxu0 0.0
    %7305 = vmatmul.mubr.f32.gmra.mrb[0].mxu0 %v7156
    %v7306 = vpop.f32.mrb[0].mxu0
    %v7307 = vadd.f32 0.0, %v7306
    %v7308 = vpop.f32.mrb[0].mxu0
    %7309 = vmatprep.mubr.f32.mxu0 0.0
    %7310 = vmatmul.mubr.f32.gmra.mrb[0].mxu0 %v7159
    %v7311 = vpop.f32.mrb[0].mxu0
    %v7312 = vadd.f32 0.0, %v7311
    %v7313 = vpop.f32.mrb[0].mxu0
    %7314 = vmatprep.mubr.f32.mxu0 0.0
    %7315 = vmatmul.mubr.f32.gmra.mrb[0].mxu0 %v7162
    %v7316 = vpop.f32.mrb[0].mxu0
    %v7317 = vadd.f32 0.0, %v7316
    %v7318 = vpop.f32.mrb[0].mxu0
    %7319 = vmatprep.mubr.f32.mxu0 0.0
    %7320 = vmatmul.mubr.f32.gmra.mrb[0].mxu0 %v7165
    %v7321 = vpop.f32.mrb[0].mxu0
    %v7322 = vadd.f32 0.0, %v7321
    %v7323 = vpop.f32.mrb[0].mxu0
    %7324 = vmatprep.mubr.f32.mxu0 0.0
    %7325 = vmatmul.mubr.f32.gmra.mrb[0].mxu0 %v7168
    %v7326 = vpop.f32.mrb[0].mxu0
    %v7327 = vadd.f32 0.0, %v7326
    %v7328 = vpop.f32.mrb[0].mxu0
    %7329 = vmatprep.mubr.f32.mxu0 0.0
    %7330 = vmatmul.mubr.f32.gmra.mrb[0].mxu0 %v7171
    %v7331 = vpop.f32.mrb[0].mxu0
    %v7332 = vadd.f32 0.0, %v7331
    %v7333 = vpop.f32.mrb[0].mxu0
    %7334 = vmatprep.mubr.f32.mxu0 0.0
    %7335 = vmatmul.mubr.f32.gmra.mrb[0].mxu0 %v7174
    %v7336 = vpop.f32.mrb[0].mxu0
    %v7337 = vadd.f32 0.0, %v7336
    %v7338 = vpop.f32.mrb[0].mxu0
    %7339 = vmatprep.mubr.f32.mxu0 0.0
    %7340 = vmatmul.mubr.f32.gmra.mrb[0].mxu0 %v7177
    %v7341 = vpop.f32.mrb[0].mxu0
    %v7342 = vadd.f32 0.0, %v7341
    %v7343 = vpop.f32.mrb[0].mxu0
    %7344 = vmatprep.mubr.f32.mxu0 0.0
    %7345 = vmatmul.mubr.f32.gmra.mrb[0].mxu0 %v7180
    %v7346 = vpop.f32.mrb[0].mxu0
    %v7347 = vadd.f32 0.0, %v7346
    %v7348 = vpop.f32.mrb[0].mxu0
    %7349 = vmatprep.mubr.f32.mxu0 0.0
    %7350 = vmatmul.mubr.f32.gmra.mrb[0].mxu0 %v7183
    %v7351 = vpop.f32.mrb[0].mxu0
    %v7352 = vadd.f32 0.0, %v7351
    %v7353 = vpop.f32.mrb[0].mxu0
    %7354 = vmatprep.mubr.f32.mxu0 0.0
    %7355 = vmatmul.mubr.f32.gmra.mrb[0].mxu0 %v7186
    %v7356 = vpop.f32.mrb[0].mxu0
    %v7357 = vadd.f32 0.0, %v7356
    %v7358 = vpop.f32.mrb[0].mxu0
    %7359 = vmatprep.mubr.f32.mxu0 0.0
    %7360 = vmatmul.mubr.f32.gmra.mrb[0].mxu0 %v7189
    %v7361 = vpop.f32.mrb[0].mxu0
    %v7362 = vadd.f32 0.0, %v7361
    %v7363 = vpop.f32.mrb[0].mxu0
    %7364 = vmatprep.mubr.f32.mxu0 0.0
    %7365 = vmatmul.mubr.f32.gmra.mrb[0].mxu0 %v7192
    %v7366 = vpop.f32.mrb[0].mxu0
    %v7367 = vadd.f32 0.0, %v7366
    %v7368 = vpop.f32.mrb[0].mxu0
    %7369 = vmatprep.mubr.f32.mxu0 0.0
    %7370 = vmatmul.mubr.f32.gmra.mrb[0].mxu0 %v7195
    %v7371 = vpop.f32.mrb[0].mxu0
    %v7372 = vadd.f32 0.0, %v7371
    %v7373 = vpop.f32.mrb[0].mxu0
    %7374 = vmatprep.mubr.f32.mxu0 0.0
    %7375 = vmatmul.mubr.f32.gmra.mrb[0].mxu0 %v7198
    %v7376 = vpop.f32.mrb[0].mxu0
    %v7377 = vadd.f32 0.0, %v7376
    %v7378 = vpop.f32.mrb[0].mxu0
    %7379 = vmatprep.mubr.f32.mxu0 0.0
    %7380 = vmatmul.mubr.f32.gmra.mrb[0].mxu0 %v7201
    %v7381 = vpop.f32.mrb[0].mxu0
    %v7382 = vadd.f32 0.0, %v7381
    %v7383 = vpop.f32.mrb[0].mxu0
    %7384 = vmatprep.mubr.f32.mxu0 0.0
    %7385 = vmatmul.mubr.f32.gmra.mrb[0].mxu0 %v7204
    %v7386 = vpop.f32.mrb[0].mxu0
    %v7387 = vadd.f32 0.0, %v7386
    %v7388 = vpop.f32.mrb[0].mxu0
    %7389 = vmatprep.mubr.f32.mxu0 0.0
    %7390 = vmatmul.mubr.f32.gmra.mrb[0].mxu0 %v7207
    %v7391 = vpop.f32.mrb[0].mxu0
    %v7392 = vadd.f32 0.0, %v7391
    %v7393 = vpop.f32.mrb[0].mxu0
    %7394 = vmatprep.mubr.f32.mxu0 0.0
    %7395 = vmatmul.mubr.f32.gmra.mrb[0].mxu0 %v7210
    %v7396 = vpop.f32.mrb[0].mxu0
    %v7397 = vadd.f32 0.0, %v7396
    %v7398 = vpop.f32.mrb[0].mxu0
    %7399 = vmatprep.mubr.f32.mxu0 0.0
    %7400 = vmatmul.mubr.f32.gmra.mrb[0].mxu0 %v7213
    %v7401 = vpop.f32.mrb[0].mxu0
    %v7402 = vadd.f32 0.0, %v7401
    %v7403 = vpop.f32.mrb[0].mxu0
    %7404 = vdwg.mxu0
    %v7405 = vadd.f32 %v7085, %v7282
    %v7406 = vadd.f32 %v7086, %v7287
    %v7407 = vadd.f32 %v7087, %v7292
    %v7408 = vadd.f32 %v7088, %v7297
    %v7409 = vadd.f32 %v7089, %v7302
    %v7410 = vadd.f32 %v7090, %v7307
    %v7411 = vadd.f32 %v7091, %v7312
    %v7412 = vadd.f32 %v7092, %v7317
    %v7413 = vadd.f32 %v7093, %v7322
    %v7414 = vadd.f32 %v7094, %v7327
    %v7415 = vadd.f32 %v7095, %v7332
    %v7416 = vadd.f32 %v7096, %v7337
    %v7417 = vadd.f32 %v7097, %v7342
    %v7418 = vadd.f32 %v7098, %v7347
    %v7419 = vadd.f32 %v7099, %v7352
    %v7420 = vadd.f32 %v7100, %v7357
    %v7421 = vadd.f32 %v7101, %v7362
    %v7422 = vadd.f32 %v7102, %v7367
    %v7423 = vadd.f32 %v7103, %v7372
    %v7424 = vadd.f32 %v7104, %v7377
    %v7425 = vadd.f32 %v7105, %v7382
    %v7426 = vadd.f32 %v7106, %v7387
    %v7427 = vadd.f32 %v7107, %v7392
    %v7428 = vadd.f32 %v7108, %v7397
    %v7429 = vadd.f32 %v7109, %v7402
    %v7430 = vld [vmem:[#allocation3 + $0x10] sm:$0xff]
    %v7431 = vld [vmem:[#allocation3 + $0x18] sm:$0xff]
    %v7432 = vld [vmem:[#allocation3 + $0x20] sm:$0xff]
    %v7433 = vld [vmem:[#allocation3 + $0x28] sm:$0xff]
    %v7434 = vld [vmem:[#allocation3 + $0x30] sm:$0xff]
    %v7435 = vld [vmem:[#allocation3 + $0x38] sm:$0xff]
    %v7436 = vld [vmem:[#allocation3 + $0x40] sm:$0xff]
    %v7437 = vld [vmem:[#allocation3 + $0x48] sm:$0xff]
    %v7438 = vld [vmem:[#allocation3 + $0x50] sm:$0xff]
    %v7439 = vld [vmem:[#allocation3 + $0x58] sm:$0xff]
    %v7440 = vld [vmem:[#allocation3 + $0x60] sm:$0xff]
    %v7441 = vld [vmem:[#allocation3 + $0x68] sm:$0xff]
    %v7442 = vld [vmem:[#allocation3 + $0x70] sm:$0xff]
    %v7443 = vld [vmem:[#allocation3 + $0x78] sm:$0xff]
    %v7444 = vld [vmem:[#allocation3 + $0x80] sm:$0xff]
    %v7445 = vld [vmem:[#allocation3 + $0x88] sm:$0xff]
    %v7446 = vld [vmem:[#allocation3 + $0x90] sm:$0xff]
    %v7447 = vld [vmem:[#allocation3 + $0x98] sm:$0xff]
    %v7448 = vld [vmem:[#allocation3 + $0xa0] sm:$0xff]
    %v7449 = vld [vmem:[#allocation3 + $0xa8] sm:$0xff]
    %v7450 = vld [vmem:[#allocation3 + $0xb0] sm:$0xff]
    %v7451 = vld [vmem:[#allocation3 + $0xb8] sm:$0xff]
    %v7452 = vld [vmem:[#allocation3 + $0xc0] sm:$0xff]
    %v7453 = vld [vmem:[#allocation3 + $0xc8] sm:$0xff]
    %v7454 = vld [vmem:[#allocation3 + $0xd0] sm:$0xff]
    %s7455 = scalar_lea.vmem [#allocation23], 128
    %v7456 = vld [vmem:[%s7455] sm:$0xff]
    %v7457 = vld [vmem:[%s7455 + $0x8] sm:$0xff]
    %v7458 = vld [vmem:[%s7455 + $0x10] sm:$0xff]
    %v7459 = vld [vmem:[%s7455 + $0x18] sm:$0xff]
    %v7461 = vsel %vm291, %v7430, 0
    %v7464 = vsel %vm291, %v7431, 0
    %v7467 = vsel %vm291, %v7432, 0
    %v7470 = vsel %vm291, %v7433, 0
    %v7473 = vsel %vm291, %v7434, 0
    %v7476 = vsel %vm291, %v7435, 0
    %v7479 = vsel %vm291, %v7436, 0
    %v7482 = vsel %vm291, %v7437, 0
    %v7485 = vsel %vm291, %v7438, 0
    %v7488 = vsel %vm291, %v7439, 0
    %v7491 = vsel %vm291, %v7440, 0
    %v7494 = vsel %vm291, %v7441, 0
    %v7497 = vsel %vm291, %v7442, 0
    %v7500 = vsel %vm291, %v7443, 0
    %v7503 = vsel %vm291, %v7444, 0
    %v7506 = vsel %vm291, %v7445, 0
    %v7509 = vsel %vm291, %v7446, 0
    %v7512 = vsel %vm291, %v7447, 0
    %v7515 = vsel %vm291, %v7448, 0
    %v7518 = vsel %vm291, %v7449, 0
    %v7521 = vsel %vm291, %v7450, 0
    %v7524 = vsel %vm291, %v7451, 0
    %v7527 = vsel %vm291, %v7452, 0
    %v7530 = vsel %vm291, %v7453, 0
    %v7533 = vsel %vm291, %v7454, 0
    %7535 = vmatprep.subr.mxu0 0.0
    %7536 = vmatpush1.msra.mxu0 %v7456
    %7537 = vmatprep.subr.mxu0 0.0
    %7538 = vmatpush1.msra.mxu0 %v7457
    %7539 = vmatprep.subr.mxu0 0.0
    %7540 = vmatpush1.msra.mxu0 %v7458
    %7541 = vmatprep.subr.mxu0 0.0
    %7542 = vmatpush1.msra.mxu0 %v7459
    %7543 = vmatprep.subr.mxu0 0.0
    %7544 = vmatpush1.msra.mxu0 0.0
    %7545 = vmatprep.subr.mxu0 0.0
    %7546 = vmatpush1.msra.mxu0 0.0
    %7547 = vmatprep.subr.mxu0 0.0
    %7548 = vmatpush1.msra.mxu0 0.0
    %7549 = vmatprep.subr.mxu0 0.0
    %7550 = vmatpush1.msra.mxu0 0.0
    %7551 = vmatprep.subr.mxu0 0.0
    %7552 = vmatpush1.msra.mxu0 0.0
    %7553 = vmatprep.subr.mxu0 0.0
    %7554 = vmatpush1.msra.mxu0 0.0
    %7555 = vmatprep.subr.mxu0 0.0
    %7556 = vmatpush1.msra.mxu0 0.0
    %7557 = vmatprep.subr.mxu0 0.0
    %7558 = vmatpush1.msra.mxu0 0.0
    %7559 = vmatprep.subr.mxu0 0.0
    %7560 = vmatpush1.msra.mxu0 0.0
    %7561 = vmatprep.subr.mxu0 0.0
    %7562 = vmatpush1.msra.mxu0 0.0
    %7563 = vmatprep.subr.mxu0 0.0
    %7564 = vmatpush1.msra.mxu0 0.0
    %7565 = vmatprep.subr.mxu0 0.0
    %7566 = vmatpush1.msra.mxu0 0.0
    %7567 = vmatprep.subr.mxu0 0.0
    %7568 = vmatpush1.msra.mxu0 0.0
    %7569 = vmatprep.subr.mxu0 0.0
    %7570 = vmatpush1.msra.mxu0 0.0
    %7571 = vmatprep.subr.mxu0 0.0
    %7572 = vmatpush1.msra.mxu0 0.0
    %7573 = vmatprep.subr.mxu0 0.0
    %7574 = vmatpush1.msra.mxu0 0.0
    %7575 = vmatprep.subr.mxu0 0.0
    %7576 = vmatpush1.msra.mxu0 0.0
    %7577 = vmatprep.subr.mxu0 0.0
    %7578 = vmatpush1.msra.mxu0 0.0
    %7579 = vmatprep.subr.mxu0 0.0
    %7580 = vmatpush1.msra.mxu0 0.0
    %7581 = vmatprep.subr.mxu0 0.0
    %7582 = vmatpush1.msra.mxu0 0.0
    %7583 = vmatprep.subr.mxu0 0.0
    %7584 = vmatpush1.msra.mxu0 0.0
    %7585 = vmatprep.subr.mxu0 0.0
    %7586 = vmatpush1.msra.mxu0 0.0
    %7587 = vmatprep.subr.mxu0 0.0
    %7588 = vmatpush1.msra.mxu0 0.0
    %7589 = vmatprep.subr.mxu0 0.0
    %7590 = vmatpush1.msra.mxu0 0.0
    %7591 = vmatprep.subr.mxu0 0.0
    %7592 = vmatpush1.msra.mxu0 0.0
    %7593 = vmatprep.subr.mxu0 0.0
    %7594 = vmatpush1.msra.mxu0 0.0
    %7595 = vmatprep.subr.mxu0 0.0
    %7596 = vmatpush1.msra.mxu0 0.0
    %7597 = vmatprep.subr.mxu0 0.0
    %7598 = vmatpush1.msra.mxu0 0.0
    %7599 = vmatprep.mubr.f32.mxu0 0.0
    %7600 = vmatmul.mubr.f32.gmra.mrb[0].mxu0 %v7461
    %v7601 = vpop.f32.mrb[0].mxu0
    %v7602 = vadd.f32 0.0, %v7601
    %v7603 = vpop.f32.mrb[0].mxu0
    %7604 = vmatprep.mubr.f32.mxu0 0.0
    %7605 = vmatmul.mubr.f32.gmra.mrb[0].mxu0 %v7464
    %v7606 = vpop.f32.mrb[0].mxu0
    %v7607 = vadd.f32 0.0, %v7606
    %v7608 = vpop.f32.mrb[0].mxu0
    %7609 = vmatprep.mubr.f32.mxu0 0.0
    %7610 = vmatmul.mubr.f32.gmra.mrb[0].mxu0 %v7467
    %v7611 = vpop.f32.mrb[0].mxu0
    %v7612 = vadd.f32 0.0, %v7611
    %v7613 = vpop.f32.mrb[0].mxu0
    %7614 = vmatprep.mubr.f32.mxu0 0.0
    %7615 = vmatmul.mubr.f32.gmra.mrb[0].mxu0 %v7470
    %v7616 = vpop.f32.mrb[0].mxu0
    %v7617 = vadd.f32 0.0, %v7616
    %v7618 = vpop.f32.mrb[0].mxu0
    %7619 = vmatprep.mubr.f32.mxu0 0.0
    %7620 = vmatmul.mubr.f32.gmra.mrb[0].mxu0 %v7473
    %v7621 = vpop.f32.mrb[0].mxu0
    %v7622 = vadd.f32 0.0, %v7621
    %v7623 = vpop.f32.mrb[0].mxu0
    %7624 = vmatprep.mubr.f32.mxu0 0.0
    %7625 = vmatmul.mubr.f32.gmra.mrb[0].mxu0 %v7476
    %v7626 = vpop.f32.mrb[0].mxu0
    %v7627 = vadd.f32 0.0, %v7626
    %v7628 = vpop.f32.mrb[0].mxu0
    %7629 = vmatprep.mubr.f32.mxu0 0.0
    %7630 = vmatmul.mubr.f32.gmra.mrb[0].mxu0 %v7479
    %v7631 = vpop.f32.mrb[0].mxu0
    %v7632 = vadd.f32 0.0, %v7631
    %v7633 = vpop.f32.mrb[0].mxu0
    %7634 = vmatprep.mubr.f32.mxu0 0.0
    %7635 = vmatmul.mubr.f32.gmra.mrb[0].mxu0 %v7482
    %v7636 = vpop.f32.mrb[0].mxu0
    %v7637 = vadd.f32 0.0, %v7636
    %v7638 = vpop.f32.mrb[0].mxu0
    %7639 = vmatprep.mubr.f32.mxu0 0.0
    %7640 = vmatmul.mubr.f32.gmra.mrb[0].mxu0 %v7485
    %v7641 = vpop.f32.mrb[0].mxu0
    %v7642 = vadd.f32 0.0, %v7641
    %v7643 = vpop.f32.mrb[0].mxu0
    %7644 = vmatprep.mubr.f32.mxu0 0.0
    %7645 = vmatmul.mubr.f32.gmra.mrb[0].mxu0 %v7488
    %v7646 = vpop.f32.mrb[0].mxu0
    %v7647 = vadd.f32 0.0, %v7646
    %v7648 = vpop.f32.mrb[0].mxu0
    %7649 = vmatprep.mubr.f32.mxu0 0.0
    %7650 = vmatmul.mubr.f32.gmra.mrb[0].mxu0 %v7491
    %v7651 = vpop.f32.mrb[0].mxu0
    %v7652 = vadd.f32 0.0, %v7651
    %v7653 = vpop.f32.mrb[0].mxu0
    %7654 = vmatprep.mubr.f32.mxu0 0.0
    %7655 = vmatmul.mubr.f32.gmra.mrb[0].mxu0 %v7494
    %v7656 = vpop.f32.mrb[0].mxu0
    %v7657 = vadd.f32 0.0, %v7656
    %v7658 = vpop.f32.mrb[0].mxu0
    %7659 = vmatprep.mubr.f32.mxu0 0.0
    %7660 = vmatmul.mubr.f32.gmra.mrb[0].mxu0 %v7497
    %v7661 = vpop.f32.mrb[0].mxu0
    %v7662 = vadd.f32 0.0, %v7661
    %v7663 = vpop.f32.mrb[0].mxu0
    %7664 = vmatprep.mubr.f32.mxu0 0.0
    %7665 = vmatmul.mubr.f32.gmra.mrb[0].mxu0 %v7500
    %v7666 = vpop.f32.mrb[0].mxu0
    %v7667 = vadd.f32 0.0, %v7666
    %v7668 = vpop.f32.mrb[0].mxu0
    %7669 = vmatprep.mubr.f32.mxu0 0.0
    %7670 = vmatmul.mubr.f32.gmra.mrb[0].mxu0 %v7503
    %v7671 = vpop.f32.mrb[0].mxu0
    %v7672 = vadd.f32 0.0, %v7671
    %v7673 = vpop.f32.mrb[0].mxu0
    %7674 = vmatprep.mubr.f32.mxu0 0.0
    %7675 = vmatmul.mubr.f32.gmra.mrb[0].mxu0 %v7506
    %v7676 = vpop.f32.mrb[0].mxu0
    %v7677 = vadd.f32 0.0, %v7676
    %v7678 = vpop.f32.mrb[0].mxu0
    %7679 = vmatprep.mubr.f32.mxu0 0.0
    %7680 = vmatmul.mubr.f32.gmra.mrb[0].mxu0 %v7509
    %v7681 = vpop.f32.mrb[0].mxu0
    %v7682 = vadd.f32 0.0, %v7681
    %v7683 = vpop.f32.mrb[0].mxu0
    %7684 = vmatprep.mubr.f32.mxu0 0.0
    %7685 = vmatmul.mubr.f32.gmra.mrb[0].mxu0 %v7512
    %v7686 = vpop.f32.mrb[0].mxu0
    %v7687 = vadd.f32 0.0, %v7686
    %v7688 = vpop.f32.mrb[0].mxu0
    %7689 = vmatprep.mubr.f32.mxu0 0.0
    %7690 = vmatmul.mubr.f32.gmra.mrb[0].mxu0 %v7515
    %v7691 = vpop.f32.mrb[0].mxu0
    %v7692 = vadd.f32 0.0, %v7691
    %v7693 = vpop.f32.mrb[0].mxu0
    %7694 = vmatprep.mubr.f32.mxu0 0.0
    %7695 = vmatmul.mubr.f32.gmra.mrb[0].mxu0 %v7518
    %v7696 = vpop.f32.mrb[0].mxu0
    %v7697 = vadd.f32 0.0, %v7696
    %v7698 = vpop.f32.mrb[0].mxu0
    %7699 = vmatprep.mubr.f32.mxu0 0.0
    %7700 = vmatmul.mubr.f32.gmra.mrb[0].mxu0 %v7521
    %v7701 = vpop.f32.mrb[0].mxu0
    %v7702 = vadd.f32 0.0, %v7701
    %v7703 = vpop.f32.mrb[0].mxu0
    %7704 = vmatprep.mubr.f32.mxu0 0.0
    %7705 = vmatmul.mubr.f32.gmra.mrb[0].mxu0 %v7524
    %v7706 = vpop.f32.mrb[0].mxu0
    %v7707 = vadd.f32 0.0, %v7706
    %v7708 = vpop.f32.mrb[0].mxu0
    %7709 = vmatprep.mubr.f32.mxu0 0.0
    %7710 = vmatmul.mubr.f32.gmra.mrb[0].mxu0 %v7527
    %v7711 = vpop.f32.mrb[0].mxu0
    %v7712 = vadd.f32 0.0, %v7711
    %v7713 = vpop.f32.mrb[0].mxu0
    %7714 = vmatprep.mubr.f32.mxu0 0.0
    %7715 = vmatmul.mubr.f32.gmra.mrb[0].mxu0 %v7530
    %v7716 = vpop.f32.mrb[0].mxu0
    %v7717 = vadd.f32 0.0, %v7716
    %v7718 = vpop.f32.mrb[0].mxu0
    %7719 = vmatprep.mubr.f32.mxu0 0.0
    %7720 = vmatmul.mubr.f32.gmra.mrb[0].mxu0 %v7533
    %v7721 = vpop.f32.mrb[0].mxu0
    %v7722 = vadd.f32 0.0, %v7721
    %v7723 = vpop.f32.mrb[0].mxu0
    %7724 = vdwg.mxu0
    %v7725 = vadd.f32 %v7405, %v7602
    %v7726 = vadd.f32 %v7406, %v7607
    %v7727 = vadd.f32 %v7407, %v7612
    %v7728 = vadd.f32 %v7408, %v7617
    %v7729 = vadd.f32 %v7409, %v7622
    %v7730 = vadd.f32 %v7410, %v7627
    %v7731 = vadd.f32 %v7411, %v7632
    %v7732 = vadd.f32 %v7412, %v7637
    %v7733 = vadd.f32 %v7413, %v7642
    %v7734 = vadd.f32 %v7414, %v7647
    %v7735 = vadd.f32 %v7415, %v7652
    %v7736 = vadd.f32 %v7416, %v7657
    %v7737 = vadd.f32 %v7417, %v7662
    %v7738 = vadd.f32 %v7418, %v7667
    %v7739 = vadd.f32 %v7419, %v7672
    %v7740 = vadd.f32 %v7420, %v7677
    %v7741 = vadd.f32 %v7421, %v7682
    %v7742 = vadd.f32 %v7422, %v7687
    %v7743 = vadd.f32 %v7423, %v7692
    %v7744 = vadd.f32 %v7424, %v7697
    %v7745 = vadd.f32 %v7425, %v7702
    %v7746 = vadd.f32 %v7426, %v7707
    %v7747 = vadd.f32 %v7427, %v7712
    %v7748 = vadd.f32 %v7428, %v7717
    %v7749 = vadd.f32 %v7429, %v7722
    %v7750 = vld [vmem:[#allocation3 + $0x11] sm:$0xff]
    %v7751 = vld [vmem:[#allocation3 + $0x19] sm:$0xff]
    %v7752 = vld [vmem:[#allocation3 + $0x21] sm:$0xff]
    %v7753 = vld [vmem:[#allocation3 + $0x29] sm:$0xff]
    %v7754 = vld [vmem:[#allocation3 + $0x31] sm:$0xff]
    %v7755 = vld [vmem:[#allocation3 + $0x39] sm:$0xff]
    %v7756 = vld [vmem:[#allocation3 + $0x41] sm:$0xff]
    %v7757 = vld [vmem:[#allocation3 + $0x49] sm:$0xff]
    %v7758 = vld [vmem:[#allocation3 + $0x51] sm:$0xff]
    %v7759 = vld [vmem:[#allocation3 + $0x59] sm:$0xff]
    %v7760 = vld [vmem:[#allocation3 + $0x61] sm:$0xff]
    %v7761 = vld [vmem:[#allocation3 + $0x69] sm:$0xff]
    %v7762 = vld [vmem:[#allocation3 + $0x71] sm:$0xff]
    %v7763 = vld [vmem:[#allocation3 + $0x79] sm:$0xff]
    %v7764 = vld [vmem:[#allocation3 + $0x81] sm:$0xff]
    %v7765 = vld [vmem:[#allocation3 + $0x89] sm:$0xff]
    %v7766 = vld [vmem:[#allocation3 + $0x91] sm:$0xff]
    %v7767 = vld [vmem:[#allocation3 + $0x99] sm:$0xff]
    %v7768 = vld [vmem:[#allocation3 + $0xa1] sm:$0xff]
    %v7769 = vld [vmem:[#allocation3 + $0xa9] sm:$0xff]
    %v7770 = vld [vmem:[#allocation3 + $0xb1] sm:$0xff]
    %v7771 = vld [vmem:[#allocation3 + $0xb9] sm:$0xff]
    %v7772 = vld [vmem:[#allocation3 + $0xc1] sm:$0xff]
    %v7773 = vld [vmem:[#allocation3 + $0xc9] sm:$0xff]
    %v7774 = vld [vmem:[#allocation3 + $0xd1] sm:$0xff]
    %s7775 = scalar_lea.vmem [#allocation23], 160
    %v7776 = vld [vmem:[%s7775] sm:$0xff]
    %v7777 = vld [vmem:[%s7775 + $0x8] sm:$0xff]
    %v7778 = vld [vmem:[%s7775 + $0x10] sm:$0xff]
    %v7779 = vld [vmem:[%s7775 + $0x18] sm:$0xff]
    %v7781 = vsel %vm291, %v7750, 0
    %v7784 = vsel %vm291, %v7751, 0
    %v7787 = vsel %vm291, %v7752, 0
    %v7790 = vsel %vm291, %v7753, 0
    %v7793 = vsel %vm291, %v7754, 0
    %v7796 = vsel %vm291, %v7755, 0
    %v7799 = vsel %vm291, %v7756, 0
    %v7802 = vsel %vm291, %v7757, 0
    %v7805 = vsel %vm291, %v7758, 0
    %v7808 = vsel %vm291, %v7759, 0
    %v7811 = vsel %vm291, %v7760, 0
    %v7814 = vsel %vm291, %v7761, 0
    %v7817 = vsel %vm291, %v7762, 0
    %v7820 = vsel %vm291, %v7763, 0
    %v7823 = vsel %vm291, %v7764, 0
    %v7826 = vsel %vm291, %v7765, 0
    %v7829 = vsel %vm291, %v7766, 0
    %v7832 = vsel %vm291, %v7767, 0
    %v7835 = vsel %vm291, %v7768, 0
    %v7838 = vsel %vm291, %v7769, 0
    %v7841 = vsel %vm291, %v7770, 0
    %v7844 = vsel %vm291, %v7771, 0
    %v7847 = vsel %vm291, %v7772, 0
    %v7850 = vsel %vm291, %v7773, 0
    %v7853 = vsel %vm291, %v7774, 0
    %7855 = vmatprep.subr.mxu0 0.0
    %7856 = vmatpush1.msra.mxu0 %v7776
    %7857 = vmatprep.subr.mxu0 0.0
    %7858 = vmatpush1.msra.mxu0 %v7777
    %7859 = vmatprep.subr.mxu0 0.0
    %7860 = vmatpush1.msra.mxu0 %v7778
    %7861 = vmatprep.subr.mxu0 0.0
    %7862 = vmatpush1.msra.mxu0 %v7779
    %7863 = vmatprep.subr.mxu0 0.0
    %7864 = vmatpush1.msra.mxu0 0.0
    %7865 = vmatprep.subr.mxu0 0.0
    %7866 = vmatpush1.msra.mxu0 0.0
    %7867 = vmatprep.subr.mxu0 0.0
    %7868 = vmatpush1.msra.mxu0 0.0
    %7869 = vmatprep.subr.mxu0 0.0
    %7870 = vmatpush1.msra.mxu0 0.0
    %7871 = vmatprep.subr.mxu0 0.0
    %7872 = vmatpush1.msra.mxu0 0.0
    %7873 = vmatprep.subr.mxu0 0.0
    %7874 = vmatpush1.msra.mxu0 0.0
    %7875 = vmatprep.subr.mxu0 0.0
    %7876 = vmatpush1.msra.mxu0 0.0
    %7877 = vmatprep.subr.mxu0 0.0
    %7878 = vmatpush1.msra.mxu0 0.0
    %7879 = vmatprep.subr.mxu0 0.0
    %7880 = vmatpush1.msra.mxu0 0.0
    %7881 = vmatprep.subr.mxu0 0.0
    %7882 = vmatpush1.msra.mxu0 0.0
    %7883 = vmatprep.subr.mxu0 0.0
    %7884 = vmatpush1.msra.mxu0 0.0
    %7885 = vmatprep.subr.mxu0 0.0
    %7886 = vmatpush1.msra.mxu0 0.0
    %7887 = vmatprep.subr.mxu0 0.0
    %7888 = vmatpush1.msra.mxu0 0.0
    %7889 = vmatprep.subr.mxu0 0.0
    %7890 = vmatpush1.msra.mxu0 0.0
    %7891 = vmatprep.subr.mxu0 0.0
    %7892 = vmatpush1.msra.mxu0 0.0
    %7893 = vmatprep.subr.mxu0 0.0
    %7894 = vmatpush1.msra.mxu0 0.0
    %7895 = vmatprep.subr.mxu0 0.0
    %7896 = vmatpush1.msra.mxu0 0.0
    %7897 = vmatprep.subr.mxu0 0.0
    %7898 = vmatpush1.msra.mxu0 0.0
    %7899 = vmatprep.subr.mxu0 0.0
    %7900 = vmatpush1.msra.mxu0 0.0
    %7901 = vmatprep.subr.mxu0 0.0
    %7902 = vmatpush1.msra.mxu0 0.0
    %7903 = vmatprep.subr.mxu0 0.0
    %7904 = vmatpush1.msra.mxu0 0.0
    %7905 = vmatprep.subr.mxu0 0.0
    %7906 = vmatpush1.msra.mxu0 0.0
    %7907 = vmatprep.subr.mxu0 0.0
    %7908 = vmatpush1.msra.mxu0 0.0
    %7909 = vmatprep.subr.mxu0 0.0
    %7910 = vmatpush1.msra.mxu0 0.0
    %7911 = vmatprep.subr.mxu0 0.0
    %7912 = vmatpush1.msra.mxu0 0.0
    %7913 = vmatprep.subr.mxu0 0.0
    %7914 = vmatpush1.msra.mxu0 0.0
    %7915 = vmatprep.subr.mxu0 0.0
    %7916 = vmatpush1.msra.mxu0 0.0
    %7917 = vmatprep.subr.mxu0 0.0
    %7918 = vmatpush1.msra.mxu0 0.0
    %7919 = vmatprep.mubr.f32.mxu0 0.0
    %7920 = vmatmul.mubr.f32.gmra.mrb[0].mxu0 %v7781
    %v7921 = vpop.f32.mrb[0].mxu0
    %v7922 = vadd.f32 0.0, %v7921
    %v7923 = vpop.f32.mrb[0].mxu0
    %7924 = vmatprep.mubr.f32.mxu0 0.0
    %7925 = vmatmul.mubr.f32.gmra.mrb[0].mxu0 %v7784
    %v7926 = vpop.f32.mrb[0].mxu0
    %v7927 = vadd.f32 0.0, %v7926
    %v7928 = vpop.f32.mrb[0].mxu0
    %7929 = vmatprep.mubr.f32.mxu0 0.0
    %7930 = vmatmul.mubr.f32.gmra.mrb[0].mxu0 %v7787
    %v7931 = vpop.f32.mrb[0].mxu0
    %v7932 = vadd.f32 0.0, %v7931
    %v7933 = vpop.f32.mrb[0].mxu0
    %7934 = vmatprep.mubr.f32.mxu0 0.0
    %7935 = vmatmul.mubr.f32.gmra.mrb[0].mxu0 %v7790
    %v7936 = vpop.f32.mrb[0].mxu0
    %v7937 = vadd.f32 0.0, %v7936
    %v7938 = vpop.f32.mrb[0].mxu0
    %7939 = vmatprep.mubr.f32.mxu0 0.0
    %7940 = vmatmul.mubr.f32.gmra.mrb[0].mxu0 %v7793
    %v7941 = vpop.f32.mrb[0].mxu0
    %v7942 = vadd.f32 0.0, %v7941
    %v7943 = vpop.f32.mrb[0].mxu0
    %7944 = vmatprep.mubr.f32.mxu0 0.0
    %7945 = vmatmul.mubr.f32.gmra.mrb[0].mxu0 %v7796
    %v7946 = vpop.f32.mrb[0].mxu0
    %v7947 = vadd.f32 0.0, %v7946
    %v7948 = vpop.f32.mrb[0].mxu0
    %7949 = vmatprep.mubr.f32.mxu0 0.0
    %7950 = vmatmul.mubr.f32.gmra.mrb[0].mxu0 %v7799
    %v7951 = vpop.f32.mrb[0].mxu0
    %v7952 = vadd.f32 0.0, %v7951
    %v7953 = vpop.f32.mrb[0].mxu0
    %7954 = vmatprep.mubr.f32.mxu0 0.0
    %7955 = vmatmul.mubr.f32.gmra.mrb[0].mxu0 %v7802
    %v7956 = vpop.f32.mrb[0].mxu0
    %v7957 = vadd.f32 0.0, %v7956
    %v7958 = vpop.f32.mrb[0].mxu0
    %7959 = vmatprep.mubr.f32.mxu0 0.0
    %7960 = vmatmul.mubr.f32.gmra.mrb[0].mxu0 %v7805
    %v7961 = vpop.f32.mrb[0].mxu0
    %v7962 = vadd.f32 0.0, %v7961
    %v7963 = vpop.f32.mrb[0].mxu0
    %7964 = vmatprep.mubr.f32.mxu0 0.0
    %7965 = vmatmul.mubr.f32.gmra.mrb[0].mxu0 %v7808
    %v7966 = vpop.f32.mrb[0].mxu0
    %v7967 = vadd.f32 0.0, %v7966
    %v7968 = vpop.f32.mrb[0].mxu0
    %7969 = vmatprep.mubr.f32.mxu0 0.0
    %7970 = vmatmul.mubr.f32.gmra.mrb[0].mxu0 %v7811
    %v7971 = vpop.f32.mrb[0].mxu0
    %v7972 = vadd.f32 0.0, %v7971
    %v7973 = vpop.f32.mrb[0].mxu0
    %7974 = vmatprep.mubr.f32.mxu0 0.0
    %7975 = vmatmul.mubr.f32.gmra.mrb[0].mxu0 %v7814
    %v7976 = vpop.f32.mrb[0].mxu0
    %v7977 = vadd.f32 0.0, %v7976
    %v7978 = vpop.f32.mrb[0].mxu0
    %7979 = vmatprep.mubr.f32.mxu0 0.0
    %7980 = vmatmul.mubr.f32.gmra.mrb[0].mxu0 %v7817
    %v7981 = vpop.f32.mrb[0].mxu0
    %v7982 = vadd.f32 0.0, %v7981
    %v7983 = vpop.f32.mrb[0].mxu0
    %7984 = vmatprep.mubr.f32.mxu0 0.0
    %7985 = vmatmul.mubr.f32.gmra.mrb[0].mxu0 %v7820
    %v7986 = vpop.f32.mrb[0].mxu0
    %v7987 = vadd.f32 0.0, %v7986
    %v7988 = vpop.f32.mrb[0].mxu0
    %7989 = vmatprep.mubr.f32.mxu0 0.0
    %7990 = vmatmul.mubr.f32.gmra.mrb[0].mxu0 %v7823
    %v7991 = vpop.f32.mrb[0].mxu0
    %v7992 = vadd.f32 0.0, %v7991
    %v7993 = vpop.f32.mrb[0].mxu0
    %7994 = vmatprep.mubr.f32.mxu0 0.0
    %7995 = vmatmul.mubr.f32.gmra.mrb[0].mxu0 %v7826
    %v7996 = vpop.f32.mrb[0].mxu0
    %v7997 = vadd.f32 0.0, %v7996
    %v7998 = vpop.f32.mrb[0].mxu0
    %7999 = vmatprep.mubr.f32.mxu0 0.0
    %8000 = vmatmul.mubr.f32.gmra.mrb[0].mxu0 %v7829
    %v8001 = vpop.f32.mrb[0].mxu0
    %v8002 = vadd.f32 0.0, %v8001
    %v8003 = vpop.f32.mrb[0].mxu0
    %8004 = vmatprep.mubr.f32.mxu0 0.0
    %8005 = vmatmul.mubr.f32.gmra.mrb[0].mxu0 %v7832
    %v8006 = vpop.f32.mrb[0].mxu0
    %v8007 = vadd.f32 0.0, %v8006
    %v8008 = vpop.f32.mrb[0].mxu0
    %8009 = vmatprep.mubr.f32.mxu0 0.0
    %8010 = vmatmul.mubr.f32.gmra.mrb[0].mxu0 %v7835
    %v8011 = vpop.f32.mrb[0].mxu0
    %v8012 = vadd.f32 0.0, %v8011
    %v8013 = vpop.f32.mrb[0].mxu0
    %8014 = vmatprep.mubr.f32.mxu0 0.0
    %8015 = vmatmul.mubr.f32.gmra.mrb[0].mxu0 %v7838
    %v8016 = vpop.f32.mrb[0].mxu0
    %v8017 = vadd.f32 0.0, %v8016
    %v8018 = vpop.f32.mrb[0].mxu0
    %8019 = vmatprep.mubr.f32.mxu0 0.0
    %8020 = vmatmul.mubr.f32.gmra.mrb[0].mxu0 %v7841
    %v8021 = vpop.f32.mrb[0].mxu0
    %v8022 = vadd.f32 0.0, %v8021
    %v8023 = vpop.f32.mrb[0].mxu0
    %8024 = vmatprep.mubr.f32.mxu0 0.0
    %8025 = vmatmul.mubr.f32.gmra.mrb[0].mxu0 %v7844
    %v8026 = vpop.f32.mrb[0].mxu0
    %v8027 = vadd.f32 0.0, %v8026
    %v8028 = vpop.f32.mrb[0].mxu0
    %8029 = vmatprep.mubr.f32.mxu0 0.0
    %8030 = vmatmul.mubr.f32.gmra.mrb[0].mxu0 %v7847
    %v8031 = vpop.f32.mrb[0].mxu0
    %v8032 = vadd.f32 0.0, %v8031
    %v8033 = vpop.f32.mrb[0].mxu0
    %8034 = vmatprep.mubr.f32.mxu0 0.0
    %8035 = vmatmul.mubr.f32.gmra.mrb[0].mxu0 %v7850
    %v8036 = vpop.f32.mrb[0].mxu0
    %v8037 = vadd.f32 0.0, %v8036
    %v8038 = vpop.f32.mrb[0].mxu0
    %8039 = vmatprep.mubr.f32.mxu0 0.0
    %8040 = vmatmul.mubr.f32.gmra.mrb[0].mxu0 %v7853
    %v8041 = vpop.f32.mrb[0].mxu0
    %v8042 = vadd.f32 0.0, %v8041
    %v8043 = vpop.f32.mrb[0].mxu0
    %8044 = vdwg.mxu0
    %v8045 = vadd.f32 %v7725, %v7922
    %v8046 = vadd.f32 %v7726, %v7927
    %v8047 = vadd.f32 %v7727, %v7932
    %v8048 = vadd.f32 %v7728, %v7937
    %v8049 = vadd.f32 %v7729, %v7942
    %v8050 = vadd.f32 %v7730, %v7947
    %v8051 = vadd.f32 %v7731, %v7952
    %v8052 = vadd.f32 %v7732, %v7957
    %v8053 = vadd.f32 %v7733, %v7962
    %v8054 = vadd.f32 %v7734, %v7967
    %v8055 = vadd.f32 %v7735, %v7972
    %v8056 = vadd.f32 %v7736, %v7977
    %v8057 = vadd.f32 %v7737, %v7982
    %v8058 = vadd.f32 %v7738, %v7987
    %v8059 = vadd.f32 %v7739, %v7992
    %v8060 = vadd.f32 %v7740, %v7997
    %v8061 = vadd.f32 %v7741, %v8002
    %v8062 = vadd.f32 %v7742, %v8007
    %v8063 = vadd.f32 %v7743, %v8012
    %v8064 = vadd.f32 %v7744, %v8017
    %v8065 = vadd.f32 %v7745, %v8022
    %v8066 = vadd.f32 %v7746, %v8027
    %v8067 = vadd.f32 %v7747, %v8032
    %v8068 = vadd.f32 %v7748, %v8037
    %v8069 = vadd.f32 %v7749, %v8042
    %v8070 = vld [vmem:[#allocation3 + $0x19] sm:$0xff]
    %v8071 = vld [vmem:[#allocation3 + $0x21] sm:$0xff]
    %v8072 = vld [vmem:[#allocation3 + $0x29] sm:$0xff]
    %v8073 = vld [vmem:[#allocation3 + $0x31] sm:$0xff]
    %v8074 = vld [vmem:[#allocation3 + $0x39] sm:$0xff]
    %v8075 = vld [vmem:[#allocation3 + $0x41] sm:$0xff]
    %v8076 = vld [vmem:[#allocation3 + $0x49] sm:$0xff]
    %v8077 = vld [vmem:[#allocation3 + $0x51] sm:$0xff]
    %v8078 = vld [vmem:[#allocation3 + $0x59] sm:$0xff]
    %v8079 = vld [vmem:[#allocation3 + $0x61] sm:$0xff]
    %v8080 = vld [vmem:[#allocation3 + $0x69] sm:$0xff]
    %v8081 = vld [vmem:[#allocation3 + $0x71] sm:$0xff]
    %v8082 = vld [vmem:[#allocation3 + $0x79] sm:$0xff]
    %v8083 = vld [vmem:[#allocation3 + $0x81] sm:$0xff]
    %v8084 = vld [vmem:[#allocation3 + $0x89] sm:$0xff]
    %v8085 = vld [vmem:[#allocation3 + $0x91] sm:$0xff]
    %v8086 = vld [vmem:[#allocation3 + $0x99] sm:$0xff]
    %v8087 = vld [vmem:[#allocation3 + $0xa1] sm:$0xff]
    %v8088 = vld [vmem:[#allocation3 + $0xa9] sm:$0xff]
    %v8089 = vld [vmem:[#allocation3 + $0xb1] sm:$0xff]
    %v8090 = vld [vmem:[#allocation3 + $0xb9] sm:$0xff]
    %v8091 = vld [vmem:[#allocation3 + $0xc1] sm:$0xff]
    %v8092 = vld [vmem:[#allocation3 + $0xc9] sm:$0xff]
    %v8093 = vld [vmem:[#allocation3 + $0xd1] sm:$0xff]
    %v8094 = vld [vmem:[#allocation3 + $0xd9] sm:$0xff]
    %s8095 = scalar_lea.vmem [#allocation23], 192
    %v8096 = vld [vmem:[%s8095] sm:$0xff]
    %v8097 = vld [vmem:[%s8095 + $0x8] sm:$0xff]
    %v8098 = vld [vmem:[%s8095 + $0x10] sm:$0xff]
    %v8099 = vld [vmem:[%s8095 + $0x18] sm:$0xff]
    %v8101 = vsel %vm291, %v8070, 0
    %v8104 = vsel %vm291, %v8071, 0
    %v8107 = vsel %vm291, %v8072, 0
    %v8110 = vsel %vm291, %v8073, 0
    %v8113 = vsel %vm291, %v8074, 0
    %v8116 = vsel %vm291, %v8075, 0
    %v8119 = vsel %vm291, %v8076, 0
    %v8122 = vsel %vm291, %v8077, 0
    %v8125 = vsel %vm291, %v8078, 0
    %v8128 = vsel %vm291, %v8079, 0
    %v8131 = vsel %vm291, %v8080, 0
    %v8134 = vsel %vm291, %v8081, 0
    %v8137 = vsel %vm291, %v8082, 0
    %v8140 = vsel %vm291, %v8083, 0
    %v8143 = vsel %vm291, %v8084, 0
    %v8146 = vsel %vm291, %v8085, 0
    %v8149 = vsel %vm291, %v8086, 0
    %v8152 = vsel %vm291, %v8087, 0
    %v8155 = vsel %vm291, %v8088, 0
    %v8158 = vsel %vm291, %v8089, 0
    %v8161 = vsel %vm291, %v8090, 0
    %v8164 = vsel %vm291, %v8091, 0
    %v8167 = vsel %vm291, %v8092, 0
    %v8170 = vsel %vm291, %v8093, 0
    %v8173 = vsel %vm291, %v8094, 0
    %8175 = vmatprep.subr.mxu0 0.0
    %8176 = vmatpush1.msra.mxu0 %v8096
    %8177 = vmatprep.subr.mxu0 0.0
    %8178 = vmatpush1.msra.mxu0 %v8097
    %8179 = vmatprep.subr.mxu0 0.0
    %8180 = vmatpush1.msra.mxu0 %v8098
    %8181 = vmatprep.subr.mxu0 0.0
    %8182 = vmatpush1.msra.mxu0 %v8099
    %8183 = vmatprep.subr.mxu0 0.0
    %8184 = vmatpush1.msra.mxu0 0.0
    %8185 = vmatprep.subr.mxu0 0.0
    %8186 = vmatpush1.msra.mxu0 0.0
    %8187 = vmatprep.subr.mxu0 0.0
    %8188 = vmatpush1.msra.mxu0 0.0
    %8189 = vmatprep.subr.mxu0 0.0
    %8190 = vmatpush1.msra.mxu0 0.0
    %8191 = vmatprep.subr.mxu0 0.0
    %8192 = vmatpush1.msra.mxu0 0.0
    %8193 = vmatprep.subr.mxu0 0.0
    %8194 = vmatpush1.msra.mxu0 0.0
    %8195 = vmatprep.subr.mxu0 0.0
    %8196 = vmatpush1.msra.mxu0 0.0
    %8197 = vmatprep.subr.mxu0 0.0
    %8198 = vmatpush1.msra.mxu0 0.0
    %8199 = vmatprep.subr.mxu0 0.0
    %8200 = vmatpush1.msra.mxu0 0.0
    %8201 = vmatprep.subr.mxu0 0.0
    %8202 = vmatpush1.msra.mxu0 0.0
    %8203 = vmatprep.subr.mxu0 0.0
    %8204 = vmatpush1.msra.mxu0 0.0
    %8205 = vmatprep.subr.mxu0 0.0
    %8206 = vmatpush1.msra.mxu0 0.0
    %8207 = vmatprep.subr.mxu0 0.0
    %8208 = vmatpush1.msra.mxu0 0.0
    %8209 = vmatprep.subr.mxu0 0.0
    %8210 = vmatpush1.msra.mxu0 0.0
    %8211 = vmatprep.subr.mxu0 0.0
    %8212 = vmatpush1.msra.mxu0 0.0
    %8213 = vmatprep.subr.mxu0 0.0
    %8214 = vmatpush1.msra.mxu0 0.0
    %8215 = vmatprep.subr.mxu0 0.0
    %8216 = vmatpush1.msra.mxu0 0.0
    %8217 = vmatprep.subr.mxu0 0.0
    %8218 = vmatpush1.msra.mxu0 0.0
    %8219 = vmatprep.subr.mxu0 0.0
    %8220 = vmatpush1.msra.mxu0 0.0
    %8221 = vmatprep.subr.mxu0 0.0
    %8222 = vmatpush1.msra.mxu0 0.0
    %8223 = vmatprep.subr.mxu0 0.0
    %8224 = vmatpush1.msra.mxu0 0.0
    %8225 = vmatprep.subr.mxu0 0.0
    %8226 = vmatpush1.msra.mxu0 0.0
    %8227 = vmatprep.subr.mxu0 0.0
    %8228 = vmatpush1.msra.mxu0 0.0
    %8229 = vmatprep.subr.mxu0 0.0
    %8230 = vmatpush1.msra.mxu0 0.0
    %8231 = vmatprep.subr.mxu0 0.0
    %8232 = vmatpush1.msra.mxu0 0.0
    %8233 = vmatprep.subr.mxu0 0.0
    %8234 = vmatpush1.msra.mxu0 0.0
    %8235 = vmatprep.subr.mxu0 0.0
    %8236 = vmatpush1.msra.mxu0 0.0
    %8237 = vmatprep.subr.mxu0 0.0
    %8238 = vmatpush1.msra.mxu0 0.0
    %8239 = vmatprep.mubr.f32.mxu0 0.0
    %8240 = vmatmul.mubr.f32.gmra.mrb[0].mxu0 %v8101
    %v8241 = vpop.f32.mrb[0].mxu0
    %v8242 = vadd.f32 0.0, %v8241
    %v8243 = vpop.f32.mrb[0].mxu0
    %8244 = vmatprep.mubr.f32.mxu0 0.0
    %8245 = vmatmul.mubr.f32.gmra.mrb[0].mxu0 %v8104
    %v8246 = vpop.f32.mrb[0].mxu0
    %v8247 = vadd.f32 0.0, %v8246
    %v8248 = vpop.f32.mrb[0].mxu0
    %8249 = vmatprep.mubr.f32.mxu0 0.0
    %8250 = vmatmul.mubr.f32.gmra.mrb[0].mxu0 %v8107
    %v8251 = vpop.f32.mrb[0].mxu0
    %v8252 = vadd.f32 0.0, %v8251
    %v8253 = vpop.f32.mrb[0].mxu0
    %8254 = vmatprep.mubr.f32.mxu0 0.0
    %8255 = vmatmul.mubr.f32.gmra.mrb[0].mxu0 %v8110
    %v8256 = vpop.f32.mrb[0].mxu0
    %v8257 = vadd.f32 0.0, %v8256
    %v8258 = vpop.f32.mrb[0].mxu0
    %8259 = vmatprep.mubr.f32.mxu0 0.0
    %8260 = vmatmul.mubr.f32.gmra.mrb[0].mxu0 %v8113
    %v8261 = vpop.f32.mrb[0].mxu0
    %v8262 = vadd.f32 0.0, %v8261
    %v8263 = vpop.f32.mrb[0].mxu0
    %8264 = vmatprep.mubr.f32.mxu0 0.0
    %8265 = vmatmul.mubr.f32.gmra.mrb[0].mxu0 %v8116
    %v8266 = vpop.f32.mrb[0].mxu0
    %v8267 = vadd.f32 0.0, %v8266
    %v8268 = vpop.f32.mrb[0].mxu0
    %8269 = vmatprep.mubr.f32.mxu0 0.0
    %8270 = vmatmul.mubr.f32.gmra.mrb[0].mxu0 %v8119
    %v8271 = vpop.f32.mrb[0].mxu0
    %v8272 = vadd.f32 0.0, %v8271
    %v8273 = vpop.f32.mrb[0].mxu0
    %8274 = vmatprep.mubr.f32.mxu0 0.0
    %8275 = vmatmul.mubr.f32.gmra.mrb[0].mxu0 %v8122
    %v8276 = vpop.f32.mrb[0].mxu0
    %v8277 = vadd.f32 0.0, %v8276
    %v8278 = vpop.f32.mrb[0].mxu0
    %8279 = vmatprep.mubr.f32.mxu0 0.0
    %8280 = vmatmul.mubr.f32.gmra.mrb[0].mxu0 %v8125
    %v8281 = vpop.f32.mrb[0].mxu0
    %v8282 = vadd.f32 0.0, %v8281
    %v8283 = vpop.f32.mrb[0].mxu0
    %8284 = vmatprep.mubr.f32.mxu0 0.0
    %8285 = vmatmul.mubr.f32.gmra.mrb[0].mxu0 %v8128
    %v8286 = vpop.f32.mrb[0].mxu0
    %v8287 = vadd.f32 0.0, %v8286
    %v8288 = vpop.f32.mrb[0].mxu0
    %8289 = vmatprep.mubr.f32.mxu0 0.0
    %8290 = vmatmul.mubr.f32.gmra.mrb[0].mxu0 %v8131
    %v8291 = vpop.f32.mrb[0].mxu0
    %v8292 = vadd.f32 0.0, %v8291
    %v8293 = vpop.f32.mrb[0].mxu0
    %8294 = vmatprep.mubr.f32.mxu0 0.0
    %8295 = vmatmul.mubr.f32.gmra.mrb[0].mxu0 %v8134
    %v8296 = vpop.f32.mrb[0].mxu0
    %v8297 = vadd.f32 0.0, %v8296
    %v8298 = vpop.f32.mrb[0].mxu0
    %8299 = vmatprep.mubr.f32.mxu0 0.0
    %8300 = vmatmul.mubr.f32.gmra.mrb[0].mxu0 %v8137
    %v8301 = vpop.f32.mrb[0].mxu0
    %v8302 = vadd.f32 0.0, %v8301
    %v8303 = vpop.f32.mrb[0].mxu0
    %8304 = vmatprep.mubr.f32.mxu0 0.0
    %8305 = vmatmul.mubr.f32.gmra.mrb[0].mxu0 %v8140
    %v8306 = vpop.f32.mrb[0].mxu0
    %v8307 = vadd.f32 0.0, %v8306
    %v8308 = vpop.f32.mrb[0].mxu0
    %8309 = vmatprep.mubr.f32.mxu0 0.0
    %8310 = vmatmul.mubr.f32.gmra.mrb[0].mxu0 %v8143
    %v8311 = vpop.f32.mrb[0].mxu0
    %v8312 = vadd.f32 0.0, %v8311
    %v8313 = vpop.f32.mrb[0].mxu0
    %8314 = vmatprep.mubr.f32.mxu0 0.0
    %8315 = vmatmul.mubr.f32.gmra.mrb[0].mxu0 %v8146
    %v8316 = vpop.f32.mrb[0].mxu0
    %v8317 = vadd.f32 0.0, %v8316
    %v8318 = vpop.f32.mrb[0].mxu0
    %8319 = vmatprep.mubr.f32.mxu0 0.0
    %8320 = vmatmul.mubr.f32.gmra.mrb[0].mxu0 %v8149
    %v8321 = vpop.f32.mrb[0].mxu0
    %v8322 = vadd.f32 0.0, %v8321
    %v8323 = vpop.f32.mrb[0].mxu0
    %8324 = vmatprep.mubr.f32.mxu0 0.0
    %8325 = vmatmul.mubr.f32.gmra.mrb[0].mxu0 %v8152
    %v8326 = vpop.f32.mrb[0].mxu0
    %v8327 = vadd.f32 0.0, %v8326
    %v8328 = vpop.f32.mrb[0].mxu0
    %8329 = vmatprep.mubr.f32.mxu0 0.0
    %8330 = vmatmul.mubr.f32.gmra.mrb[0].mxu0 %v8155
    %v8331 = vpop.f32.mrb[0].mxu0
    %v8332 = vadd.f32 0.0, %v8331
    %v8333 = vpop.f32.mrb[0].mxu0
    %8334 = vmatprep.mubr.f32.mxu0 0.0
    %8335 = vmatmul.mubr.f32.gmra.mrb[0].mxu0 %v8158
    %v8336 = vpop.f32.mrb[0].mxu0
    %v8337 = vadd.f32 0.0, %v8336
    %v8338 = vpop.f32.mrb[0].mxu0
    %8339 = vmatprep.mubr.f32.mxu0 0.0
    %8340 = vmatmul.mubr.f32.gmra.mrb[0].mxu0 %v8161
    %v8341 = vpop.f32.mrb[0].mxu0
    %v8342 = vadd.f32 0.0, %v8341
    %v8343 = vpop.f32.mrb[0].mxu0
    %8344 = vmatprep.mubr.f32.mxu0 0.0
    %8345 = vmatmul.mubr.f32.gmra.mrb[0].mxu0 %v8164
    %v8346 = vpop.f32.mrb[0].mxu0
    %v8347 = vadd.f32 0.0, %v8346
    %v8348 = vpop.f32.mrb[0].mxu0
    %8349 = vmatprep.mubr.f32.mxu0 0.0
    %8350 = vmatmul.mubr.f32.gmra.mrb[0].mxu0 %v8167
    %v8351 = vpop.f32.mrb[0].mxu0
    %v8352 = vadd.f32 0.0, %v8351
    %v8353 = vpop.f32.mrb[0].mxu0
    %8354 = vmatprep.mubr.f32.mxu0 0.0
    %8355 = vmatmul.mubr.f32.gmra.mrb[0].mxu0 %v8170
    %v8356 = vpop.f32.mrb[0].mxu0
    %v8357 = vadd.f32 0.0, %v8356
    %v8358 = vpop.f32.mrb[0].mxu0
    %8359 = vmatprep.mubr.f32.mxu0 0.0
    %8360 = vmatmul.mubr.f32.gmra.mrb[0].mxu0 %v8173
    %v8361 = vpop.f32.mrb[0].mxu0
    %v8362 = vadd.f32 0.0, %v8361
    %v8363 = vpop.f32.mrb[0].mxu0
    %8364 = vdwg.mxu0
    %v8365 = vadd.f32 %v8045, %v8242
    %v8366 = vadd.f32 %v8046, %v8247
    %v8367 = vadd.f32 %v8047, %v8252
    %v8368 = vadd.f32 %v8048, %v8257
    %v8369 = vadd.f32 %v8049, %v8262
    %v8370 = vadd.f32 %v8050, %v8267
    %v8371 = vadd.f32 %v8051, %v8272
    %v8372 = vadd.f32 %v8052, %v8277
    %v8373 = vadd.f32 %v8053, %v8282
    %v8374 = vadd.f32 %v8054, %v8287
    %v8375 = vadd.f32 %v8055, %v8292
    %v8376 = vadd.f32 %v8056, %v8297
    %v8377 = vadd.f32 %v8057, %v8302
    %v8378 = vadd.f32 %v8058, %v8307
    %v8379 = vadd.f32 %v8059, %v8312
    %v8380 = vadd.f32 %v8060, %v8317
    %v8381 = vadd.f32 %v8061, %v8322
    %v8382 = vadd.f32 %v8062, %v8327
    %v8383 = vadd.f32 %v8063, %v8332
    %v8384 = vadd.f32 %v8064, %v8337
    %v8385 = vadd.f32 %v8065, %v8342
    %v8386 = vadd.f32 %v8066, %v8347
    %v8387 = vadd.f32 %v8067, %v8352
    %v8388 = vadd.f32 %v8068, %v8357
    %v8389 = vadd.f32 %v8069, %v8362
    %v8390 = vld [vmem:[#allocation3 + $0x1a] sm:$0xff]
    %v8391 = vld [vmem:[#allocation3 + $0x22] sm:$0xff]
    %v8392 = vld [vmem:[#allocation3 + $0x2a] sm:$0xff]
    %v8393 = vld [vmem:[#allocation3 + $0x32] sm:$0xff]
    %v8394 = vld [vmem:[#allocation3 + $0x3a] sm:$0xff]
    %v8395 = vld [vmem:[#allocation3 + $0x42] sm:$0xff]
    %v8396 = vld [vmem:[#allocation3 + $0x4a] sm:$0xff]
    %v8397 = vld [vmem:[#allocation3 + $0x52] sm:$0xff]
    %v8398 = vld [vmem:[#allocation3 + $0x5a] sm:$0xff]
    %v8399 = vld [vmem:[#allocation3 + $0x62] sm:$0xff]
    %v8400 = vld [vmem:[#allocation3 + $0x6a] sm:$0xff]
    %v8401 = vld [vmem:[#allocation3 + $0x72] sm:$0xff]
    %v8402 = vld [vmem:[#allocation3 + $0x7a] sm:$0xff]
    %v8403 = vld [vmem:[#allocation3 + $0x82] sm:$0xff]
    %v8404 = vld [vmem:[#allocation3 + $0x8a] sm:$0xff]
    %v8405 = vld [vmem:[#allocation3 + $0x92] sm:$0xff]
    %v8406 = vld [vmem:[#allocation3 + $0x9a] sm:$0xff]
    %v8407 = vld [vmem:[#allocation3 + $0xa2] sm:$0xff]
    %v8408 = vld [vmem:[#allocation3 + $0xaa] sm:$0xff]
    %v8409 = vld [vmem:[#allocation3 + $0xb2] sm:$0xff]
    %v8410 = vld [vmem:[#allocation3 + $0xba] sm:$0xff]
    %v8411 = vld [vmem:[#allocation3 + $0xc2] sm:$0xff]
    %v8412 = vld [vmem:[#allocation3 + $0xca] sm:$0xff]
    %v8413 = vld [vmem:[#allocation3 + $0xd2] sm:$0xff]
    %v8414 = vld [vmem:[#allocation3 + $0xda] sm:$0xff]
    %s8415 = scalar_lea.vmem [#allocation23], 224
    %v8416 = vld [vmem:[%s8415] sm:$0xff]
    %v8417 = vld [vmem:[%s8415 + $0x8] sm:$0xff]
    %v8418 = vld [vmem:[%s8415 + $0x10] sm:$0xff]
    %v8419 = vld [vmem:[%s8415 + $0x18] sm:$0xff]
    %v8421 = vsel %vm291, %v8390, 0
    %v8424 = vsel %vm291, %v8391, 0
    %v8427 = vsel %vm291, %v8392, 0
    %v8430 = vsel %vm291, %v8393, 0
    %v8433 = vsel %vm291, %v8394, 0
    %v8436 = vsel %vm291, %v8395, 0
    %v8439 = vsel %vm291, %v8396, 0
    %v8442 = vsel %vm291, %v8397, 0
    %v8445 = vsel %vm291, %v8398, 0
    %v8448 = vsel %vm291, %v8399, 0
    %v8451 = vsel %vm291, %v8400, 0
    %v8454 = vsel %vm291, %v8401, 0
    %v8457 = vsel %vm291, %v8402, 0
    %v8460 = vsel %vm291, %v8403, 0
    %v8463 = vsel %vm291, %v8404, 0
    %v8466 = vsel %vm291, %v8405, 0
    %v8469 = vsel %vm291, %v8406, 0
    %v8472 = vsel %vm291, %v8407, 0
    %v8475 = vsel %vm291, %v8408, 0
    %v8478 = vsel %vm291, %v8409, 0
    %v8481 = vsel %vm291, %v8410, 0
    %v8484 = vsel %vm291, %v8411, 0
    %v8487 = vsel %vm291, %v8412, 0
    %v8490 = vsel %vm291, %v8413, 0
    %v8493 = vsel %vm291, %v8414, 0
    %8495 = vmatprep.subr.mxu0 0.0
    %8496 = vmatpush1.msra.mxu0 %v8416
    %8497 = vmatprep.subr.mxu0 0.0
    %8498 = vmatpush1.msra.mxu0 %v8417
    %8499 = vmatprep.subr.mxu0 0.0
    %8500 = vmatpush1.msra.mxu0 %v8418
    %8501 = vmatprep.subr.mxu0 0.0
    %8502 = vmatpush1.msra.mxu0 %v8419
    %8503 = vmatprep.subr.mxu0 0.0
    %8504 = vmatpush1.msra.mxu0 0.0
    %8505 = vmatprep.subr.mxu0 0.0
    %8506 = vmatpush1.msra.mxu0 0.0
    %8507 = vmatprep.subr.mxu0 0.0
    %8508 = vmatpush1.msra.mxu0 0.0
    %8509 = vmatprep.subr.mxu0 0.0
    %8510 = vmatpush1.msra.mxu0 0.0
    %8511 = vmatprep.subr.mxu0 0.0
    %8512 = vmatpush1.msra.mxu0 0.0
    %8513 = vmatprep.subr.mxu0 0.0
    %8514 = vmatpush1.msra.mxu0 0.0
    %8515 = vmatprep.subr.mxu0 0.0
    %8516 = vmatpush1.msra.mxu0 0.0
    %8517 = vmatprep.subr.mxu0 0.0
    %8518 = vmatpush1.msra.mxu0 0.0
    %8519 = vmatprep.subr.mxu0 0.0
    %8520 = vmatpush1.msra.mxu0 0.0
    %8521 = vmatprep.subr.mxu0 0.0
    %8522 = vmatpush1.msra.mxu0 0.0
    %8523 = vmatprep.subr.mxu0 0.0
    %8524 = vmatpush1.msra.mxu0 0.0
    %8525 = vmatprep.subr.mxu0 0.0
    %8526 = vmatpush1.msra.mxu0 0.0
    %8527 = vmatprep.subr.mxu0 0.0
    %8528 = vmatpush1.msra.mxu0 0.0
    %8529 = vmatprep.subr.mxu0 0.0
    %8530 = vmatpush1.msra.mxu0 0.0
    %8531 = vmatprep.subr.mxu0 0.0
    %8532 = vmatpush1.msra.mxu0 0.0
    %8533 = vmatprep.subr.mxu0 0.0
    %8534 = vmatpush1.msra.mxu0 0.0
    %8535 = vmatprep.subr.mxu0 0.0
    %8536 = vmatpush1.msra.mxu0 0.0
    %8537 = vmatprep.subr.mxu0 0.0
    %8538 = vmatpush1.msra.mxu0 0.0
    %8539 = vmatprep.subr.mxu0 0.0
    %8540 = vmatpush1.msra.mxu0 0.0
    %8541 = vmatprep.subr.mxu0 0.0
    %8542 = vmatpush1.msra.mxu0 0.0
    %8543 = vmatprep.subr.mxu0 0.0
    %8544 = vmatpush1.msra.mxu0 0.0
    %8545 = vmatprep.subr.mxu0 0.0
    %8546 = vmatpush1.msra.mxu0 0.0
    %8547 = vmatprep.subr.mxu0 0.0
    %8548 = vmatpush1.msra.mxu0 0.0
    %8549 = vmatprep.subr.mxu0 0.0
    %8550 = vmatpush1.msra.mxu0 0.0
    %8551 = vmatprep.subr.mxu0 0.0
    %8552 = vmatpush1.msra.mxu0 0.0
    %8553 = vmatprep.subr.mxu0 0.0
    %8554 = vmatpush1.msra.mxu0 0.0
    %8555 = vmatprep.subr.mxu0 0.0
    %8556 = vmatpush1.msra.mxu0 0.0
    %8557 = vmatprep.subr.mxu0 0.0
    %8558 = vmatpush1.msra.mxu0 0.0
    %8559 = vmatprep.mubr.f32.mxu0 0.0
    %8560 = vmatmul.mubr.f32.gmra.mrb[0].mxu0 %v8421
    %v8561 = vpop.f32.mrb[0].mxu0
    %v8562 = vadd.f32 0.0, %v8561
    %v8563 = vpop.f32.mrb[0].mxu0
    %8564 = vmatprep.mubr.f32.mxu0 0.0
    %8565 = vmatmul.mubr.f32.gmra.mrb[0].mxu0 %v8424
    %v8566 = vpop.f32.mrb[0].mxu0
    %v8567 = vadd.f32 0.0, %v8566
    %v8568 = vpop.f32.mrb[0].mxu0
    %8569 = vmatprep.mubr.f32.mxu0 0.0
    %8570 = vmatmul.mubr.f32.gmra.mrb[0].mxu0 %v8427
    %v8571 = vpop.f32.mrb[0].mxu0
    %v8572 = vadd.f32 0.0, %v8571
    %v8573 = vpop.f32.mrb[0].mxu0
    %8574 = vmatprep.mubr.f32.mxu0 0.0
    %8575 = vmatmul.mubr.f32.gmra.mrb[0].mxu0 %v8430
    %v8576 = vpop.f32.mrb[0].mxu0
    %v8577 = vadd.f32 0.0, %v8576
    %v8578 = vpop.f32.mrb[0].mxu0
    %8579 = vmatprep.mubr.f32.mxu0 0.0
    %8580 = vmatmul.mubr.f32.gmra.mrb[0].mxu0 %v8433
    %v8581 = vpop.f32.mrb[0].mxu0
    %v8582 = vadd.f32 0.0, %v8581
    %v8583 = vpop.f32.mrb[0].mxu0
    %8584 = vmatprep.mubr.f32.mxu0 0.0
    %8585 = vmatmul.mubr.f32.gmra.mrb[0].mxu0 %v8436
    %v8586 = vpop.f32.mrb[0].mxu0
    %v8587 = vadd.f32 0.0, %v8586
    %v8588 = vpop.f32.mrb[0].mxu0
    %8589 = vmatprep.mubr.f32.mxu0 0.0
    %8590 = vmatmul.mubr.f32.gmra.mrb[0].mxu0 %v8439
    %v8591 = vpop.f32.mrb[0].mxu0
    %v8592 = vadd.f32 0.0, %v8591
    %v8593 = vpop.f32.mrb[0].mxu0
    %8594 = vmatprep.mubr.f32.mxu0 0.0
    %8595 = vmatmul.mubr.f32.gmra.mrb[0].mxu0 %v8442
    %v8596 = vpop.f32.mrb[0].mxu0
    %v8597 = vadd.f32 0.0, %v8596
    %v8598 = vpop.f32.mrb[0].mxu0
    %8599 = vmatprep.mubr.f32.mxu0 0.0
    %8600 = vmatmul.mubr.f32.gmra.mrb[0].mxu0 %v8445
    %v8601 = vpop.f32.mrb[0].mxu0
    %v8602 = vadd.f32 0.0, %v8601
    %v8603 = vpop.f32.mrb[0].mxu0
    %8604 = vmatprep.mubr.f32.mxu0 0.0
    %8605 = vmatmul.mubr.f32.gmra.mrb[0].mxu0 %v8448
    %v8606 = vpop.f32.mrb[0].mxu0
    %v8607 = vadd.f32 0.0, %v8606
    %v8608 = vpop.f32.mrb[0].mxu0
    %8609 = vmatprep.mubr.f32.mxu0 0.0
    %8610 = vmatmul.mubr.f32.gmra.mrb[0].mxu0 %v8451
    %v8611 = vpop.f32.mrb[0].mxu0
    %v8612 = vadd.f32 0.0, %v8611
    %v8613 = vpop.f32.mrb[0].mxu0
    %8614 = vmatprep.mubr.f32.mxu0 0.0
    %8615 = vmatmul.mubr.f32.gmra.mrb[0].mxu0 %v8454
    %v8616 = vpop.f32.mrb[0].mxu0
    %v8617 = vadd.f32 0.0, %v8616
    %v8618 = vpop.f32.mrb[0].mxu0
    %8619 = vmatprep.mubr.f32.mxu0 0.0
    %8620 = vmatmul.mubr.f32.gmra.mrb[0].mxu0 %v8457
    %v8621 = vpop.f32.mrb[0].mxu0
    %v8622 = vadd.f32 0.0, %v8621
    %v8623 = vpop.f32.mrb[0].mxu0
    %8624 = vmatprep.mubr.f32.mxu0 0.0
    %8625 = vmatmul.mubr.f32.gmra.mrb[0].mxu0 %v8460
    %v8626 = vpop.f32.mrb[0].mxu0
    %v8627 = vadd.f32 0.0, %v8626
    %v8628 = vpop.f32.mrb[0].mxu0
    %8629 = vmatprep.mubr.f32.mxu0 0.0
    %8630 = vmatmul.mubr.f32.gmra.mrb[0].mxu0 %v8463
    %v8631 = vpop.f32.mrb[0].mxu0
    %v8632 = vadd.f32 0.0, %v8631
    %v8633 = vpop.f32.mrb[0].mxu0
    %8634 = vmatprep.mubr.f32.mxu0 0.0
    %8635 = vmatmul.mubr.f32.gmra.mrb[0].mxu0 %v8466
    %v8636 = vpop.f32.mrb[0].mxu0
    %v8637 = vadd.f32 0.0, %v8636
    %v8638 = vpop.f32.mrb[0].mxu0
    %8639 = vmatprep.mubr.f32.mxu0 0.0
    %8640 = vmatmul.mubr.f32.gmra.mrb[0].mxu0 %v8469
    %v8641 = vpop.f32.mrb[0].mxu0
    %v8642 = vadd.f32 0.0, %v8641
    %v8643 = vpop.f32.mrb[0].mxu0
    %8644 = vmatprep.mubr.f32.mxu0 0.0
    %8645 = vmatmul.mubr.f32.gmra.mrb[0].mxu0 %v8472
    %v8646 = vpop.f32.mrb[0].mxu0
    %v8647 = vadd.f32 0.0, %v8646
    %v8648 = vpop.f32.mrb[0].mxu0
    %8649 = vmatprep.mubr.f32.mxu0 0.0
    %8650 = vmatmul.mubr.f32.gmra.mrb[0].mxu0 %v8475
    %v8651 = vpop.f32.mrb[0].mxu0
    %v8652 = vadd.f32 0.0, %v8651
    %v8653 = vpop.f32.mrb[0].mxu0
    %8654 = vmatprep.mubr.f32.mxu0 0.0
    %8655 = vmatmul.mubr.f32.gmra.mrb[0].mxu0 %v8478
    %v8656 = vpop.f32.mrb[0].mxu0
    %v8657 = vadd.f32 0.0, %v8656
    %v8658 = vpop.f32.mrb[0].mxu0
    %8659 = vmatprep.mubr.f32.mxu0 0.0
    %8660 = vmatmul.mubr.f32.gmra.mrb[0].mxu0 %v8481
    %v8661 = vpop.f32.mrb[0].mxu0
    %v8662 = vadd.f32 0.0, %v8661
    %v8663 = vpop.f32.mrb[0].mxu0
    %8664 = vmatprep.mubr.f32.mxu0 0.0
    %8665 = vmatmul.mubr.f32.gmra.mrb[0].mxu0 %v8484
    %v8666 = vpop.f32.mrb[0].mxu0
    %v8667 = vadd.f32 0.0, %v8666
    %v8668 = vpop.f32.mrb[0].mxu0
    %8669 = vmatprep.mubr.f32.mxu0 0.0
    %8670 = vmatmul.mubr.f32.gmra.mrb[0].mxu0 %v8487
    %v8671 = vpop.f32.mrb[0].mxu0
    %v8672 = vadd.f32 0.0, %v8671
    %v8673 = vpop.f32.mrb[0].mxu0
    %8674 = vmatprep.mubr.f32.mxu0 0.0
    %8675 = vmatmul.mubr.f32.gmra.mrb[0].mxu0 %v8490
    %v8676 = vpop.f32.mrb[0].mxu0
    %v8677 = vadd.f32 0.0, %v8676
    %v8678 = vpop.f32.mrb[0].mxu0
    %8679 = vmatprep.mubr.f32.mxu0 0.0
    %8680 = vmatmul.mubr.f32.gmra.mrb[0].mxu0 %v8493
    %v8681 = vpop.f32.mrb[0].mxu0
    %v8682 = vadd.f32 0.0, %v8681
    %v8683 = vpop.f32.mrb[0].mxu0
    %8684 = vdwg.mxu0
    %v8685 = vadd.f32 %v8365, %v8562
    %v8686 = vadd.f32 %v8366, %v8567
    %v8687 = vadd.f32 %v8367, %v8572
    %v8688 = vadd.f32 %v8368, %v8577
    %v8689 = vadd.f32 %v8369, %v8582
    %v8690 = vadd.f32 %v8370, %v8587
    %v8691 = vadd.f32 %v8371, %v8592
    %v8692 = vadd.f32 %v8372, %v8597
    %v8693 = vadd.f32 %v8373, %v8602
    %v8694 = vadd.f32 %v8374, %v8607
    %v8695 = vadd.f32 %v8375, %v8612
    %v8696 = vadd.f32 %v8376, %v8617
    %v8697 = vadd.f32 %v8377, %v8622
    %v8698 = vadd.f32 %v8378, %v8627
    %v8699 = vadd.f32 %v8379, %v8632
    %v8700 = vadd.f32 %v8380, %v8637
    %v8701 = vadd.f32 %v8381, %v8642
    %v8702 = vadd.f32 %v8382, %v8647
    %v8703 = vadd.f32 %v8383, %v8652
    %v8704 = vadd.f32 %v8384, %v8657
    %v8705 = vadd.f32 %v8385, %v8662
    %v8706 = vadd.f32 %v8386, %v8667
    %v8707 = vadd.f32 %v8387, %v8672
    %v8708 = vadd.f32 %v8388, %v8677
    %v8709 = vadd.f32 %v8389, %v8682
    %v8710 = vld [vmem:[#allocation3 + $0x1b] sm:$0xff]
    %v8711 = vld [vmem:[#allocation3 + $0x23] sm:$0xff]
    %v8712 = vld [vmem:[#allocation3 + $0x2b] sm:$0xff]
    %v8713 = vld [vmem:[#allocation3 + $0x33] sm:$0xff]
    %v8714 = vld [vmem:[#allocation3 + $0x3b] sm:$0xff]
    %v8715 = vld [vmem:[#allocation3 + $0x43] sm:$0xff]
    %v8716 = vld [vmem:[#allocation3 + $0x4b] sm:$0xff]
    %v8717 = vld [vmem:[#allocation3 + $0x53] sm:$0xff]
    %v8718 = vld [vmem:[#allocation3 + $0x5b] sm:$0xff]
    %v8719 = vld [vmem:[#allocation3 + $0x63] sm:$0xff]
    %v8720 = vld [vmem:[#allocation3 + $0x6b] sm:$0xff]
    %v8721 = vld [vmem:[#allocation3 + $0x73] sm:$0xff]
    %v8722 = vld [vmem:[#allocation3 + $0x7b] sm:$0xff]
    %v8723 = vld [vmem:[#allocation3 + $0x83] sm:$0xff]
    %v8724 = vld [vmem:[#allocation3 + $0x8b] sm:$0xff]
    %v8725 = vld [vmem:[#allocation3 + $0x93] sm:$0xff]
    %v8726 = vld [vmem:[#allocation3 + $0x9b] sm:$0xff]
    %v8727 = vld [vmem:[#allocation3 + $0xa3] sm:$0xff]
    %v8728 = vld [vmem:[#allocation3 + $0xab] sm:$0xff]
    %v8729 = vld [vmem:[#allocation3 + $0xb3] sm:$0xff]
    %v8730 = vld [vmem:[#allocation3 + $0xbb] sm:$0xff]
    %v8731 = vld [vmem:[#allocation3 + $0xc3] sm:$0xff]
    %v8732 = vld [vmem:[#allocation3 + $0xcb] sm:$0xff]
    %v8733 = vld [vmem:[#allocation3 + $0xd3] sm:$0xff]
    %v8734 = vld [vmem:[#allocation3 + $0xdb] sm:$0xff]
    %s8735 = scalar_lea.vmem [#allocation23], 256
    %v8736 = vld [vmem:[%s8735] sm:$0xff]
    %v8737 = vld [vmem:[%s8735 + $0x8] sm:$0xff]
    %v8738 = vld [vmem:[%s8735 + $0x10] sm:$0xff]
    %v8739 = vld [vmem:[%s8735 + $0x18] sm:$0xff]
    %v8741 = vsel %vm291, %v8710, 0
    %v8744 = vsel %vm291, %v8711, 0
    %v8747 = vsel %vm291, %v8712, 0
    %v8750 = vsel %vm291, %v8713, 0
    %v8753 = vsel %vm291, %v8714, 0
    %v8756 = vsel %vm291, %v8715, 0
    %v8759 = vsel %vm291, %v8716, 0
    %v8762 = vsel %vm291, %v8717, 0
    %v8765 = vsel %vm291, %v8718, 0
    %v8768 = vsel %vm291, %v8719, 0
    %v8771 = vsel %vm291, %v8720, 0
    %v8774 = vsel %vm291, %v8721, 0
    %v8777 = vsel %vm291, %v8722, 0
    %v8780 = vsel %vm291, %v8723, 0
    %v8783 = vsel %vm291, %v8724, 0
    %v8786 = vsel %vm291, %v8725, 0
    %v8789 = vsel %vm291, %v8726, 0
    %v8792 = vsel %vm291, %v8727, 0
    %v8795 = vsel %vm291, %v8728, 0
    %v8798 = vsel %vm291, %v8729, 0
    %v8801 = vsel %vm291, %v8730, 0
    %v8804 = vsel %vm291, %v8731, 0
    %v8807 = vsel %vm291, %v8732, 0
    %v8810 = vsel %vm291, %v8733, 0
    %v8813 = vsel %vm291, %v8734, 0
    %8815 = vmatprep.subr.mxu0 0.0
    %8816 = vmatpush1.msra.mxu0 %v8736
    %8817 = vmatprep.subr.mxu0 0.0
    %8818 = vmatpush1.msra.mxu0 %v8737
    %8819 = vmatprep.subr.mxu0 0.0
    %8820 = vmatpush1.msra.mxu0 %v8738
    %8821 = vmatprep.subr.mxu0 0.0
    %8822 = vmatpush1.msra.mxu0 %v8739
    %8823 = vmatprep.subr.mxu0 0.0
    %8824 = vmatpush1.msra.mxu0 0.0
    %8825 = vmatprep.subr.mxu0 0.0
    %8826 = vmatpush1.msra.mxu0 0.0
    %8827 = vmatprep.subr.mxu0 0.0
    %8828 = vmatpush1.msra.mxu0 0.0
    %8829 = vmatprep.subr.mxu0 0.0
    %8830 = vmatpush1.msra.mxu0 0.0
    %8831 = vmatprep.subr.mxu0 0.0
    %8832 = vmatpush1.msra.mxu0 0.0
    %8833 = vmatprep.subr.mxu0 0.0
    %8834 = vmatpush1.msra.mxu0 0.0
    %8835 = vmatprep.subr.mxu0 0.0
    %8836 = vmatpush1.msra.mxu0 0.0
    %8837 = vmatprep.subr.mxu0 0.0
    %8838 = vmatpush1.msra.mxu0 0.0
    %8839 = vmatprep.subr.mxu0 0.0
    %8840 = vmatpush1.msra.mxu0 0.0
    %8841 = vmatprep.subr.mxu0 0.0
    %8842 = vmatpush1.msra.mxu0 0.0
    %8843 = vmatprep.subr.mxu0 0.0
    %8844 = vmatpush1.msra.mxu0 0.0
    %8845 = vmatprep.subr.mxu0 0.0
    %8846 = vmatpush1.msra.mxu0 0.0
    %8847 = vmatprep.subr.mxu0 0.0
    %8848 = vmatpush1.msra.mxu0 0.0
    %8849 = vmatprep.subr.mxu0 0.0
    %8850 = vmatpush1.msra.mxu0 0.0
    %8851 = vmatprep.subr.mxu0 0.0
    %8852 = vmatpush1.msra.mxu0 0.0
    %8853 = vmatprep.subr.mxu0 0.0
    %8854 = vmatpush1.msra.mxu0 0.0
    %8855 = vmatprep.subr.mxu0 0.0
    %8856 = vmatpush1.msra.mxu0 0.0
    %8857 = vmatprep.subr.mxu0 0.0
    %8858 = vmatpush1.msra.mxu0 0.0
    %8859 = vmatprep.subr.mxu0 0.0
    %8860 = vmatpush1.msra.mxu0 0.0
    %8861 = vmatprep.subr.mxu0 0.0
    %8862 = vmatpush1.msra.mxu0 0.0
    %8863 = vmatprep.subr.mxu0 0.0
    %8864 = vmatpush1.msra.mxu0 0.0
    %8865 = vmatprep.subr.mxu0 0.0
    %8866 = vmatpush1.msra.mxu0 0.0
    %8867 = vmatprep.subr.mxu0 0.0
    %8868 = vmatpush1.msra.mxu0 0.0
    %8869 = vmatprep.subr.mxu0 0.0
    %8870 = vmatpush1.msra.mxu0 0.0
    %8871 = vmatprep.subr.mxu0 0.0
    %8872 = vmatpush1.msra.mxu0 0.0
    %8873 = vmatprep.subr.mxu0 0.0
    %8874 = vmatpush1.msra.mxu0 0.0
    %8875 = vmatprep.subr.mxu0 0.0
    %8876 = vmatpush1.msra.mxu0 0.0
    %8877 = vmatprep.subr.mxu0 0.0
    %8878 = vmatpush1.msra.mxu0 0.0
    %8879 = vmatprep.mubr.f32.mxu0 0.0
    %8880 = vmatmul.mubr.f32.gmra.mrb[0].mxu0 %v8741
    %v8881 = vpop.f32.mrb[0].mxu0
    %v8882 = vadd.f32 0.0, %v8881
    %v8883 = vpop.f32.mrb[0].mxu0
    %8884 = vmatprep.mubr.f32.mxu0 0.0
    %8885 = vmatmul.mubr.f32.gmra.mrb[0].mxu0 %v8744
    %v8886 = vpop.f32.mrb[0].mxu0
    %v8887 = vadd.f32 0.0, %v8886
    %v8888 = vpop.f32.mrb[0].mxu0
    %8889 = vmatprep.mubr.f32.mxu0 0.0
    %8890 = vmatmul.mubr.f32.gmra.mrb[0].mxu0 %v8747
    %v8891 = vpop.f32.mrb[0].mxu0
    %v8892 = vadd.f32 0.0, %v8891
    %v8893 = vpop.f32.mrb[0].mxu0
    %8894 = vmatprep.mubr.f32.mxu0 0.0
    %8895 = vmatmul.mubr.f32.gmra.mrb[0].mxu0 %v8750
    %v8896 = vpop.f32.mrb[0].mxu0
    %v8897 = vadd.f32 0.0, %v8896
    %v8898 = vpop.f32.mrb[0].mxu0
    %8899 = vmatprep.mubr.f32.mxu0 0.0
    %8900 = vmatmul.mubr.f32.gmra.mrb[0].mxu0 %v8753
    %v8901 = vpop.f32.mrb[0].mxu0
    %v8902 = vadd.f32 0.0, %v8901
    %v8903 = vpop.f32.mrb[0].mxu0
    %8904 = vmatprep.mubr.f32.mxu0 0.0
    %8905 = vmatmul.mubr.f32.gmra.mrb[0].mxu0 %v8756
    %v8906 = vpop.f32.mrb[0].mxu0
    %v8907 = vadd.f32 0.0, %v8906
    %v8908 = vpop.f32.mrb[0].mxu0
    %8909 = vmatprep.mubr.f32.mxu0 0.0
    %8910 = vmatmul.mubr.f32.gmra.mrb[0].mxu0 %v8759
    %v8911 = vpop.f32.mrb[0].mxu0
    %v8912 = vadd.f32 0.0, %v8911
    %v8913 = vpop.f32.mrb[0].mxu0
    %8914 = vmatprep.mubr.f32.mxu0 0.0
    %8915 = vmatmul.mubr.f32.gmra.mrb[0].mxu0 %v8762
    %v8916 = vpop.f32.mrb[0].mxu0
    %v8917 = vadd.f32 0.0, %v8916
    %v8918 = vpop.f32.mrb[0].mxu0
    %8919 = vmatprep.mubr.f32.mxu0 0.0
    %8920 = vmatmul.mubr.f32.gmra.mrb[0].mxu0 %v8765
    %v8921 = vpop.f32.mrb[0].mxu0
    %v8922 = vadd.f32 0.0, %v8921
    %v8923 = vpop.f32.mrb[0].mxu0
    %8924 = vmatprep.mubr.f32.mxu0 0.0
    %8925 = vmatmul.mubr.f32.gmra.mrb[0].mxu0 %v8768
    %v8926 = vpop.f32.mrb[0].mxu0
    %v8927 = vadd.f32 0.0, %v8926
    %v8928 = vpop.f32.mrb[0].mxu0
    %8929 = vmatprep.mubr.f32.mxu0 0.0
    %8930 = vmatmul.mubr.f32.gmra.mrb[0].mxu0 %v8771
    %v8931 = vpop.f32.mrb[0].mxu0
    %v8932 = vadd.f32 0.0, %v8931
    %v8933 = vpop.f32.mrb[0].mxu0
    %8934 = vmatprep.mubr.f32.mxu0 0.0
    %8935 = vmatmul.mubr.f32.gmra.mrb[0].mxu0 %v8774
    %v8936 = vpop.f32.mrb[0].mxu0
    %v8937 = vadd.f32 0.0, %v8936
    %v8938 = vpop.f32.mrb[0].mxu0
    %8939 = vmatprep.mubr.f32.mxu0 0.0
    %8940 = vmatmul.mubr.f32.gmra.mrb[0].mxu0 %v8777
    %v8941 = vpop.f32.mrb[0].mxu0
    %v8942 = vadd.f32 0.0, %v8941
    %v8943 = vpop.f32.mrb[0].mxu0
    %8944 = vmatprep.mubr.f32.mxu0 0.0
    %8945 = vmatmul.mubr.f32.gmra.mrb[0].mxu0 %v8780
    %v8946 = vpop.f32.mrb[0].mxu0
    %v8947 = vadd.f32 0.0, %v8946
    %v8948 = vpop.f32.mrb[0].mxu0
    %8949 = vmatprep.mubr.f32.mxu0 0.0
    %8950 = vmatmul.mubr.f32.gmra.mrb[0].mxu0 %v8783
    %v8951 = vpop.f32.mrb[0].mxu0
    %v8952 = vadd.f32 0.0, %v8951
    %v8953 = vpop.f32.mrb[0].mxu0
    %8954 = vmatprep.mubr.f32.mxu0 0.0
    %8955 = vmatmul.mubr.f32.gmra.mrb[0].mxu0 %v8786
    %v8956 = vpop.f32.mrb[0].mxu0
    %v8957 = vadd.f32 0.0, %v8956
    %v8958 = vpop.f32.mrb[0].mxu0
    %8959 = vmatprep.mubr.f32.mxu0 0.0
    %8960 = vmatmul.mubr.f32.gmra.mrb[0].mxu0 %v8789
    %v8961 = vpop.f32.mrb[0].mxu0
    %v8962 = vadd.f32 0.0, %v8961
    %v8963 = vpop.f32.mrb[0].mxu0
    %8964 = vmatprep.mubr.f32.mxu0 0.0
    %8965 = vmatmul.mubr.f32.gmra.mrb[0].mxu0 %v8792
    %v8966 = vpop.f32.mrb[0].mxu0
    %v8967 = vadd.f32 0.0, %v8966
    %v8968 = vpop.f32.mrb[0].mxu0
    %8969 = vmatprep.mubr.f32.mxu0 0.0
    %8970 = vmatmul.mubr.f32.gmra.mrb[0].mxu0 %v8795
    %v8971 = vpop.f32.mrb[0].mxu0
    %v8972 = vadd.f32 0.0, %v8971
    %v8973 = vpop.f32.mrb[0].mxu0
    %8974 = vmatprep.mubr.f32.mxu0 0.0
    %8975 = vmatmul.mubr.f32.gmra.mrb[0].mxu0 %v8798
    %v8976 = vpop.f32.mrb[0].mxu0
    %v8977 = vadd.f32 0.0, %v8976
    %v8978 = vpop.f32.mrb[0].mxu0
    %8979 = vmatprep.mubr.f32.mxu0 0.0
    %8980 = vmatmul.mubr.f32.gmra.mrb[0].mxu0 %v8801
    %v8981 = vpop.f32.mrb[0].mxu0
    %v8982 = vadd.f32 0.0, %v8981
    %v8983 = vpop.f32.mrb[0].mxu0
    %8984 = vmatprep.mubr.f32.mxu0 0.0
    %8985 = vmatmul.mubr.f32.gmra.mrb[0].mxu0 %v8804
    %v8986 = vpop.f32.mrb[0].mxu0
    %v8987 = vadd.f32 0.0, %v8986
    %v8988 = vpop.f32.mrb[0].mxu0
    %8989 = vmatprep.mubr.f32.mxu0 0.0
    %8990 = vmatmul.mubr.f32.gmra.mrb[0].mxu0 %v8807
    %v8991 = vpop.f32.mrb[0].mxu0
    %v8992 = vadd.f32 0.0, %v8991
    %v8993 = vpop.f32.mrb[0].mxu0
    %8994 = vmatprep.mubr.f32.mxu0 0.0
    %8995 = vmatmul.mubr.f32.gmra.mrb[0].mxu0 %v8810
    %v8996 = vpop.f32.mrb[0].mxu0
    %v8997 = vadd.f32 0.0, %v8996
    %v8998 = vpop.f32.mrb[0].mxu0
    %8999 = vmatprep.mubr.f32.mxu0 0.0
    %9000 = vmatmul.mubr.f32.gmra.mrb[0].mxu0 %v8813
    %v9001 = vpop.f32.mrb[0].mxu0
    %v9002 = vadd.f32 0.0, %v9001
    %v9003 = vpop.f32.mrb[0].mxu0
    %9004 = vdwg.mxu0
    %v9005 = vadd.f32 %v8685, %v8882
    %v9006 = vadd.f32 %v8686, %v8887
    %v9007 = vadd.f32 %v8687, %v8892
    %v9008 = vadd.f32 %v8688, %v8897
    %v9009 = vadd.f32 %v8689, %v8902
    %v9010 = vadd.f32 %v8690, %v8907
    %v9011 = vadd.f32 %v8691, %v8912
    %v9012 = vadd.f32 %v8692, %v8917
    %v9013 = vadd.f32 %v8693, %v8922
    %v9014 = vadd.f32 %v8694, %v8927
    %v9015 = vadd.f32 %v8695, %v8932
    %v9016 = vadd.f32 %v8696, %v8937
    %v9017 = vadd.f32 %v8697, %v8942
    %v9018 = vadd.f32 %v8698, %v8947
    %v9019 = vadd.f32 %v8699, %v8952
    %v9020 = vadd.f32 %v8700, %v8957
    %v9021 = vadd.f32 %v8701, %v8962
    %v9022 = vadd.f32 %v8702, %v8967
    %v9023 = vadd.f32 %v8703, %v8972
    %v9024 = vadd.f32 %v8704, %v8977
    %v9025 = vadd.f32 %v8705, %v8982
    %v9026 = vadd.f32 %v8706, %v8987
    %v9027 = vadd.f32 %v8707, %v8992
    %v9028 = vadd.f32 %v8708, %v8997
    %v9029 = vadd.f32 %v8709, %v9002
    %v9030 = vld [vmem:[#allocation25] sm:$0x1]
    %v9032 = vlaneseq
    %v9033 = vshrl.u32 %v9032, 7
    %v9034 = vsub.s32 0, %v9033
    %v9035 = vrot.slane %v9030, %v9034
    %v9037 = vadd.f32 %v9005, %v9035
    %v9038 = vadd.f32 %v9006, %v9035
    %v9039 = vadd.f32 %v9007, %v9035
    %v9040 = vadd.f32 %v9008, %v9035
    %v9041 = vadd.f32 %v9009, %v9035
    %v9042 = vadd.f32 %v9010, %v9035
    %v9043 = vadd.f32 %v9011, %v9035
    %v9044 = vadd.f32 %v9012, %v9035
    %v9045 = vadd.f32 %v9013, %v9035
    %v9046 = vadd.f32 %v9014, %v9035
    %v9047 = vadd.f32 %v9015, %v9035
    %v9048 = vadd.f32 %v9016, %v9035
    %v9049 = vadd.f32 %v9017, %v9035
    %v9050 = vadd.f32 %v9018, %v9035
    %v9051 = vadd.f32 %v9019, %v9035
    %v9052 = vadd.f32 %v9020, %v9035
    %v9053 = vadd.f32 %v9021, %v9035
    %v9054 = vadd.f32 %v9022, %v9035
    %v9055 = vadd.f32 %v9023, %v9035
    %v9056 = vadd.f32 %v9024, %v9035
    %v9057 = vadd.f32 %v9025, %v9035
    %v9058 = vadd.f32 %v9026, %v9035
    %v9059 = vadd.f32 %v9027, %v9035
    %v9060 = vadd.f32 %v9028, %v9035
    %v9061 = vadd.f32 %v9029, %v9035
    %vm9062 = vcmp.gt.f32.partialorder %v9037, 0.0
    %vm9063 = vcmp.gt.f32.partialorder %v9038, 0.0
    %vm9064 = vcmp.gt.f32.partialorder %v9039, 0.0
    %vm9065 = vcmp.gt.f32.partialorder %v9040, 0.0
    %vm9066 = vcmp.gt.f32.partialorder %v9041, 0.0
    %vm9067 = vcmp.gt.f32.partialorder %v9042, 0.0
    %vm9068 = vcmp.gt.f32.partialorder %v9043, 0.0
    %vm9069 = vcmp.gt.f32.partialorder %v9044, 0.0
    %vm9070 = vcmp.gt.f32.partialorder %v9045, 0.0
    %vm9071 = vcmp.gt.f32.partialorder %v9046, 0.0
    %vm9072 = vcmp.gt.f32.partialorder %v9047, 0.0
    %vm9073 = vcmp.gt.f32.partialorder %v9048, 0.0
    %vm9074 = vcmp.gt.f32.partialorder %v9049, 0.0
    %vm9075 = vcmp.gt.f32.partialorder %v9050, 0.0
    %vm9076 = vcmp.gt.f32.partialorder %v9051, 0.0
    %vm9077 = vcmp.gt.f32.partialorder %v9052, 0.0
    %vm9078 = vcmp.gt.f32.partialorder %v9053, 0.0
    %vm9079 = vcmp.gt.f32.partialorder %v9054, 0.0
    %vm9080 = vcmp.gt.f32.partialorder %v9055, 0.0
    %vm9081 = vcmp.gt.f32.partialorder %v9056, 0.0
    %vm9082 = vcmp.gt.f32.partialorder %v9057, 0.0
    %vm9083 = vcmp.gt.f32.partialorder %v9058, 0.0
    %vm9084 = vcmp.gt.f32.partialorder %v9059, 0.0
    %vm9085 = vcmp.gt.f32.partialorder %v9060, 0.0
    %vm9086 = vcmp.gt.f32.partialorder %v9061, 0.0
    %v9087 = vmul.f32 %v9037, 0.2
    %v9088 = vmul.f32 %v9038, 0.2
    %v9089 = vmul.f32 %v9039, 0.2
    %v9090 = vmul.f32 %v9040, 0.2
    %v9091 = vmul.f32 %v9041, 0.2
    %v9092 = vmul.f32 %v9042, 0.2
    %v9093 = vmul.f32 %v9043, 0.2
    %v9094 = vmul.f32 %v9044, 0.2
    %v9095 = vmul.f32 %v9045, 0.2
    %v9096 = vmul.f32 %v9046, 0.2
    %v9097 = vmul.f32 %v9047, 0.2
    %v9098 = vmul.f32 %v9048, 0.2
    %v9099 = vmul.f32 %v9049, 0.2
    %v9100 = vmul.f32 %v9050, 0.2
    %v9101 = vmul.f32 %v9051, 0.2
    %v9102 = vmul.f32 %v9052, 0.2
    %v9103 = vmul.f32 %v9053, 0.2
    %v9104 = vmul.f32 %v9054, 0.2
    %v9105 = vmul.f32 %v9055, 0.2
    %v9106 = vmul.f32 %v9056, 0.2
    %v9107 = vmul.f32 %v9057, 0.2
    %v9108 = vmul.f32 %v9058, 0.2
    %v9109 = vmul.f32 %v9059, 0.2
    %v9110 = vmul.f32 %v9060, 0.2
    %v9111 = vmul.f32 %v9061, 0.2
    %v9112 = vsel %vm9062, %v9037, %v9087
    %v9113 = vsel %vm9063, %v9038, %v9088
    %v9114 = vsel %vm9064, %v9039, %v9089
    %v9115 = vsel %vm9065, %v9040, %v9090
    %v9116 = vsel %vm9066, %v9041, %v9091
    %v9117 = vsel %vm9067, %v9042, %v9092
    %v9118 = vsel %vm9068, %v9043, %v9093
    %v9119 = vsel %vm9069, %v9044, %v9094
    %v9120 = vsel %vm9070, %v9045, %v9095
    %v9121 = vsel %vm9071, %v9046, %v9096
    %v9122 = vsel %vm9072, %v9047, %v9097
    %v9123 = vsel %vm9073, %v9048, %v9098
    %v9124 = vsel %vm9074, %v9049, %v9099
    %v9125 = vsel %vm9075, %v9050, %v9100
    %v9126 = vsel %vm9076, %v9051, %v9101
    %v9127 = vsel %vm9077, %v9052, %v9102
    %v9128 = vsel %vm9078, %v9053, %v9103
    %v9129 = vsel %vm9079, %v9054, %v9104
    %v9130 = vsel %vm9080, %v9055, %v9105
    %v9131 = vsel %vm9081, %v9056, %v9106
    %v9132 = vsel %vm9082, %v9057, %v9107
    %v9133 = vsel %vm9083, %v9058, %v9108
    %v9134 = vsel %vm9084, %v9059, %v9109
    %v9135 = vsel %vm9085, %v9060, %v9110
    %v9136 = vsel %vm9086, %v9061, %v9111
    %v9137 = vmul.f32 %v9112, %v9112
    %v9138 = vmul.f32 %v9113, %v9113
    %v9139 = vmul.f32 %v9114, %v9114
    %v9140 = vmul.f32 %v9115, %v9115
    %v9141 = vmul.f32 %v9116, %v9116
    %v9142 = vmul.f32 %v9117, %v9117
    %v9143 = vmul.f32 %v9118, %v9118
    %v9144 = vmul.f32 %v9119, %v9119
    %v9145 = vmul.f32 %v9120, %v9120
    %v9146 = vmul.f32 %v9121, %v9121
    %v9147 = vmul.f32 %v9122, %v9122
    %v9148 = vmul.f32 %v9123, %v9123
    %v9149 = vmul.f32 %v9124, %v9124
    %v9150 = vmul.f32 %v9125, %v9125
    %v9151 = vmul.f32 %v9126, %v9126
    %v9152 = vmul.f32 %v9127, %v9127
    %v9153 = vmul.f32 %v9128, %v9128
    %v9154 = vmul.f32 %v9129, %v9129
    %v9155 = vmul.f32 %v9130, %v9130
    %v9156 = vmul.f32 %v9131, %v9131
    %v9157 = vmul.f32 %v9132, %v9132
    %v9158 = vmul.f32 %v9133, %v9133
    %v9159 = vmul.f32 %v9134, %v9134
    %v9160 = vmul.f32 %v9135, %v9135
    %v9161 = vmul.f32 %v9136, %v9136
    %v9162 = vsel %vm291, %v9137, 0.0
    %9163 = vadd.xlane.f32.xlu0 %v9162
    %v9164 = vpop.xlane.xlu0 %9163
    %v9165 = vsel %vm291, %v9138, 0.0
    %9166 = vadd.xlane.f32.xlu0 %v9165
    %v9167 = vpop.xlane.xlu0 %9166
    %v9168 = vsel %vm291, %v9139, 0.0
    %9169 = vadd.xlane.f32.xlu0 %v9168
    %v9170 = vpop.xlane.xlu0 %9169
    %v9171 = vsel %vm291, %v9140, 0.0
    %9172 = vadd.xlane.f32.xlu0 %v9171
    %v9173 = vpop.xlane.xlu0 %9172
    %v9174 = vsel %vm291, %v9141, 0.0
    %9175 = vadd.xlane.f32.xlu0 %v9174
    %v9176 = vpop.xlane.xlu0 %9175
    %v9177 = vsel %vm291, %v9142, 0.0
    %9178 = vadd.xlane.f32.xlu0 %v9177
    %v9179 = vpop.xlane.xlu0 %9178
    %v9180 = vsel %vm291, %v9143, 0.0
    %9181 = vadd.xlane.f32.xlu0 %v9180
    %v9182 = vpop.xlane.xlu0 %9181
    %v9183 = vsel %vm291, %v9144, 0.0
    %9184 = vadd.xlane.f32.xlu0 %v9183
    %v9185 = vpop.xlane.xlu0 %9184
    %v9186 = vsel %vm291, %v9145, 0.0
    %9187 = vadd.xlane.f32.xlu0 %v9186
    %v9188 = vpop.xlane.xlu0 %9187
    %v9189 = vsel %vm291, %v9146, 0.0
    %9190 = vadd.xlane.f32.xlu0 %v9189
    %v9191 = vpop.xlane.xlu0 %9190
    %v9192 = vsel %vm291, %v9147, 0.0
    %9193 = vadd.xlane.f32.xlu0 %v9192
    %v9194 = vpop.xlane.xlu0 %9193
    %v9195 = vsel %vm291, %v9148, 0.0
    %9196 = vadd.xlane.f32.xlu0 %v9195
    %v9197 = vpop.xlane.xlu0 %9196
    %v9198 = vsel %vm291, %v9149, 0.0
    %9199 = vadd.xlane.f32.xlu0 %v9198
    %v9200 = vpop.xlane.xlu0 %9199
    %v9201 = vsel %vm291, %v9150, 0.0
    %9202 = vadd.xlane.f32.xlu0 %v9201
    %v9203 = vpop.xlane.xlu0 %9202
    %v9204 = vsel %vm291, %v9151, 0.0
    %9205 = vadd.xlane.f32.xlu0 %v9204
    %v9206 = vpop.xlane.xlu0 %9205
    %v9207 = vsel %vm291, %v9152, 0.0
    %9208 = vadd.xlane.f32.xlu0 %v9207
    %v9209 = vpop.xlane.xlu0 %9208
    %v9210 = vsel %vm291, %v9153, 0.0
    %9211 = vadd.xlane.f32.xlu0 %v9210
    %v9212 = vpop.xlane.xlu0 %9211
    %v9213 = vsel %vm291, %v9154, 0.0
    %9214 = vadd.xlane.f32.xlu0 %v9213
    %v9215 = vpop.xlane.xlu0 %9214
    %v9216 = vsel %vm291, %v9155, 0.0
    %9217 = vadd.xlane.f32.xlu0 %v9216
    %v9218 = vpop.xlane.xlu0 %9217
    %v9219 = vsel %vm291, %v9156, 0.0
    %9220 = vadd.xlane.f32.xlu0 %v9219
    %v9221 = vpop.xlane.xlu0 %9220
    %v9222 = vsel %vm291, %v9157, 0.0
    %9223 = vadd.xlane.f32.xlu0 %v9222
    %v9224 = vpop.xlane.xlu0 %9223
    %v9225 = vsel %vm291, %v9158, 0.0
    %9226 = vadd.xlane.f32.xlu0 %v9225
    %v9227 = vpop.xlane.xlu0 %9226
    %v9228 = vsel %vm291, %v9159, 0.0
    %9229 = vadd.xlane.f32.xlu0 %v9228
    %v9230 = vpop.xlane.xlu0 %9229
    %v9231 = vsel %vm291, %v9160, 0.0
    %9232 = vadd.xlane.f32.xlu0 %v9231
    %v9233 = vpop.xlane.xlu0 %9232
    %v9234 = vsel %vm291, %v9161, 0.0
    %9235 = vadd.xlane.f32.xlu0 %v9234
    %v9236 = vpop.xlane.xlu0 %9235
    %v9237 = vmul.f32 %v9164, %v246
    %v9238 = vmul.f32 %v9167, %v246
    %v9239 = vmul.f32 %v9170, %v246
    %v9240 = vmul.f32 %v9173, %v246
    %v9241 = vmul.f32 %v9176, %v246
    %v9242 = vmul.f32 %v9179, %v246
    %v9243 = vmul.f32 %v9182, %v246
    %v9244 = vmul.f32 %v9185, %v246
    %v9245 = vmul.f32 %v9188, %v246
    %v9246 = vmul.f32 %v9191, %v246
    %v9247 = vmul.f32 %v9194, %v246
    %v9248 = vmul.f32 %v9197, %v246
    %v9249 = vmul.f32 %v9200, %v246
    %v9250 = vmul.f32 %v9203, %v246
    %v9251 = vmul.f32 %v9206, %v246
    %v9252 = vmul.f32 %v9209, %v246
    %v9253 = vmul.f32 %v9212, %v246
    %v9254 = vmul.f32 %v9215, %v246
    %v9255 = vmul.f32 %v9218, %v246
    %v9256 = vmul.f32 %v9221, %v246
    %v9257 = vmul.f32 %v9224, %v246
    %v9258 = vmul.f32 %v9227, %v246
    %v9259 = vmul.f32 %v9230, %v246
    %v9260 = vmul.f32 %v9233, %v246
    %v9261 = vmul.f32 %v9236, %v246
    %v9262 = vadd.f32 %v9237, 1e-08
    %v9263 = vadd.f32 %v9238, 1e-08
    %v9264 = vadd.f32 %v9239, 1e-08
    %v9265 = vadd.f32 %v9240, 1e-08
    %v9266 = vadd.f32 %v9241, 1e-08
    %v9267 = vadd.f32 %v9242, 1e-08
    %v9268 = vadd.f32 %v9243, 1e-08
    %v9269 = vadd.f32 %v9244, 1e-08
    %v9270 = vadd.f32 %v9245, 1e-08
    %v9271 = vadd.f32 %v9246, 1e-08
    %v9272 = vadd.f32 %v9247, 1e-08
    %v9273 = vadd.f32 %v9248, 1e-08
    %v9274 = vadd.f32 %v9249, 1e-08
    %v9275 = vadd.f32 %v9250, 1e-08
    %v9276 = vadd.f32 %v9251, 1e-08
    %v9277 = vadd.f32 %v9252, 1e-08
    %v9278 = vadd.f32 %v9253, 1e-08
    %v9279 = vadd.f32 %v9254, 1e-08
    %v9280 = vadd.f32 %v9255, 1e-08
    %v9281 = vadd.f32 %v9256, 1e-08
    %v9282 = vadd.f32 %v9257, 1e-08
    %v9283 = vadd.f32 %v9258, 1e-08
    %v9284 = vadd.f32 %v9259, 1e-08
    %v9285 = vadd.f32 %v9260, 1e-08
    %v9286 = vadd.f32 %v9261, 1e-08
    %v9287 = vrsqrt.pop %v9262
    %v9288 = vrsqrt.pop %v9263
    %v9289 = vrsqrt.pop %v9264
    %v9290 = vrsqrt.pop %v9265
    %v9291 = vrsqrt.pop %v9266
    %v9292 = vrsqrt.pop %v9267
    %v9293 = vrsqrt.pop %v9268
    %v9294 = vrsqrt.pop %v9269
    %v9295 = vrsqrt.pop %v9270
    %v9296 = vrsqrt.pop %v9271
    %v9297 = vrsqrt.pop %v9272
    %v9298 = vrsqrt.pop %v9273
    %v9299 = vrsqrt.pop %v9274
    %v9300 = vrsqrt.pop %v9275
    %v9301 = vrsqrt.pop %v9276
    %v9302 = vrsqrt.pop %v9277
    %v9303 = vrsqrt.pop %v9278
    %v9304 = vrsqrt.pop %v9279
    %v9305 = vrsqrt.pop %v9280
    %v9306 = vrsqrt.pop %v9281
    %v9307 = vrsqrt.pop %v9282
    %v9308 = vrsqrt.pop %v9283
    %v9309 = vrsqrt.pop %v9284
    %v9310 = vrsqrt.pop %v9285
    %v9311 = vrsqrt.pop %v9286
    %v9312 = vmul.f32 %v9112, %v9287
    %v9313 = vmul.f32 %v9113, %v9288
    %v9314 = vmul.f32 %v9114, %v9289
    %v9315 = vmul.f32 %v9115, %v9290
    %v9316 = vmul.f32 %v9116, %v9291
    %v9317 = vmul.f32 %v9117, %v9292
    %v9318 = vmul.f32 %v9118, %v9293
    %v9319 = vmul.f32 %v9119, %v9294
    %v9320 = vmul.f32 %v9120, %v9295
    %v9321 = vmul.f32 %v9121, %v9296
    %v9322 = vmul.f32 %v9122, %v9297
    %v9323 = vmul.f32 %v9123, %v9298
    %v9324 = vmul.f32 %v9124, %v9299
    %v9325 = vmul.f32 %v9125, %v9300
    %v9326 = vmul.f32 %v9126, %v9301
    %v9327 = vmul.f32 %v9127, %v9302
    %v9328 = vmul.f32 %v9128, %v9303
    %v9329 = vmul.f32 %v9129, %v9304
    %v9330 = vmul.f32 %v9130, %v9305
    %v9331 = vmul.f32 %v9131, %v9306
    %v9332 = vmul.f32 %v9132, %v9307
    %v9333 = vmul.f32 %v9133, %v9308
    %v9334 = vmul.f32 %v9134, %v9309
    %v9335 = vmul.f32 %v9135, %v9310
    %v9336 = vmul.f32 %v9136, %v9311
    %v9337 = vld [vmem:[#allocation17] sm:$0xff]
    %v9338 = vld [vmem:[#allocation17 + $0x8] sm:$0xff]
    %v9339 = vld [vmem:[#allocation17 + $0x10] sm:$0xff]
    %v9340 = vld [vmem:[#allocation17 + $0x18] sm:$0xff]
    %v9341 = vld [vmem:[#allocation17 + $0x20] sm:$0xff]
    %v9342 = vld [vmem:[#allocation17 + $0x28] sm:$0xff]
    %v9343 = vld [vmem:[#allocation17 + $0x30] sm:$0xff]
    %v9344 = vld [vmem:[#allocation17 + $0x38] sm:$0xff]
    %v9345 = vld [vmem:[#allocation17 + $0x40] sm:$0xff]
    %v9346 = vld [vmem:[#allocation17 + $0x48] sm:$0xff]
    %v9347 = vld [vmem:[#allocation17 + $0x50] sm:$0xff]
    %v9348 = vld [vmem:[#allocation17 + $0x58] sm:$0xff]
    %v9349 = vld [vmem:[#allocation17 + $0x60] sm:$0xff]
    %v9350 = vld [vmem:[#allocation17 + $0x68] sm:$0xff]
    %v9351 = vld [vmem:[#allocation17 + $0x70] sm:$0xff]
    %v9352 = vld [vmem:[#allocation17 + $0x78] sm:$0xff]
    %v9353 = vld [vmem:[#allocation17 + $0x80] sm:$0xff]
    %v9354 = vld [vmem:[#allocation17 + $0x88] sm:$0xff]
    %v9355 = vld [vmem:[#allocation17 + $0x90] sm:$0xff]
    %v9356 = vld [vmem:[#allocation17 + $0x98] sm:$0xff]
    %v9357 = vld [vmem:[#allocation17 + $0xa0] sm:$0xff]
    %v9358 = vld [vmem:[#allocation17 + $0xa8] sm:$0xff]
    %v9359 = vld [vmem:[#allocation17 + $0xb0] sm:$0xff]
    %v9360 = vld [vmem:[#allocation17 + $0xb8] sm:$0xff]
    %v9361 = vld [vmem:[#allocation17 + $0xc0] sm:$0xff]
    %9363 = vset.pattern.permute.xlu0 0
    %9364 = vperm.xlu0 %9363, %v9337
    %v9365 = vpop.permute.xlu0 %9364
    %9368 = vset.pattern.permute.xlu0 0
    %9369 = vperm.xlu0 %9368, %v9338
    %v9370 = vpop.permute.xlu0 %9369
    %9373 = vset.pattern.permute.xlu0 0
    %9374 = vperm.xlu0 %9373, %v9339
    %v9375 = vpop.permute.xlu0 %9374
    %9378 = vset.pattern.permute.xlu0 0
    %9379 = vperm.xlu0 %9378, %v9340
    %v9380 = vpop.permute.xlu0 %9379
    %9383 = vset.pattern.permute.xlu0 0
    %9384 = vperm.xlu0 %9383, %v9341
    %v9385 = vpop.permute.xlu0 %9384
    %9388 = vset.pattern.permute.xlu0 0
    %9389 = vperm.xlu0 %9388, %v9342
    %v9390 = vpop.permute.xlu0 %9389
    %9393 = vset.pattern.permute.xlu0 0
    %9394 = vperm.xlu0 %9393, %v9343
    %v9395 = vpop.permute.xlu0 %9394
    %9398 = vset.pattern.permute.xlu0 0
    %9399 = vperm.xlu0 %9398, %v9344
    %v9400 = vpop.permute.xlu0 %9399
    %9403 = vset.pattern.permute.xlu0 0
    %9404 = vperm.xlu0 %9403, %v9345
    %v9405 = vpop.permute.xlu0 %9404
    %9408 = vset.pattern.permute.xlu0 0
    %9409 = vperm.xlu0 %9408, %v9346
    %v9410 = vpop.permute.xlu0 %9409
    %9413 = vset.pattern.permute.xlu0 0
    %9414 = vperm.xlu0 %9413, %v9347
    %v9415 = vpop.permute.xlu0 %9414
    %9418 = vset.pattern.permute.xlu0 0
    %9419 = vperm.xlu0 %9418, %v9348
    %v9420 = vpop.permute.xlu0 %9419
    %9423 = vset.pattern.permute.xlu0 0
    %9424 = vperm.xlu0 %9423, %v9349
    %v9425 = vpop.permute.xlu0 %9424
    %9428 = vset.pattern.permute.xlu0 0
    %9429 = vperm.xlu0 %9428, %v9350
    %v9430 = vpop.permute.xlu0 %9429
    %9433 = vset.pattern.permute.xlu0 0
    %9434 = vperm.xlu0 %9433, %v9351
    %v9435 = vpop.permute.xlu0 %9434
    %9438 = vset.pattern.permute.xlu0 0
    %9439 = vperm.xlu0 %9438, %v9352
    %v9440 = vpop.permute.xlu0 %9439
    %9443 = vset.pattern.permute.xlu0 0
    %9444 = vperm.xlu0 %9443, %v9353
    %v9445 = vpop.permute.xlu0 %9444
    %9448 = vset.pattern.permute.xlu0 0
    %9449 = vperm.xlu0 %9448, %v9354
    %v9450 = vpop.permute.xlu0 %9449
    %9453 = vset.pattern.permute.xlu0 0
    %9454 = vperm.xlu0 %9453, %v9355
    %v9455 = vpop.permute.xlu0 %9454
    %9458 = vset.pattern.permute.xlu0 0
    %9459 = vperm.xlu0 %9458, %v9356
    %v9460 = vpop.permute.xlu0 %9459
    %9463 = vset.pattern.permute.xlu0 0
    %9464 = vperm.xlu0 %9463, %v9357
    %v9465 = vpop.permute.xlu0 %9464
    %9468 = vset.pattern.permute.xlu0 0
    %9469 = vperm.xlu0 %9468, %v9358
    %v9470 = vpop.permute.xlu0 %9469
    %9473 = vset.pattern.permute.xlu0 0
    %9474 = vperm.xlu0 %9473, %v9359
    %v9475 = vpop.permute.xlu0 %9474
    %9478 = vset.pattern.permute.xlu0 0
    %9479 = vperm.xlu0 %9478, %v9360
    %v9480 = vpop.permute.xlu0 %9479
    %9483 = vset.pattern.permute.xlu0 0
    %9484 = vperm.xlu0 %9483, %v9361
    %v9485 = vpop.permute.xlu0 %9484
    %v9487 = vmul.f32 %v9312, %v9365
    %v9488 = vmul.f32 %v9313, %v9370
    %v9489 = vmul.f32 %v9314, %v9375
    %v9490 = vmul.f32 %v9315, %v9380
    %v9491 = vmul.f32 %v9316, %v9385
    %v9492 = vmul.f32 %v9317, %v9390
    %v9493 = vmul.f32 %v9318, %v9395
    %v9494 = vmul.f32 %v9319, %v9400
    %v9495 = vmul.f32 %v9320, %v9405
    %v9496 = vmul.f32 %v9321, %v9410
    %v9497 = vmul.f32 %v9322, %v9415
    %v9498 = vmul.f32 %v9323, %v9420
    %v9499 = vmul.f32 %v9324, %v9425
    %v9500 = vmul.f32 %v9325, %v9430
    %v9501 = vmul.f32 %v9326, %v9435
    %v9502 = vmul.f32 %v9327, %v9440
    %v9503 = vmul.f32 %v9328, %v9445
    %v9504 = vmul.f32 %v9329, %v9450
    %v9505 = vmul.f32 %v9330, %v9455
    %v9506 = vmul.f32 %v9331, %v9460
    %v9507 = vmul.f32 %v9332, %v9465
    %v9508 = vmul.f32 %v9333, %v9470
    %v9509 = vmul.f32 %v9334, %v9475
    %v9510 = vmul.f32 %v9335, %v9480
    %v9511 = vmul.f32 %v9336, %v9485
    %9512 = vst.msk [vmem:[#allocation2] sm:$0xff] %vm659, 0.0
    %9513 = vst.msk [vmem:[#allocation2 + $0x8] sm:$0xff] %vm659, 0.0
    %9514 = vst.msk [vmem:[#allocation2 + $0x10] sm:$0xff] %vm291, %v9487
    %9515 = vst.msk [vmem:[#allocation2 + $0x18] sm:$0xff] %vm291, %v9488
    %9516 = vst.msk [vmem:[#allocation2 + $0x20] sm:$0xff] %vm291, %v9489
    %9517 = vst.msk [vmem:[#allocation2 + $0x28] sm:$0xff] %vm291, %v9490
    %9518 = vst.msk [vmem:[#allocation2 + $0x30] sm:$0xff] %vm291, %v9491
    %9519 = vst.msk [vmem:[#allocation2 + $0x38] sm:$0xff] %vm291, %v9492
    %9520 = vst.msk [vmem:[#allocation2 + $0x40] sm:$0xff] %vm291, %v9493
    %9521 = vst.msk [vmem:[#allocation2 + $0x48] sm:$0xff] %vm291, %v9494
    %9522 = vst.msk [vmem:[#allocation2 + $0x50] sm:$0xff] %vm291, %v9495
    %9523 = vst.msk [vmem:[#allocation2 + $0x58] sm:$0xff] %vm291, %v9496
    %9524 = vst.msk [vmem:[#allocation2 + $0x60] sm:$0xff] %vm291, %v9497
    %9525 = vst.msk [vmem:[#allocation2 + $0x68] sm:$0xff] %vm291, %v9498
    %9526 = vst.msk [vmem:[#allocation2 + $0x70] sm:$0xff] %vm291, %v9499
    %9527 = vst.msk [vmem:[#allocation2 + $0x78] sm:$0xff] %vm291, %v9500
    %9528 = vst.msk [vmem:[#allocation2 + $0x80] sm:$0xff] %vm291, %v9501
    %9529 = vst.msk [vmem:[#allocation2 + $0x88] sm:$0xff] %vm291, %v9502
    %9530 = vst.msk [vmem:[#allocation2 + $0x90] sm:$0xff] %vm291, %v9503
    %9531 = vst.msk [vmem:[#allocation2 + $0x98] sm:$0xff] %vm291, %v9504
    %9532 = vst.msk [vmem:[#allocation2 + $0xa0] sm:$0xff] %vm291, %v9505
    %9533 = vst.msk [vmem:[#allocation2 + $0xa8] sm:$0xff] %vm291, %v9506
    %9534 = vst.msk [vmem:[#allocation2 + $0xb0] sm:$0xff] %vm291, %v9507
    %9535 = vst.msk [vmem:[#allocation2 + $0xb8] sm:$0xff] %vm291, %v9508
    %9536 = vst.msk [vmem:[#allocation2 + $0xc0] sm:$0xff] %vm291, %v9509
    %9537 = vst.msk [vmem:[#allocation2 + $0xc8] sm:$0xff] %vm291, %v9510
    %9538 = vst.msk [vmem:[#allocation2 + $0xd0] sm:$0xff] %vm291, %v9511
    %9539 = vst.msk [vmem:[#allocation2 + $0xd8] sm:$0xff] %vm659, 0.0
    %9540 = vst.msk [vmem:[#allocation2 + $0xe0] sm:$0xff] %vm659, 0.0
    %v9541 = vld [vmem:[#allocation26] sm:$0x7]
    %v9542 = vld [vmem:[#allocation2 + $0x10] sm:$0xff]
    %v9543 = vld [vmem:[#allocation2 + $0x18] sm:$0xff]
    %v9544 = vld [vmem:[#allocation2 + $0x20] sm:$0xff]
    %v9545 = vld [vmem:[#allocation2 + $0x28] sm:$0xff]
    %v9546 = vld [vmem:[#allocation2 + $0x30] sm:$0xff]
    %v9547 = vld [vmem:[#allocation2 + $0x38] sm:$0xff]
    %v9548 = vld [vmem:[#allocation2 + $0x40] sm:$0xff]
    %v9549 = vld [vmem:[#allocation2 + $0x48] sm:$0xff]
    %v9550 = vld [vmem:[#allocation2 + $0x50] sm:$0xff]
    %v9551 = vld [vmem:[#allocation2 + $0x58] sm:$0xff]
    %v9552 = vld [vmem:[#allocation2 + $0x60] sm:$0xff]
    %v9553 = vld [vmem:[#allocation2 + $0x68] sm:$0xff]
    %v9554 = vld [vmem:[#allocation2 + $0x70] sm:$0xff]
    %v9555 = vld [vmem:[#allocation2 + $0x78] sm:$0xff]
    %v9556 = vld [vmem:[#allocation2 + $0x80] sm:$0xff]
    %v9557 = vld [vmem:[#allocation2 + $0x88] sm:$0xff]
    %v9558 = vld [vmem:[#allocation2 + $0x90] sm:$0xff]
    %v9559 = vld [vmem:[#allocation2 + $0x98] sm:$0xff]
    %v9560 = vld [vmem:[#allocation2 + $0xa0] sm:$0xff]
    %v9561 = vld [vmem:[#allocation2 + $0xa8] sm:$0xff]
    %v9562 = vld [vmem:[#allocation2 + $0xb0] sm:$0xff]
    %v9563 = vld [vmem:[#allocation2 + $0xb8] sm:$0xff]
    %v9564 = vld [vmem:[#allocation2 + $0xc0] sm:$0xff]
    %v9565 = vld [vmem:[#allocation2 + $0xc8] sm:$0xff]
    %v9566 = vld [vmem:[#allocation2 + $0xd0] sm:$0xff]
    %v9567 = vld [vmem:[#allocation28] sm:$0x7]
    %9569 = vset.pattern.permute.xlu0 0
    %9570 = vperm.xlu0 %9569, %v9567
    %v9571 = vpop.permute.xlu0 %9570
    %v9574 = vsel %vm291, %v9541, 0
    %v9577 = vsel %vm291, %v9542, 0
    %v9580 = vsel %vm291, %v9543, 0
    %v9583 = vsel %vm291, %v9544, 0
    %v9586 = vsel %vm291, %v9545, 0
    %v9589 = vsel %vm291, %v9546, 0
    %v9592 = vsel %vm291, %v9547, 0
    %v9595 = vsel %vm291, %v9548, 0
    %v9598 = vsel %vm291, %v9549, 0
    %v9601 = vsel %vm291, %v9550, 0
    %v9604 = vsel %vm291, %v9551, 0
    %v9607 = vsel %vm291, %v9552, 0
    %v9610 = vsel %vm291, %v9553, 0
    %v9613 = vsel %vm291, %v9554, 0
    %v9616 = vsel %vm291, %v9555, 0
    %v9619 = vsel %vm291, %v9556, 0
    %v9622 = vsel %vm291, %v9557, 0
    %v9625 = vsel %vm291, %v9558, 0
    %v9628 = vsel %vm291, %v9559, 0
    %v9631 = vsel %vm291, %v9560, 0
    %v9634 = vsel %vm291, %v9561, 0
    %v9637 = vsel %vm291, %v9562, 0
    %v9640 = vsel %vm291, %v9563, 0
    %v9643 = vsel %vm291, %v9564, 0
    %v9646 = vsel %vm291, %v9565, 0
    %v9649 = vsel %vm291, %v9566, 0
    %9651 = vmatprep.subr.mxu0 0.0
    %9652 = vmatpush1.xpose.msra.mxu0 %v9577
    %9653 = vmatprep.subr.mxu0 0.0
    %9654 = vmatpush1.xpose.msra.mxu0 %v9580
    %9655 = vmatprep.subr.mxu0 0.0
    %9656 = vmatpush1.xpose.msra.mxu0 %v9583
    %9657 = vmatprep.subr.mxu0 0.0
    %9658 = vmatpush1.xpose.msra.mxu0 %v9586
    %9659 = vmatprep.subr.mxu0 0.0
    %9660 = vmatpush1.xpose.msra.mxu0 %v9589
    %9661 = vmatprep.subr.mxu0 0.0
    %9662 = vmatpush1.xpose.msra.mxu0 %v9592
    %9663 = vmatprep.subr.mxu0 0.0
    %9664 = vmatpush1.xpose.msra.mxu0 %v9595
    %9665 = vmatprep.subr.mxu0 0.0
    %9666 = vmatpush1.xpose.msra.mxu0 %v9598
    %9667 = vmatprep.subr.mxu0 0.0
    %9668 = vmatpush1.xpose.msra.mxu0 %v9601
    %9669 = vmatprep.subr.mxu0 0.0
    %9670 = vmatpush1.xpose.msra.mxu0 %v9604
    %9671 = vmatprep.subr.mxu0 0.0
    %9672 = vmatpush1.xpose.msra.mxu0 %v9607
    %9673 = vmatprep.subr.mxu0 0.0
    %9674 = vmatpush1.xpose.msra.mxu0 %v9610
    %9675 = vmatprep.subr.mxu0 0.0
    %9676 = vmatpush1.xpose.msra.mxu0 %v9613
    %9677 = vmatprep.subr.mxu0 0.0
    %9678 = vmatpush1.xpose.msra.mxu0 %v9616
    %9679 = vmatprep.subr.mxu0 0.0
    %9680 = vmatpush1.xpose.msra.mxu0 %v9619
    %9681 = vmatprep.subr.mxu0 0.0
    %9682 = vmatpush1.xpose.msra.mxu0 %v9622
    %9683 = vmatprep.subr.mxu0 0.0
    %9684 = vmatpush1.xpose.msra.mxu0 %v9625
    %9685 = vmatprep.subr.mxu0 0.0
    %9686 = vmatpush1.xpose.msra.mxu0 %v9628
    %9687 = vmatprep.subr.mxu0 0.0
    %9688 = vmatpush1.xpose.msra.mxu0 %v9631
    %9689 = vmatprep.subr.mxu0 0.0
    %9690 = vmatpush1.xpose.msra.mxu0 %v9634
    %9691 = vmatprep.subr.mxu0 0.0
    %9692 = vmatpush1.xpose.msra.mxu0 %v9637
    %9693 = vmatprep.subr.mxu0 0.0
    %9694 = vmatpush1.xpose.msra.mxu0 %v9640
    %9695 = vmatprep.subr.mxu0 0.0
    %9696 = vmatpush1.xpose.msra.mxu0 %v9643
    %9697 = vmatprep.subr.mxu0 0.0
    %9698 = vmatpush1.xpose.msra.mxu0 %v9646
    %9699 = vmatprep.subr.mxu0 0.0
    %9700 = vmatpush1.xpose.msra.mxu0 %v9649
    %9701 = vmatprep.subr.mxu0 0.0
    %9702 = vmatpush1.xpose.msra.mxu0 0.0
    %9703 = vmatprep.subr.mxu0 0.0
    %9704 = vmatpush1.xpose.msra.mxu0 0.0
    %9705 = vmatprep.subr.mxu0 0.0
    %9706 = vmatpush1.xpose.msra.mxu0 0.0
    %9707 = vmatprep.subr.mxu0 0.0
    %9708 = vmatpush1.xpose.msra.mxu0 0.0
    %9709 = vmatprep.subr.mxu0 0.0
    %9710 = vmatpush1.xpose.msra.mxu0 0.0
    %9711 = vmatprep.subr.mxu0 0.0
    %9712 = vmatpush1.xpose.msra.mxu0 0.0
    %9713 = vmatprep.subr.mxu0 0.0
    %9714 = vmatpush1.xpose.msra.mxu0 0.0
    %9715 = vmatprep.mubr.f32.mxu0 0.0
    %9716 = vmatmul.mubr.f32.gmra.mrb[0].mxu0 %v9574
    %v9717 = vpop.f32.mrb[0].mxu0
    %v9718 = vadd.f32 %v9571, %v9717
    %v9719 = vpop.f32.mrb[0].mxu0
    %v9720 = vadd.f32 %v9571, %v9719
    %9721 = vdwg.mxu0
    %v9724 = vcombine.low %v9718, %v9720
    %vm9726 = vcmask 1042432
    %vm9727 = vcmask 587780
    %vm9728 = vmor %vm9727, %vm9726
    %9729 = vst.msk [vmem:[#allocation29] sm:$0x77] %vm9728, %v9724
    // Predicated region
    $region122: #{tpu_custom_call.1} parent=1 // pred_check
      _
    $region123: #{tpu_custom_call.1} parent=1 // pred_check_branch
      %9731 = sbr.rel (0) target = $region125
    $region124: #{tpu_custom_call.1} parent=1 // pred_region
      %s9733 = ssub.s32 128, 128
      %9734 = vsyncadd [#allocation7], %s9733
      %s9736 = sshll.u32 [#allocation29], 4
      %s9737 = int_to_ptr.vmem [resolvable:$true] %s9736
      %9739 = dma.vmem_to_hbm [thread:$0]  %s9737, 128, %s15, [#allocation7]
    $region125: #{tpu_custom_call.1} parent=1 // pred_fallthru
      _
    // Predicated region
    $region126: #{tpu_custom_call.1} parent=1 // pred_check
      _
    $region127: #{tpu_custom_call.1} parent=1 // pred_check_branch
      %9741 = sbr.rel (0) target = $region129
    $region128: #{tpu_custom_call.1} parent=1 // pred_region
      %9742 = dma.done [#allocation7], 128
    $region129: #{tpu_custom_call.1} parent=1 // pred_fallthru
      _
    %9743 = vsyncpa [#allocation6], 1
    %9744 = vsyncpa [#allocation9], 1
    %9745 = vsyncpa [#allocation12], 1
    %9746 = vsyncpa [#allocation15], 1
    %9747 = vsyncpa [#allocation18], 1
    %9748 = vsyncpa [#allocation21], 1
    %9749 = vsyncpa [#allocation24], 1
    %9750 = vsyncpa [#allocation27], 1
    %9751 = vsyncpa [#allocation7], 1

</llo_original>
